<compile_context>
chip_gen: v5e
topology: v5e:2x2
jax: 0.10.0
libtpu: 0.0.40
codegen_flags: <defaults>
</compile_context>

<pallas_src>
import functools

import jax
import jax.numpy as jnp
from jax.experimental import pallas as pl
from jax.experimental.pallas import tpu as pltpu


# ----------------------------------------------------------------------------
# VMEM budgeting helpers (v5e/v6e: 128 MiB physical, v7x: 64 MiB)
# ----------------------------------------------------------------------------
_VMEM_LIMIT_CACHE = None


def _vmem_limit_bytes():
    """Scoped-VMEM limit passed to every pallas_call (~75% of physical VMEM)."""
    global _VMEM_LIMIT_CACHE
    if _VMEM_LIMIT_CACHE is None:
        try:
            cap = int(pltpu.get_tpu_info().vmem_capacity_bytes)
        except Exception:
            cap = 0
        if cap <= 0:
            cap = 64 * 1024 * 1024            # conservative (v7x physical VMEM)
        _VMEM_LIMIT_CACHE = int(min(cap * 3 // 4, 100 * 1024 * 1024))
    return _VMEM_LIMIT_CACHE


def _attn_vmem_bytes(sb, n, c, inner, heads):
    """Rough per-grid-step VMEM footprint of the fused attention kernel."""
    rows = sb * n
    io = 2 * 2 * rows * c * 4                         # x + out blocks, double buffered
    w = 2 * (c * 3 * inner + inner * c) * 2           # bf16 weights, double buffered
    bias = 2 * heads * n * n * 4                      # rel-pos bias, double buffered
    small = 2 * (3 * c * 4 + sb * n * 4)              # gamma/beta/b_out + mask
    temps = (2 * rows * c * 4                         # x / xn in f32
             + rows * 3 * inner * (4 + 2)             # qkv f32 result + bf16 copy
             + 4 * n * n * 4                          # per-head score temporaries
             + rows * inner * (4 + 2)                 # concatenated head outputs
             + rows * c * 4)                          # output projection
    return io + w + bias + small + temps


def _ff_vmem_bytes(tm, c, hid):
    io = 2 * 2 * tm * c * 4
    w = 2 * (c * hid + hid * c) * 2                   # bf16 w1/w2, double buffered
    small = 2 * (4 * c + hid) * 4
    temps = 2 * tm * c * 4 + tm * hid * (4 + 4 + 2) + tm * c * 4
    return io + w + small + temps


def _pick_row_tile(m, bytes_fn, budget):
    valid = [t for t in (2048, 1024, 512, 256, 128, 64, 32, 16, 8)
             if t <= m and m % t == 0]
    for t in valid:
        if bytes_fn(t) <= budget:
            return t
    return valid[-1] if valid else m


def _pick_seq_batch(S, n, bytes_fn, budget):
    """Sequences per grid step: capped at 8 (bounds in-kernel unrolling), keeps the
    flattened (sb*n)-row block sublane aligned, budgeted against VMEM."""
    cands = [c for c in (8, 4, 2, 1)
             if c <= S and S % c == 0 and (c * n) % 8 == 0]
    sb = None
    for c in cands:
        if bytes_fn(c) <= budget:
            sb = c
            break
    if sb is None:
        sb = cands[-1] if cands else S
    # keep >= 2 grid steps when possible so both TensorCores (v7x) get work
    while (sb > 1 and S // sb < 2 and S % (sb // 2) == 0
           and ((sb // 2) * n) % 8 == 0):
        sb //= 2
    if (sb * n) % 8 != 0 and sb != S:
        sb = S                                        # single full block (always legal)
    return sb


# ----------------------------------------------------------------------------
# Pallas kernels
# ----------------------------------------------------------------------------
def _ln_kernel(x_ref, g_ref, b_ref, o_ref, *, eps):
    x = x_ref[...].astype(jnp.float32)
    mu = jnp.mean(x, axis=-1, keepdims=True)
    var = jnp.mean(jnp.square(x - mu), axis=-1, keepdims=True)
    y = (x - mu) * jax.lax.rsqrt(var + eps)
    o_ref[...] = (y * g_ref[...] + b_ref[...]).astype(o_ref.dtype)


def layernorm(x, gamma, beta, eps=1e-5):
    m, c = x.shape
    limit = _vmem_limit_bytes()
    tm = _pick_row_tile(m, lambda t: 2 * 2 * t * c * 4 + 2 * t * c * 4 + 4 * c * 4,
                        int(limit * 0.85))
    return pl.pallas_call(
        functools.partial(_ln_kernel, eps=eps),
        out_shape=jax.ShapeDtypeStruct((m, c), x.dtype),
        grid=(m // tm,),
        in_specs=[
            pl.BlockSpec((tm, c), lambda i: (i, 0)),
            pl.BlockSpec((1, c), lambda i: (0, 0)),
            pl.BlockSpec((1, c), lambda i: (0, 0)),
        ],
        out_specs=pl.BlockSpec((tm, c), lambda i: (i, 0)),
        compiler_params=pltpu.CompilerParams(
            dimension_semantics=("parallel",), vmem_limit_bytes=limit),
    )(x, gamma.reshape(1, c), beta.reshape(1, c))


def _attn_block_kernel(x_ref, g_ref, b_ref, wqkv_ref, wout_ref, bout_ref, bias_ref,
                       *rest, seq_batch, seq_len, heads, dim_head, eps, has_mask):
    """Fused pre-norm residual MHSA for `seq_batch` whole sequences.

    x_ref: (Sb*N, C) lane-dense slab; wqkv: (C, 3*inner) bf16 (Q pre-scaled);
    wout: (inner, C) bf16; bias_ref: (heads, N, N); mask_ref: (Sb, 1, N) additive.
    """
    if has_mask:
        mask_ref, o_ref = rest
    else:
        (o_ref,) = rest

    n = seq_len
    inner = heads * dim_head

    x = x_ref[...].astype(jnp.float32)                           # (Sb*N, C)
    mu = jnp.mean(x, axis=-1, keepdims=True)
    var = jnp.mean(jnp.square(x - mu), axis=-1, keepdims=True)
    xn = (x - mu) * jax.lax.rsqrt(var + eps) * g_ref[...] + b_ref[...]

    # One large QKV matmul for all sequences of this grid step; exactly one bf16 cast.
    qkv = jnp.dot(xn.astype(jnp.bfloat16), wqkv_ref[...],
                  preferred_element_type=jnp.float32).astype(jnp.bfloat16)

    wout = wout_ref[...]                                         # (inner, C) bf16

    seq_outs = []
    for i in range(seq_batch):
        r0 = i * n
        qkv_i = qkv[r0:r0 + n, :]                                # (N, 3*inner) bf16
        head_outs = []
        for h in range(heads):
            lo = h * dim_head
            q = qkv_i[:, lo:lo + dim_head]                       # pre-scaled
            k = qkv_i[:, inner + lo:inner + lo + dim_head]
            v = qkv_i[:, 2 * inner + lo:2 * inner + lo + dim_head]

            # scores = q @ k^T, contracting the last dim of both (no explicit k.T)
            s = jax.lax.dot_general(q, k, (((1,), (1,)), ((), ())),
                                    preferred_element_type=jnp.float32)   # (N, N)
            s = s + bias_ref[h]
            if has_mask:
                s = s + mask_ref[i]
            s = s - jnp.max(s, axis=-1, keepdims=True)
            p = jnp.exp(s)
            p = p * pl.reciprocal(jnp.sum(p, axis=-1, keepdims=True), approx=True)
            head_outs.append(jnp.dot(p.astype(jnp.bfloat16), v,
                                     preferred_element_type=jnp.float32))  # (N, dh)
        seq_outs.append(jnp.concatenate(head_outs, axis=-1))                # (N, inner)

    # Single output projection for the whole slab (contraction dim = inner, not dh).
    o_all = jnp.concatenate(seq_outs, axis=0).astype(jnp.bfloat16)          # (Sb*N, inner)
    proj = jnp.dot(o_all, wout, preferred_element_type=jnp.float32)         # (Sb*N, C)

    o_ref[...] = (x + proj + bout_ref[...]).astype(o_ref.dtype)             # residual


def attention_block(x_seq, p, rel_bias, mask_add, *, heads, dim_head):
    """x_seq: (S, N, C); rel_bias: (heads, N, N) f32;
    mask_add: None or (S, 1, N) per-sequence additive key bias."""
    S, N, C = x_seq.shape
    inner = heads * dim_head
    limit = _vmem_limit_bytes()
    sb = _pick_seq_batch(S, N,
                         lambda b: _attn_vmem_bytes(b, N, C, inner, heads),
                         int(limit * 0.85))
    rows = sb * N
    has_mask = mask_add is not None

    x2 = x_seq.reshape(S * N, C)                       # contiguous (free) reshape
    in_specs = [
        pl.BlockSpec((rows, C), lambda s: (s, 0)),                 # Sb sequences
        pl.BlockSpec((1, C), lambda s: (0, 0)),                    # ln gamma
        pl.BlockSpec((1, C), lambda s: (0, 0)),                    # ln beta
        pl.BlockSpec((C, 3 * inner), lambda s: (0, 0)),            # w_qkv (resident)
        pl.BlockSpec((inner, C), lambda s: (0, 0)),                # w_out (resident)
        pl.BlockSpec((1, C), lambda s: (0, 0)),                    # b_out
        pl.BlockSpec((heads, N, N), lambda s: (0, 0, 0)),          # rel-pos bias
    ]
    args = [x2, p["ln_g"].reshape(1, C), p["ln_b"].reshape(1, C),
            p["w_qkv"], p["w_out"], p["b_out"].reshape(1, C), rel_bias]
    if has_mask:
        in_specs.append(pl.BlockSpec((sb, 1, N), lambda s: (s, 0, 0)))
        args.append(mask_add)

    out2 = pl.pallas_call(
        functools.partial(_attn_block_kernel, seq_batch=sb, seq_len=N, heads=heads,
                          dim_head=dim_head, eps=1e-5, has_mask=has_mask),
        out_shape=jax.ShapeDtypeStruct((S * N, C), x_seq.dtype),
        grid=(S // sb,),
        in_specs=in_specs,
        out_specs=pl.BlockSpec((rows, C), lambda s: (s, 0)),
        compiler_params=pltpu.CompilerParams(
            dimension_semantics=("parallel",), vmem_limit_bytes=limit),
    )(*args)
    return out2.reshape(S, N, C)


def _ff_block_kernel(x_ref, g_ref, b_ref, w1_ref, b1_ref, w2_ref, b2_ref,
                     *rest, eps, final_ln):
    if final_ln:
        g2_ref, bf_ref, o_ref = rest
    else:
        (o_ref,) = rest

    x = x_ref[...].astype(jnp.float32)
    mu = jnp.mean(x, axis=-1, keepdims=True)
    var = jnp.mean(jnp.square(x - mu), axis=-1, keepdims=True)
    xn = (x - mu) * jax.lax.rsqrt(var + eps) * g_ref[...] + b_ref[...]

    h = jnp.dot(xn.astype(jnp.bfloat16), w1_ref[...],
                preferred_element_type=jnp.float32) + b1_ref[...]
    # TODO(synk): PyTorch nn.GELU default is the erf form; tanh approximation used here.
    h = jax.nn.gelu(h, approximate=True)
    o = jnp.dot(h.astype(jnp.bfloat16), w2_ref[...],
                preferred_element_type=jnp.float32) + b2_ref[...]
    y = x + o                                                     # residual
    if final_ln:                                                  # fused final LayerNorm
        mu2 = jnp.mean(y, axis=-1, keepdims=True)
        var2 = jnp.mean(jnp.square(y - mu2), axis=-1, keepdims=True)
        y = (y - mu2) * jax.lax.rsqrt(var2 + eps) * g2_ref[...] + bf_ref[...]
    o_ref[...] = y.astype(o_ref.dtype)


def ff_block(x_flat, p, final_norm=None):
    m, c = x_flat.shape
    hid = p["w1"].shape[1]
    limit = _vmem_limit_bytes()
    tm = _pick_row_tile(m, lambda t: _ff_vmem_bytes(t, c, hid), int(limit * 0.85))
    final_ln = final_norm is not None

    in_specs = [
        pl.BlockSpec((tm, c), lambda i: (i, 0)),
        pl.BlockSpec((1, c), lambda i: (0, 0)),
        pl.BlockSpec((1, c), lambda i: (0, 0)),
        pl.BlockSpec((c, hid), lambda i: (0, 0)),
        pl.BlockSpec((1, hid), lambda i: (0, 0)),
        pl.BlockSpec((hid, c), lambda i: (0, 0)),
        pl.BlockSpec((1, c), lambda i: (0, 0)),
    ]
    args = [x_flat, p["ln_g"].reshape(1, c), p["ln_b"].reshape(1, c),
            p["w1"], p["b1"].reshape(1, hid), p["w2"], p["b2"].reshape(1, c)]
    if final_ln:
        g2, bf = final_norm
        in_specs += [pl.BlockSpec((1, c), lambda i: (0, 0)),
                     pl.BlockSpec((1, c), lambda i: (0, 0))]
        args += [g2.reshape(1, c), bf.reshape(1, c)]

    return pl.pallas_call(
        functools.partial(_ff_block_kernel, eps=1e-5, final_ln=final_ln),
        out_shape=jax.ShapeDtypeStruct((m, c), x_flat.dtype),
        grid=(m // tm,),
        in_specs=in_specs,
        out_specs=pl.BlockSpec((tm, c), lambda i: (i, 0)),
        compiler_params=pltpu.CompilerParams(
            dimension_semantics=("parallel",), vmem_limit_bytes=limit),
    )(*args)


# ----------------------------------------------------------------------------
# model glue (reshapes, rel-pos bias tables, parameter setup)
# ----------------------------------------------------------------------------
def _spatial_rel_bias(table, h, w):
    """table: ((2h-1)*(2w-1), heads) -> (heads, h*w, h*w)"""
    coords = jnp.stack(
        jnp.meshgrid(jnp.arange(h), jnp.arange(w), indexing="ij"), axis=-1
    ).reshape(h * w, 2)
    rel = coords[:, None, :] - coords[None, :, :]
    idx = (rel[..., 0] + h - 1) * (2 * w - 1) + (rel[..., 1] + w - 1)
    return table[idx].transpose(2, 0, 1).astype(jnp.float32)


def _temporal_rel_bias(table, t):
    """table: (2t-1, heads) -> (heads, t, t)"""
    pos = jnp.arange(t)
    idx = pos[:, None] - pos[None, :] + t - 1
    return table[idx].transpose(2, 0, 1).astype(jnp.float32)


def init_params(key, dim, depth, heads, dim_head, ff_mult, H, W, T,
                use_rel_pos_spatial=True, use_rel_pos_temporal=True):
    inner = heads * dim_head
    hidden = dim * ff_mult
    scale = dim_head ** -0.5

    def dense(k, shape):
        return 0.02 * jax.random.normal(k, shape, dtype=jnp.float32)

    def qkv_weight(k):
        w = dense(k, (dim, 3 * inner))
        w = w.at[:, :inner].multiply(scale)     # fold 1/sqrt(dim_head) into Q columns
        return w.astype(jnp.bfloat16)

    layers = []
    keys = jax.random.split(key, depth) if depth else []
    for d in range(depth):
        ks = jax.random.split(keys[d], 8)
        spatial_attn = dict(
            ln_g=jnp.ones((dim,), jnp.float32), ln_b=jnp.zeros((dim,), jnp.float32),
            w_qkv=qkv_weight(ks[0]),
            w_out=dense(ks[1], (inner, dim)).astype(jnp.bfloat16),
            b_out=jnp.zeros((dim,), jnp.float32),
        )
        temporal_attn = dict(
            ln_g=jnp.ones((dim,), jnp.float32), ln_b=jnp.zeros((dim,), jnp.float32),
            w_qkv=qkv_weight(ks[2]),
            w_out=dense(ks[3], (inner, dim)).astype(jnp.bfloat16),
            b_out=jnp.zeros((dim,), jnp.float32),
        )
        ff = dict(
            ln_g=jnp.ones((dim,), jnp.float32), ln_b=jnp.zeros((dim,), jnp.float32),
            w1=dense(ks[4], (dim, hidden)).astype(jnp.bfloat16),
            b1=jnp.zeros((hidden,), jnp.float32),
            w2=dense(ks[5], (hidden, dim)).astype(jnp.bfloat16),
            b2=jnp.zeros((dim,), jnp.float32),
        )
        if use_rel_pos_spatial:
            s_tab = dense(ks[6], ((2 * H - 1) * (2 * W - 1), heads))
        else:
            s_tab = jnp.zeros(((2 * H - 1) * (2 * W - 1), heads), jnp.float32)
        if use_rel_pos_temporal:
            t_tab = dense(ks[7], (2 * T - 1, heads))
        else:
            t_tab = jnp.zeros((2 * T - 1, heads), jnp.float32)
        layers.append(dict(
            spatial_attn=spatial_attn, temporal_attn=temporal_attn, ff=ff,
            spatial_rel_bias=_spatial_rel_bias(s_tab, H, W),
            temporal_rel_bias=_temporal_rel_bias(t_tab, T),
        ))
    return dict(
        layers=layers,
        norm_out_g=jnp.ones((dim,), jnp.float32),
        norm_out_b=jnp.zeros((dim,), jnp.float32),
    )


def video_encoder_forward(params, video, temporal_mask=None, *, heads, dim_head):
    B, T, H, W, C = video.shape
    x = video

    # Key-padding mask as a per-sequence additive key bias (S, 1, T), broadcast over
    # heads/queries inside the kernel.  None => the mask add is compiled out.
    if temporal_mask is not None:
        madd = jnp.where(temporal_mask, 0.0, -1e9).astype(jnp.float32)       # (B, T)
        madd = jnp.broadcast_to(madd[:, None, None, :], (B, H, W, T))
        temporal_mask_add = madd.reshape(B * H * W, 1, T)
    else:
        temporal_mask_add = None

    n_layers = len(params["layers"])
    for li, layer in enumerate(params["layers"]):
        # --- spatial attention over H*W tokens, per (b, t) sequence ---
        xs = x.reshape(B * T, H * W, C)
        xs = attention_block(xs, layer["spatial_attn"], layer["spatial_rel_bias"],
                             None, heads=heads, dim_head=dim_head)
        x = xs.reshape(B, T, H, W, C)
        # TODO(synk): spatial PEG layer would be applied here if configured.

        # --- temporal attention over T tokens, per (b, h, w) sequence ---
        # TODO(synk): still an XLA transpose; an in-kernel strided read would avoid it.
        xt = x.transpose(0, 2, 3, 1, 4).reshape(B * H * W, T, C)
        xt = attention_block(xt, layer["temporal_attn"], layer["temporal_rel_bias"],
                             temporal_mask_add, heads=heads, dim_head=dim_head)
        x = xt.reshape(B, H, W, T, C).transpose(0, 3, 1, 2, 4)
        # TODO(synk): temporal PEG layer would be applied here if configured.

        # --- feedforward (LN + MLP + residual fused); final LayerNorm fused into the
        #     last layer's epilogue ---
        final_norm = ((params["norm_out_g"], params["norm_out_b"])
                      if li == n_layers - 1 else None)
        xf = ff_block(x.reshape(B * T * H * W, C), layer["ff"], final_norm=final_norm)
        x = xf.reshape(B, T, H, W, C)

    if n_layers == 0:   # no layers: just the final LayerNorm
        xf = layernorm(x.reshape(B * T * H * W, C),
                       params["norm_out_g"], params["norm_out_b"])
        x = xf.reshape(B, T, H, W, C)
    return x


# ----------------------------------------------------------------------------
# demo
# ----------------------------------------------------------------------------
if __name__ == "__main__":
    B, T, H, W = 2, 4, 4, 4
    dim, depth, heads, dim_head, ff_mult = 32, 2, 2, 16, 4

    key = jax.random.PRNGKey(0)
    k_param, k_video = jax.random.split(key)

    params = init_params(k_param, dim, depth, heads, dim_head, ff_mult, H, W, T,
                         use_rel_pos_spatial=True, use_rel_pos_temporal=True)
    video = jax.random.normal(k_video, (B, T, H, W, dim), dtype=jnp.float32)
    temporal_mask = jnp.array([[True, True, True, False],
                               [True, True, True, True]])

    fwd = jax.jit(functools.partial(video_encoder_forward, heads=heads, dim_head=dim_head))
    out = fwd(params, video, temporal_mask)
    out = jax.block_until_ready(out)

    assert out.shape == (B, T, H, W, dim), out.shape
    assert jnp.all(jnp.isfinite(out))
    print("KERNEL_OK")
</pallas_src>

<mosaic_0001>
module attributes {stable_mosaic.version = 11 : i64} {
  func.func @_attn_block_kernel(%arg0: i32, %arg1: memref<64x32xf32, #tpu.memory_space<vmem>>, %arg2: memref<1x32xf32, #tpu.memory_space<vmem>>, %arg3: memref<1x32xf32, #tpu.memory_space<vmem>>, %arg4: memref<32x96xbf16, #tpu.memory_space<vmem>>, %arg5: memref<32x32xbf16, #tpu.memory_space<vmem>>, %arg6: memref<1x32xf32, #tpu.memory_space<vmem>>, %arg7: memref<2x16x16xf32, #tpu.memory_space<vmem>>, %arg8: memref<64x32xf32, #tpu.memory_space<vmem>>) attributes {dimension_semantics = [#tpu.dimension_semantics<parallel>], iteration_bounds = array<i64: 2>, scalar_prefetch = 0 : i64, scratch_operands = 0 : i64, tpu.core_type = #tpu.core_type<tc>, window_params = [{transform_indices = @transform_0, window_bounds = array<i64: 64, 32>}, {pipeline_mode = #tpu.pipeline_mode<synchronous>, transform_indices = @transform_1, window_bounds = array<i64: 1, 32>}, {pipeline_mode = #tpu.pipeline_mode<synchronous>, transform_indices = @transform_2, window_bounds = array<i64: 1, 32>}, {pipeline_mode = #tpu.pipeline_mode<synchronous>, transform_indices = @transform_3, window_bounds = array<i64: 32, 96>}, {pipeline_mode = #tpu.pipeline_mode<synchronous>, transform_indices = @transform_4, window_bounds = array<i64: 32, 32>}, {pipeline_mode = #tpu.pipeline_mode<synchronous>, transform_indices = @transform_5, window_bounds = array<i64: 1, 32>}, {pipeline_mode = #tpu.pipeline_mode<synchronous>, transform_indices = @transform_6, window_bounds = array<i64: 2, 16, 16>}, {transform_indices = @transform_7, window_bounds = array<i64: 64, 32>}]} {
    %c0 = arith.constant 0 : index
    %c0_0 = arith.constant 0 : index
    %0 = vector.load %arg1[%c0, %c0_0] : memref<64x32xf32, #tpu.memory_space<vmem>>, vector<64x32xf32>
    %cst = arith.constant dense<0.000000e+00> : vector<64xf32>
    %1 = vector.multi_reduction <add>, %0, %cst [1] : vector<64x32xf32> to vector<64xf32>
    %2 = vector.shape_cast %1 : vector<64xf32> to vector<64x1xf32>
    %cst_1 = arith.constant 3.200000e+01 : f32
    %3 = vector.broadcast %cst_1 : f32 to vector<64x1xf32>
    %4 = arith.divf %2, %3 : vector<64x1xf32>
    %5 = vector.broadcast %4 : vector<64x1xf32> to vector<64x32xf32>
    %6 = arith.subf %0, %5 : vector<64x32xf32>
    %7 = arith.mulf %6, %6 : vector<64x32xf32>
    %cst_2 = arith.constant dense<0.000000e+00> : vector<64xf32>
    %8 = vector.multi_reduction <add>, %7, %cst_2 [1] : vector<64x32xf32> to vector<64xf32>
    %9 = vector.shape_cast %8 : vector<64xf32> to vector<64x1xf32>
    %cst_3 = arith.constant 3.200000e+01 : f32
    %10 = vector.broadcast %cst_3 : f32 to vector<64x1xf32>
    %11 = arith.divf %9, %10 : vector<64x1xf32>
    %12 = vector.broadcast %4 : vector<64x1xf32> to vector<64x32xf32>
    %13 = arith.subf %0, %12 : vector<64x32xf32>
    %cst_4 = arith.constant 9.99999974E-6 : f32
    %14 = vector.broadcast %cst_4 : f32 to vector<64x1xf32>
    %15 = arith.addf %11, %14 : vector<64x1xf32>
    %16 = math.rsqrt %15 : vector<64x1xf32>
    %17 = vector.broadcast %16 : vector<64x1xf32> to vector<64x32xf32>
    %18 = arith.mulf %13, %17 : vector<64x32xf32>
    %c0_5 = arith.constant 0 : index
    %c0_6 = arith.constant 0 : index
    %19 = vector.load %arg2[%c0_5, %c0_6] : memref<1x32xf32, #tpu.memory_space<vmem>>, vector<1x32xf32>
    %20 = vector.broadcast %19 : vector<1x32xf32> to vector<64x32xf32>
    %21 = arith.mulf %18, %20 : vector<64x32xf32>
    %c0_7 = arith.constant 0 : index
    %c0_8 = arith.constant 0 : index
    %22 = vector.load %arg3[%c0_7, %c0_8] : memref<1x32xf32, #tpu.memory_space<vmem>>, vector<1x32xf32>
    %23 = vector.broadcast %22 : vector<1x32xf32> to vector<64x32xf32>
    %24 = arith.addf %21, %23 : vector<64x32xf32>
    %25 = arith.truncf %24 : vector<64x32xf32> to vector<64x32xbf16>
    %c0_9 = arith.constant 0 : index
    %c0_10 = arith.constant 0 : index
    %26 = vector.load %arg4[%c0_9, %c0_10] : memref<32x96xbf16, #tpu.memory_space<vmem>>, vector<32x96xbf16>
    %cst_11 = arith.constant dense<0.000000e+00> : vector<64x96xf32>
    %27 = tpu.matmul %25, %26, %cst_11 {dimension_numbers = #tpu.dot_dimension_numbers<[1], [0], [0], [1], [0, 0, 1, 1], [], []>} : vector<64x32xbf16>, vector<32x96xbf16>, vector<64x96xf32> -> vector<64x96xf32>
    %28 = arith.truncf %27 : vector<64x96xf32> to vector<64x96xbf16>
    %c0_12 = arith.constant 0 : index
    %c0_13 = arith.constant 0 : index
    %29 = vector.load %arg5[%c0_12, %c0_13] : memref<32x32xbf16, #tpu.memory_space<vmem>>, vector<32x32xbf16>
    %30 = vector.extract_strided_slice %28 {offsets = [0, 0], sizes = [16, 96], strides = [1, 1]} : vector<64x96xbf16> to vector<16x96xbf16>
    %31 = vector.extract_strided_slice %30 {offsets = [0, 0], sizes = [16, 16], strides = [1, 1]} : vector<16x96xbf16> to vector<16x16xbf16>
    %32 = vector.extract_strided_slice %30 {offsets = [0, 32], sizes = [16, 16], strides = [1, 1]} : vector<16x96xbf16> to vector<16x16xbf16>
    %33 = vector.extract_strided_slice %30 {offsets = [0, 64], sizes = [16, 16], strides = [1, 1]} : vector<16x96xbf16> to vector<16x16xbf16>
    %cst_14 = arith.constant dense<0.000000e+00> : vector<16x16xf32>
    %34 = tpu.matmul %31, %32, %cst_14 {dimension_numbers = #tpu.dot_dimension_numbers<[1], [1], [0], [0], [0, 0, 1, 0], [], []>} : vector<16x16xbf16>, vector<16x16xbf16>, vector<16x16xf32> -> vector<16x16xf32>
    %c0_15 = arith.constant 0 : index
    %c0_16 = arith.constant 0 : index
    %c0_17 = arith.constant 0 : index
    %35 = vector.load %arg7[%c0_15, %c0_16, %c0_17] : memref<2x16x16xf32, #tpu.memory_space<vmem>>, vector<1x16x16xf32>
    %36 = vector.shape_cast %35 : vector<1x16x16xf32> to vector<16x16xf32>
    %37 = arith.addf %34, %36 : vector<16x16xf32>
    %cst_18 = arith.constant dense<0xFF800000> : vector<16xf32>
    %38 = vector.multi_reduction <maximumf>, %37, %cst_18 [1] : vector<16x16xf32> to vector<16xf32>
    %39 = vector.shape_cast %38 : vector<16xf32> to vector<16x1xf32>
    %40 = vector.broadcast %39 : vector<16x1xf32> to vector<16x16xf32>
    %41 = arith.subf %37, %40 : vector<16x16xf32>
    %42 = math.exp %41 : vector<16x16xf32>
    %cst_19 = arith.constant dense<0.000000e+00> : vector<16xf32>
    %43 = vector.multi_reduction <add>, %42, %cst_19 [1] : vector<16x16xf32> to vector<16xf32>
    %44 = vector.shape_cast %43 : vector<16xf32> to vector<16x1xf32>
    %45 = tpu.reciprocal %44 {approx = true} : vector<16x1xf32> -> vector<16x1xf32>
    %46 = vector.broadcast %45 : vector<16x1xf32> to vector<16x16xf32>
    %47 = arith.mulf %42, %46 : vector<16x16xf32>
    %48 = arith.truncf %47 : vector<16x16xf32> to vector<16x16xbf16>
    %cst_20 = arith.constant dense<0.000000e+00> : vector<16x16xf32>
    %49 = tpu.matmul %48, %33, %cst_20 {dimension_numbers = #tpu.dot_dimension_numbers<[1], [0], [0], [1], [0, 0, 1, 1], [], []>} : vector<16x16xbf16>, vector<16x16xbf16>, vector<16x16xf32> -> vector<16x16xf32>
    %50 = vector.extract_strided_slice %30 {offsets = [0, 16], sizes = [16, 16], strides = [1, 1]} : vector<16x96xbf16> to vector<16x16xbf16>
    %51 = vector.extract_strided_slice %30 {offsets = [0, 48], sizes = [16, 16], strides = [1, 1]} : vector<16x96xbf16> to vector<16x16xbf16>
    %52 = vector.extract_strided_slice %30 {offsets = [0, 80], sizes = [16, 16], strides = [1, 1]} : vector<16x96xbf16> to vector<16x16xbf16>
    %cst_21 = arith.constant dense<0.000000e+00> : vector<16x16xf32>
    %53 = tpu.matmul %50, %51, %cst_21 {dimension_numbers = #tpu.dot_dimension_numbers<[1], [1], [0], [0], [0, 0, 1, 0], [], []>} : vector<16x16xbf16>, vector<16x16xbf16>, vector<16x16xf32> -> vector<16x16xf32>
    %c1 = arith.constant 1 : index
    %c0_22 = arith.constant 0 : index
    %c0_23 = arith.constant 0 : index
    %54 = vector.load %arg7[%c1, %c0_22, %c0_23] : memref<2x16x16xf32, #tpu.memory_space<vmem>>, vector<1x16x16xf32>
    %55 = vector.shape_cast %54 : vector<1x16x16xf32> to vector<16x16xf32>
    %56 = arith.addf %53, %55 : vector<16x16xf32>
    %cst_24 = arith.constant dense<0xFF800000> : vector<16xf32>
    %57 = vector.multi_reduction <maximumf>, %56, %cst_24 [1] : vector<16x16xf32> to vector<16xf32>
    %58 = vector.shape_cast %57 : vector<16xf32> to vector<16x1xf32>
    %59 = vector.broadcast %58 : vector<16x1xf32> to vector<16x16xf32>
    %60 = arith.subf %56, %59 : vector<16x16xf32>
    %61 = math.exp %60 : vector<16x16xf32>
    %cst_25 = arith.constant dense<0.000000e+00> : vector<16xf32>
    %62 = vector.multi_reduction <add>, %61, %cst_25 [1] : vector<16x16xf32> to vector<16xf32>
    %63 = vector.shape_cast %62 : vector<16xf32> to vector<16x1xf32>
    %64 = tpu.reciprocal %63 {approx = true} : vector<16x1xf32> -> vector<16x1xf32>
    %65 = vector.broadcast %64 : vector<16x1xf32> to vector<16x16xf32>
    %66 = arith.mulf %61, %65 : vector<16x16xf32>
    %67 = arith.truncf %66 : vector<16x16xf32> to vector<16x16xbf16>
    %cst_26 = arith.constant dense<0.000000e+00> : vector<16x16xf32>
    %68 = tpu.matmul %67, %52, %cst_26 {dimension_numbers = #tpu.dot_dimension_numbers<[1], [0], [0], [1], [0, 0, 1, 1], [], []>} : vector<16x16xbf16>, vector<16x16xbf16>, vector<16x16xf32> -> vector<16x16xf32>
    %69 = tpu.concatenate %49, %68 in 1 : vector<16x16xf32>, vector<16x16xf32> -> vector<16x32xf32>
    %70 = vector.extract_strided_slice %28 {offsets = [16, 0], sizes = [16, 96], strides = [1, 1]} : vector<64x96xbf16> to vector<16x96xbf16>
    %71 = vector.extract_strided_slice %70 {offsets = [0, 0], sizes = [16, 16], strides = [1, 1]} : vector<16x96xbf16> to vector<16x16xbf16>
    %72 = vector.extract_strided_slice %70 {offsets = [0, 32], sizes = [16, 16], strides = [1, 1]} : vector<16x96xbf16> to vector<16x16xbf16>
    %73 = vector.extract_strided_slice %70 {offsets = [0, 64], sizes = [16, 16], strides = [1, 1]} : vector<16x96xbf16> to vector<16x16xbf16>
    %cst_27 = arith.constant dense<0.000000e+00> : vector<16x16xf32>
    %74 = tpu.matmul %71, %72, %cst_27 {dimension_numbers = #tpu.dot_dimension_numbers<[1], [1], [0], [0], [0, 0, 1, 0], [], []>} : vector<16x16xbf16>, vector<16x16xbf16>, vector<16x16xf32> -> vector<16x16xf32>
    %c0_28 = arith.constant 0 : index
    %c0_29 = arith.constant 0 : index
    %c0_30 = arith.constant 0 : index
    %75 = vector.load %arg7[%c0_28, %c0_29, %c0_30] : memref<2x16x16xf32, #tpu.memory_space<vmem>>, vector<1x16x16xf32>
    %76 = vector.shape_cast %75 : vector<1x16x16xf32> to vector<16x16xf32>
    %77 = arith.addf %74, %76 : vector<16x16xf32>
    %cst_31 = arith.constant dense<0xFF800000> : vector<16xf32>
    %78 = vector.multi_reduction <maximumf>, %77, %cst_31 [1] : vector<16x16xf32> to vector<16xf32>
    %79 = vector.shape_cast %78 : vector<16xf32> to vector<16x1xf32>
    %80 = vector.broadcast %79 : vector<16x1xf32> to vector<16x16xf32>
    %81 = arith.subf %77, %80 : vector<16x16xf32>
    %82 = math.exp %81 : vector<16x16xf32>
    %cst_32 = arith.constant dense<0.000000e+00> : vector<16xf32>
    %83 = vector.multi_reduction <add>, %82, %cst_32 [1] : vector<16x16xf32> to vector<16xf32>
    %84 = vector.shape_cast %83 : vector<16xf32> to vector<16x1xf32>
    %85 = tpu.reciprocal %84 {approx = true} : vector<16x1xf32> -> vector<16x1xf32>
    %86 = vector.broadcast %85 : vector<16x1xf32> to vector<16x16xf32>
    %87 = arith.mulf %82, %86 : vector<16x16xf32>
    %88 = arith.truncf %87 : vector<16x16xf32> to vector<16x16xbf16>
    %cst_33 = arith.constant dense<0.000000e+00> : vector<16x16xf32>
    %89 = tpu.matmul %88, %73, %cst_33 {dimension_numbers = #tpu.dot_dimension_numbers<[1], [0], [0], [1], [0, 0, 1, 1], [], []>} : vector<16x16xbf16>, vector<16x16xbf16>, vector<16x16xf32> -> vector<16x16xf32>
    %90 = vector.extract_strided_slice %70 {offsets = [0, 16], sizes = [16, 16], strides = [1, 1]} : vector<16x96xbf16> to vector<16x16xbf16>
    %91 = vector.extract_strided_slice %70 {offsets = [0, 48], sizes = [16, 16], strides = [1, 1]} : vector<16x96xbf16> to vector<16x16xbf16>
    %92 = vector.extract_strided_slice %70 {offsets = [0, 80], sizes = [16, 16], strides = [1, 1]} : vector<16x96xbf16> to vector<16x16xbf16>
    %cst_34 = arith.constant dense<0.000000e+00> : vector<16x16xf32>
    %93 = tpu.matmul %90, %91, %cst_34 {dimension_numbers = #tpu.dot_dimension_numbers<[1], [1], [0], [0], [0, 0, 1, 0], [], []>} : vector<16x16xbf16>, vector<16x16xbf16>, vector<16x16xf32> -> vector<16x16xf32>
    %c1_35 = arith.constant 1 : index
    %c0_36 = arith.constant 0 : index
    %c0_37 = arith.constant 0 : index
    %94 = vector.load %arg7[%c1_35, %c0_36, %c0_37] : memref<2x16x16xf32, #tpu.memory_space<vmem>>, vector<1x16x16xf32>
    %95 = vector.shape_cast %94 : vector<1x16x16xf32> to vector<16x16xf32>
    %96 = arith.addf %93, %95 : vector<16x16xf32>
    %cst_38 = arith.constant dense<0xFF800000> : vector<16xf32>
    %97 = vector.multi_reduction <maximumf>, %96, %cst_38 [1] : vector<16x16xf32> to vector<16xf32>
    %98 = vector.shape_cast %97 : vector<16xf32> to vector<16x1xf32>
    %99 = vector.broadcast %98 : vector<16x1xf32> to vector<16x16xf32>
    %100 = arith.subf %96, %99 : vector<16x16xf32>
    %101 = math.exp %100 : vector<16x16xf32>
    %cst_39 = arith.constant dense<0.000000e+00> : vector<16xf32>
    %102 = vector.multi_reduction <add>, %101, %cst_39 [1] : vector<16x16xf32> to vector<16xf32>
    %103 = vector.shape_cast %102 : vector<16xf32> to vector<16x1xf32>
    %104 = tpu.reciprocal %103 {approx = true} : vector<16x1xf32> -> vector<16x1xf32>
    %105 = vector.broadcast %104 : vector<16x1xf32> to vector<16x16xf32>
    %106 = arith.mulf %101, %105 : vector<16x16xf32>
    %107 = arith.truncf %106 : vector<16x16xf32> to vector<16x16xbf16>
    %cst_40 = arith.constant dense<0.000000e+00> : vector<16x16xf32>
    %108 = tpu.matmul %107, %92, %cst_40 {dimension_numbers = #tpu.dot_dimension_numbers<[1], [0], [0], [1], [0, 0, 1, 1], [], []>} : vector<16x16xbf16>, vector<16x16xbf16>, vector<16x16xf32> -> vector<16x16xf32>
    %109 = tpu.concatenate %89, %108 in 1 : vector<16x16xf32>, vector<16x16xf32> -> vector<16x32xf32>
    %110 = vector.extract_strided_slice %28 {offsets = [32, 0], sizes = [16, 96], strides = [1, 1]} : vector<64x96xbf16> to vector<16x96xbf16>
    %111 = vector.extract_strided_slice %110 {offsets = [0, 0], sizes = [16, 16], strides = [1, 1]} : vector<16x96xbf16> to vector<16x16xbf16>
    %112 = vector.extract_strided_slice %110 {offsets = [0, 32], sizes = [16, 16], strides = [1, 1]} : vector<16x96xbf16> to vector<16x16xbf16>
    %113 = vector.extract_strided_slice %110 {offsets = [0, 64], sizes = [16, 16], strides = [1, 1]} : vector<16x96xbf16> to vector<16x16xbf16>
    %cst_41 = arith.constant dense<0.000000e+00> : vector<16x16xf32>
    %114 = tpu.matmul %111, %112, %cst_41 {dimension_numbers = #tpu.dot_dimension_numbers<[1], [1], [0], [0], [0, 0, 1, 0], [], []>} : vector<16x16xbf16>, vector<16x16xbf16>, vector<16x16xf32> -> vector<16x16xf32>
    %c0_42 = arith.constant 0 : index
    %c0_43 = arith.constant 0 : index
    %c0_44 = arith.constant 0 : index
    %115 = vector.load %arg7[%c0_42, %c0_43, %c0_44] : memref<2x16x16xf32, #tpu.memory_space<vmem>>, vector<1x16x16xf32>
    %116 = vector.shape_cast %115 : vector<1x16x16xf32> to vector<16x16xf32>
    %117 = arith.addf %114, %116 : vector<16x16xf32>
    %cst_45 = arith.constant dense<0xFF800000> : vector<16xf32>
    %118 = vector.multi_reduction <maximumf>, %117, %cst_45 [1] : vector<16x16xf32> to vector<16xf32>
    %119 = vector.shape_cast %118 : vector<16xf32> to vector<16x1xf32>
    %120 = vector.broadcast %119 : vector<16x1xf32> to vector<16x16xf32>
    %121 = arith.subf %117, %120 : vector<16x16xf32>
    %122 = math.exp %121 : vector<16x16xf32>
    %cst_46 = arith.constant dense<0.000000e+00> : vector<16xf32>
    %123 = vector.multi_reduction <add>, %122, %cst_46 [1] : vector<16x16xf32> to vector<16xf32>
    %124 = vector.shape_cast %123 : vector<16xf32> to vector<16x1xf32>
    %125 = tpu.reciprocal %124 {approx = true} : vector<16x1xf32> -> vector<16x1xf32>
    %126 = vector.broadcast %125 : vector<16x1xf32> to vector<16x16xf32>
    %127 = arith.mulf %122, %126 : vector<16x16xf32>
    %128 = arith.truncf %127 : vector<16x16xf32> to vector<16x16xbf16>
    %cst_47 = arith.constant dense<0.000000e+00> : vector<16x16xf32>
    %129 = tpu.matmul %128, %113, %cst_47 {dimension_numbers = #tpu.dot_dimension_numbers<[1], [0], [0], [1], [0, 0, 1, 1], [], []>} : vector<16x16xbf16>, vector<16x16xbf16>, vector<16x16xf32> -> vector<16x16xf32>
    %130 = vector.extract_strided_slice %110 {offsets = [0, 16], sizes = [16, 16], strides = [1, 1]} : vector<16x96xbf16> to vector<16x16xbf16>
    %131 = vector.extract_strided_slice %110 {offsets = [0, 48], sizes = [16, 16], strides = [1, 1]} : vector<16x96xbf16> to vector<16x16xbf16>
    %132 = vector.extract_strided_slice %110 {offsets = [0, 80], sizes = [16, 16], strides = [1, 1]} : vector<16x96xbf16> to vector<16x16xbf16>
    %cst_48 = arith.constant dense<0.000000e+00> : vector<16x16xf32>
    %133 = tpu.matmul %130, %131, %cst_48 {dimension_numbers = #tpu.dot_dimension_numbers<[1], [1], [0], [0], [0, 0, 1, 0], [], []>} : vector<16x16xbf16>, vector<16x16xbf16>, vector<16x16xf32> -> vector<16x16xf32>
    %c1_49 = arith.constant 1 : index
    %c0_50 = arith.constant 0 : index
    %c0_51 = arith.constant 0 : index
    %134 = vector.load %arg7[%c1_49, %c0_50, %c0_51] : memref<2x16x16xf32, #tpu.memory_space<vmem>>, vector<1x16x16xf32>
    %135 = vector.shape_cast %134 : vector<1x16x16xf32> to vector<16x16xf32>
    %136 = arith.addf %133, %135 : vector<16x16xf32>
    %cst_52 = arith.constant dense<0xFF800000> : vector<16xf32>
    %137 = vector.multi_reduction <maximumf>, %136, %cst_52 [1] : vector<16x16xf32> to vector<16xf32>
    %138 = vector.shape_cast %137 : vector<16xf32> to vector<16x1xf32>
    %139 = vector.broadcast %138 : vector<16x1xf32> to vector<16x16xf32>
    %140 = arith.subf %136, %139 : vector<16x16xf32>
    %141 = math.exp %140 : vector<16x16xf32>
    %cst_53 = arith.constant dense<0.000000e+00> : vector<16xf32>
    %142 = vector.multi_reduction <add>, %141, %cst_53 [1] : vector<16x16xf32> to vector<16xf32>
    %143 = vector.shape_cast %142 : vector<16xf32> to vector<16x1xf32>
    %144 = tpu.reciprocal %143 {approx = true} : vector<16x1xf32> -> vector<16x1xf32>
    %145 = vector.broadcast %144 : vector<16x1xf32> to vector<16x16xf32>
    %146 = arith.mulf %141, %145 : vector<16x16xf32>
    %147 = arith.truncf %146 : vector<16x16xf32> to vector<16x16xbf16>
    %cst_54 = arith.constant dense<0.000000e+00> : vector<16x16xf32>
    %148 = tpu.matmul %147, %132, %cst_54 {dimension_numbers = #tpu.dot_dimension_numbers<[1], [0], [0], [1], [0, 0, 1, 1], [], []>} : vector<16x16xbf16>, vector<16x16xbf16>, vector<16x16xf32> -> vector<16x16xf32>
    %149 = tpu.concatenate %129, %148 in 1 : vector<16x16xf32>, vector<16x16xf32> -> vector<16x32xf32>
    %150 = vector.extract_strided_slice %28 {offsets = [48, 0], sizes = [16, 96], strides = [1, 1]} : vector<64x96xbf16> to vector<16x96xbf16>
    %151 = vector.extract_strided_slice %150 {offsets = [0, 0], sizes = [16, 16], strides = [1, 1]} : vector<16x96xbf16> to vector<16x16xbf16>
    %152 = vector.extract_strided_slice %150 {offsets = [0, 32], sizes = [16, 16], strides = [1, 1]} : vector<16x96xbf16> to vector<16x16xbf16>
    %153 = vector.extract_strided_slice %150 {offsets = [0, 64], sizes = [16, 16], strides = [1, 1]} : vector<16x96xbf16> to vector<16x16xbf16>
    %cst_55 = arith.constant dense<0.000000e+00> : vector<16x16xf32>
    %154 = tpu.matmul %151, %152, %cst_55 {dimension_numbers = #tpu.dot_dimension_numbers<[1], [1], [0], [0], [0, 0, 1, 0], [], []>} : vector<16x16xbf16>, vector<16x16xbf16>, vector<16x16xf32> -> vector<16x16xf32>
    %c0_56 = arith.constant 0 : index
    %c0_57 = arith.constant 0 : index
    %c0_58 = arith.constant 0 : index
    %155 = vector.load %arg7[%c0_56, %c0_57, %c0_58] : memref<2x16x16xf32, #tpu.memory_space<vmem>>, vector<1x16x16xf32>
    %156 = vector.shape_cast %155 : vector<1x16x16xf32> to vector<16x16xf32>
    %157 = arith.addf %154, %156 : vector<16x16xf32>
    %cst_59 = arith.constant dense<0xFF800000> : vector<16xf32>
    %158 = vector.multi_reduction <maximumf>, %157, %cst_59 [1] : vector<16x16xf32> to vector<16xf32>
    %159 = vector.shape_cast %158 : vector<16xf32> to vector<16x1xf32>
    %160 = vector.broadcast %159 : vector<16x1xf32> to vector<16x16xf32>
    %161 = arith.subf %157, %160 : vector<16x16xf32>
    %162 = math.exp %161 : vector<16x16xf32>
    %cst_60 = arith.constant dense<0.000000e+00> : vector<16xf32>
    %163 = vector.multi_reduction <add>, %162, %cst_60 [1] : vector<16x16xf32> to vector<16xf32>
    %164 = vector.shape_cast %163 : vector<16xf32> to vector<16x1xf32>
    %165 = tpu.reciprocal %164 {approx = true} : vector<16x1xf32> -> vector<16x1xf32>
    %166 = vector.broadcast %165 : vector<16x1xf32> to vector<16x16xf32>
    %167 = arith.mulf %162, %166 : vector<16x16xf32>
    %168 = arith.truncf %167 : vector<16x16xf32> to vector<16x16xbf16>
    %cst_61 = arith.constant dense<0.000000e+00> : vector<16x16xf32>
    %169 = tpu.matmul %168, %153, %cst_61 {dimension_numbers = #tpu.dot_dimension_numbers<[1], [0], [0], [1], [0, 0, 1, 1], [], []>} : vector<16x16xbf16>, vector<16x16xbf16>, vector<16x16xf32> -> vector<16x16xf32>
    %170 = vector.extract_strided_slice %150 {offsets = [0, 16], sizes = [16, 16], strides = [1, 1]} : vector<16x96xbf16> to vector<16x16xbf16>
    %171 = vector.extract_strided_slice %150 {offsets = [0, 48], sizes = [16, 16], strides = [1, 1]} : vector<16x96xbf16> to vector<16x16xbf16>
    %172 = vector.extract_strided_slice %150 {offsets = [0, 80], sizes = [16, 16], strides = [1, 1]} : vector<16x96xbf16> to vector<16x16xbf16>
    %cst_62 = arith.constant dense<0.000000e+00> : vector<16x16xf32>
    %173 = tpu.matmul %170, %171, %cst_62 {dimension_numbers = #tpu.dot_dimension_numbers<[1], [1], [0], [0], [0, 0, 1, 0], [], []>} : vector<16x16xbf16>, vector<16x16xbf16>, vector<16x16xf32> -> vector<16x16xf32>
    %c1_63 = arith.constant 1 : index
    %c0_64 = arith.constant 0 : index
    %c0_65 = arith.constant 0 : index
    %174 = vector.load %arg7[%c1_63, %c0_64, %c0_65] : memref<2x16x16xf32, #tpu.memory_space<vmem>>, vector<1x16x16xf32>
    %175 = vector.shape_cast %174 : vector<1x16x16xf32> to vector<16x16xf32>
    %176 = arith.addf %173, %175 : vector<16x16xf32>
    %cst_66 = arith.constant dense<0xFF800000> : vector<16xf32>
    %177 = vector.multi_reduction <maximumf>, %176, %cst_66 [1] : vector<16x16xf32> to vector<16xf32>
    %178 = vector.shape_cast %177 : vector<16xf32> to vector<16x1xf32>
    %179 = vector.broadcast %178 : vector<16x1xf32> to vector<16x16xf32>
    %180 = arith.subf %176, %179 : vector<16x16xf32>
    %181 = math.exp %180 : vector<16x16xf32>
    %cst_67 = arith.constant dense<0.000000e+00> : vector<16xf32>
    %182 = vector.multi_reduction <add>, %181, %cst_67 [1] : vector<16x16xf32> to vector<16xf32>
    %183 = vector.shape_cast %182 : vector<16xf32> to vector<16x1xf32>
    %184 = tpu.reciprocal %183 {approx = true} : vector<16x1xf32> -> vector<16x1xf32>
    %185 = vector.broadcast %184 : vector<16x1xf32> to vector<16x16xf32>
    %186 = arith.mulf %181, %185 : vector<16x16xf32>
    %187 = arith.truncf %186 : vector<16x16xf32> to vector<16x16xbf16>
    %cst_68 = arith.constant dense<0.000000e+00> : vector<16x16xf32>
    %188 = tpu.matmul %187, %172, %cst_68 {dimension_numbers = #tpu.dot_dimension_numbers<[1], [0], [0], [1], [0, 0, 1, 1], [], []>} : vector<16x16xbf16>, vector<16x16xbf16>, vector<16x16xf32> -> vector<16x16xf32>
    %189 = tpu.concatenate %169, %188 in 1 : vector<16x16xf32>, vector<16x16xf32> -> vector<16x32xf32>
    %190 = tpu.concatenate %69, %109, %149, %189 in 0 : vector<16x32xf32>, vector<16x32xf32>, vector<16x32xf32>, vector<16x32xf32> -> vector<64x32xf32>
    %191 = arith.truncf %190 : vector<64x32xf32> to vector<64x32xbf16>
    %cst_69 = arith.constant dense<0.000000e+00> : vector<64x32xf32>
    %192 = tpu.matmul %191, %29, %cst_69 {dimension_numbers = #tpu.dot_dimension_numbers<[1], [0], [0], [1], [0, 0, 1, 1], [], []>} : vector<64x32xbf16>, vector<32x32xbf16>, vector<64x32xf32> -> vector<64x32xf32>
    %193 = arith.addf %0, %192 : vector<64x32xf32>
    %c0_70 = arith.constant 0 : index
    %c0_71 = arith.constant 0 : index
    %194 = vector.load %arg6[%c0_70, %c0_71] : memref<1x32xf32, #tpu.memory_space<vmem>>, vector<1x32xf32>
    %195 = vector.broadcast %194 : vector<1x32xf32> to vector<64x32xf32>
    %196 = arith.addf %193, %195 : vector<64x32xf32>
    %c0_72 = arith.constant 0 : index
    %c0_73 = arith.constant 0 : index
    %197 = vector.load %arg8[%c0_72, %c0_73] : memref<64x32xf32, #tpu.memory_space<vmem>>, vector<64x32xf32>
    tpu.vector_store %arg8[%c0_72, %c0_73], %196 {strides = array<i32>} : memref<64x32xf32, #tpu.memory_space<vmem>>, vector<64x32xf32>,
    return
  }
  func.func @transform_0(%arg0: i32) -> (i32, i32) {
    %c0_i32 = arith.constant 0 : i32
    %c0_i32_0 = arith.constant 0 : i32
    return %arg0, %c0_i32 : i32, i32
  }
  func.func @transform_1(%arg0: i32) -> (i32, i32) {
    %c0_i32 = arith.constant 0 : i32
    %c0_i32_0 = arith.constant 0 : i32
    %c0_i32_1 = arith.constant 0 : i32
    return %c0_i32, %c0_i32_0 : i32, i32
  }
  func.func @transform_2(%arg0: i32) -> (i32, i32) {
    %c0_i32 = arith.constant 0 : i32
    %c0_i32_0 = arith.constant 0 : i32
    %c0_i32_1 = arith.constant 0 : i32
    return %c0_i32, %c0_i32_0 : i32, i32
  }
  func.func @transform_3(%arg0: i32) -> (i32, i32) {
    %c0_i32 = arith.constant 0 : i32
    %c0_i32_0 = arith.constant 0 : i32
    %c0_i32_1 = arith.constant 0 : i32
    return %c0_i32, %c0_i32_0 : i32, i32
  }
  func.func @transform_4(%arg0: i32) -> (i32, i32) {
    %c0_i32 = arith.constant 0 : i32
    %c0_i32_0 = arith.constant 0 : i32
    %c0_i32_1 = arith.constant 0 : i32
    return %c0_i32, %c0_i32_0 : i32, i32
  }
  func.func @transform_5(%arg0: i32) -> (i32, i32) {
    %c0_i32 = arith.constant 0 : i32
    %c0_i32_0 = arith.constant 0 : i32
    %c0_i32_1 = arith.constant 0 : i32
    return %c0_i32, %c0_i32_0 : i32, i32
  }
  func.func @transform_6(%arg0: i32) -> (i32, i32, i32) {
    %c0_i32 = arith.constant 0 : i32
    %c0_i32_0 = arith.constant 0 : i32
    %c0_i32_1 = arith.constant 0 : i32
    %c0_i32_2 = arith.constant 0 : i32
    return %c0_i32, %c0_i32_0, %c0_i32_1 : i32, i32, i32
  }
  func.func @transform_7(%arg0: i32) -> (i32, i32) {
    %c0_i32 = arith.constant 0 : i32
    %c0_i32_0 = arith.constant 0 : i32
    return %arg0, %c0_i32 : i32, i32
  }
}

module attributes {stable_mosaic.version = 11 : i64} {
  func.func @_attn_block_kernel(%arg0: i32, %arg1: memref<32x32xf32, #tpu.memory_space<vmem>>, %arg2: memref<1x32xf32, #tpu.memory_space<vmem>>, %arg3: memref<1x32xf32, #tpu.memory_space<vmem>>, %arg4: memref<32x96xbf16, #tpu.memory_space<vmem>>, %arg5: memref<32x32xbf16, #tpu.memory_space<vmem>>, %arg6: memref<1x32xf32, #tpu.memory_space<vmem>>, %arg7: memref<2x4x4xf32, #tpu.memory_space<vmem>>, %arg8: memref<8x1x4xf32, #tpu.memory_space<vmem>>, %arg9: memref<32x32xf32, #tpu.memory_space<vmem>>) attributes {dimension_semantics = [#tpu.dimension_semantics<parallel>], iteration_bounds = array<i64: 4>, scalar_prefetch = 0 : i64, scratch_operands = 0 : i64, tpu.core_type = #tpu.core_type<tc>, window_params = [{transform_indices = @transform_0, window_bounds = array<i64: 32, 32>}, {pipeline_mode = #tpu.pipeline_mode<synchronous>, transform_indices = @transform_1, window_bounds = array<i64: 1, 32>}, {pipeline_mode = #tpu.pipeline_mode<synchronous>, transform_indices = @transform_2, window_bounds = array<i64: 1, 32>}, {pipeline_mode = #tpu.pipeline_mode<synchronous>, transform_indices = @transform_3, window_bounds = array<i64: 32, 96>}, {pipeline_mode = #tpu.pipeline_mode<synchronous>, transform_indices = @transform_4, window_bounds = array<i64: 32, 32>}, {pipeline_mode = #tpu.pipeline_mode<synchronous>, transform_indices = @transform_5, window_bounds = array<i64: 1, 32>}, {pipeline_mode = #tpu.pipeline_mode<synchronous>, transform_indices = @transform_6, window_bounds = array<i64: 2, 4, 4>}, {transform_indices = @transform_7, window_bounds = array<i64: 8, 1, 4>}, {transform_indices = @transform_8, window_bounds = array<i64: 32, 32>}]} {
    %c0 = arith.constant 0 : index
    %c0_0 = arith.constant 0 : index
    %0 = vector.load %arg1[%c0, %c0_0] : memref<32x32xf32, #tpu.memory_space<vmem>>, vector<32x32xf32>
    %cst = arith.constant dense<0.000000e+00> : vector<32xf32>
    %1 = vector.multi_reduction <add>, %0, %cst [1] : vector<32x32xf32> to vector<32xf32>
    %2 = vector.shape_cast %1 : vector<32xf32> to vector<32x1xf32>
    %cst_1 = arith.constant 3.200000e+01 : f32
    %3 = vector.broadcast %cst_1 : f32 to vector<32x1xf32>
    %4 = arith.divf %2, %3 : vector<32x1xf32>
    %5 = vector.broadcast %4 : vector<32x1xf32> to vector<32x32xf32>
    %6 = arith.subf %0, %5 : vector<32x32xf32>
    %7 = arith.mulf %6, %6 : vector<32x32xf32>
    %cst_2 = arith.constant dense<0.000000e+00> : vector<32xf32>
    %8 = vector.multi_reduction <add>, %7, %cst_2 [1] : vector<32x32xf32> to vector<32xf32>
    %9 = vector.shape_cast %8 : vector<32xf32> to vector<32x1xf32>
    %cst_3 = arith.constant 3.200000e+01 : f32
    %10 = vector.broadcast %cst_3 : f32 to vector<32x1xf32>
    %11 = arith.divf %9, %10 : vector<32x1xf32>
    %12 = vector.broadcast %4 : vector<32x1xf32> to vector<32x32xf32>
    %13 = arith.subf %0, %12 : vector<32x32xf32>
    %cst_4 = arith.constant 9.99999974E-6 : f32
    %14 = vector.broadcast %cst_4 : f32 to vector<32x1xf32>
    %15 = arith.addf %11, %14 : vector<32x1xf32>
    %16 = math.rsqrt %15 : vector<32x1xf32>
    %17 = vector.broadcast %16 : vector<32x1xf32> to vector<32x32xf32>
    %18 = arith.mulf %13, %17 : vector<32x32xf32>
    %c0_5 = arith.constant 0 : index
    %c0_6 = arith.constant 0 : index
    %19 = vector.load %arg2[%c0_5, %c0_6] : memref<1x32xf32, #tpu.memory_space<vmem>>, vector<1x32xf32>
    %20 = vector.broadcast %19 : vector<1x32xf32> to vector<32x32xf32>
    %21 = arith.mulf %18, %20 : vector<32x32xf32>
    %c0_7 = arith.constant 0 : index
    %c0_8 = arith.constant 0 : index
    %22 = vector.load %arg3[%c0_7, %c0_8] : memref<1x32xf32, #tpu.memory_space<vmem>>, vector<1x32xf32>
    %23 = vector.broadcast %22 : vector<1x32xf32> to vector<32x32xf32>
    %24 = arith.addf %21, %23 : vector<32x32xf32>
    %25 = arith.truncf %24 : vector<32x32xf32> to vector<32x32xbf16>
    %c0_9 = arith.constant 0 : index
    %c0_10 = arith.constant 0 : index
    %26 = vector.load %arg4[%c0_9, %c0_10] : memref<32x96xbf16, #tpu.memory_space<vmem>>, vector<32x96xbf16>
    %cst_11 = arith.constant dense<0.000000e+00> : vector<32x96xf32>
    %27 = tpu.matmul %25, %26, %cst_11 {dimension_numbers = #tpu.dot_dimension_numbers<[1], [0], [0], [1], [0, 0, 1, 1], [], []>} : vector<32x32xbf16>, vector<32x96xbf16>, vector<32x96xf32> -> vector<32x96xf32>
    %28 = arith.truncf %27 : vector<32x96xf32> to vector<32x96xbf16>
    %c0_12 = arith.constant 0 : index
    %c0_13 = arith.constant 0 : index
    %29 = vector.load %arg5[%c0_12, %c0_13] : memref<32x32xbf16, #tpu.memory_space<vmem>>, vector<32x32xbf16>
    %30 = vector.extract_strided_slice %28 {offsets = [0, 0], sizes = [4, 96], strides = [1, 1]} : vector<32x96xbf16> to vector<4x96xbf16>
    %31 = vector.extract_strided_slice %30 {offsets = [0, 0], sizes = [4, 16], strides = [1, 1]} : vector<4x96xbf16> to vector<4x16xbf16>
    %32 = vector.extract_strided_slice %30 {offsets = [0, 32], sizes = [4, 16], strides = [1, 1]} : vector<4x96xbf16> to vector<4x16xbf16>
    %33 = vector.extract_strided_slice %30 {offsets = [0, 64], sizes = [4, 16], strides = [1, 1]} : vector<4x96xbf16> to vector<4x16xbf16>
    %cst_14 = arith.constant dense<0.000000e+00> : vector<4x4xf32>
    %34 = tpu.matmul %31, %32, %cst_14 {dimension_numbers = #tpu.dot_dimension_numbers<[1], [1], [0], [0], [0, 0, 1, 0], [], []>} : vector<4x16xbf16>, vector<4x16xbf16>, vector<4x4xf32> -> vector<4x4xf32>
    %c0_15 = arith.constant 0 : index
    %c0_16 = arith.constant 0 : index
    %c0_17 = arith.constant 0 : index
    %35 = vector.load %arg7[%c0_15, %c0_16, %c0_17] : memref<2x4x4xf32, #tpu.memory_space<vmem>>, vector<1x4x4xf32>
    %36 = vector.shape_cast %35 : vector<1x4x4xf32> to vector<4x4xf32>
    %37 = arith.addf %34, %36 : vector<4x4xf32>
    %c0_18 = arith.constant 0 : index
    %c0_19 = arith.constant 0 : index
    %c0_20 = arith.constant 0 : index
    %38 = vector.load %arg8[%c0_18, %c0_19, %c0_20] : memref<8x1x4xf32, #tpu.memory_space<vmem>>, vector<1x1x4xf32>
    %39 = vector.shape_cast %38 : vector<1x1x4xf32> to vector<1x4xf32>
    %40 = vector.broadcast %39 : vector<1x4xf32> to vector<4x4xf32>
    %41 = arith.addf %37, %40 : vector<4x4xf32>
    %cst_21 = arith.constant dense<0xFF800000> : vector<4xf32>
    %42 = vector.multi_reduction <maximumf>, %41, %cst_21 [1] : vector<4x4xf32> to vector<4xf32>
    %43 = vector.shape_cast %42 : vector<4xf32> to vector<4x1xf32>
    %44 = vector.broadcast %43 : vector<4x1xf32> to vector<4x4xf32>
    %45 = arith.subf %41, %44 : vector<4x4xf32>
    %46 = math.exp %45 : vector<4x4xf32>
    %cst_22 = arith.constant dense<0.000000e+00> : vector<4xf32>
    %47 = vector.multi_reduction <add>, %46, %cst_22 [1] : vector<4x4xf32> to vector<4xf32>
    %48 = vector.shape_cast %47 : vector<4xf32> to vector<4x1xf32>
    %49 = tpu.reciprocal %48 {approx = true} : vector<4x1xf32> -> vector<4x1xf32>
    %50 = vector.broadcast %49 : vector<4x1xf32> to vector<4x4xf32>
    %51 = arith.mulf %46, %50 : vector<4x4xf32>
    %52 = arith.truncf %51 : vector<4x4xf32> to vector<4x4xbf16>
    %cst_23 = arith.constant dense<0.000000e+00> : vector<4x16xf32>
    %53 = tpu.matmul %52, %33, %cst_23 {dimension_numbers = #tpu.dot_dimension_numbers<[1], [0], [0], [1], [0, 0, 1, 1], [], []>} : vector<4x4xbf16>, vector<4x16xbf16>, vector<4x16xf32> -> vector<4x16xf32>
    %54 = vector.extract_strided_slice %30 {offsets = [0, 16], sizes = [4, 16], strides = [1, 1]} : vector<4x96xbf16> to vector<4x16xbf16>
    %55 = vector.extract_strided_slice %30 {offsets = [0, 48], sizes = [4, 16], strides = [1, 1]} : vector<4x96xbf16> to vector<4x16xbf16>
    %56 = vector.extract_strided_slice %30 {offsets = [0, 80], sizes = [4, 16], strides = [1, 1]} : vector<4x96xbf16> to vector<4x16xbf16>
    %cst_24 = arith.constant dense<0.000000e+00> : vector<4x4xf32>
    %57 = tpu.matmul %54, %55, %cst_24 {dimension_numbers = #tpu.dot_dimension_numbers<[1], [1], [0], [0], [0, 0, 1, 0], [], []>} : vector<4x16xbf16>, vector<4x16xbf16>, vector<4x4xf32> -> vector<4x4xf32>
    %c1 = arith.constant 1 : index
    %c0_25 = arith.constant 0 : index
    %c0_26 = arith.constant 0 : index
    %58 = vector.load %arg7[%c1, %c0_25, %c0_26] : memref<2x4x4xf32, #tpu.memory_space<vmem>>, vector<1x4x4xf32>
    %59 = vector.shape_cast %58 : vector<1x4x4xf32> to vector<4x4xf32>
    %60 = arith.addf %57, %59 : vector<4x4xf32>
    %c0_27 = arith.constant 0 : index
    %c0_28 = arith.constant 0 : index
    %c0_29 = arith.constant 0 : index
    %61 = vector.load %arg8[%c0_27, %c0_28, %c0_29] : memref<8x1x4xf32, #tpu.memory_space<vmem>>, vector<1x1x4xf32>
    %62 = vector.shape_cast %61 : vector<1x1x4xf32> to vector<1x4xf32>
    %63 = vector.broadcast %62 : vector<1x4xf32> to vector<4x4xf32>
    %64 = arith.addf %60, %63 : vector<4x4xf32>
    %cst_30 = arith.constant dense<0xFF800000> : vector<4xf32>
    %65 = vector.multi_reduction <maximumf>, %64, %cst_30 [1] : vector<4x4xf32> to vector<4xf32>
    %66 = vector.shape_cast %65 : vector<4xf32> to vector<4x1xf32>
    %67 = vector.broadcast %66 : vector<4x1xf32> to vector<4x4xf32>
    %68 = arith.subf %64, %67 : vector<4x4xf32>
    %69 = math.exp %68 : vector<4x4xf32>
    %cst_31 = arith.constant dense<0.000000e+00> : vector<4xf32>
    %70 = vector.multi_reduction <add>, %69, %cst_31 [1] : vector<4x4xf32> to vector<4xf32>
    %71 = vector.shape_cast %70 : vector<4xf32> to vector<4x1xf32>
    %72 = tpu.reciprocal %71 {approx = true} : vector<4x1xf32> -> vector<4x1xf32>
    %73 = vector.broadcast %72 : vector<4x1xf32> to vector<4x4xf32>
    %74 = arith.mulf %69, %73 : vector<4x4xf32>
    %75 = arith.truncf %74 : vector<4x4xf32> to vector<4x4xbf16>
    %cst_32 = arith.constant dense<0.000000e+00> : vector<4x16xf32>
    %76 = tpu.matmul %75, %56, %cst_32 {dimension_numbers = #tpu.dot_dimension_numbers<[1], [0], [0], [1], [0, 0, 1, 1], [], []>} : vector<4x4xbf16>, vector<4x16xbf16>, vector<4x16xf32> -> vector<4x16xf32>
    %77 = tpu.concatenate %53, %76 in 1 : vector<4x16xf32>, vector<4x16xf32> -> vector<4x32xf32>
    %78 = vector.extract_strided_slice %28 {offsets = [4, 0], sizes = [4, 96], strides = [1, 1]} : vector<32x96xbf16> to vector<4x96xbf16>
    %79 = vector.extract_strided_slice %78 {offsets = [0, 0], sizes = [4, 16], strides = [1, 1]} : vector<4x96xbf16> to vector<4x16xbf16>
    %80 = vector.extract_strided_slice %78 {offsets = [0, 32], sizes = [4, 16], strides = [1, 1]} : vector<4x96xbf16> to vector<4x16xbf16>
    %81 = vector.extract_strided_slice %78 {offsets = [0, 64], sizes = [4, 16], strides = [1, 1]} : vector<4x96xbf16> to vector<4x16xbf16>
    %cst_33 = arith.constant dense<0.000000e+00> : vector<4x4xf32>
    %82 = tpu.matmul %79, %80, %cst_33 {dimension_numbers = #tpu.dot_dimension_numbers<[1], [1], [0], [0], [0, 0, 1, 0], [], []>} : vector<4x16xbf16>, vector<4x16xbf16>, vector<4x4xf32> -> vector<4x4xf32>
    %c0_34 = arith.constant 0 : index
    %c0_35 = arith.constant 0 : index
    %c0_36 = arith.constant 0 : index
    %83 = vector.load %arg7[%c0_34, %c0_35, %c0_36] : memref<2x4x4xf32, #tpu.memory_space<vmem>>, vector<1x4x4xf32>
    %84 = vector.shape_cast %83 : vector<1x4x4xf32> to vector<4x4xf32>
    %85 = arith.addf %82, %84 : vector<4x4xf32>
    %c1_37 = arith.constant 1 : index
    %c0_38 = arith.constant 0 : index
    %c0_39 = arith.constant 0 : index
    %86 = vector.load %arg8[%c1_37, %c0_38, %c0_39] : memref<8x1x4xf32, #tpu.memory_space<vmem>>, vector<1x1x4xf32>
    %87 = vector.shape_cast %86 : vector<1x1x4xf32> to vector<1x4xf32>
    %88 = vector.broadcast %87 : vector<1x4xf32> to vector<4x4xf32>
    %89 = arith.addf %85, %88 : vector<4x4xf32>
    %cst_40 = arith.constant dense<0xFF800000> : vector<4xf32>
    %90 = vector.multi_reduction <maximumf>, %89, %cst_40 [1] : vector<4x4xf32> to vector<4xf32>
    %91 = vector.shape_cast %90 : vector<4xf32> to vector<4x1xf32>
    %92 = vector.broadcast %91 : vector<4x1xf32> to vector<4x4xf32>
    %93 = arith.subf %89, %92 : vector<4x4xf32>
    %94 = math.exp %93 : vector<4x4xf32>
    %cst_41 = arith.constant dense<0.000000e+00> : vector<4xf32>
    %95 = vector.multi_reduction <add>, %94, %cst_41 [1] : vector<4x4xf32> to vector<4xf32>
    %96 = vector.shape_cast %95 : vector<4xf32> to vector<4x1xf32>
    %97 = tpu.reciprocal %96 {approx = true} : vector<4x1xf32> -> vector<4x1xf32>
    %98 = vector.broadcast %97 : vector<4x1xf32> to vector<4x4xf32>
    %99 = arith.mulf %94, %98 : vector<4x4xf32>
    %100 = arith.truncf %99 : vector<4x4xf32> to vector<4x4xbf16>
    %cst_42 = arith.constant dense<0.000000e+00> : vector<4x16xf32>
    %101 = tpu.matmul %100, %81, %cst_42 {dimension_numbers = #tpu.dot_dimension_numbers<[1], [0], [0], [1], [0, 0, 1, 1], [], []>} : vector<4x4xbf16>, vector<4x16xbf16>, vector<4x16xf32> -> vector<4x16xf32>
    %102 = vector.extract_strided_slice %78 {offsets = [0, 16], sizes = [4, 16], strides = [1, 1]} : vector<4x96xbf16> to vector<4x16xbf16>
    %103 = vector.extract_strided_slice %78 {offsets = [0, 48], sizes = [4, 16], strides = [1, 1]} : vector<4x96xbf16> to vector<4x16xbf16>
    %104 = vector.extract_strided_slice %78 {offsets = [0, 80], sizes = [4, 16], strides = [1, 1]} : vector<4x96xbf16> to vector<4x16xbf16>
    %cst_43 = arith.constant dense<0.000000e+00> : vector<4x4xf32>
    %105 = tpu.matmul %102, %103, %cst_43 {dimension_numbers = #tpu.dot_dimension_numbers<[1], [1], [0], [0], [0, 0, 1, 0], [], []>} : vector<4x16xbf16>, vector<4x16xbf16>, vector<4x4xf32> -> vector<4x4xf32>
    %c1_44 = arith.constant 1 : index
    %c0_45 = arith.constant 0 : index
    %c0_46 = arith.constant 0 : index
    %106 = vector.load %arg7[%c1_44, %c0_45, %c0_46] : memref<2x4x4xf32, #tpu.memory_space<vmem>>, vector<1x4x4xf32>
    %107 = vector.shape_cast %106 : vector<1x4x4xf32> to vector<4x4xf32>
    %108 = arith.addf %105, %107 : vector<4x4xf32>
    %c1_47 = arith.constant 1 : index
    %c0_48 = arith.constant 0 : index
    %c0_49 = arith.constant 0 : index
    %109 = vector.load %arg8[%c1_47, %c0_48, %c0_49] : memref<8x1x4xf32, #tpu.memory_space<vmem>>, vector<1x1x4xf32>
    %110 = vector.shape_cast %109 : vector<1x1x4xf32> to vector<1x4xf32>
    %111 = vector.broadcast %110 : vector<1x4xf32> to vector<4x4xf32>
    %112 = arith.addf %108, %111 : vector<4x4xf32>
    %cst_50 = arith.constant dense<0xFF800000> : vector<4xf32>
    %113 = vector.multi_reduction <maximumf>, %112, %cst_50 [1] : vector<4x4xf32> to vector<4xf32>
    %114 = vector.shape_cast %113 : vector<4xf32> to vector<4x1xf32>
    %115 = vector.broadcast %114 : vector<4x1xf32> to vector<4x4xf32>
    %116 = arith.subf %112, %115 : vector<4x4xf32>
    %117 = math.exp %116 : vector<4x4xf32>
    %cst_51 = arith.constant dense<0.000000e+00> : vector<4xf32>
    %118 = vector.multi_reduction <add>, %117, %cst_51 [1] : vector<4x4xf32> to vector<4xf32>
    %119 = vector.shape_cast %118 : vector<4xf32> to vector<4x1xf32>
    %120 = tpu.reciprocal %119 {approx = true} : vector<4x1xf32> -> vector<4x1xf32>
    %121 = vector.broadcast %120 : vector<4x1xf32> to vector<4x4xf32>
    %122 = arith.mulf %117, %121 : vector<4x4xf32>
    %123 = arith.truncf %122 : vector<4x4xf32> to vector<4x4xbf16>
    %cst_52 = arith.constant dense<0.000000e+00> : vector<4x16xf32>
    %124 = tpu.matmul %123, %104, %cst_52 {dimension_numbers = #tpu.dot_dimension_numbers<[1], [0], [0], [1], [0, 0, 1, 1], [], []>} : vector<4x4xbf16>, vector<4x16xbf16>, vector<4x16xf32> -> vector<4x16xf32>
    %125 = tpu.concatenate %101, %124 in 1 : vector<4x16xf32>, vector<4x16xf32> -> vector<4x32xf32>
    %126 = vector.extract_strided_slice %28 {offsets = [8, 0], sizes = [4, 96], strides = [1, 1]} : vector<32x96xbf16> to vector<4x96xbf16>
    %127 = vector.extract_strided_slice %126 {offsets = [0, 0], sizes = [4, 16], strides = [1, 1]} : vector<4x96xbf16> to vector<4x16xbf16>
    %128 = vector.extract_strided_slice %126 {offsets = [0, 32], sizes = [4, 16], strides = [1, 1]} : vector<4x96xbf16> to vector<4x16xbf16>
    %129 = vector.extract_strided_slice %126 {offsets = [0, 64], sizes = [4, 16], strides = [1, 1]} : vector<4x96xbf16> to vector<4x16xbf16>
    %cst_53 = arith.constant dense<0.000000e+00> : vector<4x4xf32>
    %130 = tpu.matmul %127, %128, %cst_53 {dimension_numbers = #tpu.dot_dimension_numbers<[1], [1], [0], [0], [0, 0, 1, 0], [], []>} : vector<4x16xbf16>, vector<4x16xbf16>, vector<4x4xf32> -> vector<4x4xf32>
    %c0_54 = arith.constant 0 : index
    %c0_55 = arith.constant 0 : index
    %c0_56 = arith.constant 0 : index
    %131 = vector.load %arg7[%c0_54, %c0_55, %c0_56] : memref<2x4x4xf32, #tpu.memory_space<vmem>>, vector<1x4x4xf32>
    %132 = vector.shape_cast %131 : vector<1x4x4xf32> to vector<4x4xf32>
    %133 = arith.addf %130, %132 : vector<4x4xf32>
    %c2 = arith.constant 2 : index
    %c0_57 = arith.constant 0 : index
    %c0_58 = arith.constant 0 : index
    %134 = vector.load %arg8[%c2, %c0_57, %c0_58] : memref<8x1x4xf32, #tpu.memory_space<vmem>>, vector<1x1x4xf32>
    %135 = vector.shape_cast %134 : vector<1x1x4xf32> to vector<1x4xf32>
    %136 = vector.broadcast %135 : vector<1x4xf32> to vector<4x4xf32>
    %137 = arith.addf %133, %136 : vector<4x4xf32>
    %cst_59 = arith.constant dense<0xFF800000> : vector<4xf32>
    %138 = vector.multi_reduction <maximumf>, %137, %cst_59 [1] : vector<4x4xf32> to vector<4xf32>
    %139 = vector.shape_cast %138 : vector<4xf32> to vector<4x1xf32>
    %140 = vector.broadcast %139 : vector<4x1xf32> to vector<4x4xf32>
    %141 = arith.subf %137, %140 : vector<4x4xf32>
    %142 = math.exp %141 : vector<4x4xf32>
    %cst_60 = arith.constant dense<0.000000e+00> : vector<4xf32>
    %143 = vector.multi_reduction <add>, %142, %cst_60 [1] : vector<4x4xf32> to vector<4xf32>
    %144 = vector.shape_cast %143 : vector<4xf32> to vector<4x1xf32>
    %145 = tpu.reciprocal %144 {approx = true} : vector<4x1xf32> -> vector<4x1xf32>
    %146 = vector.broadcast %145 : vector<4x1xf32> to vector<4x4xf32>
    %147 = arith.mulf %142, %146 : vector<4x4xf32>
    %148 = arith.truncf %147 : vector<4x4xf32> to vector<4x4xbf16>
    %cst_61 = arith.constant dense<0.000000e+00> : vector<4x16xf32>
    %149 = tpu.matmul %148, %129, %cst_61 {dimension_numbers = #tpu.dot_dimension_numbers<[1], [0], [0], [1], [0, 0, 1, 1], [], []>} : vector<4x4xbf16>, vector<4x16xbf16>, vector<4x16xf32> -> vector<4x16xf32>
    %150 = vector.extract_strided_slice %126 {offsets = [0, 16], sizes = [4, 16], strides = [1, 1]} : vector<4x96xbf16> to vector<4x16xbf16>
    %151 = vector.extract_strided_slice %126 {offsets = [0, 48], sizes = [4, 16], strides = [1, 1]} : vector<4x96xbf16> to vector<4x16xbf16>
    %152 = vector.extract_strided_slice %126 {offsets = [0, 80], sizes = [4, 16], strides = [1, 1]} : vector<4x96xbf16> to vector<4x16xbf16>
    %cst_62 = arith.constant dense<0.000000e+00> : vector<4x4xf32>
    %153 = tpu.matmul %150, %151, %cst_62 {dimension_numbers = #tpu.dot_dimension_numbers<[1], [1], [0], [0], [0, 0, 1, 0], [], []>} : vector<4x16xbf16>, vector<4x16xbf16>, vector<4x4xf32> -> vector<4x4xf32>
    %c1_63 = arith.constant 1 : index
    %c0_64 = arith.constant 0 : index
    %c0_65 = arith.constant 0 : index
    %154 = vector.load %arg7[%c1_63, %c0_64, %c0_65] : memref<2x4x4xf32, #tpu.memory_space<vmem>>, vector<1x4x4xf32>
    %155 = vector.shape_cast %154 : vector<1x4x4xf32> to vector<4x4xf32>
    %156 = arith.addf %153, %155 : vector<4x4xf32>
    %c2_66 = arith.constant 2 : index
    %c0_67 = arith.constant 0 : index
    %c0_68 = arith.constant 0 : index
    %157 = vector.load %arg8[%c2_66, %c0_67, %c0_68] : memref<8x1x4xf32, #tpu.memory_space<vmem>>, vector<1x1x4xf32>
    %158 = vector.shape_cast %157 : vector<1x1x4xf32> to vector<1x4xf32>
    %159 = vector.broadcast %158 : vector<1x4xf32> to vector<4x4xf32>
    %160 = arith.addf %156, %159 : vector<4x4xf32>
    %cst_69 = arith.constant dense<0xFF800000> : vector<4xf32>
    %161 = vector.multi_reduction <maximumf>, %160, %cst_69 [1] : vector<4x4xf32> to vector<4xf32>
    %162 = vector.shape_cast %161 : vector<4xf32> to vector<4x1xf32>
    %163 = vector.broadcast %162 : vector<4x1xf32> to vector<4x4xf32>
    %164 = arith.subf %160, %163 : vector<4x4xf32>
    %165 = math.exp %164 : vector<4x4xf32>
    %cst_70 = arith.constant dense<0.000000e+00> : vector<4xf32>
    %166 = vector.multi_reduction <add>, %165, %cst_70 [1] : vector<4x4xf32> to vector<4xf32>
    %167 = vector.shape_cast %166 : vector<4xf32> to vector<4x1xf32>
    %168 = tpu.reciprocal %167 {approx = true} : vector<4x1xf32> -> vector<4x1xf32>
    %169 = vector.broadcast %168 : vector<4x1xf32> to vector<4x4xf32>
    %170 = arith.mulf %165, %169 : vector<4x4xf32>
    %171 = arith.truncf %170 : vector<4x4xf32> to vector<4x4xbf16>
    %cst_71 = arith.constant dense<0.000000e+00> : vector<4x16xf32>
    %172 = tpu.matmul %171, %152, %cst_71 {dimension_numbers = #tpu.dot_dimension_numbers<[1], [0], [0], [1], [0, 0, 1, 1], [], []>} : vector<4x4xbf16>, vector<4x16xbf16>, vector<4x16xf32> -> vector<4x16xf32>
    %173 = tpu.concatenate %149, %172 in 1 : vector<4x16xf32>, vector<4x16xf32> -> vector<4x32xf32>
    %174 = vector.extract_strided_slice %28 {offsets = [12, 0], sizes = [4, 96], strides = [1, 1]} : vector<32x96xbf16> to vector<4x96xbf16>
    %175 = vector.extract_strided_slice %174 {offsets = [0, 0], sizes = [4, 16], strides = [1, 1]} : vector<4x96xbf16> to vector<4x16xbf16>
    %176 = vector.extract_strided_slice %174 {offsets = [0, 32], sizes = [4, 16], strides = [1, 1]} : vector<4x96xbf16> to vector<4x16xbf16>
    %177 = vector.extract_strided_slice %174 {offsets = [0, 64], sizes = [4, 16], strides = [1, 1]} : vector<4x96xbf16> to vector<4x16xbf16>
    %cst_72 = arith.constant dense<0.000000e+00> : vector<4x4xf32>
    %178 = tpu.matmul %175, %176, %cst_72 {dimension_numbers = #tpu.dot_dimension_numbers<[1], [1], [0], [0], [0, 0, 1, 0], [], []>} : vector<4x16xbf16>, vector<4x16xbf16>, vector<4x4xf32> -> vector<4x4xf32>
    %c0_73 = arith.constant 0 : index
    %c0_74 = arith.constant 0 : index
    %c0_75 = arith.constant 0 : index
    %179 = vector.load %arg7[%c0_73, %c0_74, %c0_75] : memref<2x4x4xf32, #tpu.memory_space<vmem>>, vector<1x4x4xf32>
    %180 = vector.shape_cast %179 : vector<1x4x4xf32> to vector<4x4xf32>
    %181 = arith.addf %178, %180 : vector<4x4xf32>
    %c3 = arith.constant 3 : index
    %c0_76 = arith.constant 0 : index
    %c0_77 = arith.constant 0 : index
    %182 = vector.load %arg8[%c3, %c0_76, %c0_77] : memref<8x1x4xf32, #tpu.memory_space<vmem>>, vector<1x1x4xf32>
    %183 = vector.shape_cast %182 : vector<1x1x4xf32> to vector<1x4xf32>
    %184 = vector.broadcast %183 : vector<1x4xf32> to vector<4x4xf32>
    %185 = arith.addf %181, %184 : vector<4x4xf32>
    %cst_78 = arith.constant dense<0xFF800000> : vector<4xf32>
    %186 = vector.multi_reduction <maximumf>, %185, %cst_78 [1] : vector<4x4xf32> to vector<4xf32>
    %187 = vector.shape_cast %186 : vector<4xf32> to vector<4x1xf32>
    %188 = vector.broadcast %187 : vector<4x1xf32> to vector<4x4xf32>
    %189 = arith.subf %185, %188 : vector<4x4xf32>
    %190 = math.exp %189 : vector<4x4xf32>
    %cst_79 = arith.constant dense<0.000000e+00> : vector<4xf32>
    %191 = vector.multi_reduction <add>, %190, %cst_79 [1] : vector<4x4xf32> to vector<4xf32>
    %192 = vector.shape_cast %191 : vector<4xf32> to vector<4x1xf32>
    %193 = tpu.reciprocal %192 {approx = true} : vector<4x1xf32> -> vector<4x1xf32>
    %194 = vector.broadcast %193 : vector<4x1xf32> to vector<4x4xf32>
    %195 = arith.mulf %190, %194 : vector<4x4xf32>
    %196 = arith.truncf %195 : vector<4x4xf32> to vector<4x4xbf16>
    %cst_80 = arith.constant dense<0.000000e+00> : vector<4x16xf32>
    %197 = tpu.matmul %196, %177, %cst_80 {dimension_numbers = #tpu.dot_dimension_numbers<[1], [0], [0], [1], [0, 0, 1, 1], [], []>} : vector<4x4xbf16>, vector<4x16xbf16>, vector<4x16xf32> -> vector<4x16xf32>
    %198 = vector.extract_strided_slice %174 {offsets = [0, 16], sizes = [4, 16], strides = [1, 1]} : vector<4x96xbf16> to vector<4x16xbf16>
    %199 = vector.extract_strided_slice %174 {offsets = [0, 48], sizes = [4, 16], strides = [1, 1]} : vector<4x96xbf16> to vector<4x16xbf16>
    %200 = vector.extract_strided_slice %174 {offsets = [0, 80], sizes = [4, 16], strides = [1, 1]} : vector<4x96xbf16> to vector<4x16xbf16>
    %cst_81 = arith.constant dense<0.000000e+00> : vector<4x4xf32>
    %201 = tpu.matmul %198, %199, %cst_81 {dimension_numbers = #tpu.dot_dimension_numbers<[1], [1], [0], [0], [0, 0, 1, 0], [], []>} : vector<4x16xbf16>, vector<4x16xbf16>, vector<4x4xf32> -> vector<4x4xf32>
    %c1_82 = arith.constant 1 : index
    %c0_83 = arith.constant 0 : index
    %c0_84 = arith.constant 0 : index
    %202 = vector.load %arg7[%c1_82, %c0_83, %c0_84] : memref<2x4x4xf32, #tpu.memory_space<vmem>>, vector<1x4x4xf32>
    %203 = vector.shape_cast %202 : vector<1x4x4xf32> to vector<4x4xf32>
    %204 = arith.addf %201, %203 : vector<4x4xf32>
    %c3_85 = arith.constant 3 : index
    %c0_86 = arith.constant 0 : index
    %c0_87 = arith.constant 0 : index
    %205 = vector.load %arg8[%c3_85, %c0_86, %c0_87] : memref<8x1x4xf32, #tpu.memory_space<vmem>>, vector<1x1x4xf32>
    %206 = vector.shape_cast %205 : vector<1x1x4xf32> to vector<1x4xf32>
    %207 = vector.broadcast %206 : vector<1x4xf32> to vector<4x4xf32>
    %208 = arith.addf %204, %207 : vector<4x4xf32>
    %cst_88 = arith.constant dense<0xFF800000> : vector<4xf32>
    %209 = vector.multi_reduction <maximumf>, %208, %cst_88 [1] : vector<4x4xf32> to vector<4xf32>
    %210 = vector.shape_cast %209 : vector<4xf32> to vector<4x1xf32>
    %211 = vector.broadcast %210 : vector<4x1xf32> to vector<4x4xf32>
    %212 = arith.subf %208, %211 : vector<4x4xf32>
    %213 = math.exp %212 : vector<4x4xf32>
    %cst_89 = arith.constant dense<0.000000e+00> : vector<4xf32>
    %214 = vector.multi_reduction <add>, %213, %cst_89 [1] : vector<4x4xf32> to vector<4xf32>
    %215 = vector.shape_cast %214 : vector<4xf32> to vector<4x1xf32>
    %216 = tpu.reciprocal %215 {approx = true} : vector<4x1xf32> -> vector<4x1xf32>
    %217 = vector.broadcast %216 : vector<4x1xf32> to vector<4x4xf32>
    %218 = arith.mulf %213, %217 : vector<4x4xf32>
    %219 = arith.truncf %218 : vector<4x4xf32> to vector<4x4xbf16>
    %cst_90 = arith.constant dense<0.000000e+00> : vector<4x16xf32>
    %220 = tpu.matmul %219, %200, %cst_90 {dimension_numbers = #tpu.dot_dimension_numbers<[1], [0], [0], [1], [0, 0, 1, 1], [], []>} : vector<4x4xbf16>, vector<4x16xbf16>, vector<4x16xf32> -> vector<4x16xf32>
    %221 = tpu.concatenate %197, %220 in 1 : vector<4x16xf32>, vector<4x16xf32> -> vector<4x32xf32>
    %222 = vector.extract_strided_slice %28 {offsets = [16, 0], sizes = [4, 96], strides = [1, 1]} : vector<32x96xbf16> to vector<4x96xbf16>
    %223 = vector.extract_strided_slice %222 {offsets = [0, 0], sizes = [4, 16], strides = [1, 1]} : vector<4x96xbf16> to vector<4x16xbf16>
    %224 = vector.extract_strided_slice %222 {offsets = [0, 32], sizes = [4, 16], strides = [1, 1]} : vector<4x96xbf16> to vector<4x16xbf16>
    %225 = vector.extract_strided_slice %222 {offsets = [0, 64], sizes = [4, 16], strides = [1, 1]} : vector<4x96xbf16> to vector<4x16xbf16>
    %cst_91 = arith.constant dense<0.000000e+00> : vector<4x4xf32>
    %226 = tpu.matmul %223, %224, %cst_91 {dimension_numbers = #tpu.dot_dimension_numbers<[1], [1], [0], [0], [0, 0, 1, 0], [], []>} : vector<4x16xbf16>, vector<4x16xbf16>, vector<4x4xf32> -> vector<4x4xf32>
    %c0_92 = arith.constant 0 : index
    %c0_93 = arith.constant 0 : index
    %c0_94 = arith.constant 0 : index
    %227 = vector.load %arg7[%c0_92, %c0_93, %c0_94] : memref<2x4x4xf32, #tpu.memory_space<vmem>>, vector<1x4x4xf32>
    %228 = vector.shape_cast %227 : vector<1x4x4xf32> to vector<4x4xf32>
    %229 = arith.addf %226, %228 : vector<4x4xf32>
    %c4 = arith.constant 4 : index
    %c0_95 = arith.constant 0 : index
    %c0_96 = arith.constant 0 : index
    %230 = vector.load %arg8[%c4, %c0_95, %c0_96] : memref<8x1x4xf32, #tpu.memory_space<vmem>>, vector<1x1x4xf32>
    %231 = vector.shape_cast %230 : vector<1x1x4xf32> to vector<1x4xf32>
    %232 = vector.broadcast %231 : vector<1x4xf32> to vector<4x4xf32>
    %233 = arith.addf %229, %232 : vector<4x4xf32>
    %cst_97 = arith.constant dense<0xFF800000> : vector<4xf32>
    %234 = vector.multi_reduction <maximumf>, %233, %cst_97 [1] : vector<4x4xf32> to vector<4xf32>
    %235 = vector.shape_cast %234 : vector<4xf32> to vector<4x1xf32>
    %236 = vector.broadcast %235 : vector<4x1xf32> to vector<4x4xf32>
    %237 = arith.subf %233, %236 : vector<4x4xf32>
    %238 = math.exp %237 : vector<4x4xf32>
    %cst_98 = arith.constant dense<0.000000e+00> : vector<4xf32>
    %239 = vector.multi_reduction <add>, %238, %cst_98 [1] : vector<4x4xf32> to vector<4xf32>
    %240 = vector.shape_cast %239 : vector<4xf32> to vector<4x1xf32>
    %241 = tpu.reciprocal %240 {approx = true} : vector<4x1xf32> -> vector<4x1xf32>
    %242 = vector.broadcast %241 : vector<4x1xf32> to vector<4x4xf32>
    %243 = arith.mulf %238, %242 : vector<4x4xf32>
    %244 = arith.truncf %243 : vector<4x4xf32> to vector<4x4xbf16>
    %cst_99 = arith.constant dense<0.000000e+00> : vector<4x16xf32>
    %245 = tpu.matmul %244, %225, %cst_99 {dimension_numbers = #tpu.dot_dimension_numbers<[1], [0], [0], [1], [0, 0, 1, 1], [], []>} : vector<4x4xbf16>, vector<4x16xbf16>, vector<4x16xf32> -> vector<4x16xf32>
    %246 = vector.extract_strided_slice %222 {offsets = [0, 16], sizes = [4, 16], strides = [1, 1]} : vector<4x96xbf16> to vector<4x16xbf16>
    %247 = vector.extract_strided_slice %222 {offsets = [0, 48], sizes = [4, 16], strides = [1, 1]} : vector<4x96xbf16> to vector<4x16xbf16>
    %248 = vector.extract_strided_slice %222 {offsets = [0, 80], sizes = [4, 16], strides = [1, 1]} : vector<4x96xbf16> to vector<4x16xbf16>
    %cst_100 = arith.constant dense<0.000000e+00> : vector<4x4xf32>
    %249 = tpu.matmul %246, %247, %cst_100 {dimension_numbers = #tpu.dot_dimension_numbers<[1], [1], [0], [0], [0, 0, 1, 0], [], []>} : vector<4x16xbf16>, vector<4x16xbf16>, vector<4x4xf32> -> vector<4x4xf32>
    %c1_101 = arith.constant 1 : index
    %c0_102 = arith.constant 0 : index
    %c0_103 = arith.constant 0 : index
    %250 = vector.load %arg7[%c1_101, %c0_102, %c0_103] : memref<2x4x4xf32, #tpu.memory_space<vmem>>, vector<1x4x4xf32>
    %251 = vector.shape_cast %250 : vector<1x4x4xf32> to vector<4x4xf32>
    %252 = arith.addf %249, %251 : vector<4x4xf32>
    %c4_104 = arith.constant 4 : index
    %c0_105 = arith.constant 0 : index
    %c0_106 = arith.constant 0 : index
    %253 = vector.load %arg8[%c4_104, %c0_105, %c0_106] : memref<8x1x4xf32, #tpu.memory_space<vmem>>, vector<1x1x4xf32>
    %254 = vector.shape_cast %253 : vector<1x1x4xf32> to vector<1x4xf32>
    %255 = vector.broadcast %254 : vector<1x4xf32> to vector<4x4xf32>
    %256 = arith.addf %252, %255 : vector<4x4xf32>
    %cst_107 = arith.constant dense<0xFF800000> : vector<4xf32>
    %257 = vector.multi_reduction <maximumf>, %256, %cst_107 [1] : vector<4x4xf32> to vector<4xf32>
    %258 = vector.shape_cast %257 : vector<4xf32> to vector<4x1xf32>
    %259 = vector.broadcast %258 : vector<4x1xf32> to vector<4x4xf32>
    %260 = arith.subf %256, %259 : vector<4x4xf32>
    %261 = math.exp %260 : vector<4x4xf32>
    %cst_108 = arith.constant dense<0.000000e+00> : vector<4xf32>
    %262 = vector.multi_reduction <add>, %261, %cst_108 [1] : vector<4x4xf32> to vector<4xf32>
    %263 = vector.shape_cast %262 : vector<4xf32> to vector<4x1xf32>
    %264 = tpu.reciprocal %263 {approx = true} : vector<4x1xf32> -> vector<4x1xf32>
    %265 = vector.broadcast %264 : vector<4x1xf32> to vector<4x4xf32>
    %266 = arith.mulf %261, %265 : vector<4x4xf32>
    %267 = arith.truncf %266 : vector<4x4xf32> to vector<4x4xbf16>
    %cst_109 = arith.constant dense<0.000000e+00> : vector<4x16xf32>
    %268 = tpu.matmul %267, %248, %cst_109 {dimension_numbers = #tpu.dot_dimension_numbers<[1], [0], [0], [1], [0, 0, 1, 1], [], []>} : vector<4x4xbf16>, vector<4x16xbf16>, vector<4x16xf32> -> vector<4x16xf32>
    %269 = tpu.concatenate %245, %268 in 1 : vector<4x16xf32>, vector<4x16xf32> -> vector<4x32xf32>
    %270 = vector.extract_strided_slice %28 {offsets = [20, 0], sizes = [4, 96], strides = [1, 1]} : vector<32x96xbf16> to vector<4x96xbf16>
    %271 = vector.extract_strided_slice %270 {offsets = [0, 0], sizes = [4, 16], strides = [1, 1]} : vector<4x96xbf16> to vector<4x16xbf16>
    %272 = vector.extract_strided_slice %270 {offsets = [0, 32], sizes = [4, 16], strides = [1, 1]} : vector<4x96xbf16> to vector<4x16xbf16>
    %273 = vector.extract_strided_slice %270 {offsets = [0, 64], sizes = [4, 16], strides = [1, 1]} : vector<4x96xbf16> to vector<4x16xbf16>
    %cst_110 = arith.constant dense<0.000000e+00> : vector<4x4xf32>
    %274 = tpu.matmul %271, %272, %cst_110 {dimension_numbers = #tpu.dot_dimension_numbers<[1], [1], [0], [0], [0, 0, 1, 0], [], []>} : vector<4x16xbf16>, vector<4x16xbf16>, vector<4x4xf32> -> vector<4x4xf32>
    %c0_111 = arith.constant 0 : index
    %c0_112 = arith.constant 0 : index
    %c0_113 = arith.constant 0 : index
    %275 = vector.load %arg7[%c0_111, %c0_112, %c0_113] : memref<2x4x4xf32, #tpu.memory_space<vmem>>, vector<1x4x4xf32>
    %276 = vector.shape_cast %275 : vector<1x4x4xf32> to vector<4x4xf32>
    %277 = arith.addf %274, %276 : vector<4x4xf32>
    %c5 = arith.constant 5 : index
    %c0_114 = arith.constant 0 : index
    %c0_115 = arith.constant 0 : index
    %278 = vector.load %arg8[%c5, %c0_114, %c0_115] : memref<8x1x4xf32, #tpu.memory_space<vmem>>, vector<1x1x4xf32>
    %279 = vector.shape_cast %278 : vector<1x1x4xf32> to vector<1x4xf32>
    %280 = vector.broadcast %279 : vector<1x4xf32> to vector<4x4xf32>
    %281 = arith.addf %277, %280 : vector<4x4xf32>
    %cst_116 = arith.constant dense<0xFF800000> : vector<4xf32>
    %282 = vector.multi_reduction <maximumf>, %281, %cst_116 [1] : vector<4x4xf32> to vector<4xf32>
    %283 = vector.shape_cast %282 : vector<4xf32> to vector<4x1xf32>
    %284 = vector.broadcast %283 : vector<4x1xf32> to vector<4x4xf32>
    %285 = arith.subf %281, %284 : vector<4x4xf32>
    %286 = math.exp %285 : vector<4x4xf32>
    %cst_117 = arith.constant dense<0.000000e+00> : vector<4xf32>
    %287 = vector.multi_reduction <add>, %286, %cst_117 [1] : vector<4x4xf32> to vector<4xf32>
    %288 = vector.shape_cast %287 : vector<4xf32> to vector<4x1xf32>
    %289 = tpu.reciprocal %288 {approx = true} : vector<4x1xf32> -> vector<4x1xf32>
    %290 = vector.broadcast %289 : vector<4x1xf32> to vector<4x4xf32>
    %291 = arith.mulf %286, %290 : vector<4x4xf32>
    %292 = arith.truncf %291 : vector<4x4xf32> to vector<4x4xbf16>
    %cst_118 = arith.constant dense<0.000000e+00> : vector<4x16xf32>
    %293 = tpu.matmul %292, %273, %cst_118 {dimension_numbers = #tpu.dot_dimension_numbers<[1], [0], [0], [1], [0, 0, 1, 1], [], []>} : vector<4x4xbf16>, vector<4x16xbf16>, vector<4x16xf32> -> vector<4x16xf32>
    %294 = vector.extract_strided_slice %270 {offsets = [0, 16], sizes = [4, 16], strides = [1, 1]} : vector<4x96xbf16> to vector<4x16xbf16>
    %295 = vector.extract_strided_slice %270 {offsets = [0, 48], sizes = [4, 16], strides = [1, 1]} : vector<4x96xbf16> to vector<4x16xbf16>
    %296 = vector.extract_strided_slice %270 {offsets = [0, 80], sizes = [4, 16], strides = [1, 1]} : vector<4x96xbf16> to vector<4x16xbf16>
    %cst_119 = arith.constant dense<0.000000e+00> : vector<4x4xf32>
    %297 = tpu.matmul %294, %295, %cst_119 {dimension_numbers = #tpu.dot_dimension_numbers<[1], [1], [0], [0], [0, 0, 1, 0], [], []>} : vector<4x16xbf16>, vector<4x16xbf16>, vector<4x4xf32> -> vector<4x4xf32>
    %c1_120 = arith.constant 1 : index
    %c0_121 = arith.constant 0 : index
    %c0_122 = arith.constant 0 : index
    %298 = vector.load %arg7[%c1_120, %c0_121, %c0_122] : memref<2x4x4xf32, #tpu.memory_space<vmem>>, vector<1x4x4xf32>
    %299 = vector.shape_cast %298 : vector<1x4x4xf32> to vector<4x4xf32>
    %300 = arith.addf %297, %299 : vector<4x4xf32>
    %c5_123 = arith.constant 5 : index
    %c0_124 = arith.constant 0 : index
    %c0_125 = arith.constant 0 : index
    %301 = vector.load %arg8[%c5_123, %c0_124, %c0_125] : memref<8x1x4xf32, #tpu.memory_space<vmem>>, vector<1x1x4xf32>
    %302 = vector.shape_cast %301 : vector<1x1x4xf32> to vector<1x4xf32>
    %303 = vector.broadcast %302 : vector<1x4xf32> to vector<4x4xf32>
    %304 = arith.addf %300, %303 : vector<4x4xf32>
    %cst_126 = arith.constant dense<0xFF800000> : vector<4xf32>
    %305 = vector.multi_reduction <maximumf>, %304, %cst_126 [1] : vector<4x4xf32> to vector<4xf32>
    %306 = vector.shape_cast %305 : vector<4xf32> to vector<4x1xf32>
    %307 = vector.broadcast %306 : vector<4x1xf32> to vector<4x4xf32>
    %308 = arith.subf %304, %307 : vector<4x4xf32>
    %309 = math.exp %308 : vector<4x4xf32>
    %cst_127 = arith.constant dense<0.000000e+00> : vector<4xf32>
    %310 = vector.multi_reduction <add>, %309, %cst_127 [1] : vector<4x4xf32> to vector<4xf32>
    %311 = vector.shape_cast %310 : vector<4xf32> to vector<4x1xf32>
    %312 = tpu.reciprocal %311 {approx = true} : vector<4x1xf32> -> vector<4x1xf32>
    %313 = vector.broadcast %312 : vector<4x1xf32> to vector<4x4xf32>
    %314 = arith.mulf %309, %313 : vector<4x4xf32>
    %315 = arith.truncf %314 : vector<4x4xf32> to vector<4x4xbf16>
    %cst_128 = arith.constant dense<0.000000e+00> : vector<4x16xf32>
    %316 = tpu.matmul %315, %296, %cst_128 {dimension_numbers = #tpu.dot_dimension_numbers<[1], [0], [0], [1], [0, 0, 1, 1], [], []>} : vector<4x4xbf16>, vector<4x16xbf16>, vector<4x16xf32> -> vector<4x16xf32>
    %317 = tpu.concatenate %293, %316 in 1 : vector<4x16xf32>, vector<4x16xf32> -> vector<4x32xf32>
    %318 = vector.extract_strided_slice %28 {offsets = [24, 0], sizes = [4, 96], strides = [1, 1]} : vector<32x96xbf16> to vector<4x96xbf16>
    %319 = vector.extract_strided_slice %318 {offsets = [0, 0], sizes = [4, 16], strides = [1, 1]} : vector<4x96xbf16> to vector<4x16xbf16>
    %320 = vector.extract_strided_slice %318 {offsets = [0, 32], sizes = [4, 16], strides = [1, 1]} : vector<4x96xbf16> to vector<4x16xbf16>
    %321 = vector.extract_strided_slice %318 {offsets = [0, 64], sizes = [4, 16], strides = [1, 1]} : vector<4x96xbf16> to vector<4x16xbf16>
    %cst_129 = arith.constant dense<0.000000e+00> : vector<4x4xf32>
    %322 = tpu.matmul %319, %320, %cst_129 {dimension_numbers = #tpu.dot_dimension_numbers<[1], [1], [0], [0], [0, 0, 1, 0], [], []>} : vector<4x16xbf16>, vector<4x16xbf16>, vector<4x4xf32> -> vector<4x4xf32>
    %c0_130 = arith.constant 0 : index
    %c0_131 = arith.constant 0 : index
    %c0_132 = arith.constant 0 : index
    %323 = vector.load %arg7[%c0_130, %c0_131, %c0_132] : memref<2x4x4xf32, #tpu.memory_space<vmem>>, vector<1x4x4xf32>
    %324 = vector.shape_cast %323 : vector<1x4x4xf32> to vector<4x4xf32>
    %325 = arith.addf %322, %324 : vector<4x4xf32>
    %c6 = arith.constant 6 : index
    %c0_133 = arith.constant 0 : index
    %c0_134 = arith.constant 0 : index
    %326 = vector.load %arg8[%c6, %c0_133, %c0_134] : memref<8x1x4xf32, #tpu.memory_space<vmem>>, vector<1x1x4xf32>
    %327 = vector.shape_cast %326 : vector<1x1x4xf32> to vector<1x4xf32>
    %328 = vector.broadcast %327 : vector<1x4xf32> to vector<4x4xf32>
    %329 = arith.addf %325, %328 : vector<4x4xf32>
    %cst_135 = arith.constant dense<0xFF800000> : vector<4xf32>
    %330 = vector.multi_reduction <maximumf>, %329, %cst_135 [1] : vector<4x4xf32> to vector<4xf32>
    %331 = vector.shape_cast %330 : vector<4xf32> to vector<4x1xf32>
    %332 = vector.broadcast %331 : vector<4x1xf32> to vector<4x4xf32>
    %333 = arith.subf %329, %332 : vector<4x4xf32>
    %334 = math.exp %333 : vector<4x4xf32>
    %cst_136 = arith.constant dense<0.000000e+00> : vector<4xf32>
    %335 = vector.multi_reduction <add>, %334, %cst_136 [1] : vector<4x4xf32> to vector<4xf32>
    %336 = vector.shape_cast %335 : vector<4xf32> to vector<4x1xf32>
    %337 = tpu.reciprocal %336 {approx = true} : vector<4x1xf32> -> vector<4x1xf32>
    %338 = vector.broadcast %337 : vector<4x1xf32> to vector<4x4xf32>
    %339 = arith.mulf %334, %338 : vector<4x4xf32>
    %340 = arith.truncf %339 : vector<4x4xf32> to vector<4x4xbf16>
    %cst_137 = arith.constant dense<0.000000e+00> : vector<4x16xf32>
    %341 = tpu.matmul %340, %321, %cst_137 {dimension_numbers = #tpu.dot_dimension_numbers<[1], [0], [0], [1], [0, 0, 1, 1], [], []>} : vector<4x4xbf16>, vector<4x16xbf16>, vector<4x16xf32> -> vector<4x16xf32>
    %342 = vector.extract_strided_slice %318 {offsets = [0, 16], sizes = [4, 16], strides = [1, 1]} : vector<4x96xbf16> to vector<4x16xbf16>
    %343 = vector.extract_strided_slice %318 {offsets = [0, 48], sizes = [4, 16], strides = [1, 1]} : vector<4x96xbf16> to vector<4x16xbf16>
    %344 = vector.extract_strided_slice %318 {offsets = [0, 80], sizes = [4, 16], strides = [1, 1]} : vector<4x96xbf16> to vector<4x16xbf16>
    %cst_138 = arith.constant dense<0.000000e+00> : vector<4x4xf32>
    %345 = tpu.matmul %342, %343, %cst_138 {dimension_numbers = #tpu.dot_dimension_numbers<[1], [1], [0], [0], [0, 0, 1, 0], [], []>} : vector<4x16xbf16>, vector<4x16xbf16>, vector<4x4xf32> -> vector<4x4xf32>
    %c1_139 = arith.constant 1 : index
    %c0_140 = arith.constant 0 : index
    %c0_141 = arith.constant 0 : index
    %346 = vector.load %arg7[%c1_139, %c0_140, %c0_141] : memref<2x4x4xf32, #tpu.memory_space<vmem>>, vector<1x4x4xf32>
    %347 = vector.shape_cast %346 : vector<1x4x4xf32> to vector<4x4xf32>
    %348 = arith.addf %345, %347 : vector<4x4xf32>
    %c6_142 = arith.constant 6 : index
    %c0_143 = arith.constant 0 : index
    %c0_144 = arith.constant 0 : index
    %349 = vector.load %arg8[%c6_142, %c0_143, %c0_144] : memref<8x1x4xf32, #tpu.memory_space<vmem>>, vector<1x1x4xf32>
    %350 = vector.shape_cast %349 : vector<1x1x4xf32> to vector<1x4xf32>
    %351 = vector.broadcast %350 : vector<1x4xf32> to vector<4x4xf32>
    %352 = arith.addf %348, %351 : vector<4x4xf32>
    %cst_145 = arith.constant dense<0xFF800000> : vector<4xf32>
    %353 = vector.multi_reduction <maximumf>, %352, %cst_145 [1] : vector<4x4xf32> to vector<4xf32>
    %354 = vector.shape_cast %353 : vector<4xf32> to vector<4x1xf32>
    %355 = vector.broadcast %354 : vector<4x1xf32> to vector<4x4xf32>
    %356 = arith.subf %352, %355 : vector<4x4xf32>
    %357 = math.exp %356 : vector<4x4xf32>
    %cst_146 = arith.constant dense<0.000000e+00> : vector<4xf32>
    %358 = vector.multi_reduction <add>, %357, %cst_146 [1] : vector<4x4xf32> to vector<4xf32>
    %359 = vector.shape_cast %358 : vector<4xf32> to vector<4x1xf32>
    %360 = tpu.reciprocal %359 {approx = true} : vector<4x1xf32> -> vector<4x1xf32>
    %361 = vector.broadcast %360 : vector<4x1xf32> to vector<4x4xf32>
    %362 = arith.mulf %357, %361 : vector<4x4xf32>
    %363 = arith.truncf %362 : vector<4x4xf32> to vector<4x4xbf16>
    %cst_147 = arith.constant dense<0.000000e+00> : vector<4x16xf32>
    %364 = tpu.matmul %363, %344, %cst_147 {dimension_numbers = #tpu.dot_dimension_numbers<[1], [0], [0], [1], [0, 0, 1, 1], [], []>} : vector<4x4xbf16>, vector<4x16xbf16>, vector<4x16xf32> -> vector<4x16xf32>
    %365 = tpu.concatenate %341, %364 in 1 : vector<4x16xf32>, vector<4x16xf32> -> vector<4x32xf32>
    %366 = vector.extract_strided_slice %28 {offsets = [28, 0], sizes = [4, 96], strides = [1, 1]} : vector<32x96xbf16> to vector<4x96xbf16>
    %367 = vector.extract_strided_slice %366 {offsets = [0, 0], sizes = [4, 16], strides = [1, 1]} : vector<4x96xbf16> to vector<4x16xbf16>
    %368 = vector.extract_strided_slice %366 {offsets = [0, 32], sizes = [4, 16], strides = [1, 1]} : vector<4x96xbf16> to vector<4x16xbf16>
    %369 = vector.extract_strided_slice %366 {offsets = [0, 64], sizes = [4, 16], strides = [1, 1]} : vector<4x96xbf16> to vector<4x16xbf16>
    %cst_148 = arith.constant dense<0.000000e+00> : vector<4x4xf32>
    %370 = tpu.matmul %367, %368, %cst_148 {dimension_numbers = #tpu.dot_dimension_numbers<[1], [1], [0], [0], [0, 0, 1, 0], [], []>} : vector<4x16xbf16>, vector<4x16xbf16>, vector<4x4xf32> -> vector<4x4xf32>
    %c0_149 = arith.constant 0 : index
    %c0_150 = arith.constant 0 : index
    %c0_151 = arith.constant 0 : index
    %371 = vector.load %arg7[%c0_149, %c0_150, %c0_151] : memref<2x4x4xf32, #tpu.memory_space<vmem>>, vector<1x4x4xf32>
    %372 = vector.shape_cast %371 : vector<1x4x4xf32> to vector<4x4xf32>
    %373 = arith.addf %370, %372 : vector<4x4xf32>
    %c7 = arith.constant 7 : index
    %c0_152 = arith.constant 0 : index
    %c0_153 = arith.constant 0 : index
    %374 = vector.load %arg8[%c7, %c0_152, %c0_153] : memref<8x1x4xf32, #tpu.memory_space<vmem>>, vector<1x1x4xf32>
    %375 = vector.shape_cast %374 : vector<1x1x4xf32> to vector<1x4xf32>
    %376 = vector.broadcast %375 : vector<1x4xf32> to vector<4x4xf32>
    %377 = arith.addf %373, %376 : vector<4x4xf32>
    %cst_154 = arith.constant dense<0xFF800000> : vector<4xf32>
    %378 = vector.multi_reduction <maximumf>, %377, %cst_154 [1] : vector<4x4xf32> to vector<4xf32>
    %379 = vector.shape_cast %378 : vector<4xf32> to vector<4x1xf32>
    %380 = vector.broadcast %379 : vector<4x1xf32> to vector<4x4xf32>
    %381 = arith.subf %377, %380 : vector<4x4xf32>
    %382 = math.exp %381 : vector<4x4xf32>
    %cst_155 = arith.constant dense<0.000000e+00> : vector<4xf32>
    %383 = vector.multi_reduction <add>, %382, %cst_155 [1] : vector<4x4xf32> to vector<4xf32>
    %384 = vector.shape_cast %383 : vector<4xf32> to vector<4x1xf32>
    %385 = tpu.reciprocal %384 {approx = true} : vector<4x1xf32> -> vector<4x1xf32>
    %386 = vector.broadcast %385 : vector<4x1xf32> to vector<4x4xf32>
    %387 = arith.mulf %382, %386 : vector<4x4xf32>
    %388 = arith.truncf %387 : vector<4x4xf32> to vector<4x4xbf16>
    %cst_156 = arith.constant dense<0.000000e+00> : vector<4x16xf32>
    %389 = tpu.matmul %388, %369, %cst_156 {dimension_numbers = #tpu.dot_dimension_numbers<[1], [0], [0], [1], [0, 0, 1, 1], [], []>} : vector<4x4xbf16>, vector<4x16xbf16>, vector<4x16xf32> -> vector<4x16xf32>
    %390 = vector.extract_strided_slice %366 {offsets = [0, 16], sizes = [4, 16], strides = [1, 1]} : vector<4x96xbf16> to vector<4x16xbf16>
    %391 = vector.extract_strided_slice %366 {offsets = [0, 48], sizes = [4, 16], strides = [1, 1]} : vector<4x96xbf16> to vector<4x16xbf16>
    %392 = vector.extract_strided_slice %366 {offsets = [0, 80], sizes = [4, 16], strides = [1, 1]} : vector<4x96xbf16> to vector<4x16xbf16>
    %cst_157 = arith.constant dense<0.000000e+00> : vector<4x4xf32>
    %393 = tpu.matmul %390, %391, %cst_157 {dimension_numbers = #tpu.dot_dimension_numbers<[1], [1], [0], [0], [0, 0, 1, 0], [], []>} : vector<4x16xbf16>, vector<4x16xbf16>, vector<4x4xf32> -> vector<4x4xf32>
    %c1_158 = arith.constant 1 : index
    %c0_159 = arith.constant 0 : index
    %c0_160 = arith.constant 0 : index
    %394 = vector.load %arg7[%c1_158, %c0_159, %c0_160] : memref<2x4x4xf32, #tpu.memory_space<vmem>>, vector<1x4x4xf32>
    %395 = vector.shape_cast %394 : vector<1x4x4xf32> to vector<4x4xf32>
    %396 = arith.addf %393, %395 : vector<4x4xf32>
    %c7_161 = arith.constant 7 : index
    %c0_162 = arith.constant 0 : index
    %c0_163 = arith.constant 0 : index
    %397 = vector.load %arg8[%c7_161, %c0_162, %c0_163] : memref<8x1x4xf32, #tpu.memory_space<vmem>>, vector<1x1x4xf32>
    %398 = vector.shape_cast %397 : vector<1x1x4xf32> to vector<1x4xf32>
    %399 = vector.broadcast %398 : vector<1x4xf32> to vector<4x4xf32>
    %400 = arith.addf %396, %399 : vector<4x4xf32>
    %cst_164 = arith.constant dense<0xFF800000> : vector<4xf32>
    %401 = vector.multi_reduction <maximumf>, %400, %cst_164 [1] : vector<4x4xf32> to vector<4xf32>
    %402 = vector.shape_cast %401 : vector<4xf32> to vector<4x1xf32>
    %403 = vector.broadcast %402 : vector<4x1xf32> to vector<4x4xf32>
    %404 = arith.subf %400, %403 : vector<4x4xf32>
    %405 = math.exp %404 : vector<4x4xf32>
    %cst_165 = arith.constant dense<0.000000e+00> : vector<4xf32>
    %406 = vector.multi_reduction <add>, %405, %cst_165 [1] : vector<4x4xf32> to vector<4xf32>
    %407 = vector.shape_cast %406 : vector<4xf32> to vector<4x1xf32>
    %408 = tpu.reciprocal %407 {approx = true} : vector<4x1xf32> -> vector<4x1xf32>
    %409 = vector.broadcast %408 : vector<4x1xf32> to vector<4x4xf32>
    %410 = arith.mulf %405, %409 : vector<4x4xf32>
    %411 = arith.truncf %410 : vector<4x4xf32> to vector<4x4xbf16>
    %cst_166 = arith.constant dense<0.000000e+00> : vector<4x16xf32>
    %412 = tpu.matmul %411, %392, %cst_166 {dimension_numbers = #tpu.dot_dimension_numbers<[1], [0], [0], [1], [0, 0, 1, 1], [], []>} : vector<4x4xbf16>, vector<4x16xbf16>, vector<4x16xf32> -> vector<4x16xf32>
    %413 = tpu.concatenate %389, %412 in 1 : vector<4x16xf32>, vector<4x16xf32> -> vector<4x32xf32>
    %414 = tpu.concatenate %77, %125, %173, %221, %269, %317, %365, %413 in 0 : vector<4x32xf32>, vector<4x32xf32>, vector<4x32xf32>, vector<4x32xf32>, vector<4x32xf32>, vector<4x32xf32>, vector<4x32xf32>, vector<4x32xf32> -> vector<32x32xf32>
    %415 = arith.truncf %414 : vector<32x32xf32> to vector<32x32xbf16>
    %cst_167 = arith.constant dense<0.000000e+00> : vector<32x32xf32>
    %416 = tpu.matmul %415, %29, %cst_167 {dimension_numbers = #tpu.dot_dimension_numbers<[1], [0], [0], [1], [0, 0, 1, 1], [], []>} : vector<32x32xbf16>, vector<32x32xbf16>, vector<32x32xf32> -> vector<32x32xf32>
    %417 = arith.addf %0, %416 : vector<32x32xf32>
    %c0_168 = arith.constant 0 : index
    %c0_169 = arith.constant 0 : index
    %418 = vector.load %arg6[%c0_168, %c0_169] : memref<1x32xf32, #tpu.memory_space<vmem>>, vector<1x32xf32>
    %419 = vector.broadcast %418 : vector<1x32xf32> to vector<32x32xf32>
    %420 = arith.addf %417, %419 : vector<32x32xf32>
    %c0_170 = arith.constant 0 : index
    %c0_171 = arith.constant 0 : index
    %421 = vector.load %arg9[%c0_170, %c0_171] : memref<32x32xf32, #tpu.memory_space<vmem>>, vector<32x32xf32>
    tpu.vector_store %arg9[%c0_170, %c0_171], %420 {strides = array<i32>} : memref<32x32xf32, #tpu.memory_space<vmem>>, vector<32x32xf32>,
    return
  }
  func.func @transform_0(%arg0: i32) -> (i32, i32) {
    %c0_i32 = arith.constant 0 : i32
    %c0_i32_0 = arith.constant 0 : i32
    return %arg0, %c0_i32 : i32, i32
  }
  func.func @transform_1(%arg0: i32) -> (i32, i32) {
    %c0_i32 = arith.constant 0 : i32
    %c0_i32_0 = arith.constant 0 : i32
    %c0_i32_1 = arith.constant 0 : i32
    return %c0_i32, %c0_i32_0 : i32, i32
  }
  func.func @transform_2(%arg0: i32) -> (i32, i32) {
    %c0_i32 = arith.constant 0 : i32
    %c0_i32_0 = arith.constant 0 : i32
    %c0_i32_1 = arith.constant 0 : i32
    return %c0_i32, %c0_i32_0 : i32, i32
  }
  func.func @transform_3(%arg0: i32) -> (i32, i32) {
    %c0_i32 = arith.constant 0 : i32
    %c0_i32_0 = arith.constant 0 : i32
    %c0_i32_1 = arith.constant 0 : i32
    return %c0_i32, %c0_i32_0 : i32, i32
  }
  func.func @transform_4(%arg0: i32) -> (i32, i32) {
    %c0_i32 = arith.constant 0 : i32
    %c0_i32_0 = arith.constant 0 : i32
    %c0_i32_1 = arith.constant 0 : i32
    return %c0_i32, %c0_i32_0 : i32, i32
  }
  func.func @transform_5(%arg0: i32) -> (i32, i32) {
    %c0_i32 = arith.constant 0 : i32
    %c0_i32_0 = arith.constant 0 : i32
    %c0_i32_1 = arith.constant 0 : i32
    return %c0_i32, %c0_i32_0 : i32, i32
  }
  func.func @transform_6(%arg0: i32) -> (i32, i32, i32) {
    %c0_i32 = arith.constant 0 : i32
    %c0_i32_0 = arith.constant 0 : i32
    %c0_i32_1 = arith.constant 0 : i32
    %c0_i32_2 = arith.constant 0 : i32
    return %c0_i32, %c0_i32_0, %c0_i32_1 : i32, i32, i32
  }
  func.func @transform_7(%arg0: i32) -> (i32, i32, i32) {
    %c0_i32 = arith.constant 0 : i32
    %c0_i32_0 = arith.constant 0 : i32
    %c0_i32_1 = arith.constant 0 : i32
    return %arg0, %c0_i32, %c0_i32_0 : i32, i32, i32
  }
  func.func @transform_8(%arg0: i32) -> (i32, i32) {
    %c0_i32 = arith.constant 0 : i32
    %c0_i32_0 = arith.constant 0 : i32
    return %arg0, %c0_i32 : i32, i32
  }
}

module attributes {stable_mosaic.version = 11 : i64} {
  func.func @_ff_block_kernel(%arg0: i32, %arg1: memref<128x32xf32, #tpu.memory_space<vmem>>, %arg2: memref<1x32xf32, #tpu.memory_space<vmem>>, %arg3: memref<1x32xf32, #tpu.memory_space<vmem>>, %arg4: memref<32x128xbf16, #tpu.memory_space<vmem>>, %arg5: memref<1x128xf32, #tpu.memory_space<vmem>>, %arg6: memref<128x32xbf16, #tpu.memory_space<vmem>>, %arg7: memref<1x32xf32, #tpu.memory_space<vmem>>, %arg8: memref<128x32xf32, #tpu.memory_space<vmem>>) attributes {dimension_semantics = [#tpu.dimension_semantics<parallel>], iteration_bounds = array<i64: 1>, scalar_prefetch = 0 : i64, scratch_operands = 0 : i64, tpu.core_type = #tpu.core_type<tc>, window_params = [{transform_indices = @transform_0, window_bounds = array<i64: 128, 32>}, {pipeline_mode = #tpu.pipeline_mode<synchronous>, transform_indices = @transform_1, window_bounds = array<i64: 1, 32>}, {pipeline_mode = #tpu.pipeline_mode<synchronous>, transform_indices = @transform_2, window_bounds = array<i64: 1, 32>}, {pipeline_mode = #tpu.pipeline_mode<synchronous>, transform_indices = @transform_3, window_bounds = array<i64: 32, 128>}, {pipeline_mode = #tpu.pipeline_mode<synchronous>, transform_indices = @transform_4, window_bounds = array<i64: 1, 128>}, {pipeline_mode = #tpu.pipeline_mode<synchronous>, transform_indices = @transform_5, window_bounds = array<i64: 128, 32>}, {pipeline_mode = #tpu.pipeline_mode<synchronous>, transform_indices = @transform_6, window_bounds = array<i64: 1, 32>}, {transform_indices = @transform_7, window_bounds = array<i64: 128, 32>}]} {
    %c0 = arith.constant 0 : index
    %c0_0 = arith.constant 0 : index
    %0 = vector.load %arg1[%c0, %c0_0] : memref<128x32xf32, #tpu.memory_space<vmem>>, vector<128x32xf32>
    %cst = arith.constant dense<0.000000e+00> : vector<128xf32>
    %1 = vector.multi_reduction <add>, %0, %cst [1] : vector<128x32xf32> to vector<128xf32>
    %2 = vector.shape_cast %1 : vector<128xf32> to vector<128x1xf32>
    %cst_1 = arith.constant 3.200000e+01 : f32
    %3 = vector.broadcast %cst_1 : f32 to vector<128x1xf32>
    %4 = arith.divf %2, %3 : vector<128x1xf32>
    %5 = vector.broadcast %4 : vector<128x1xf32> to vector<128x32xf32>
    %6 = arith.subf %0, %5 : vector<128x32xf32>
    %7 = arith.mulf %6, %6 : vector<128x32xf32>
    %cst_2 = arith.constant dense<0.000000e+00> : vector<128xf32>
    %8 = vector.multi_reduction <add>, %7, %cst_2 [1] : vector<128x32xf32> to vector<128xf32>
    %9 = vector.shape_cast %8 : vector<128xf32> to vector<128x1xf32>
    %cst_3 = arith.constant 3.200000e+01 : f32
    %10 = vector.broadcast %cst_3 : f32 to vector<128x1xf32>
    %11 = arith.divf %9, %10 : vector<128x1xf32>
    %12 = vector.broadcast %4 : vector<128x1xf32> to vector<128x32xf32>
    %13 = arith.subf %0, %12 : vector<128x32xf32>
    %cst_4 = arith.constant 9.99999974E-6 : f32
    %14 = vector.broadcast %cst_4 : f32 to vector<128x1xf32>
    %15 = arith.addf %11, %14 : vector<128x1xf32>
    %16 = math.rsqrt %15 : vector<128x1xf32>
    %17 = vector.broadcast %16 : vector<128x1xf32> to vector<128x32xf32>
    %18 = arith.mulf %13, %17 : vector<128x32xf32>
    %c0_5 = arith.constant 0 : index
    %c0_6 = arith.constant 0 : index
    %19 = vector.load %arg2[%c0_5, %c0_6] : memref<1x32xf32, #tpu.memory_space<vmem>>, vector<1x32xf32>
    %20 = vector.broadcast %19 : vector<1x32xf32> to vector<128x32xf32>
    %21 = arith.mulf %18, %20 : vector<128x32xf32>
    %c0_7 = arith.constant 0 : index
    %c0_8 = arith.constant 0 : index
    %22 = vector.load %arg3[%c0_7, %c0_8] : memref<1x32xf32, #tpu.memory_space<vmem>>, vector<1x32xf32>
    %23 = vector.broadcast %22 : vector<1x32xf32> to vector<128x32xf32>
    %24 = arith.addf %21, %23 : vector<128x32xf32>
    %25 = arith.truncf %24 : vector<128x32xf32> to vector<128x32xbf16>
    %c0_9 = arith.constant 0 : index
    %c0_10 = arith.constant 0 : index
    %26 = vector.load %arg4[%c0_9, %c0_10] : memref<32x128xbf16, #tpu.memory_space<vmem>>, vector<32x128xbf16>
    %cst_11 = arith.constant dense<0.000000e+00> : vector<128x128xf32>
    %27 = tpu.matmul %25, %26, %cst_11 {dimension_numbers = #tpu.dot_dimension_numbers<[1], [0], [0], [1], [0, 0, 1, 1], [], []>} : vector<128x32xbf16>, vector<32x128xbf16>, vector<128x128xf32> -> vector<128x128xf32>
    %c0_12 = arith.constant 0 : index
    %c0_13 = arith.constant 0 : index
    %28 = vector.load %arg5[%c0_12, %c0_13] : memref<1x128xf32, #tpu.memory_space<vmem>>, vector<1x128xf32>
    %29 = vector.broadcast %28 : vector<1x128xf32> to vector<128x128xf32>
    %30 = arith.addf %27, %29 : vector<128x128xf32>
    %31 = arith.mulf %30, %30 : vector<128x128xf32>
    %32 = arith.mulf %30, %31 : vector<128x128xf32>
    %cst_14 = arith.constant 4.471500e-02 : f32
    %33 = vector.broadcast %cst_14 : f32 to vector<128x128xf32>
    %34 = arith.mulf %33, %32 : vector<128x128xf32>
    %35 = arith.addf %30, %34 : vector<128x128xf32>
    %cst_15 = arith.constant 0.797884583 : f32
    %36 = vector.broadcast %cst_15 : f32 to vector<128x128xf32>
    %37 = arith.mulf %36, %35 : vector<128x128xf32>
    %38 = math.tanh %37 : vector<128x128xf32>
    %cst_16 = arith.constant 1.000000e+00 : f32
    %39 = vector.broadcast %cst_16 : f32 to vector<128x128xf32>
    %40 = arith.addf %39, %38 : vector<128x128xf32>
    %cst_17 = arith.constant 5.000000e-01 : f32
    %41 = vector.broadcast %cst_17 : f32 to vector<128x128xf32>
    %42 = arith.mulf %41, %40 : vector<128x128xf32>
    %43 = arith.mulf %30, %42 : vector<128x128xf32>
    %44 = arith.truncf %43 : vector<128x128xf32> to vector<128x128xbf16>
    %c0_18 = arith.constant 0 : index
    %c0_19 = arith.constant 0 : index
    %45 = vector.load %arg6[%c0_18, %c0_19] : memref<128x32xbf16, #tpu.memory_space<vmem>>, vector<128x32xbf16>
    %cst_20 = arith.constant dense<0.000000e+00> : vector<128x32xf32>
    %46 = tpu.matmul %44, %45, %cst_20 {dimension_numbers = #tpu.dot_dimension_numbers<[1], [0], [0], [1], [0, 0, 1, 1], [], []>} : vector<128x128xbf16>, vector<128x32xbf16>, vector<128x32xf32> -> vector<128x32xf32>
    %c0_21 = arith.constant 0 : index
    %c0_22 = arith.constant 0 : index
    %47 = vector.load %arg7[%c0_21, %c0_22] : memref<1x32xf32, #tpu.memory_space<vmem>>, vector<1x32xf32>
    %48 = vector.broadcast %47 : vector<1x32xf32> to vector<128x32xf32>
    %49 = arith.addf %46, %48 : vector<128x32xf32>
    %50 = arith.addf %0, %49 : vector<128x32xf32>
    %c0_23 = arith.constant 0 : index
    %c0_24 = arith.constant 0 : index
    %51 = vector.load %arg8[%c0_23, %c0_24] : memref<128x32xf32, #tpu.memory_space<vmem>>, vector<128x32xf32>
    tpu.vector_store %arg8[%c0_23, %c0_24], %50 {strides = array<i32>} : memref<128x32xf32, #tpu.memory_space<vmem>>, vector<128x32xf32>,
    return
  }
  func.func @transform_0(%arg0: i32) -> (i32, i32) {
    %c0_i32 = arith.constant 0 : i32
    %c0_i32_0 = arith.constant 0 : i32
    return %arg0, %c0_i32 : i32, i32
  }
  func.func @transform_1(%arg0: i32) -> (i32, i32) {
    %c0_i32 = arith.constant 0 : i32
    %c0_i32_0 = arith.constant 0 : i32
    %c0_i32_1 = arith.constant 0 : i32
    return %c0_i32, %c0_i32_0 : i32, i32
  }
  func.func @transform_2(%arg0: i32) -> (i32, i32) {
    %c0_i32 = arith.constant 0 : i32
    %c0_i32_0 = arith.constant 0 : i32
    %c0_i32_1 = arith.constant 0 : i32
    return %c0_i32, %c0_i32_0 : i32, i32
  }
  func.func @transform_3(%arg0: i32) -> (i32, i32) {
    %c0_i32 = arith.constant 0 : i32
    %c0_i32_0 = arith.constant 0 : i32
    %c0_i32_1 = arith.constant 0 : i32
    return %c0_i32, %c0_i32_0 : i32, i32
  }
  func.func @transform_4(%arg0: i32) -> (i32, i32) {
    %c0_i32 = arith.constant 0 : i32
    %c0_i32_0 = arith.constant 0 : i32
    %c0_i32_1 = arith.constant 0 : i32
    return %c0_i32, %c0_i32_0 : i32, i32
  }
  func.func @transform_5(%arg0: i32) -> (i32, i32) {
    %c0_i32 = arith.constant 0 : i32
    %c0_i32_0 = arith.constant 0 : i32
    %c0_i32_1 = arith.constant 0 : i32
    return %c0_i32, %c0_i32_0 : i32, i32
  }
  func.func @transform_6(%arg0: i32) -> (i32, i32) {
    %c0_i32 = arith.constant 0 : i32
    %c0_i32_0 = arith.constant 0 : i32
    %c0_i32_1 = arith.constant 0 : i32
    return %c0_i32, %c0_i32_0 : i32, i32
  }
  func.func @transform_7(%arg0: i32) -> (i32, i32) {
    %c0_i32 = arith.constant 0 : i32
    %c0_i32_0 = arith.constant 0 : i32
    return %arg0, %c0_i32 : i32, i32
  }
}

module attributes {stable_mosaic.version = 11 : i64} {
  func.func @_attn_block_kernel(%arg0: i32, %arg1: memref<64x32xf32, #tpu.memory_space<vmem>>, %arg2: memref<1x32xf32, #tpu.memory_space<vmem>>, %arg3: memref<1x32xf32, #tpu.memory_space<vmem>>, %arg4: memref<32x96xbf16, #tpu.memory_space<vmem>>, %arg5: memref<32x32xbf16, #tpu.memory_space<vmem>>, %arg6: memref<1x32xf32, #tpu.memory_space<vmem>>, %arg7: memref<2x16x16xf32, #tpu.memory_space<vmem>>, %arg8: memref<64x32xf32, #tpu.memory_space<vmem>>) attributes {dimension_semantics = [#tpu.dimension_semantics<parallel>], iteration_bounds = array<i64: 2>, scalar_prefetch = 0 : i64, scratch_operands = 0 : i64, tpu.core_type = #tpu.core_type<tc>, window_params = [{transform_indices = @transform_0, window_bounds = array<i64: 64, 32>}, {pipeline_mode = #tpu.pipeline_mode<synchronous>, transform_indices = @transform_1, window_bounds = array<i64: 1, 32>}, {pipeline_mode = #tpu.pipeline_mode<synchronous>, transform_indices = @transform_2, window_bounds = array<i64: 1, 32>}, {pipeline_mode = #tpu.pipeline_mode<synchronous>, transform_indices = @transform_3, window_bounds = array<i64: 32, 96>}, {pipeline_mode = #tpu.pipeline_mode<synchronous>, transform_indices = @transform_4, window_bounds = array<i64: 32, 32>}, {pipeline_mode = #tpu.pipeline_mode<synchronous>, transform_indices = @transform_5, window_bounds = array<i64: 1, 32>}, {pipeline_mode = #tpu.pipeline_mode<synchronous>, transform_indices = @transform_6, window_bounds = array<i64: 2, 16, 16>}, {transform_indices = @transform_7, window_bounds = array<i64: 64, 32>}]} {
    %c0 = arith.constant 0 : index
    %c0_0 = arith.constant 0 : index
    %0 = vector.load %arg1[%c0, %c0_0] : memref<64x32xf32, #tpu.memory_space<vmem>>, vector<64x32xf32>
    %cst = arith.constant dense<0.000000e+00> : vector<64xf32>
    %1 = vector.multi_reduction <add>, %0, %cst [1] : vector<64x32xf32> to vector<64xf32>
    %2 = vector.shape_cast %1 : vector<64xf32> to vector<64x1xf32>
    %cst_1 = arith.constant 3.200000e+01 : f32
    %3 = vector.broadcast %cst_1 : f32 to vector<64x1xf32>
    %4 = arith.divf %2, %3 : vector<64x1xf32>
    %5 = vector.broadcast %4 : vector<64x1xf32> to vector<64x32xf32>
    %6 = arith.subf %0, %5 : vector<64x32xf32>
    %7 = arith.mulf %6, %6 : vector<64x32xf32>
    %cst_2 = arith.constant dense<0.000000e+00> : vector<64xf32>
    %8 = vector.multi_reduction <add>, %7, %cst_2 [1] : vector<64x32xf32> to vector<64xf32>
    %9 = vector.shape_cast %8 : vector<64xf32> to vector<64x1xf32>
    %cst_3 = arith.constant 3.200000e+01 : f32
    %10 = vector.broadcast %cst_3 : f32 to vector<64x1xf32>
    %11 = arith.divf %9, %10 : vector<64x1xf32>
    %12 = vector.broadcast %4 : vector<64x1xf32> to vector<64x32xf32>
    %13 = arith.subf %0, %12 : vector<64x32xf32>
    %cst_4 = arith.constant 9.99999974E-6 : f32
    %14 = vector.broadcast %cst_4 : f32 to vector<64x1xf32>
    %15 = arith.addf %11, %14 : vector<64x1xf32>
    %16 = math.rsqrt %15 : vector<64x1xf32>
    %17 = vector.broadcast %16 : vector<64x1xf32> to vector<64x32xf32>
    %18 = arith.mulf %13, %17 : vector<64x32xf32>
    %c0_5 = arith.constant 0 : index
    %c0_6 = arith.constant 0 : index
    %19 = vector.load %arg2[%c0_5, %c0_6] : memref<1x32xf32, #tpu.memory_space<vmem>>, vector<1x32xf32>
    %20 = vector.broadcast %19 : vector<1x32xf32> to vector<64x32xf32>
    %21 = arith.mulf %18, %20 : vector<64x32xf32>
    %c0_7 = arith.constant 0 : index
    %c0_8 = arith.constant 0 : index
    %22 = vector.load %arg3[%c0_7, %c0_8] : memref<1x32xf32, #tpu.memory_space<vmem>>, vector<1x32xf32>
    %23 = vector.broadcast %22 : vector<1x32xf32> to vector<64x32xf32>
    %24 = arith.addf %21, %23 : vector<64x32xf32>
    %25 = arith.truncf %24 : vector<64x32xf32> to vector<64x32xbf16>
    %c0_9 = arith.constant 0 : index
    %c0_10 = arith.constant 0 : index
    %26 = vector.load %arg4[%c0_9, %c0_10] : memref<32x96xbf16, #tpu.memory_space<vmem>>, vector<32x96xbf16>
    %cst_11 = arith.constant dense<0.000000e+00> : vector<64x96xf32>
    %27 = tpu.matmul %25, %26, %cst_11 {dimension_numbers = #tpu.dot_dimension_numbers<[1], [0], [0], [1], [0, 0, 1, 1], [], []>} : vector<64x32xbf16>, vector<32x96xbf16>, vector<64x96xf32> -> vector<64x96xf32>
    %28 = arith.truncf %27 : vector<64x96xf32> to vector<64x96xbf16>
    %c0_12 = arith.constant 0 : index
    %c0_13 = arith.constant 0 : index
    %29 = vector.load %arg5[%c0_12, %c0_13] : memref<32x32xbf16, #tpu.memory_space<vmem>>, vector<32x32xbf16>
    %30 = vector.extract_strided_slice %28 {offsets = [0, 0], sizes = [16, 96], strides = [1, 1]} : vector<64x96xbf16> to vector<16x96xbf16>
    %31 = vector.extract_strided_slice %30 {offsets = [0, 0], sizes = [16, 16], strides = [1, 1]} : vector<16x96xbf16> to vector<16x16xbf16>
    %32 = vector.extract_strided_slice %30 {offsets = [0, 32], sizes = [16, 16], strides = [1, 1]} : vector<16x96xbf16> to vector<16x16xbf16>
    %33 = vector.extract_strided_slice %30 {offsets = [0, 64], sizes = [16, 16], strides = [1, 1]} : vector<16x96xbf16> to vector<16x16xbf16>
    %cst_14 = arith.constant dense<0.000000e+00> : vector<16x16xf32>
    %34 = tpu.matmul %31, %32, %cst_14 {dimension_numbers = #tpu.dot_dimension_numbers<[1], [1], [0], [0], [0, 0, 1, 0], [], []>} : vector<16x16xbf16>, vector<16x16xbf16>, vector<16x16xf32> -> vector<16x16xf32>
    %c0_15 = arith.constant 0 : index
    %c0_16 = arith.constant 0 : index
    %c0_17 = arith.constant 0 : index
    %35 = vector.load %arg7[%c0_15, %c0_16, %c0_17] : memref<2x16x16xf32, #tpu.memory_space<vmem>>, vector<1x16x16xf32>
    %36 = vector.shape_cast %35 : vector<1x16x16xf32> to vector<16x16xf32>
    %37 = arith.addf %34, %36 : vector<16x16xf32>
    %cst_18 = arith.constant dense<0xFF800000> : vector<16xf32>
    %38 = vector.multi_reduction <maximumf>, %37, %cst_18 [1] : vector<16x16xf32> to vector<16xf32>
    %39 = vector.shape_cast %38 : vector<16xf32> to vector<16x1xf32>
    %40 = vector.broadcast %39 : vector<16x1xf32> to vector<16x16xf32>
    %41 = arith.subf %37, %40 : vector<16x16xf32>
    %42 = math.exp %41 : vector<16x16xf32>
    %cst_19 = arith.constant dense<0.000000e+00> : vector<16xf32>
    %43 = vector.multi_reduction <add>, %42, %cst_19 [1] : vector<16x16xf32> to vector<16xf32>
    %44 = vector.shape_cast %43 : vector<16xf32> to vector<16x1xf32>
    %45 = tpu.reciprocal %44 {approx = true} : vector<16x1xf32> -> vector<16x1xf32>
    %46 = vector.broadcast %45 : vector<16x1xf32> to vector<16x16xf32>
    %47 = arith.mulf %42, %46 : vector<16x16xf32>
    %48 = arith.truncf %47 : vector<16x16xf32> to vector<16x16xbf16>
    %cst_20 = arith.constant dense<0.000000e+00> : vector<16x16xf32>
    %49 = tpu.matmul %48, %33, %cst_20 {dimension_numbers = #tpu.dot_dimension_numbers<[1], [0], [0], [1], [0, 0, 1, 1], [], []>} : vector<16x16xbf16>, vector<16x16xbf16>, vector<16x16xf32> -> vector<16x16xf32>
    %50 = vector.extract_strided_slice %30 {offsets = [0, 16], sizes = [16, 16], strides = [1, 1]} : vector<16x96xbf16> to vector<16x16xbf16>
    %51 = vector.extract_strided_slice %30 {offsets = [0, 48], sizes = [16, 16], strides = [1, 1]} : vector<16x96xbf16> to vector<16x16xbf16>
    %52 = vector.extract_strided_slice %30 {offsets = [0, 80], sizes = [16, 16], strides = [1, 1]} : vector<16x96xbf16> to vector<16x16xbf16>
    %cst_21 = arith.constant dense<0.000000e+00> : vector<16x16xf32>
    %53 = tpu.matmul %50, %51, %cst_21 {dimension_numbers = #tpu.dot_dimension_numbers<[1], [1], [0], [0], [0, 0, 1, 0], [], []>} : vector<16x16xbf16>, vector<16x16xbf16>, vector<16x16xf32> -> vector<16x16xf32>
    %c1 = arith.constant 1 : index
    %c0_22 = arith.constant 0 : index
    %c0_23 = arith.constant 0 : index
    %54 = vector.load %arg7[%c1, %c0_22, %c0_23] : memref<2x16x16xf32, #tpu.memory_space<vmem>>, vector<1x16x16xf32>
    %55 = vector.shape_cast %54 : vector<1x16x16xf32> to vector<16x16xf32>
    %56 = arith.addf %53, %55 : vector<16x16xf32>
    %cst_24 = arith.constant dense<0xFF800000> : vector<16xf32>
    %57 = vector.multi_reduction <maximumf>, %56, %cst_24 [1] : vector<16x16xf32> to vector<16xf32>
    %58 = vector.shape_cast %57 : vector<16xf32> to vector<16x1xf32>
    %59 = vector.broadcast %58 : vector<16x1xf32> to vector<16x16xf32>
    %60 = arith.subf %56, %59 : vector<16x16xf32>
    %61 = math.exp %60 : vector<16x16xf32>
    %cst_25 = arith.constant dense<0.000000e+00> : vector<16xf32>
    %62 = vector.multi_reduction <add>, %61, %cst_25 [1] : vector<16x16xf32> to vector<16xf32>
    %63 = vector.shape_cast %62 : vector<16xf32> to vector<16x1xf32>
    %64 = tpu.reciprocal %63 {approx = true} : vector<16x1xf32> -> vector<16x1xf32>
    %65 = vector.broadcast %64 : vector<16x1xf32> to vector<16x16xf32>
    %66 = arith.mulf %61, %65 : vector<16x16xf32>
    %67 = arith.truncf %66 : vector<16x16xf32> to vector<16x16xbf16>
    %cst_26 = arith.constant dense<0.000000e+00> : vector<16x16xf32>
    %68 = tpu.matmul %67, %52, %cst_26 {dimension_numbers = #tpu.dot_dimension_numbers<[1], [0], [0], [1], [0, 0, 1, 1], [], []>} : vector<16x16xbf16>, vector<16x16xbf16>, vector<16x16xf32> -> vector<16x16xf32>
    %69 = tpu.concatenate %49, %68 in 1 : vector<16x16xf32>, vector<16x16xf32> -> vector<16x32xf32>
    %70 = vector.extract_strided_slice %28 {offsets = [16, 0], sizes = [16, 96], strides = [1, 1]} : vector<64x96xbf16> to vector<16x96xbf16>
    %71 = vector.extract_strided_slice %70 {offsets = [0, 0], sizes = [16, 16], strides = [1, 1]} : vector<16x96xbf16> to vector<16x16xbf16>
    %72 = vector.extract_strided_slice %70 {offsets = [0, 32], sizes = [16, 16], strides = [1, 1]} : vector<16x96xbf16> to vector<16x16xbf16>
    %73 = vector.extract_strided_slice %70 {offsets = [0, 64], sizes = [16, 16], strides = [1, 1]} : vector<16x96xbf16> to vector<16x16xbf16>
    %cst_27 = arith.constant dense<0.000000e+00> : vector<16x16xf32>
    %74 = tpu.matmul %71, %72, %cst_27 {dimension_numbers = #tpu.dot_dimension_numbers<[1], [1], [0], [0], [0, 0, 1, 0], [], []>} : vector<16x16xbf16>, vector<16x16xbf16>, vector<16x16xf32> -> vector<16x16xf32>
    %c0_28 = arith.constant 0 : index
    %c0_29 = arith.constant 0 : index
    %c0_30 = arith.constant 0 : index
    %75 = vector.load %arg7[%c0_28, %c0_29, %c0_30] : memref<2x16x16xf32, #tpu.memory_space<vmem>>, vector<1x16x16xf32>
    %76 = vector.shape_cast %75 : vector<1x16x16xf32> to vector<16x16xf32>
    %77 = arith.addf %74, %76 : vector<16x16xf32>
    %cst_31 = arith.constant dense<0xFF800000> : vector<16xf32>
    %78 = vector.multi_reduction <maximumf>, %77, %cst_31 [1] : vector<16x16xf32> to vector<16xf32>
    %79 = vector.shape_cast %78 : vector<16xf32> to vector<16x1xf32>
    %80 = vector.broadcast %79 : vector<16x1xf32> to vector<16x16xf32>
    %81 = arith.subf %77, %80 : vector<16x16xf32>
    %82 = math.exp %81 : vector<16x16xf32>
    %cst_32 = arith.constant dense<0.000000e+00> : vector<16xf32>
    %83 = vector.multi_reduction <add>, %82, %cst_32 [1] : vector<16x16xf32> to vector<16xf32>
    %84 = vector.shape_cast %83 : vector<16xf32> to vector<16x1xf32>
    %85 = tpu.reciprocal %84 {approx = true} : vector<16x1xf32> -> vector<16x1xf32>
    %86 = vector.broadcast %85 : vector<16x1xf32> to vector<16x16xf32>
    %87 = arith.mulf %82, %86 : vector<16x16xf32>
    %88 = arith.truncf %87 : vector<16x16xf32> to vector<16x16xbf16>
    %cst_33 = arith.constant dense<0.000000e+00> : vector<16x16xf32>
    %89 = tpu.matmul %88, %73, %cst_33 {dimension_numbers = #tpu.dot_dimension_numbers<[1], [0], [0], [1], [0, 0, 1, 1], [], []>} : vector<16x16xbf16>, vector<16x16xbf16>, vector<16x16xf32> -> vector<16x16xf32>
    %90 = vector.extract_strided_slice %70 {offsets = [0, 16], sizes = [16, 16], strides = [1, 1]} : vector<16x96xbf16> to vector<16x16xbf16>
    %91 = vector.extract_strided_slice %70 {offsets = [0, 48], sizes = [16, 16], strides = [1, 1]} : vector<16x96xbf16> to vector<16x16xbf16>
    %92 = vector.extract_strided_slice %70 {offsets = [0, 80], sizes = [16, 16], strides = [1, 1]} : vector<16x96xbf16> to vector<16x16xbf16>
    %cst_34 = arith.constant dense<0.000000e+00> : vector<16x16xf32>
    %93 = tpu.matmul %90, %91, %cst_34 {dimension_numbers = #tpu.dot_dimension_numbers<[1], [1], [0], [0], [0, 0, 1, 0], [], []>} : vector<16x16xbf16>, vector<16x16xbf16>, vector<16x16xf32> -> vector<16x16xf32>
    %c1_35 = arith.constant 1 : index
    %c0_36 = arith.constant 0 : index
    %c0_37 = arith.constant 0 : index
    %94 = vector.load %arg7[%c1_35, %c0_36, %c0_37] : memref<2x16x16xf32, #tpu.memory_space<vmem>>, vector<1x16x16xf32>
    %95 = vector.shape_cast %94 : vector<1x16x16xf32> to vector<16x16xf32>
    %96 = arith.addf %93, %95 : vector<16x16xf32>
    %cst_38 = arith.constant dense<0xFF800000> : vector<16xf32>
    %97 = vector.multi_reduction <maximumf>, %96, %cst_38 [1] : vector<16x16xf32> to vector<16xf32>
    %98 = vector.shape_cast %97 : vector<16xf32> to vector<16x1xf32>
    %99 = vector.broadcast %98 : vector<16x1xf32> to vector<16x16xf32>
    %100 = arith.subf %96, %99 : vector<16x16xf32>
    %101 = math.exp %100 : vector<16x16xf32>
    %cst_39 = arith.constant dense<0.000000e+00> : vector<16xf32>
    %102 = vector.multi_reduction <add>, %101, %cst_39 [1] : vector<16x16xf32> to vector<16xf32>
    %103 = vector.shape_cast %102 : vector<16xf32> to vector<16x1xf32>
    %104 = tpu.reciprocal %103 {approx = true} : vector<16x1xf32> -> vector<16x1xf32>
    %105 = vector.broadcast %104 : vector<16x1xf32> to vector<16x16xf32>
    %106 = arith.mulf %101, %105 : vector<16x16xf32>
    %107 = arith.truncf %106 : vector<16x16xf32> to vector<16x16xbf16>
    %cst_40 = arith.constant dense<0.000000e+00> : vector<16x16xf32>
    %108 = tpu.matmul %107, %92, %cst_40 {dimension_numbers = #tpu.dot_dimension_numbers<[1], [0], [0], [1], [0, 0, 1, 1], [], []>} : vector<16x16xbf16>, vector<16x16xbf16>, vector<16x16xf32> -> vector<16x16xf32>
    %109 = tpu.concatenate %89, %108 in 1 : vector<16x16xf32>, vector<16x16xf32> -> vector<16x32xf32>
    %110 = vector.extract_strided_slice %28 {offsets = [32, 0], sizes = [16, 96], strides = [1, 1]} : vector<64x96xbf16> to vector<16x96xbf16>
    %111 = vector.extract_strided_slice %110 {offsets = [0, 0], sizes = [16, 16], strides = [1, 1]} : vector<16x96xbf16> to vector<16x16xbf16>
    %112 = vector.extract_strided_slice %110 {offsets = [0, 32], sizes = [16, 16], strides = [1, 1]} : vector<16x96xbf16> to vector<16x16xbf16>
    %113 = vector.extract_strided_slice %110 {offsets = [0, 64], sizes = [16, 16], strides = [1, 1]} : vector<16x96xbf16> to vector<16x16xbf16>
    %cst_41 = arith.constant dense<0.000000e+00> : vector<16x16xf32>
    %114 = tpu.matmul %111, %112, %cst_41 {dimension_numbers = #tpu.dot_dimension_numbers<[1], [1], [0], [0], [0, 0, 1, 0], [], []>} : vector<16x16xbf16>, vector<16x16xbf16>, vector<16x16xf32> -> vector<16x16xf32>
    %c0_42 = arith.constant 0 : index
    %c0_43 = arith.constant 0 : index
    %c0_44 = arith.constant 0 : index
    %115 = vector.load %arg7[%c0_42, %c0_43, %c0_44] : memref<2x16x16xf32, #tpu.memory_space<vmem>>, vector<1x16x16xf32>
    %116 = vector.shape_cast %115 : vector<1x16x16xf32> to vector<16x16xf32>
    %117 = arith.addf %114, %116 : vector<16x16xf32>
    %cst_45 = arith.constant dense<0xFF800000> : vector<16xf32>
    %118 = vector.multi_reduction <maximumf>, %117, %cst_45 [1] : vector<16x16xf32> to vector<16xf32>
    %119 = vector.shape_cast %118 : vector<16xf32> to vector<16x1xf32>
    %120 = vector.broadcast %119 : vector<16x1xf32> to vector<16x16xf32>
    %121 = arith.subf %117, %120 : vector<16x16xf32>
    %122 = math.exp %121 : vector<16x16xf32>
    %cst_46 = arith.constant dense<0.000000e+00> : vector<16xf32>
    %123 = vector.multi_reduction <add>, %122, %cst_46 [1] : vector<16x16xf32> to vector<16xf32>
    %124 = vector.shape_cast %123 : vector<16xf32> to vector<16x1xf32>
    %125 = tpu.reciprocal %124 {approx = true} : vector<16x1xf32> -> vector<16x1xf32>
    %126 = vector.broadcast %125 : vector<16x1xf32> to vector<16x16xf32>
    %127 = arith.mulf %122, %126 : vector<16x16xf32>
    %128 = arith.truncf %127 : vector<16x16xf32> to vector<16x16xbf16>
    %cst_47 = arith.constant dense<0.000000e+00> : vector<16x16xf32>
    %129 = tpu.matmul %128, %113, %cst_47 {dimension_numbers = #tpu.dot_dimension_numbers<[1], [0], [0], [1], [0, 0, 1, 1], [], []>} : vector<16x16xbf16>, vector<16x16xbf16>, vector<16x16xf32> -> vector<16x16xf32>
    %130 = vector.extract_strided_slice %110 {offsets = [0, 16], sizes = [16, 16], strides = [1, 1]} : vector<16x96xbf16> to vector<16x16xbf16>
    %131 = vector.extract_strided_slice %110 {offsets = [0, 48], sizes = [16, 16], strides = [1, 1]} : vector<16x96xbf16> to vector<16x16xbf16>
    %132 = vector.extract_strided_slice %110 {offsets = [0, 80], sizes = [16, 16], strides = [1, 1]} : vector<16x96xbf16> to vector<16x16xbf16>
    %cst_48 = arith.constant dense<0.000000e+00> : vector<16x16xf32>
    %133 = tpu.matmul %130, %131, %cst_48 {dimension_numbers = #tpu.dot_dimension_numbers<[1], [1], [0], [0], [0, 0, 1, 0], [], []>} : vector<16x16xbf16>, vector<16x16xbf16>, vector<16x16xf32> -> vector<16x16xf32>
    %c1_49 = arith.constant 1 : index
    %c0_50 = arith.constant 0 : index
    %c0_51 = arith.constant 0 : index
    %134 = vector.load %arg7[%c1_49, %c0_50, %c0_51] : memref<2x16x16xf32, #tpu.memory_space<vmem>>, vector<1x16x16xf32>
    %135 = vector.shape_cast %134 : vector<1x16x16xf32> to vector<16x16xf32>
    %136 = arith.addf %133, %135 : vector<16x16xf32>
    %cst_52 = arith.constant dense<0xFF800000> : vector<16xf32>
    %137 = vector.multi_reduction <maximumf>, %136, %cst_52 [1] : vector<16x16xf32> to vector<16xf32>
    %138 = vector.shape_cast %137 : vector<16xf32> to vector<16x1xf32>
    %139 = vector.broadcast %138 : vector<16x1xf32> to vector<16x16xf32>
    %140 = arith.subf %136, %139 : vector<16x16xf32>
    %141 = math.exp %140 : vector<16x16xf32>
    %cst_53 = arith.constant dense<0.000000e+00> : vector<16xf32>
    %142 = vector.multi_reduction <add>, %141, %cst_53 [1] : vector<16x16xf32> to vector<16xf32>
    %143 = vector.shape_cast %142 : vector<16xf32> to vector<16x1xf32>
    %144 = tpu.reciprocal %143 {approx = true} : vector<16x1xf32> -> vector<16x1xf32>
    %145 = vector.broadcast %144 : vector<16x1xf32> to vector<16x16xf32>
    %146 = arith.mulf %141, %145 : vector<16x16xf32>
    %147 = arith.truncf %146 : vector<16x16xf32> to vector<16x16xbf16>
    %cst_54 = arith.constant dense<0.000000e+00> : vector<16x16xf32>
    %148 = tpu.matmul %147, %132, %cst_54 {dimension_numbers = #tpu.dot_dimension_numbers<[1], [0], [0], [1], [0, 0, 1, 1], [], []>} : vector<16x16xbf16>, vector<16x16xbf16>, vector<16x16xf32> -> vector<16x16xf32>
    %149 = tpu.concatenate %129, %148 in 1 : vector<16x16xf32>, vector<16x16xf32> -> vector<16x32xf32>
    %150 = vector.extract_strided_slice %28 {offsets = [48, 0], sizes = [16, 96], strides = [1, 1]} : vector<64x96xbf16> to vector<16x96xbf16>
    %151 = vector.extract_strided_slice %150 {offsets = [0, 0], sizes = [16, 16], strides = [1, 1]} : vector<16x96xbf16> to vector<16x16xbf16>
    %152 = vector.extract_strided_slice %150 {offsets = [0, 32], sizes = [16, 16], strides = [1, 1]} : vector<16x96xbf16> to vector<16x16xbf16>
    %153 = vector.extract_strided_slice %150 {offsets = [0, 64], sizes = [16, 16], strides = [1, 1]} : vector<16x96xbf16> to vector<16x16xbf16>
    %cst_55 = arith.constant dense<0.000000e+00> : vector<16x16xf32>
    %154 = tpu.matmul %151, %152, %cst_55 {dimension_numbers = #tpu.dot_dimension_numbers<[1], [1], [0], [0], [0, 0, 1, 0], [], []>} : vector<16x16xbf16>, vector<16x16xbf16>, vector<16x16xf32> -> vector<16x16xf32>
    %c0_56 = arith.constant 0 : index
    %c0_57 = arith.constant 0 : index
    %c0_58 = arith.constant 0 : index
    %155 = vector.load %arg7[%c0_56, %c0_57, %c0_58] : memref<2x16x16xf32, #tpu.memory_space<vmem>>, vector<1x16x16xf32>
    %156 = vector.shape_cast %155 : vector<1x16x16xf32> to vector<16x16xf32>
    %157 = arith.addf %154, %156 : vector<16x16xf32>
    %cst_59 = arith.constant dense<0xFF800000> : vector<16xf32>
    %158 = vector.multi_reduction <maximumf>, %157, %cst_59 [1] : vector<16x16xf32> to vector<16xf32>
    %159 = vector.shape_cast %158 : vector<16xf32> to vector<16x1xf32>
    %160 = vector.broadcast %159 : vector<16x1xf32> to vector<16x16xf32>
    %161 = arith.subf %157, %160 : vector<16x16xf32>
    %162 = math.exp %161 : vector<16x16xf32>
    %cst_60 = arith.constant dense<0.000000e+00> : vector<16xf32>
    %163 = vector.multi_reduction <add>, %162, %cst_60 [1] : vector<16x16xf32> to vector<16xf32>
    %164 = vector.shape_cast %163 : vector<16xf32> to vector<16x1xf32>
    %165 = tpu.reciprocal %164 {approx = true} : vector<16x1xf32> -> vector<16x1xf32>
    %166 = vector.broadcast %165 : vector<16x1xf32> to vector<16x16xf32>
    %167 = arith.mulf %162, %166 : vector<16x16xf32>
    %168 = arith.truncf %167 : vector<16x16xf32> to vector<16x16xbf16>
    %cst_61 = arith.constant dense<0.000000e+00> : vector<16x16xf32>
    %169 = tpu.matmul %168, %153, %cst_61 {dimension_numbers = #tpu.dot_dimension_numbers<[1], [0], [0], [1], [0, 0, 1, 1], [], []>} : vector<16x16xbf16>, vector<16x16xbf16>, vector<16x16xf32> -> vector<16x16xf32>
    %170 = vector.extract_strided_slice %150 {offsets = [0, 16], sizes = [16, 16], strides = [1, 1]} : vector<16x96xbf16> to vector<16x16xbf16>
    %171 = vector.extract_strided_slice %150 {offsets = [0, 48], sizes = [16, 16], strides = [1, 1]} : vector<16x96xbf16> to vector<16x16xbf16>
    %172 = vector.extract_strided_slice %150 {offsets = [0, 80], sizes = [16, 16], strides = [1, 1]} : vector<16x96xbf16> to vector<16x16xbf16>
    %cst_62 = arith.constant dense<0.000000e+00> : vector<16x16xf32>
    %173 = tpu.matmul %170, %171, %cst_62 {dimension_numbers = #tpu.dot_dimension_numbers<[1], [1], [0], [0], [0, 0, 1, 0], [], []>} : vector<16x16xbf16>, vector<16x16xbf16>, vector<16x16xf32> -> vector<16x16xf32>
    %c1_63 = arith.constant 1 : index
    %c0_64 = arith.constant 0 : index
    %c0_65 = arith.constant 0 : index
    %174 = vector.load %arg7[%c1_63, %c0_64, %c0_65] : memref<2x16x16xf32, #tpu.memory_space<vmem>>, vector<1x16x16xf32>
    %175 = vector.shape_cast %174 : vector<1x16x16xf32> to vector<16x16xf32>
    %176 = arith.addf %173, %175 : vector<16x16xf32>
    %cst_66 = arith.constant dense<0xFF800000> : vector<16xf32>
    %177 = vector.multi_reduction <maximumf>, %176, %cst_66 [1] : vector<16x16xf32> to vector<16xf32>
    %178 = vector.shape_cast %177 : vector<16xf32> to vector<16x1xf32>
    %179 = vector.broadcast %178 : vector<16x1xf32> to vector<16x16xf32>
    %180 = arith.subf %176, %179 : vector<16x16xf32>
    %181 = math.exp %180 : vector<16x16xf32>
    %cst_67 = arith.constant dense<0.000000e+00> : vector<16xf32>
    %182 = vector.multi_reduction <add>, %181, %cst_67 [1] : vector<16x16xf32> to vector<16xf32>
    %183 = vector.shape_cast %182 : vector<16xf32> to vector<16x1xf32>
    %184 = tpu.reciprocal %183 {approx = true} : vector<16x1xf32> -> vector<16x1xf32>
    %185 = vector.broadcast %184 : vector<16x1xf32> to vector<16x16xf32>
    %186 = arith.mulf %181, %185 : vector<16x16xf32>
    %187 = arith.truncf %186 : vector<16x16xf32> to vector<16x16xbf16>
    %cst_68 = arith.constant dense<0.000000e+00> : vector<16x16xf32>
    %188 = tpu.matmul %187, %172, %cst_68 {dimension_numbers = #tpu.dot_dimension_numbers<[1], [0], [0], [1], [0, 0, 1, 1], [], []>} : vector<16x16xbf16>, vector<16x16xbf16>, vector<16x16xf32> -> vector<16x16xf32>
    %189 = tpu.concatenate %169, %188 in 1 : vector<16x16xf32>, vector<16x16xf32> -> vector<16x32xf32>
    %190 = tpu.concatenate %69, %109, %149, %189 in 0 : vector<16x32xf32>, vector<16x32xf32>, vector<16x32xf32>, vector<16x32xf32> -> vector<64x32xf32>
    %191 = arith.truncf %190 : vector<64x32xf32> to vector<64x32xbf16>
    %cst_69 = arith.constant dense<0.000000e+00> : vector<64x32xf32>
    %192 = tpu.matmul %191, %29, %cst_69 {dimension_numbers = #tpu.dot_dimension_numbers<[1], [0], [0], [1], [0, 0, 1, 1], [], []>} : vector<64x32xbf16>, vector<32x32xbf16>, vector<64x32xf32> -> vector<64x32xf32>
    %193 = arith.addf %0, %192 : vector<64x32xf32>
    %c0_70 = arith.constant 0 : index
    %c0_71 = arith.constant 0 : index
    %194 = vector.load %arg6[%c0_70, %c0_71] : memref<1x32xf32, #tpu.memory_space<vmem>>, vector<1x32xf32>
    %195 = vector.broadcast %194 : vector<1x32xf32> to vector<64x32xf32>
    %196 = arith.addf %193, %195 : vector<64x32xf32>
    %c0_72 = arith.constant 0 : index
    %c0_73 = arith.constant 0 : index
    %197 = vector.load %arg8[%c0_72, %c0_73] : memref<64x32xf32, #tpu.memory_space<vmem>>, vector<64x32xf32>
    tpu.vector_store %arg8[%c0_72, %c0_73], %196 {strides = array<i32>} : memref<64x32xf32, #tpu.memory_space<vmem>>, vector<64x32xf32>,
    return
  }
  func.func @transform_0(%arg0: i32) -> (i32, i32) {
    %c0_i32 = arith.constant 0 : i32
    %c0_i32_0 = arith.constant 0 : i32
    return %arg0, %c0_i32 : i32, i32
  }
  func.func @transform_1(%arg0: i32) -> (i32, i32) {
    %c0_i32 = arith.constant 0 : i32
    %c0_i32_0 = arith.constant 0 : i32
    %c0_i32_1 = arith.constant 0 : i32
    return %c0_i32, %c0_i32_0 : i32, i32
  }
  func.func @transform_2(%arg0: i32) -> (i32, i32) {
    %c0_i32 = arith.constant 0 : i32
    %c0_i32_0 = arith.constant 0 : i32
    %c0_i32_1 = arith.constant 0 : i32
    return %c0_i32, %c0_i32_0 : i32, i32
  }
  func.func @transform_3(%arg0: i32) -> (i32, i32) {
    %c0_i32 = arith.constant 0 : i32
    %c0_i32_0 = arith.constant 0 : i32
    %c0_i32_1 = arith.constant 0 : i32
    return %c0_i32, %c0_i32_0 : i32, i32
  }
  func.func @transform_4(%arg0: i32) -> (i32, i32) {
    %c0_i32 = arith.constant 0 : i32
    %c0_i32_0 = arith.constant 0 : i32
    %c0_i32_1 = arith.constant 0 : i32
    return %c0_i32, %c0_i32_0 : i32, i32
  }
  func.func @transform_5(%arg0: i32) -> (i32, i32) {
    %c0_i32 = arith.constant 0 : i32
    %c0_i32_0 = arith.constant 0 : i32
    %c0_i32_1 = arith.constant 0 : i32
    return %c0_i32, %c0_i32_0 : i32, i32
  }
  func.func @transform_6(%arg0: i32) -> (i32, i32, i32) {
    %c0_i32 = arith.constant 0 : i32
    %c0_i32_0 = arith.constant 0 : i32
    %c0_i32_1 = arith.constant 0 : i32
    %c0_i32_2 = arith.constant 0 : i32
    return %c0_i32, %c0_i32_0, %c0_i32_1 : i32, i32, i32
  }
  func.func @transform_7(%arg0: i32) -> (i32, i32) {
    %c0_i32 = arith.constant 0 : i32
    %c0_i32_0 = arith.constant 0 : i32
    return %arg0, %c0_i32 : i32, i32
  }
}

module attributes {stable_mosaic.version = 11 : i64} {
  func.func @_ff_block_kernel(%arg0: i32, %arg1: memref<128x32xf32, #tpu.memory_space<vmem>>, %arg2: memref<1x32xf32, #tpu.memory_space<vmem>>, %arg3: memref<1x32xf32, #tpu.memory_space<vmem>>, %arg4: memref<32x128xbf16, #tpu.memory_space<vmem>>, %arg5: memref<1x128xf32, #tpu.memory_space<vmem>>, %arg6: memref<128x32xbf16, #tpu.memory_space<vmem>>, %arg7: memref<1x32xf32, #tpu.memory_space<vmem>>, %arg8: memref<1x32xf32, #tpu.memory_space<vmem>>, %arg9: memref<1x32xf32, #tpu.memory_space<vmem>>, %arg10: memref<128x32xf32, #tpu.memory_space<vmem>>) attributes {dimension_semantics = [#tpu.dimension_semantics<parallel>], iteration_bounds = array<i64: 1>, scalar_prefetch = 0 : i64, scratch_operands = 0 : i64, tpu.core_type = #tpu.core_type<tc>, window_params = [{transform_indices = @transform_0, window_bounds = array<i64: 128, 32>}, {pipeline_mode = #tpu.pipeline_mode<synchronous>, transform_indices = @transform_1, window_bounds = array<i64: 1, 32>}, {pipeline_mode = #tpu.pipeline_mode<synchronous>, transform_indices = @transform_2, window_bounds = array<i64: 1, 32>}, {pipeline_mode = #tpu.pipeline_mode<synchronous>, transform_indices = @transform_3, window_bounds = array<i64: 32, 128>}, {pipeline_mode = #tpu.pipeline_mode<synchronous>, transform_indices = @transform_4, window_bounds = array<i64: 1, 128>}, {pipeline_mode = #tpu.pipeline_mode<synchronous>, transform_indices = @transform_5, window_bounds = array<i64: 128, 32>}, {pipeline_mode = #tpu.pipeline_mode<synchronous>, transform_indices = @transform_6, window_bounds = array<i64: 1, 32>}, {pipeline_mode = #tpu.pipeline_mode<synchronous>, transform_indices = @transform_7, window_bounds = array<i64: 1, 32>}, {pipeline_mode = #tpu.pipeline_mode<synchronous>, transform_indices = @transform_8, window_bounds = array<i64: 1, 32>}, {transform_indices = @transform_9, window_bounds = array<i64: 128, 32>}]} {
    %c0 = arith.constant 0 : index
    %c0_0 = arith.constant 0 : index
    %0 = vector.load %arg1[%c0, %c0_0] : memref<128x32xf32, #tpu.memory_space<vmem>>, vector<128x32xf32>
    %cst = arith.constant dense<0.000000e+00> : vector<128xf32>
    %1 = vector.multi_reduction <add>, %0, %cst [1] : vector<128x32xf32> to vector<128xf32>
    %2 = vector.shape_cast %1 : vector<128xf32> to vector<128x1xf32>
    %cst_1 = arith.constant 3.200000e+01 : f32
    %3 = vector.broadcast %cst_1 : f32 to vector<128x1xf32>
    %4 = arith.divf %2, %3 : vector<128x1xf32>
    %5 = vector.broadcast %4 : vector<128x1xf32> to vector<128x32xf32>
    %6 = arith.subf %0, %5 : vector<128x32xf32>
    %7 = arith.mulf %6, %6 : vector<128x32xf32>
    %cst_2 = arith.constant dense<0.000000e+00> : vector<128xf32>
    %8 = vector.multi_reduction <add>, %7, %cst_2 [1] : vector<128x32xf32> to vector<128xf32>
    %9 = vector.shape_cast %8 : vector<128xf32> to vector<128x1xf32>
    %cst_3 = arith.constant 3.200000e+01 : f32
    %10 = vector.broadcast %cst_3 : f32 to vector<128x1xf32>
    %11 = arith.divf %9, %10 : vector<128x1xf32>
    %12 = vector.broadcast %4 : vector<128x1xf32> to vector<128x32xf32>
    %13 = arith.subf %0, %12 : vector<128x32xf32>
    %cst_4 = arith.constant 9.99999974E-6 : f32
    %14 = vector.broadcast %cst_4 : f32 to vector<128x1xf32>
    %15 = arith.addf %11, %14 : vector<128x1xf32>
    %16 = math.rsqrt %15 : vector<128x1xf32>
    %17 = vector.broadcast %16 : vector<128x1xf32> to vector<128x32xf32>
    %18 = arith.mulf %13, %17 : vector<128x32xf32>
    %c0_5 = arith.constant 0 : index
    %c0_6 = arith.constant 0 : index
    %19 = vector.load %arg2[%c0_5, %c0_6] : memref<1x32xf32, #tpu.memory_space<vmem>>, vector<1x32xf32>
    %20 = vector.broadcast %19 : vector<1x32xf32> to vector<128x32xf32>
    %21 = arith.mulf %18, %20 : vector<128x32xf32>
    %c0_7 = arith.constant 0 : index
    %c0_8 = arith.constant 0 : index
    %22 = vector.load %arg3[%c0_7, %c0_8] : memref<1x32xf32, #tpu.memory_space<vmem>>, vector<1x32xf32>
    %23 = vector.broadcast %22 : vector<1x32xf32> to vector<128x32xf32>
    %24 = arith.addf %21, %23 : vector<128x32xf32>
    %25 = arith.truncf %24 : vector<128x32xf32> to vector<128x32xbf16>
    %c0_9 = arith.constant 0 : index
    %c0_10 = arith.constant 0 : index
    %26 = vector.load %arg4[%c0_9, %c0_10] : memref<32x128xbf16, #tpu.memory_space<vmem>>, vector<32x128xbf16>
    %cst_11 = arith.constant dense<0.000000e+00> : vector<128x128xf32>
    %27 = tpu.matmul %25, %26, %cst_11 {dimension_numbers = #tpu.dot_dimension_numbers<[1], [0], [0], [1], [0, 0, 1, 1], [], []>} : vector<128x32xbf16>, vector<32x128xbf16>, vector<128x128xf32> -> vector<128x128xf32>
    %c0_12 = arith.constant 0 : index
    %c0_13 = arith.constant 0 : index
    %28 = vector.load %arg5[%c0_12, %c0_13] : memref<1x128xf32, #tpu.memory_space<vmem>>, vector<1x128xf32>
    %29 = vector.broadcast %28 : vector<1x128xf32> to vector<128x128xf32>
    %30 = arith.addf %27, %29 : vector<128x128xf32>
    %31 = arith.mulf %30, %30 : vector<128x128xf32>
    %32 = arith.mulf %30, %31 : vector<128x128xf32>
    %cst_14 = arith.constant 4.471500e-02 : f32
    %33 = vector.broadcast %cst_14 : f32 to vector<128x128xf32>
    %34 = arith.mulf %33, %32 : vector<128x128xf32>
    %35 = arith.addf %30, %34 : vector<128x128xf32>
    %cst_15 = arith.constant 0.797884583 : f32
    %36 = vector.broadcast %cst_15 : f32 to vector<128x128xf32>
    %37 = arith.mulf %36, %35 : vector<128x128xf32>
    %38 = math.tanh %37 : vector<128x128xf32>
    %cst_16 = arith.constant 1.000000e+00 : f32
    %39 = vector.broadcast %cst_16 : f32 to vector<128x128xf32>
    %40 = arith.addf %39, %38 : vector<128x128xf32>
    %cst_17 = arith.constant 5.000000e-01 : f32
    %41 = vector.broadcast %cst_17 : f32 to vector<128x128xf32>
    %42 = arith.mulf %41, %40 : vector<128x128xf32>
    %43 = arith.mulf %30, %42 : vector<128x128xf32>
    %44 = arith.truncf %43 : vector<128x128xf32> to vector<128x128xbf16>
    %c0_18 = arith.constant 0 : index
    %c0_19 = arith.constant 0 : index
    %45 = vector.load %arg6[%c0_18, %c0_19] : memref<128x32xbf16, #tpu.memory_space<vmem>>, vector<128x32xbf16>
    %cst_20 = arith.constant dense<0.000000e+00> : vector<128x32xf32>
    %46 = tpu.matmul %44, %45, %cst_20 {dimension_numbers = #tpu.dot_dimension_numbers<[1], [0], [0], [1], [0, 0, 1, 1], [], []>} : vector<128x128xbf16>, vector<128x32xbf16>, vector<128x32xf32> -> vector<128x32xf32>
    %c0_21 = arith.constant 0 : index
    %c0_22 = arith.constant 0 : index
    %47 = vector.load %arg7[%c0_21, %c0_22] : memref<1x32xf32, #tpu.memory_space<vmem>>, vector<1x32xf32>
    %48 = vector.broadcast %47 : vector<1x32xf32> to vector<128x32xf32>
    %49 = arith.addf %46, %48 : vector<128x32xf32>
    %50 = arith.addf %0, %49 : vector<128x32xf32>
    %cst_23 = arith.constant dense<0.000000e+00> : vector<128xf32>
    %51 = vector.multi_reduction <add>, %50, %cst_23 [1] : vector<128x32xf32> to vector<128xf32>
    %52 = vector.shape_cast %51 : vector<128xf32> to vector<128x1xf32>
    %cst_24 = arith.constant 3.200000e+01 : f32
    %53 = vector.broadcast %cst_24 : f32 to vector<128x1xf32>
    %54 = arith.divf %52, %53 : vector<128x1xf32>
    %55 = vector.broadcast %54 : vector<128x1xf32> to vector<128x32xf32>
    %56 = arith.subf %50, %55 : vector<128x32xf32>
    %57 = arith.mulf %56, %56 : vector<128x32xf32>
    %cst_25 = arith.constant dense<0.000000e+00> : vector<128xf32>
    %58 = vector.multi_reduction <add>, %57, %cst_25 [1] : vector<128x32xf32> to vector<128xf32>
    %59 = vector.shape_cast %58 : vector<128xf32> to vector<128x1xf32>
    %cst_26 = arith.constant 3.200000e+01 : f32
    %60 = vector.broadcast %cst_26 : f32 to vector<128x1xf32>
    %61 = arith.divf %59, %60 : vector<128x1xf32>
    %62 = vector.broadcast %54 : vector<128x1xf32> to vector<128x32xf32>
    %63 = arith.subf %50, %62 : vector<128x32xf32>
    %cst_27 = arith.constant 9.99999974E-6 : f32
    %64 = vector.broadcast %cst_27 : f32 to vector<128x1xf32>
    %65 = arith.addf %61, %64 : vector<128x1xf32>
    %66 = math.rsqrt %65 : vector<128x1xf32>
    %67 = vector.broadcast %66 : vector<128x1xf32> to vector<128x32xf32>
    %68 = arith.mulf %63, %67 : vector<128x32xf32>
    %c0_28 = arith.constant 0 : index
    %c0_29 = arith.constant 0 : index
    %69 = vector.load %arg8[%c0_28, %c0_29] : memref<1x32xf32, #tpu.memory_space<vmem>>, vector<1x32xf32>
    %70 = vector.broadcast %69 : vector<1x32xf32> to vector<128x32xf32>
    %71 = arith.mulf %68, %70 : vector<128x32xf32>
    %c0_30 = arith.constant 0 : index
    %c0_31 = arith.constant 0 : index
    %72 = vector.load %arg9[%c0_30, %c0_31] : memref<1x32xf32, #tpu.memory_space<vmem>>, vector<1x32xf32>
    %73 = vector.broadcast %72 : vector<1x32xf32> to vector<128x32xf32>
    %74 = arith.addf %71, %73 : vector<128x32xf32>
    %c0_32 = arith.constant 0 : index
    %c0_33 = arith.constant 0 : index
    %75 = vector.load %arg10[%c0_32, %c0_33] : memref<128x32xf32, #tpu.memory_space<vmem>>, vector<128x32xf32>
    tpu.vector_store %arg10[%c0_32, %c0_33], %74 {strides = array<i32>} : memref<128x32xf32, #tpu.memory_space<vmem>>, vector<128x32xf32>,
    return
  }
  func.func @transform_0(%arg0: i32) -> (i32, i32) {
    %c0_i32 = arith.constant 0 : i32
    %c0_i32_0 = arith.constant 0 : i32
    return %arg0, %c0_i32 : i32, i32
  }
  func.func @transform_1(%arg0: i32) -> (i32, i32) {
    %c0_i32 = arith.constant 0 : i32
    %c0_i32_0 = arith.constant 0 : i32
    %c0_i32_1 = arith.constant 0 : i32
    return %c0_i32, %c0_i32_0 : i32, i32
  }
  func.func @transform_2(%arg0: i32) -> (i32, i32) {
    %c0_i32 = arith.constant 0 : i32
    %c0_i32_0 = arith.constant 0 : i32
    %c0_i32_1 = arith.constant 0 : i32
    return %c0_i32, %c0_i32_0 : i32, i32
  }
  func.func @transform_3(%arg0: i32) -> (i32, i32) {
    %c0_i32 = arith.constant 0 : i32
    %c0_i32_0 = arith.constant 0 : i32
    %c0_i32_1 = arith.constant 0 : i32
    return %c0_i32, %c0_i32_0 : i32, i32
  }
  func.func @transform_4(%arg0: i32) -> (i32, i32) {
    %c0_i32 = arith.constant 0 : i32
    %c0_i32_0 = arith.constant 0 : i32
    %c0_i32_1 = arith.constant 0 : i32
    return %c0_i32, %c0_i32_0 : i32, i32
  }
  func.func @transform_5(%arg0: i32) -> (i32, i32) {
    %c0_i32 = arith.constant 0 : i32
    %c0_i32_0 = arith.constant 0 : i32
    %c0_i32_1 = arith.constant 0 : i32
    return %c0_i32, %c0_i32_0 : i32, i32
  }
  func.func @transform_6(%arg0: i32) -> (i32, i32) {
    %c0_i32 = arith.constant 0 : i32
    %c0_i32_0 = arith.constant 0 : i32
    %c0_i32_1 = arith.constant 0 : i32
    return %c0_i32, %c0_i32_0 : i32, i32
  }
  func.func @transform_7(%arg0: i32) -> (i32, i32) {
    %c0_i32 = arith.constant 0 : i32
    %c0_i32_0 = arith.constant 0 : i32
    %c0_i32_1 = arith.constant 0 : i32
    return %c0_i32, %c0_i32_0 : i32, i32
  }
  func.func @transform_8(%arg0: i32) -> (i32, i32) {
    %c0_i32 = arith.constant 0 : i32
    %c0_i32_0 = arith.constant 0 : i32
    %c0_i32_1 = arith.constant 0 : i32
    return %c0_i32, %c0_i32_0 : i32, i32
  }
  func.func @transform_9(%arg0: i32) -> (i32, i32) {
    %c0_i32 = arith.constant 0 : i32
    %c0_i32_0 = arith.constant 0 : i32
    return %arg0, %c0_i32 : i32, i32
  }
}

</mosaic_0001>

<llo_original>
// kernel: video_encoder_forward.8
$region0: #{video_encoder_forward.8}
  #allocation0 [shape = 'u32[]', space=smem, size = 0x4, offset = 0x4, fixed_abs, tag = 'smem constant byte address 0x4 - core index']
  #allocation1 [shape = 'u32[72,128]{1,0:T(1,128)}', space=vmem, size = 0x9000, scoped, tag = 'internal scratch']
  %s0 = inlined_call_operand.vmem [shape: f32[128,32], index: 0, kind: input, shape index: {}]
  %s1 = inlined_call_operand.vmem [shape: f32[1,32], index: 1, kind: input, shape index: {}]
  %s2 = inlined_call_operand.vmem [shape: f32[1,32], index: 2, kind: input, shape index: {}]
  %s3 = inlined_call_operand.vmem [shape: bf16[32,128], index: 3, kind: input, shape index: {}]
  %s4 = inlined_call_operand.vmem [shape: f32[1,128], index: 4, kind: input, shape index: {}]
  %s5 = inlined_call_operand.vmem [shape: bf16[128,32], index: 5, kind: input, shape index: {}]
  %s6 = inlined_call_operand.vmem [shape: f32[1,32], index: 6, kind: input, shape index: {}]
  %s7 = inlined_call_operand.vmem [shape: f32[128,32], index: 7, kind: output, shape index: {}]
  %s8 = sld [smem:[#allocation0]]
  $region38: #{video_encoder_forward.8} parent=0
    _
  %s10 = ssub.s32 1, %s8
  %s11 = scalar_select 0, %s10, %s8
  // Predicated region
  $region2: #{video_encoder_forward.8} parent=0 // pred_check
    _
  $region3: #{video_encoder_forward.8} parent=0 // pred_check_branch
    %13 = sbr.rel (0) target = $region5
  $region4: #{video_encoder_forward.8} parent=0 // pred_region
    _
  $region5: #{video_encoder_forward.8} parent=0 // pred_fallthru
    _
  // Predicated region
  $region6: #{video_encoder_forward.8} parent=0 // pred_check
    _
  $region7: #{video_encoder_forward.8} parent=0 // pred_check_branch
    %15 = sbr.rel (0) target = $region9
  $region8: #{video_encoder_forward.8} parent=0 // pred_region
    _
  $region9: #{video_encoder_forward.8} parent=0 // pred_fallthru
    _
  // Predicated region
  $region10: #{video_encoder_forward.8} parent=0 // pred_check
    _
  $region11: #{video_encoder_forward.8} parent=0 // pred_check_branch
    %17 = sbr.rel (0) target = $region13
  $region12: #{video_encoder_forward.8} parent=0 // pred_region
    _
  $region13: #{video_encoder_forward.8} parent=0 // pred_fallthru
    _
  // Predicated region
  $region14: #{video_encoder_forward.8} parent=0 // pred_check
    _
  $region15: #{video_encoder_forward.8} parent=0 // pred_check_branch
    %19 = sbr.rel (0) target = $region17
  $region16: #{video_encoder_forward.8} parent=0 // pred_region
    _
  $region17: #{video_encoder_forward.8} parent=0 // pred_fallthru
    _
  // Predicated region
  $region18: #{video_encoder_forward.8} parent=0 // pred_check
    _
  $region19: #{video_encoder_forward.8} parent=0 // pred_check_branch
    %21 = sbr.rel (0) target = $region21
  $region20: #{video_encoder_forward.8} parent=0 // pred_region
    _
  $region21: #{video_encoder_forward.8} parent=0 // pred_fallthru
    _
  // Predicated region
  $region22: #{video_encoder_forward.8} parent=0 // pred_check
    _
  $region23: #{video_encoder_forward.8} parent=0 // pred_check_branch
    %23 = sbr.rel (0) target = $region25
  $region24: #{video_encoder_forward.8} parent=0 // pred_region
    _
  $region25: #{video_encoder_forward.8} parent=0 // pred_fallthru
    _
  // Predicated region
  $region26: #{video_encoder_forward.8} parent=0 // pred_check
    _
  $region27: #{video_encoder_forward.8} parent=0 // pred_check_branch
    %25 = sbr.rel (0) target = $region29
  $region28: #{video_encoder_forward.8} parent=0 // pred_region
    _
  $region29: #{video_encoder_forward.8} parent=0 // pred_fallthru
    _
  %v27 = vld [vmem:[%s0] sm:$0xff]
  %v28 = vld [vmem:[%s0 + $0x8] sm:$0xff]
  %v29 = vld [vmem:[%s0 + $0x10] sm:$0xff]
  %v30 = vld [vmem:[%s0 + $0x18] sm:$0xff]
  %v31 = vld [vmem:[%s0 + $0x20] sm:$0xff]
  %v32 = vld [vmem:[%s0 + $0x28] sm:$0xff]
  %v33 = vld [vmem:[%s0 + $0x30] sm:$0xff]
  %v34 = vld [vmem:[%s0 + $0x38] sm:$0xff]
  %v35 = vld [vmem:[%s0 + $0x40] sm:$0xff]
  %v36 = vld [vmem:[%s0 + $0x48] sm:$0xff]
  %v37 = vld [vmem:[%s0 + $0x50] sm:$0xff]
  %v38 = vld [vmem:[%s0 + $0x58] sm:$0xff]
  %v39 = vld [vmem:[%s0 + $0x60] sm:$0xff]
  %v40 = vld [vmem:[%s0 + $0x68] sm:$0xff]
  %v41 = vld [vmem:[%s0 + $0x70] sm:$0xff]
  %v42 = vld [vmem:[%s0 + $0x78] sm:$0xff]
  %vm43 = vcmask 261120
  %v44 = vsel %vm43, %v27, 0.0
  %45 = vadd.xlane.f32.xlu0 %v44
  %v46 = vpop.xlane.xlu0 %45
  %v47 = vsel %vm43, %v28, 0.0
  %48 = vadd.xlane.f32.xlu0 %v47
  %v49 = vpop.xlane.xlu0 %48
  %v50 = vsel %vm43, %v29, 0.0
  %51 = vadd.xlane.f32.xlu0 %v50
  %v52 = vpop.xlane.xlu0 %51
  %v53 = vsel %vm43, %v30, 0.0
  %54 = vadd.xlane.f32.xlu0 %v53
  %v55 = vpop.xlane.xlu0 %54
  %v56 = vsel %vm43, %v31, 0.0
  %57 = vadd.xlane.f32.xlu0 %v56
  %v58 = vpop.xlane.xlu0 %57
  %v59 = vsel %vm43, %v32, 0.0
  %60 = vadd.xlane.f32.xlu0 %v59
  %v61 = vpop.xlane.xlu0 %60
  %v62 = vsel %vm43, %v33, 0.0
  %63 = vadd.xlane.f32.xlu0 %v62
  %v64 = vpop.xlane.xlu0 %63
  %v65 = vsel %vm43, %v34, 0.0
  %66 = vadd.xlane.f32.xlu0 %v65
  %v67 = vpop.xlane.xlu0 %66
  %v68 = vsel %vm43, %v35, 0.0
  %69 = vadd.xlane.f32.xlu0 %v68
  %v70 = vpop.xlane.xlu0 %69
  %v71 = vsel %vm43, %v36, 0.0
  %72 = vadd.xlane.f32.xlu0 %v71
  %v73 = vpop.xlane.xlu0 %72
  %v74 = vsel %vm43, %v37, 0.0
  %75 = vadd.xlane.f32.xlu0 %v74
  %v76 = vpop.xlane.xlu0 %75
  %v77 = vsel %vm43, %v38, 0.0
  %78 = vadd.xlane.f32.xlu0 %v77
  %v79 = vpop.xlane.xlu0 %78
  %v80 = vsel %vm43, %v39, 0.0
  %81 = vadd.xlane.f32.xlu0 %v80
  %v82 = vpop.xlane.xlu0 %81
  %v83 = vsel %vm43, %v40, 0.0
  %84 = vadd.xlane.f32.xlu0 %v83
  %v85 = vpop.xlane.xlu0 %84
  %v86 = vsel %vm43, %v41, 0.0
  %87 = vadd.xlane.f32.xlu0 %v86
  %v88 = vpop.xlane.xlu0 %87
  %v89 = vsel %vm43, %v42, 0.0
  %90 = vadd.xlane.f32.xlu0 %v89
  %v91 = vpop.xlane.xlu0 %90
  %v92 = vrcp.pop 32.0
  %v93 = vmul.f32 32.0, %v92
  %v94 = vsub.f32 1.0, %v93
  %v95 = vmul.f32 %v92, %v94
  %v96 = vadd.f32 %v92, %v95
  %vm97 = vweird.f32 %v92
  %v98 = vsel %vm97, %v92, %v96
  %v99 = vmul.f32 %v46, %v98
  %v100 = vmul.f32 %v49, %v98
  %v101 = vmul.f32 %v52, %v98
  %v102 = vmul.f32 %v55, %v98
  %v103 = vmul.f32 %v58, %v98
  %v104 = vmul.f32 %v61, %v98
  %v105 = vmul.f32 %v64, %v98
  %v106 = vmul.f32 %v67, %v98
  %v107 = vmul.f32 %v70, %v98
  %v108 = vmul.f32 %v73, %v98
  %v109 = vmul.f32 %v76, %v98
  %v110 = vmul.f32 %v79, %v98
  %v111 = vmul.f32 %v82, %v98
  %v112 = vmul.f32 %v85, %v98
  %v113 = vmul.f32 %v88, %v98
  %v114 = vmul.f32 %v91, %v98
  %v115 = vsub.f32 %v27, %v99
  %v116 = vsub.f32 %v28, %v100
  %v117 = vsub.f32 %v29, %v101
  %v118 = vsub.f32 %v30, %v102
  %v119 = vsub.f32 %v31, %v103
  %v120 = vsub.f32 %v32, %v104
  %v121 = vsub.f32 %v33, %v105
  %v122 = vsub.f32 %v34, %v106
  %v123 = vsub.f32 %v35, %v107
  %v124 = vsub.f32 %v36, %v108
  %v125 = vsub.f32 %v37, %v109
  %v126 = vsub.f32 %v38, %v110
  %v127 = vsub.f32 %v39, %v111
  %v128 = vsub.f32 %v40, %v112
  %v129 = vsub.f32 %v41, %v113
  %v130 = vsub.f32 %v42, %v114
  %v131 = vmul.f32 %v115, %v115
  %v132 = vmul.f32 %v116, %v116
  %v133 = vmul.f32 %v117, %v117
  %v134 = vmul.f32 %v118, %v118
  %v135 = vmul.f32 %v119, %v119
  %v136 = vmul.f32 %v120, %v120
  %v137 = vmul.f32 %v121, %v121
  %v138 = vmul.f32 %v122, %v122
  %v139 = vmul.f32 %v123, %v123
  %v140 = vmul.f32 %v124, %v124
  %v141 = vmul.f32 %v125, %v125
  %v142 = vmul.f32 %v126, %v126
  %v143 = vmul.f32 %v127, %v127
  %v144 = vmul.f32 %v128, %v128
  %v145 = vmul.f32 %v129, %v129
  %v146 = vmul.f32 %v130, %v130
  %v147 = vsel %vm43, %v131, 0.0
  %148 = vadd.xlane.f32.xlu0 %v147
  %v149 = vpop.xlane.xlu0 %148
  %v150 = vsel %vm43, %v132, 0.0
  %151 = vadd.xlane.f32.xlu0 %v150
  %v152 = vpop.xlane.xlu0 %151
  %v153 = vsel %vm43, %v133, 0.0
  %154 = vadd.xlane.f32.xlu0 %v153
  %v155 = vpop.xlane.xlu0 %154
  %v156 = vsel %vm43, %v134, 0.0
  %157 = vadd.xlane.f32.xlu0 %v156
  %v158 = vpop.xlane.xlu0 %157
  %v159 = vsel %vm43, %v135, 0.0
  %160 = vadd.xlane.f32.xlu0 %v159
  %v161 = vpop.xlane.xlu0 %160
  %v162 = vsel %vm43, %v136, 0.0
  %163 = vadd.xlane.f32.xlu0 %v162
  %v164 = vpop.xlane.xlu0 %163
  %v165 = vsel %vm43, %v137, 0.0
  %166 = vadd.xlane.f32.xlu0 %v165
  %v167 = vpop.xlane.xlu0 %166
  %v168 = vsel %vm43, %v138, 0.0
  %169 = vadd.xlane.f32.xlu0 %v168
  %v170 = vpop.xlane.xlu0 %169
  %v171 = vsel %vm43, %v139, 0.0
  %172 = vadd.xlane.f32.xlu0 %v171
  %v173 = vpop.xlane.xlu0 %172
  %v174 = vsel %vm43, %v140, 0.0
  %175 = vadd.xlane.f32.xlu0 %v174
  %v176 = vpop.xlane.xlu0 %175
  %v177 = vsel %vm43, %v141, 0.0
  %178 = vadd.xlane.f32.xlu0 %v177
  %v179 = vpop.xlane.xlu0 %178
  %v180 = vsel %vm43, %v142, 0.0
  %181 = vadd.xlane.f32.xlu0 %v180
  %v182 = vpop.xlane.xlu0 %181
  %v183 = vsel %vm43, %v143, 0.0
  %184 = vadd.xlane.f32.xlu0 %v183
  %v185 = vpop.xlane.xlu0 %184
  %v186 = vsel %vm43, %v144, 0.0
  %187 = vadd.xlane.f32.xlu0 %v186
  %v188 = vpop.xlane.xlu0 %187
  %v189 = vsel %vm43, %v145, 0.0
  %190 = vadd.xlane.f32.xlu0 %v189
  %v191 = vpop.xlane.xlu0 %190
  %v192 = vsel %vm43, %v146, 0.0
  %193 = vadd.xlane.f32.xlu0 %v192
  %v194 = vpop.xlane.xlu0 %193
  %v195 = vmul.f32 %v149, %v98
  %v196 = vmul.f32 %v152, %v98
  %v197 = vmul.f32 %v155, %v98
  %v198 = vmul.f32 %v158, %v98
  %v199 = vmul.f32 %v161, %v98
  %v200 = vmul.f32 %v164, %v98
  %v201 = vmul.f32 %v167, %v98
  %v202 = vmul.f32 %v170, %v98
  %v203 = vmul.f32 %v173, %v98
  %v204 = vmul.f32 %v176, %v98
  %v205 = vmul.f32 %v179, %v98
  %v206 = vmul.f32 %v182, %v98
  %v207 = vmul.f32 %v185, %v98
  %v208 = vmul.f32 %v188, %v98
  %v209 = vmul.f32 %v191, %v98
  %v210 = vmul.f32 %v194, %v98
  %v211 = vadd.f32 %v195, 1e-05
  %v212 = vadd.f32 %v196, 1e-05
  %v213 = vadd.f32 %v197, 1e-05
  %v214 = vadd.f32 %v198, 1e-05
  %v215 = vadd.f32 %v199, 1e-05
  %v216 = vadd.f32 %v200, 1e-05
  %v217 = vadd.f32 %v201, 1e-05
  %v218 = vadd.f32 %v202, 1e-05
  %v219 = vadd.f32 %v203, 1e-05
  %v220 = vadd.f32 %v204, 1e-05
  %v221 = vadd.f32 %v205, 1e-05
  %v222 = vadd.f32 %v206, 1e-05
  %v223 = vadd.f32 %v207, 1e-05
  %v224 = vadd.f32 %v208, 1e-05
  %v225 = vadd.f32 %v209, 1e-05
  %v226 = vadd.f32 %v210, 1e-05
  %v227 = vrsqrt.pop %v211
  %v228 = vmul.f32 %v227, %v211
  %v229 = vmul.f32 %v228, %v227
  %v230 = vmul.f32 0.5, %v229
  %v231 = vsub.f32 1.5, %v230
  %v232 = vmul.f32 %v227, %v231
  %vm233 = vweird.f32 %v211
  %vm234 = vweird.f32 %v227
  %vm235 = vmor %vm233, %vm234
  %v236 = vsel %vm235, %v227, %v232
  %v237 = vrsqrt.pop %v212
  %v238 = vmul.f32 %v237, %v212
  %v239 = vmul.f32 %v238, %v237
  %v240 = vmul.f32 0.5, %v239
  %v241 = vsub.f32 1.5, %v240
  %v242 = vmul.f32 %v237, %v241
  %vm243 = vweird.f32 %v212
  %vm244 = vweird.f32 %v237
  %vm245 = vmor %vm243, %vm244
  %v246 = vsel %vm245, %v237, %v242
  %v247 = vrsqrt.pop %v213
  %v248 = vmul.f32 %v247, %v213
  %v249 = vmul.f32 %v248, %v247
  %v250 = vmul.f32 0.5, %v249
  %v251 = vsub.f32 1.5, %v250
  %v252 = vmul.f32 %v247, %v251
  %vm253 = vweird.f32 %v213
  %vm254 = vweird.f32 %v247
  %vm255 = vmor %vm253, %vm254
  %v256 = vsel %vm255, %v247, %v252
  %v257 = vrsqrt.pop %v214
  %v258 = vmul.f32 %v257, %v214
  %v259 = vmul.f32 %v258, %v257
  %v260 = vmul.f32 0.5, %v259
  %v261 = vsub.f32 1.5, %v260
  %v262 = vmul.f32 %v257, %v261
  %vm263 = vweird.f32 %v214
  %vm264 = vweird.f32 %v257
  %vm265 = vmor %vm263, %vm264
  %v266 = vsel %vm265, %v257, %v262
  %v267 = vrsqrt.pop %v215
  %v268 = vmul.f32 %v267, %v215
  %v269 = vmul.f32 %v268, %v267
  %v270 = vmul.f32 0.5, %v269
  %v271 = vsub.f32 1.5, %v270
  %v272 = vmul.f32 %v267, %v271
  %vm273 = vweird.f32 %v215
  %vm274 = vweird.f32 %v267
  %vm275 = vmor %vm273, %vm274
  %v276 = vsel %vm275, %v267, %v272
  %v277 = vrsqrt.pop %v216
  %v278 = vmul.f32 %v277, %v216
  %v279 = vmul.f32 %v278, %v277
  %v280 = vmul.f32 0.5, %v279
  %v281 = vsub.f32 1.5, %v280
  %v282 = vmul.f32 %v277, %v281
  %vm283 = vweird.f32 %v216
  %vm284 = vweird.f32 %v277
  %vm285 = vmor %vm283, %vm284
  %v286 = vsel %vm285, %v277, %v282
  %v287 = vrsqrt.pop %v217
  %v288 = vmul.f32 %v287, %v217
  %v289 = vmul.f32 %v288, %v287
  %v290 = vmul.f32 0.5, %v289
  %v291 = vsub.f32 1.5, %v290
  %v292 = vmul.f32 %v287, %v291
  %vm293 = vweird.f32 %v217
  %vm294 = vweird.f32 %v287
  %vm295 = vmor %vm293, %vm294
  %v296 = vsel %vm295, %v287, %v292
  %v297 = vrsqrt.pop %v218
  %v298 = vmul.f32 %v297, %v218
  %v299 = vmul.f32 %v298, %v297
  %v300 = vmul.f32 0.5, %v299
  %v301 = vsub.f32 1.5, %v300
  %v302 = vmul.f32 %v297, %v301
  %vm303 = vweird.f32 %v218
  %vm304 = vweird.f32 %v297
  %vm305 = vmor %vm303, %vm304
  %v306 = vsel %vm305, %v297, %v302
  %v307 = vrsqrt.pop %v219
  %v308 = vmul.f32 %v307, %v219
  %v309 = vmul.f32 %v308, %v307
  %v310 = vmul.f32 0.5, %v309
  %v311 = vsub.f32 1.5, %v310
  %v312 = vmul.f32 %v307, %v311
  %vm313 = vweird.f32 %v219
  %vm314 = vweird.f32 %v307
  %vm315 = vmor %vm313, %vm314
  %v316 = vsel %vm315, %v307, %v312
  %v317 = vrsqrt.pop %v220
  %v318 = vmul.f32 %v317, %v220
  %v319 = vmul.f32 %v318, %v317
  %v320 = vmul.f32 0.5, %v319
  %v321 = vsub.f32 1.5, %v320
  %v322 = vmul.f32 %v317, %v321
  %vm323 = vweird.f32 %v220
  %vm324 = vweird.f32 %v317
  %vm325 = vmor %vm323, %vm324
  %v326 = vsel %vm325, %v317, %v322
  %v327 = vrsqrt.pop %v221
  %v328 = vmul.f32 %v327, %v221
  %v329 = vmul.f32 %v328, %v327
  %v330 = vmul.f32 0.5, %v329
  %v331 = vsub.f32 1.5, %v330
  %v332 = vmul.f32 %v327, %v331
  %vm333 = vweird.f32 %v221
  %vm334 = vweird.f32 %v327
  %vm335 = vmor %vm333, %vm334
  %v336 = vsel %vm335, %v327, %v332
  %v337 = vrsqrt.pop %v222
  %v338 = vmul.f32 %v337, %v222
  %v339 = vmul.f32 %v338, %v337
  %v340 = vmul.f32 0.5, %v339
  %v341 = vsub.f32 1.5, %v340
  %v342 = vmul.f32 %v337, %v341
  %vm343 = vweird.f32 %v222
  %vm344 = vweird.f32 %v337
  %vm345 = vmor %vm343, %vm344
  %v346 = vsel %vm345, %v337, %v342
  %v347 = vrsqrt.pop %v223
  %v348 = vmul.f32 %v347, %v223
  %v349 = vmul.f32 %v348, %v347
  %v350 = vmul.f32 0.5, %v349
  %v351 = vsub.f32 1.5, %v350
  %v352 = vmul.f32 %v347, %v351
  %vm353 = vweird.f32 %v223
  %vm354 = vweird.f32 %v347
  %vm355 = vmor %vm353, %vm354
  %v356 = vsel %vm355, %v347, %v352
  %v357 = vrsqrt.pop %v224
  %v358 = vmul.f32 %v357, %v224
  %v359 = vmul.f32 %v358, %v357
  %v360 = vmul.f32 0.5, %v359
  %v361 = vsub.f32 1.5, %v360
  %v362 = vmul.f32 %v357, %v361
  %vm363 = vweird.f32 %v224
  %vm364 = vweird.f32 %v357
  %vm365 = vmor %vm363, %vm364
  %v366 = vsel %vm365, %v357, %v362
  %v367 = vrsqrt.pop %v225
  %v368 = vmul.f32 %v367, %v225
  %v369 = vmul.f32 %v368, %v367
  %v370 = vmul.f32 0.5, %v369
  %v371 = vsub.f32 1.5, %v370
  %v372 = vmul.f32 %v367, %v371
  %vm373 = vweird.f32 %v225
  %vm374 = vweird.f32 %v367
  %vm375 = vmor %vm373, %vm374
  %v376 = vsel %vm375, %v367, %v372
  %v377 = vrsqrt.pop %v226
  %v378 = vmul.f32 %v377, %v226
  %v379 = vmul.f32 %v378, %v377
  %v380 = vmul.f32 0.5, %v379
  %v381 = vsub.f32 1.5, %v380
  %v382 = vmul.f32 %v377, %v381
  %vm383 = vweird.f32 %v226
  %vm384 = vweird.f32 %v377
  %vm385 = vmor %vm383, %vm384
  %v386 = vsel %vm385, %v377, %v382
  %v387 = vmul.f32 %v115, %v236
  %v388 = vmul.f32 %v116, %v246
  %v389 = vmul.f32 %v117, %v256
  %v390 = vmul.f32 %v118, %v266
  %v391 = vmul.f32 %v119, %v276
  %v392 = vmul.f32 %v120, %v286
  %v393 = vmul.f32 %v121, %v296
  %v394 = vmul.f32 %v122, %v306
  %v395 = vmul.f32 %v123, %v316
  %v396 = vmul.f32 %v124, %v326
  %v397 = vmul.f32 %v125, %v336
  %v398 = vmul.f32 %v126, %v346
  %v399 = vmul.f32 %v127, %v356
  %v400 = vmul.f32 %v128, %v366
  %v401 = vmul.f32 %v129, %v376
  %v402 = vmul.f32 %v130, %v386
  %v403 = vld [vmem:[%s1] sm:$0x1]
  %v405 = vperm.slane %v403, 0
  %v407 = vmul.f32 %v387, %v405
  %v408 = vmul.f32 %v388, %v405
  %v409 = vmul.f32 %v389, %v405
  %v410 = vmul.f32 %v390, %v405
  %v411 = vmul.f32 %v391, %v405
  %v412 = vmul.f32 %v392, %v405
  %v413 = vmul.f32 %v393, %v405
  %v414 = vmul.f32 %v394, %v405
  %v415 = vmul.f32 %v395, %v405
  %v416 = vmul.f32 %v396, %v405
  %v417 = vmul.f32 %v397, %v405
  %v418 = vmul.f32 %v398, %v405
  %v419 = vmul.f32 %v399, %v405
  %v420 = vmul.f32 %v400, %v405
  %v421 = vmul.f32 %v401, %v405
  %v422 = vmul.f32 %v402, %v405
  %v423 = vld [vmem:[%s2] sm:$0x1]
  %v425 = vperm.slane %v423, 0
  %v427 = vadd.f32 %v407, %v425
  %v428 = vadd.f32 %v408, %v425
  %v429 = vadd.f32 %v409, %v425
  %v430 = vadd.f32 %v410, %v425
  %v431 = vadd.f32 %v411, %v425
  %v432 = vadd.f32 %v412, %v425
  %v433 = vadd.f32 %v413, %v425
  %v434 = vadd.f32 %v414, %v425
  %v435 = vadd.f32 %v415, %v425
  %v436 = vadd.f32 %v416, %v425
  %v437 = vadd.f32 %v417, %v425
  %v438 = vadd.f32 %v418, %v425
  %v439 = vadd.f32 %v419, %v425
  %v440 = vadd.f32 %v420, %v425
  %v441 = vadd.f32 %v421, %v425
  %v442 = vadd.f32 %v422, %v425
  %v443 = vpack.c.bf16 %v428, %v427
  %v444 = vpack.c.bf16 %v430, %v429
  %v445 = vpack.c.bf16 %v432, %v431
  %v446 = vpack.c.bf16 %v434, %v433
  %v447 = vpack.c.bf16 %v436, %v435
  %v448 = vpack.c.bf16 %v438, %v437
  %v449 = vpack.c.bf16 %v440, %v439
  %v450 = vpack.c.bf16 %v442, %v441
  %v451 = vld [vmem:[%s3] sm:$0xf]
  %v452 = vld [vmem:[%s3 + $0x4] sm:$0xf]
  %v453 = vld [vmem:[%s3 + $0x8] sm:$0xf]
  %v454 = vld [vmem:[%s3 + $0xc] sm:$0xf]
  %v455 = vld [vmem:[%s4] sm:$0x1]
  %v457 = vperm.slane %v455, 0
  %v463 = vunpack.c.l.b16 %v451
  %v464 = vunpack.c.l.b16 %v452
  %v465 = vunpack.c.l.b16 %v453
  %v466 = vunpack.c.l.b16 %v454
  %v467 = vpack.c.b16 %v464, %v463
  %v468 = vpack.c.b16 %v466, %v465
  %v472 = vsel %vm43, %v443, 0
  %v475 = vsel %vm43, %v444, 0
  %v478 = vsel %vm43, %v445, 0
  %v481 = vsel %vm43, %v446, 0
  %v484 = vsel %vm43, %v447, 0
  %v487 = vsel %vm43, %v448, 0
  %v490 = vsel %vm43, %v449, 0
  %v493 = vsel %vm43, %v450, 0
  %495 = vmatpush.bf16.msra.mxu0 0
  %496 = vmatpush.bf16.msra.mxu0 0
  %497 = vmatpush.bf16.msra.mxu0 0
  %498 = vmatpush.bf16.msra.mxu0 0
  %499 = vmatpush.bf16.msra.mxu0 0
  %500 = vmatpush.bf16.msra.mxu0 0
  %501 = vmatpush.bf16.msra.mxu0 %v468
  %502 = vmatpush.bf16.msra.mxu0 %v467
  %503 = vmatmul.bf16.gmra.mxu0 %v472
  %v504 = vpop.f32.mrf.mxu0
  %v505 = vadd.f32 %v457, %v504
  %v506 = vpop.f32.mrf.mxu0
  %v507 = vadd.f32 %v457, %v506
  %508 = vmatmul.bf16.gmra.mxu0 %v475
  %v509 = vpop.f32.mrf.mxu0
  %v510 = vadd.f32 %v457, %v509
  %v511 = vpop.f32.mrf.mxu0
  %v512 = vadd.f32 %v457, %v511
  %513 = vmatmul.bf16.gmra.mxu0 %v478
  %v514 = vpop.f32.mrf.mxu0
  %v515 = vadd.f32 %v457, %v514
  %v516 = vpop.f32.mrf.mxu0
  %v517 = vadd.f32 %v457, %v516
  %518 = vmatmul.bf16.gmra.mxu0 %v481
  %v519 = vpop.f32.mrf.mxu0
  %v520 = vadd.f32 %v457, %v519
  %v521 = vpop.f32.mrf.mxu0
  %v522 = vadd.f32 %v457, %v521
  %523 = vmatmul.bf16.gmra.mxu0 %v484
  %v524 = vpop.f32.mrf.mxu0
  %v525 = vadd.f32 %v457, %v524
  %v526 = vpop.f32.mrf.mxu0
  %v527 = vadd.f32 %v457, %v526
  %528 = vmatmul.bf16.gmra.mxu0 %v487
  %v529 = vpop.f32.mrf.mxu0
  %v530 = vadd.f32 %v457, %v529
  %v531 = vpop.f32.mrf.mxu0
  %v532 = vadd.f32 %v457, %v531
  %533 = vmatmul.bf16.gmra.mxu0 %v490
  %v534 = vpop.f32.mrf.mxu0
  %v535 = vadd.f32 %v457, %v534
  %v536 = vpop.f32.mrf.mxu0
  %v537 = vadd.f32 %v457, %v536
  %538 = vmatmul.bf16.gmra.mxu0 %v493
  %v539 = vpop.f32.mrf.mxu0
  %v540 = vadd.f32 %v457, %v539
  %v541 = vpop.f32.mrf.mxu0
  %v542 = vadd.f32 %v457, %v541
  %543 = vdwg.mxu0
  %v544 = vmul.f32 %v505, %v505
  %v545 = vmul.f32 %v507, %v507
  %v546 = vmul.f32 %v510, %v510
  %v547 = vmul.f32 %v512, %v512
  %v548 = vmul.f32 %v515, %v515
  %v549 = vmul.f32 %v517, %v517
  %v550 = vmul.f32 %v520, %v520
  %v551 = vmul.f32 %v522, %v522
  %v552 = vmul.f32 %v525, %v525
  %v553 = vmul.f32 %v527, %v527
  %v554 = vmul.f32 %v530, %v530
  %v555 = vmul.f32 %v532, %v532
  %v556 = vmul.f32 %v535, %v535
  %v557 = vmul.f32 %v537, %v537
  %v558 = vmul.f32 %v540, %v540
  %v559 = vmul.f32 %v542, %v542
  %v560 = vmul.f32 %v505, %v544
  %v561 = vmul.f32 %v507, %v545
  %v562 = vmul.f32 %v510, %v546
  %v563 = vmul.f32 %v512, %v547
  %v564 = vmul.f32 %v515, %v548
  %v565 = vmul.f32 %v517, %v549
  %v566 = vmul.f32 %v520, %v550
  %v567 = vmul.f32 %v522, %v551
  %v568 = vmul.f32 %v525, %v552
  %v569 = vmul.f32 %v527, %v553
  %v570 = vmul.f32 %v530, %v554
  %v571 = vmul.f32 %v532, %v555
  %v572 = vmul.f32 %v535, %v556
  %v573 = vmul.f32 %v537, %v557
  %v574 = vmul.f32 %v540, %v558
  %v575 = vmul.f32 %v542, %v559
  %v576 = vmul.f32 %v560, 0.044715
  %v577 = vmul.f32 %v561, 0.044715
  %v578 = vmul.f32 %v562, 0.044715
  %v579 = vmul.f32 %v563, 0.044715
  %v580 = vmul.f32 %v564, 0.044715
  %v581 = vmul.f32 %v565, 0.044715
  %v582 = vmul.f32 %v566, 0.044715
  %v583 = vmul.f32 %v567, 0.044715
  %v584 = vmul.f32 %v568, 0.044715
  %v585 = vmul.f32 %v569, 0.044715
  %v586 = vmul.f32 %v570, 0.044715
  %v587 = vmul.f32 %v571, 0.044715
  %v588 = vmul.f32 %v572, 0.044715
  %v589 = vmul.f32 %v573, 0.044715
  %v590 = vmul.f32 %v574, 0.044715
  %v591 = vmul.f32 %v575, 0.044715
  %v592 = vadd.f32 %v505, %v576
  %v593 = vadd.f32 %v507, %v577
  %v594 = vadd.f32 %v510, %v578
  %v595 = vadd.f32 %v512, %v579
  %v596 = vadd.f32 %v515, %v580
  %v597 = vadd.f32 %v517, %v581
  %v598 = vadd.f32 %v520, %v582
  %v599 = vadd.f32 %v522, %v583
  %v600 = vadd.f32 %v525, %v584
  %v601 = vadd.f32 %v527, %v585
  %v602 = vadd.f32 %v530, %v586
  %v603 = vadd.f32 %v532, %v587
  %v604 = vadd.f32 %v535, %v588
  %v605 = vadd.f32 %v537, %v589
  %v606 = vadd.f32 %v540, %v590
  %v607 = vadd.f32 %v542, %v591
  %v608 = vmul.f32 %v592, 0.7978846
  %v609 = vmul.f32 %v593, 0.7978846
  %v610 = vmul.f32 %v594, 0.7978846
  %v611 = vmul.f32 %v595, 0.7978846
  %v612 = vmul.f32 %v596, 0.7978846
  %v613 = vmul.f32 %v597, 0.7978846
  %v614 = vmul.f32 %v598, 0.7978846
  %v615 = vmul.f32 %v599, 0.7978846
  %v616 = vmul.f32 %v600, 0.7978846
  %v617 = vmul.f32 %v601, 0.7978846
  %v618 = vmul.f32 %v602, 0.7978846
  %v619 = vmul.f32 %v603, 0.7978846
  %v620 = vmul.f32 %v604, 0.7978846
  %v621 = vmul.f32 %v605, 0.7978846
  %v622 = vmul.f32 %v606, 0.7978846
  %v623 = vmul.f32 %v607, 0.7978846
  %v624 = vtanh.pop %v608
  %v625 = vtanh.pop %v609
  %v626 = vtanh.pop %v610
  %v627 = vtanh.pop %v611
  %v628 = vtanh.pop %v612
  %v629 = vtanh.pop %v613
  %v630 = vtanh.pop %v614
  %v631 = vtanh.pop %v615
  %v632 = vtanh.pop %v616
  %v633 = vtanh.pop %v617
  %v634 = vtanh.pop %v618
  %v635 = vtanh.pop %v619
  %v636 = vtanh.pop %v620
  %v637 = vtanh.pop %v621
  %v638 = vtanh.pop %v622
  %v639 = vtanh.pop %v623
  %v640 = vadd.f32 %v624, 1.0
  %v641 = vadd.f32 %v625, 1.0
  %v642 = vadd.f32 %v626, 1.0
  %v643 = vadd.f32 %v627, 1.0
  %v644 = vadd.f32 %v628, 1.0
  %v645 = vadd.f32 %v629, 1.0
  %v646 = vadd.f32 %v630, 1.0
  %v647 = vadd.f32 %v631, 1.0
  %v648 = vadd.f32 %v632, 1.0
  %v649 = vadd.f32 %v633, 1.0
  %v650 = vadd.f32 %v634, 1.0
  %v651 = vadd.f32 %v635, 1.0
  %v652 = vadd.f32 %v636, 1.0
  %v653 = vadd.f32 %v637, 1.0
  %v654 = vadd.f32 %v638, 1.0
  %v655 = vadd.f32 %v639, 1.0
  %v656 = vmul.f32 %v640, 0.5
  %v657 = vmul.f32 %v641, 0.5
  %v658 = vmul.f32 %v642, 0.5
  %v659 = vmul.f32 %v643, 0.5
  %v660 = vmul.f32 %v644, 0.5
  %v661 = vmul.f32 %v645, 0.5
  %v662 = vmul.f32 %v646, 0.5
  %v663 = vmul.f32 %v647, 0.5
  %v664 = vmul.f32 %v648, 0.5
  %v665 = vmul.f32 %v649, 0.5
  %v666 = vmul.f32 %v650, 0.5
  %v667 = vmul.f32 %v651, 0.5
  %v668 = vmul.f32 %v652, 0.5
  %v669 = vmul.f32 %v653, 0.5
  %v670 = vmul.f32 %v654, 0.5
  %v671 = vmul.f32 %v655, 0.5
  %v672 = vmul.f32 %v505, %v656
  %v673 = vmul.f32 %v507, %v657
  %v674 = vmul.f32 %v510, %v658
  %v675 = vmul.f32 %v512, %v659
  %v676 = vmul.f32 %v515, %v660
  %v677 = vmul.f32 %v517, %v661
  %v678 = vmul.f32 %v520, %v662
  %v679 = vmul.f32 %v522, %v663
  %v680 = vmul.f32 %v525, %v664
  %v681 = vmul.f32 %v527, %v665
  %v682 = vmul.f32 %v530, %v666
  %v683 = vmul.f32 %v532, %v667
  %v684 = vmul.f32 %v535, %v668
  %v685 = vmul.f32 %v537, %v669
  %v686 = vmul.f32 %v540, %v670
  %v687 = vmul.f32 %v542, %v671
  %v688 = vpack.c.bf16 %v673, %v672
  %v689 = vpack.c.bf16 %v675, %v674
  %v690 = vpack.c.bf16 %v677, %v676
  %v691 = vpack.c.bf16 %v679, %v678
  %v692 = vpack.c.bf16 %v681, %v680
  %v693 = vpack.c.bf16 %v683, %v682
  %v694 = vpack.c.bf16 %v685, %v684
  %v695 = vpack.c.bf16 %v687, %v686
  %v696 = vld [vmem:[%s5] sm:$0xf]
  %v697 = vld [vmem:[%s5 + $0x4] sm:$0xf]
  %v698 = vld [vmem:[%s5 + $0x8] sm:$0xf]
  %v699 = vld [vmem:[%s5 + $0xc] sm:$0xf]
  %v700 = vld [vmem:[%s5 + $0x10] sm:$0xf]
  %v701 = vld [vmem:[%s5 + $0x14] sm:$0xf]
  %v702 = vld [vmem:[%s5 + $0x18] sm:$0xf]
  %v703 = vld [vmem:[%s5 + $0x1c] sm:$0xf]
  %v704 = vld [vmem:[%s5 + $0x20] sm:$0xf]
  %v705 = vld [vmem:[%s5 + $0x24] sm:$0xf]
  %v706 = vld [vmem:[%s5 + $0x28] sm:$0xf]
  %v707 = vld [vmem:[%s5 + $0x2c] sm:$0xf]
  %v708 = vld [vmem:[%s5 + $0x30] sm:$0xf]
  %v709 = vld [vmem:[%s5 + $0x34] sm:$0xf]
  %v710 = vld [vmem:[%s5 + $0x38] sm:$0xf]
  %v711 = vld [vmem:[%s5 + $0x3c] sm:$0xf]
  %v712 = vld [vmem:[%s6] sm:$0x1]
  %v714 = vperm.slane %v712, 0
  %v732 = vunpack.c.l.b16 %v696
  %v733 = vunpack.c.l.b16 %v697
  %v734 = vunpack.c.l.b16 %v698
  %v735 = vunpack.c.l.b16 %v699
  %v736 = vunpack.c.l.b16 %v700
  %v737 = vunpack.c.l.b16 %v701
  %v738 = vunpack.c.l.b16 %v702
  %v739 = vunpack.c.l.b16 %v703
  %v740 = vunpack.c.l.b16 %v704
  %v741 = vunpack.c.l.b16 %v705
  %v742 = vunpack.c.l.b16 %v706
  %v743 = vunpack.c.l.b16 %v707
  %v744 = vunpack.c.l.b16 %v708
  %v745 = vunpack.c.l.b16 %v709
  %v746 = vunpack.c.l.b16 %v710
  %v747 = vunpack.c.l.b16 %v711
  %v748 = vpack.c.b16 %v733, %v732
  %v749 = vpack.c.b16 %v735, %v734
  %v750 = vpack.c.b16 %v737, %v736
  %v751 = vpack.c.b16 %v739, %v738
  %v752 = vpack.c.b16 %v741, %v740
  %v753 = vpack.c.b16 %v743, %v742
  %v754 = vpack.c.b16 %v745, %v744
  %v755 = vpack.c.b16 %v747, %v746
  %764 = vmatpush.bf16.msra.mxu0 %v755
  %765 = vmatpush.bf16.msra.mxu0 %v754
  %766 = vmatpush.bf16.msra.mxu0 %v753
  %767 = vmatpush.bf16.msra.mxu0 %v752
  %768 = vmatpush.bf16.msra.mxu0 %v751
  %769 = vmatpush.bf16.msra.mxu0 %v750
  %770 = vmatpush.bf16.msra.mxu0 %v749
  %771 = vmatpush.bf16.msra.mxu0 %v748
  %772 = vmatmul.bf16.gmra.mxu0 %v688
  %v773 = vpop.f32.mrf.mxu0
  %v774 = vadd.f32 %v714, %v773
  %v775 = vpop.f32.mrf.mxu0
  %v776 = vadd.f32 %v714, %v775
  %777 = vmatmul.bf16.gmra.mxu0 %v689
  %v778 = vpop.f32.mrf.mxu0
  %v779 = vadd.f32 %v714, %v778
  %v780 = vpop.f32.mrf.mxu0
  %v781 = vadd.f32 %v714, %v780
  %782 = vmatmul.bf16.gmra.mxu0 %v690
  %v783 = vpop.f32.mrf.mxu0
  %v784 = vadd.f32 %v714, %v783
  %v785 = vpop.f32.mrf.mxu0
  %v786 = vadd.f32 %v714, %v785
  %787 = vmatmul.bf16.gmra.mxu0 %v691
  %v788 = vpop.f32.mrf.mxu0
  %v789 = vadd.f32 %v714, %v788
  %v790 = vpop.f32.mrf.mxu0
  %v791 = vadd.f32 %v714, %v790
  %792 = vmatmul.bf16.gmra.mxu0 %v692
  %v793 = vpop.f32.mrf.mxu0
  %v794 = vadd.f32 %v714, %v793
  %v795 = vpop.f32.mrf.mxu0
  %v796 = vadd.f32 %v714, %v795
  %797 = vmatmul.bf16.gmra.mxu0 %v693
  %v798 = vpop.f32.mrf.mxu0
  %v799 = vadd.f32 %v714, %v798
  %v800 = vpop.f32.mrf.mxu0
  %v801 = vadd.f32 %v714, %v800
  %802 = vmatmul.bf16.gmra.mxu0 %v694
  %v803 = vpop.f32.mrf.mxu0
  %v804 = vadd.f32 %v714, %v803
  %v805 = vpop.f32.mrf.mxu0
  %v806 = vadd.f32 %v714, %v805
  %807 = vmatmul.bf16.gmra.mxu0 %v695
  %v808 = vpop.f32.mrf.mxu0
  %v809 = vadd.f32 %v714, %v808
  %v810 = vpop.f32.mrf.mxu0
  %v811 = vadd.f32 %v714, %v810
  %812 = vdwg.mxu0
  %v813 = vadd.f32 %v27, %v774
  %v814 = vadd.f32 %v28, %v776
  %v815 = vadd.f32 %v29, %v779
  %v816 = vadd.f32 %v30, %v781
  %v817 = vadd.f32 %v31, %v784
  %v818 = vadd.f32 %v32, %v786
  %v819 = vadd.f32 %v33, %v789
  %v820 = vadd.f32 %v34, %v791
  %v821 = vadd.f32 %v35, %v794
  %v822 = vadd.f32 %v36, %v796
  %v823 = vadd.f32 %v37, %v799
  %v824 = vadd.f32 %v38, %v801
  %v825 = vadd.f32 %v39, %v804
  %v826 = vadd.f32 %v40, %v806
  %v827 = vadd.f32 %v41, %v809
  %v828 = vadd.f32 %v42, %v811
  %829 = vst.msk [vmem:[%s7] sm:$0xff] %vm43, %v813
  %830 = vst.msk [vmem:[%s7 + $0x8] sm:$0xff] %vm43, %v814
  %831 = vst.msk [vmem:[%s7 + $0x10] sm:$0xff] %vm43, %v815
  %832 = vst.msk [vmem:[%s7 + $0x18] sm:$0xff] %vm43, %v816
  %833 = vst.msk [vmem:[%s7 + $0x20] sm:$0xff] %vm43, %v817
  %834 = vst.msk [vmem:[%s7 + $0x28] sm:$0xff] %vm43, %v818
  %835 = vst.msk [vmem:[%s7 + $0x30] sm:$0xff] %vm43, %v819
  %836 = vst.msk [vmem:[%s7 + $0x38] sm:$0xff] %vm43, %v820
  %837 = vst.msk [vmem:[%s7 + $0x40] sm:$0xff] %vm43, %v821
  %838 = vst.msk [vmem:[%s7 + $0x48] sm:$0xff] %vm43, %v822
  %839 = vst.msk [vmem:[%s7 + $0x50] sm:$0xff] %vm43, %v823
  %840 = vst.msk [vmem:[%s7 + $0x58] sm:$0xff] %vm43, %v824
  %841 = vst.msk [vmem:[%s7 + $0x60] sm:$0xff] %vm43, %v825
  %842 = vst.msk [vmem:[%s7 + $0x68] sm:$0xff] %vm43, %v826
  %843 = vst.msk [vmem:[%s7 + $0x70] sm:$0xff] %vm43, %v827
  %844 = vst.msk [vmem:[%s7 + $0x78] sm:$0xff] %vm43, %v828
  // Predicated region
  $region30: #{video_encoder_forward.8} parent=0 // pred_check
    _
  $region31: #{video_encoder_forward.8} parent=0 // pred_check_branch
    %846 = sbr.rel (0) target = $region33
  $region32: #{video_encoder_forward.8} parent=0 // pred_region
    _
  $region33: #{video_encoder_forward.8} parent=0 // pred_fallthru
    _
  // Predicated region
  $region34: #{video_encoder_forward.8} parent=0 // pred_check
    _
  $region35: #{video_encoder_forward.8} parent=0 // pred_check_branch
    %848 = sbr.rel (0) target = $region37
  $region36: #{video_encoder_forward.8} parent=0 // pred_region
    _
  $region37: #{video_encoder_forward.8} parent=0 // pred_fallthru
    _

// kernel: video_encoder_forward.6
$region0: #{video_encoder_forward.6}
  #allocation0 [shape = 'u32[]', space=smem, size = 0x4, offset = 0x4, fixed_abs, tag = 'smem constant byte address 0x4 - core index']
  #allocation1 [shape = 'u32[72,128]{1,0:T(1,128)}', space=vmem, size = 0x9000, scoped, tag = 'internal scratch']
  %s0 = inlined_call_operand.hbm [shape: f32[128,32], index: 0, kind: input, shape index: {}]
  %s1 = inlined_call_operand.vmem [shape: f32[1,32], index: 1, kind: input, shape index: {}]
  %s2 = inlined_call_operand.vmem [shape: f32[1,32], index: 2, kind: input, shape index: {}]
  %s3 = inlined_call_operand.vmem [shape: bf16[32,96], index: 3, kind: input, shape index: {}]
  %s4 = inlined_call_operand.hbm [shape: bf16[32,32], index: 4, kind: input, shape index: {}]
  %s5 = inlined_call_operand.vmem [shape: f32[1,32], index: 5, kind: input, shape index: {}]
  %s6 = inlined_call_operand.vmem [shape: f32[2,16,16], index: 6, kind: input, shape index: {}]
  %s7 = inlined_call_operand.vmem [shape: f32[128,32], index: 7, kind: output, shape index: {}]
  %s8 = sld [smem:[#allocation0]]
  $region69: #{video_encoder_forward.6} parent=0
    _
  %s10 = ssub.s32 1, %s8
  %s11 = scalar_select 0, %s10, %s8
  $region1: #{video_encoder_forward.6} parent=0
    #allocation2 [shape = 'u8[65536]{0}', space=vmem, size = 0x10000, scoped, tag = 'input window, operand 0']
    #allocation3 [shape = 's32[2]{0}', space=sflag, size = 0x8, scoped, tag = 'scoped memory for video_encoder_forward.6']
    #allocation4 [shape = 'u8[8192]{0}', space=vmem, size = 0x2000, scoped, tag = 'input window, operand 4, single buffered']
    #allocation5 [shape = 's32[1]{0}', space=sflag, size = 0x4, scoped, tag = 'scoped memory for video_encoder_forward.6']
    %12 = vsyncpa [#allocation3], 0
    %s13 = scalar_lea.sflag [#allocation3], 1
    %14 = vsyncpa %s13, 0
    %15 = vsyncpa [#allocation5], 0
    loop: start=0, step=1, limit=4
    $region2: #{video_encoder_forward.6} parent=1 // loop_pre_header
      _
    $region3: #{video_encoder_forward.6} parent=1 // loop_header
      %s17 = sphi 0, %s21
      %p18 = scmp.ge.s32.totalorder %s17, 4
      %s27 = sphi 0, %s29
      %s30 = sphi 0, %s27
      %s31 = sphi 0, %s30
      %s47 = sphi 0, %s31
      %s51 = sphi 0, %s51
      %s53 = sphi 0, %s51
      %s54 = sphi 0, %s53
      %s68 = sphi 0, %s54
      %s72 = sphi 0, %s72
      %s74 = sphi 0, %s72
      %s75 = sphi 0, %s74
      %s89 = sphi 0, %s75
      %s93 = sphi 0, %s93
      %s95 = sphi 0, %s93
      %s96 = sphi 0, %s95
      %s110 = sphi 0, %s96
      %s114 = sphi 0, %s114
      %s116 = sphi 0, %s114
      %s117 = sphi 0, %s116
      %s131 = sphi 0, %s117
      %s135 = sphi 0, %s135
      %s137 = sphi 0, %s135
      %s138 = sphi 0, %s137
      %s152 = sphi 0, %s138
      %s156 = sphi 0, %s156
      %s158 = sphi 0, %s156
      %s159 = sphi 0, %s158
      %s173 = sphi 0, %s159
      %s179 = sphi 0, %s181
      %s182 = sphi 0, %s179
      %s183 = sphi 0, %s182
      %s199 = sphi 0, %s183
    $region4: #{video_encoder_forward.6} parent=1 // loop_header_branch
      %20 = sbr.rel (%p18) target = $region8
    $region5: #{video_encoder_forward.6} parent=1 // loop_body
      %s22 = ssub.s32 %s17, 1
      %s23 = ssub.s32 %s17, 2
      %s24 = sadd.s32 %s17, 1
      %s25 = ssub.s32 %s17, %s24
      %p26 = scmp.eq.s32.totalorder %s25, 0
      %s28 = sadd.s32 %s27, 1
      %s29 = scalar_select %p26, %s27, %s28
      %p32 = pneg %p26
      %p33 = scmp.eq.s32.totalorder %s17, 1
      %p34 = por %p32, %p33
      %p35 = scmp.ne.s32.totalorder %s27, %s30
      %p36 = scmp.eq.s32.totalorder %s17, 0
      %p37 = por %p35, %p36
      %p38 = scmp.ne.s32.totalorder %s27, %s30
      %p39 = scmp.eq.s32.totalorder %s22, 1
      %p40 = por %p38, %p39
      %p41 = scmp.ne.s32.totalorder %s30, %s31
      %p42 = scmp.eq.s32.totalorder %s22, 0
      %p43 = por %p41, %p42
      %p44 = scmp.ne.s32.totalorder %s30, %s31
      %p45 = scmp.eq.s32.totalorder %s23, 1
      %p46 = por %p44, %p45
      %p48 = scmp.ne.s32.totalorder %s31, %s47
      %p49 = scmp.eq.s32.totalorder %s23, 0
      %p50 = por %p48, %p49
      %s52 = sadd.s32 %s51, 1
      %p55 = scmp.eq.s32.totalorder %s17, 1
      %p56 = scmp.ne.s32.totalorder %s51, %s53
      %p57 = scmp.eq.s32.totalorder %s17, 0
      %p58 = por %p56, %p57
      %p59 = scmp.ne.s32.totalorder %s51, %s53
      %p60 = scmp.eq.s32.totalorder %s22, 1
      %p61 = por %p59, %p60
      %p62 = scmp.ne.s32.totalorder %s53, %s54
      %p63 = scmp.eq.s32.totalorder %s22, 0
      %p64 = por %p62, %p63
      %p65 = scmp.ne.s32.totalorder %s53, %s54
      %p66 = scmp.eq.s32.totalorder %s23, 1
      %p67 = por %p65, %p66
      %p69 = scmp.ne.s32.totalorder %s54, %s68
      %p70 = scmp.eq.s32.totalorder %s23, 0
      %p71 = por %p69, %p70
      %s73 = sadd.s32 %s72, 1
      %p76 = scmp.eq.s32.totalorder %s17, 1
      %p77 = scmp.ne.s32.totalorder %s72, %s74
      %p78 = scmp.eq.s32.totalorder %s17, 0
      %p79 = por %p77, %p78
      %p80 = scmp.ne.s32.totalorder %s72, %s74
      %p81 = scmp.eq.s32.totalorder %s22, 1
      %p82 = por %p80, %p81
      %p83 = scmp.ne.s32.totalorder %s74, %s75
      %p84 = scmp.eq.s32.totalorder %s22, 0
      %p85 = por %p83, %p84
      %p86 = scmp.ne.s32.totalorder %s74, %s75
      %p87 = scmp.eq.s32.totalorder %s23, 1
      %p88 = por %p86, %p87
      %p90 = scmp.ne.s32.totalorder %s75, %s89
      %p91 = scmp.eq.s32.totalorder %s23, 0
      %p92 = por %p90, %p91
      %s94 = sadd.s32 %s93, 1
      %p97 = scmp.eq.s32.totalorder %s17, 1
      %p98 = scmp.ne.s32.totalorder %s93, %s95
      %p99 = scmp.eq.s32.totalorder %s17, 0
      %p100 = por %p98, %p99
      %p101 = scmp.ne.s32.totalorder %s93, %s95
      %p102 = scmp.eq.s32.totalorder %s22, 1
      %p103 = por %p101, %p102
      %p104 = scmp.ne.s32.totalorder %s95, %s96
      %p105 = scmp.eq.s32.totalorder %s22, 0
      %p106 = por %p104, %p105
      %p107 = scmp.ne.s32.totalorder %s95, %s96
      %p108 = scmp.eq.s32.totalorder %s23, 1
      %p109 = por %p107, %p108
      %p111 = scmp.ne.s32.totalorder %s96, %s110
      %p112 = scmp.eq.s32.totalorder %s23, 0
      %p113 = por %p111, %p112
      %s115 = sadd.s32 %s114, 1
      %p118 = scmp.eq.s32.totalorder %s17, 1
      %p119 = scmp.ne.s32.totalorder %s114, %s116
      %p120 = scmp.eq.s32.totalorder %s17, 0
      %p121 = por %p119, %p120
      %p122 = scmp.ne.s32.totalorder %s114, %s116
      %p123 = scmp.eq.s32.totalorder %s22, 1
      %p124 = por %p122, %p123
      %p125 = scmp.ne.s32.totalorder %s116, %s117
      %p126 = scmp.eq.s32.totalorder %s22, 0
      %p127 = por %p125, %p126
      %p128 = scmp.ne.s32.totalorder %s116, %s117
      %p129 = scmp.eq.s32.totalorder %s23, 1
      %p130 = por %p128, %p129
      %p132 = scmp.ne.s32.totalorder %s117, %s131
      %p133 = scmp.eq.s32.totalorder %s23, 0
      %p134 = por %p132, %p133
      %s136 = sadd.s32 %s135, 1
      %p139 = scmp.eq.s32.totalorder %s17, 1
      %p140 = scmp.ne.s32.totalorder %s135, %s137
      %p141 = scmp.eq.s32.totalorder %s17, 0
      %p142 = por %p140, %p141
      %p143 = scmp.ne.s32.totalorder %s135, %s137
      %p144 = scmp.eq.s32.totalorder %s22, 1
      %p145 = por %p143, %p144
      %p146 = scmp.ne.s32.totalorder %s137, %s138
      %p147 = scmp.eq.s32.totalorder %s22, 0
      %p148 = por %p146, %p147
      %p149 = scmp.ne.s32.totalorder %s137, %s138
      %p150 = scmp.eq.s32.totalorder %s23, 1
      %p151 = por %p149, %p150
      %p153 = scmp.ne.s32.totalorder %s138, %s152
      %p154 = scmp.eq.s32.totalorder %s23, 0
      %p155 = por %p153, %p154
      %s157 = sadd.s32 %s156, 1
      %p160 = scmp.eq.s32.totalorder %s17, 1
      %p161 = scmp.ne.s32.totalorder %s156, %s158
      %p162 = scmp.eq.s32.totalorder %s17, 0
      %p163 = por %p161, %p162
      %p164 = scmp.ne.s32.totalorder %s156, %s158
      %p165 = scmp.eq.s32.totalorder %s22, 1
      %p166 = por %p164, %p165
      %p167 = scmp.ne.s32.totalorder %s158, %s159
      %p168 = scmp.eq.s32.totalorder %s22, 0
      %p169 = por %p167, %p168
      %p170 = scmp.ne.s32.totalorder %s158, %s159
      %p171 = scmp.eq.s32.totalorder %s23, 1
      %p172 = por %p170, %p171
      %p174 = scmp.ne.s32.totalorder %s159, %s173
      %p175 = scmp.eq.s32.totalorder %s23, 0
      %p176 = por %p174, %p175
      %s177 = ssub.s32 %s17, %s24
      %p178 = scmp.eq.s32.totalorder %s177, 0
      %s180 = sadd.s32 %s179, 1
      %s181 = scalar_select %p178, %s179, %s180
      %p184 = pneg %p178
      %p185 = scmp.eq.s32.totalorder %s17, 1
      %p186 = por %p184, %p185
      %p187 = scmp.ne.s32.totalorder %s179, %s182
      %p188 = scmp.eq.s32.totalorder %s17, 0
      %p189 = por %p187, %p188
      %p190 = scmp.ne.s32.totalorder %s179, %s182
      %p191 = scmp.eq.s32.totalorder %s22, 1
      %p192 = por %p190, %p191
      %p193 = scmp.ne.s32.totalorder %s182, %s183
      %p194 = scmp.eq.s32.totalorder %s22, 0
      %p195 = por %p193, %p194
      %p196 = scmp.ne.s32.totalorder %s182, %s183
      %p197 = scmp.eq.s32.totalorder %s23, 1
      %p198 = por %p196, %p197
      %p200 = scmp.ne.s32.totalorder %s183, %s199
      %p201 = scmp.eq.s32.totalorder %s23, 0
      %p202 = por %p200, %p201
      %p203 = scmp.le.s32.totalorder 1, %s17
      %p204 = scmp.lt.s32.totalorder %s17, 3
      %p205 = pnand %p203, %p204
      %p206 = pneg %p205
      // Predicated region
      $region9: #{video_encoder_forward.6} parent=5 // pred_check
        _
      $region10: #{video_encoder_forward.6} parent=5 // pred_check_branch
        %208 = sbr.rel (%p205) target = $region12
      $region11: #{video_encoder_forward.6} parent=5 // pred_region
        %s209 = ssub.s32 %s17, 1
        // Predicated region
        $region13: #{video_encoder_forward.6} parent=11 // pred_check
          %p210 = pneg %p64
        $region14: #{video_encoder_forward.6} parent=11 // pred_check_branch
          %212 = sbr.rel (%p210) target = $region16
        $region15: #{video_encoder_forward.6} parent=11 // pred_region
          _
        $region16: #{video_encoder_forward.6} parent=11 // pred_fallthru
          _
        // Predicated region
        $region17: #{video_encoder_forward.6} parent=11 // pred_check
          %p213 = pneg %p85
        $region18: #{video_encoder_forward.6} parent=11 // pred_check_branch
          %215 = sbr.rel (%p213) target = $region20
        $region19: #{video_encoder_forward.6} parent=11 // pred_region
          _
        $region20: #{video_encoder_forward.6} parent=11 // pred_fallthru
          _
        // Predicated region
        $region21: #{video_encoder_forward.6} parent=11 // pred_check
          %p216 = pneg %p106
        $region22: #{video_encoder_forward.6} parent=11 // pred_check_branch
          %218 = sbr.rel (%p216) target = $region24
        $region23: #{video_encoder_forward.6} parent=11 // pred_region
          _
        $region24: #{video_encoder_forward.6} parent=11 // pred_fallthru
          _
        // Predicated region
        $region25: #{video_encoder_forward.6} parent=11 // pred_check
          %p219 = pneg %p127
        $region26: #{video_encoder_forward.6} parent=11 // pred_check_branch
          %221 = sbr.rel (%p219) target = $region28
        $region27: #{video_encoder_forward.6} parent=11 // pred_region
          %223 = vsyncadd [#allocation5], 0
          %s224 = sshll.u32 %s4, 4
          %s225 = int_to_ptr.hbm [resolvable:$true] %s224
          %s226 = sshll.u32 [#allocation4], 4
          %s227 = int_to_ptr.vmem [resolvable:$true] %s226
          %232 = dma.hbm_to_vmem [thread:$0]  %s225, 256, %s227, [#allocation5], 64, 64, 4
        $region28: #{video_encoder_forward.6} parent=11 // pred_fallthru
          _
        // Predicated region
        $region29: #{video_encoder_forward.6} parent=11 // pred_check
          %p233 = pneg %p148
        $region30: #{video_encoder_forward.6} parent=11 // pred_check_branch
          %235 = sbr.rel (%p233) target = $region32
        $region31: #{video_encoder_forward.6} parent=11 // pred_region
          _
        $region32: #{video_encoder_forward.6} parent=11 // pred_fallthru
          _
        // Predicated region
        $region33: #{video_encoder_forward.6} parent=11 // pred_check
          %p236 = pneg %p169
        $region34: #{video_encoder_forward.6} parent=11 // pred_check_branch
          %238 = sbr.rel (%p236) target = $region36
        $region35: #{video_encoder_forward.6} parent=11 // pred_region
          _
        $region36: #{video_encoder_forward.6} parent=11 // pred_fallthru
          _
      $region12: #{video_encoder_forward.6} parent=5 // pred_fallthru
        _
      %p239 = scmp.lt.s32.totalorder %s17, 2
      // Predicated region
      $region37: #{video_encoder_forward.6} parent=5 // pred_check
        %p240 = pneg %p239
      $region38: #{video_encoder_forward.6} parent=5 // pred_check_branch
        %242 = sbr.rel (%p240) target = $region40
      $region39: #{video_encoder_forward.6} parent=5 // pred_region
        // Predicated region
        $region41: #{video_encoder_forward.6} parent=39 // pred_check
          %p243 = pneg %p37
        $region42: #{video_encoder_forward.6} parent=39 // pred_check_branch
          %245 = sbr.rel (%p243) target = $region44
        $region43: #{video_encoder_forward.6} parent=39 // pred_region
          %s246 = sand.u32 %s27, 1
          %s247 = scalar_lea.sflag [#allocation3], %s246
          %s248 = sand.u32 %s27, 1
          %s249 = smul.addr %s248, 64
          %s250 = scalar_lea.vmem [#allocation2], %s249
          %s251 = smul.u32 8, %s17
          %253 = vsyncadd %s247, 0
          %s254 = smul.addr %s251, 8
          %s255 = scalar_lea.hbm %s0, %s254
          %s256 = sshll.u32 %s255, 4
          %s257 = int_to_ptr.hbm [resolvable:$true] %s256
          %s258 = sshll.u32 %s250, 4
          %s259 = int_to_ptr.vmem [resolvable:$true] %s258
          %264 = dma.hbm_to_vmem [thread:$0]  %s257, 1024, %s259, %s247, 128, 128, 8
        $region44: #{video_encoder_forward.6} parent=39 // pred_fallthru
          _
      $region40: #{video_encoder_forward.6} parent=5 // pred_fallthru
        _
      %p265 = scmp.le.s32.totalorder 1, %s17
      %p266 = scmp.lt.s32.totalorder %s17, 3
      %p267 = pnand %p265, %p266
      %p268 = pneg %p267
      // Predicated region
      $region45: #{video_encoder_forward.6} parent=5 // pred_check
        _
      $region46: #{video_encoder_forward.6} parent=5 // pred_check_branch
        %270 = sbr.rel (%p267) target = $region48
      $region47: #{video_encoder_forward.6} parent=5 // pred_region
        %s271 = ssub.s32 %s17, 1
        %s272 = sand.u32 %s30, 1
        %s273 = scalar_lea.sflag [#allocation3], %s272
        %s274 = sand.u32 %s30, 1
        %s275 = smul.addr %s274, 64
        %s276 = scalar_lea.vmem [#allocation2], %s275
        // Predicated region
        $region49: #{video_encoder_forward.6} parent=47 // pred_check
          %p277 = pneg %p43
        $region50: #{video_encoder_forward.6} parent=47 // pred_check_branch
          %279 = sbr.rel (%p277) target = $region52
        $region51: #{video_encoder_forward.6} parent=47 // pred_region
          %281 = dma.done %s273, 1024
        $region52: #{video_encoder_forward.6} parent=47 // pred_fallthru
          _
        // Predicated region
        $region53: #{video_encoder_forward.6} parent=47 // pred_check
          %p282 = pneg %p127
        $region54: #{video_encoder_forward.6} parent=47 // pred_check_branch
          %284 = sbr.rel (%p282) target = $region56
        $region55: #{video_encoder_forward.6} parent=47 // pred_region
          %286 = dma.done [#allocation5], 256
        $region56: #{video_encoder_forward.6} parent=47 // pred_fallthru
          _
        %s287 = sand.u32 %s30, 1
        %s288 = scalar_lea.sflag [#allocation3], %s287
        %s289 = sand.u32 %s30, 1
        %s290 = smul.addr %s289, 64
        %s291 = scalar_lea.vmem [#allocation2], %s290
        %p292 = pneg %p43
        %p293 = pneg %p40
        %p294 = pneg %p64
        %p295 = pneg %p61
        %p296 = pneg %p85
        %p297 = pneg %p82
        %p298 = pneg %p106
        %p299 = pneg %p103
        %p300 = pneg %p127
        %p301 = pneg %p124
        %p302 = pneg %p148
        %p303 = pneg %p145
        %p304 = pneg %p169
        %p305 = pneg %p166
        %p306 = pneg %p195
        %p307 = pneg %p192
        %s308 = smul.u32 8, %s22
        %p309 = scmp.lt.s32.totalorder %s308, 15
        %s310 = scalar_select %p309, %s308, 15
        %s311 = smul.addr %s310, 8
        %s312 = scalar_lea.vmem %s7, %s311
        %s313 = smul.u32 8, %s22
        %s314 = smul.u32 8, %s22
        %p315 = scmp.lt.s32.totalorder %s314, 15
        %s316 = scalar_select %p315, %s314, 15
        %s317 = smul.addr %s316, 8
        %s318 = scalar_lea.vmem %s7, %s317
        %s319 = smul.u32 8, %s22
        %v321 = vld [vmem:[%s276] sm:$0xff]
        %v322 = vld [vmem:[%s276 + $0x8] sm:$0xff]
        %v323 = vld [vmem:[%s276 + $0x10] sm:$0xff]
        %v324 = vld [vmem:[%s276 + $0x18] sm:$0xff]
        %v325 = vld [vmem:[%s276 + $0x20] sm:$0xff]
        %v326 = vld [vmem:[%s276 + $0x28] sm:$0xff]
        %v327 = vld [vmem:[%s276 + $0x30] sm:$0xff]
        %v328 = vld [vmem:[%s276 + $0x38] sm:$0xff]
        %vm329 = vcmask 261120
        %v330 = vsel %vm329, %v321, 0.0
        %331 = vadd.xlane.f32.xlu0 %v330
        %v332 = vpop.xlane.xlu0 %331
        %v333 = vsel %vm329, %v322, 0.0
        %334 = vadd.xlane.f32.xlu0 %v333
        %v335 = vpop.xlane.xlu0 %334
        %v336 = vsel %vm329, %v323, 0.0
        %337 = vadd.xlane.f32.xlu0 %v336
        %v338 = vpop.xlane.xlu0 %337
        %v339 = vsel %vm329, %v324, 0.0
        %340 = vadd.xlane.f32.xlu0 %v339
        %v341 = vpop.xlane.xlu0 %340
        %v342 = vsel %vm329, %v325, 0.0
        %343 = vadd.xlane.f32.xlu0 %v342
        %v344 = vpop.xlane.xlu0 %343
        %v345 = vsel %vm329, %v326, 0.0
        %346 = vadd.xlane.f32.xlu0 %v345
        %v347 = vpop.xlane.xlu0 %346
        %v348 = vsel %vm329, %v327, 0.0
        %349 = vadd.xlane.f32.xlu0 %v348
        %v350 = vpop.xlane.xlu0 %349
        %v351 = vsel %vm329, %v328, 0.0
        %352 = vadd.xlane.f32.xlu0 %v351
        %v353 = vpop.xlane.xlu0 %352
        %v354 = vrcp.pop 32.0
        %v355 = vmul.f32 32.0, %v354
        %v356 = vsub.f32 1.0, %v355
        %v357 = vmul.f32 %v354, %v356
        %v358 = vadd.f32 %v354, %v357
        %vm359 = vweird.f32 %v354
        %v360 = vsel %vm359, %v354, %v358
        %v361 = vmul.f32 %v332, %v360
        %v362 = vmul.f32 %v335, %v360
        %v363 = vmul.f32 %v338, %v360
        %v364 = vmul.f32 %v341, %v360
        %v365 = vmul.f32 %v344, %v360
        %v366 = vmul.f32 %v347, %v360
        %v367 = vmul.f32 %v350, %v360
        %v368 = vmul.f32 %v353, %v360
        %v369 = vsub.f32 %v321, %v361
        %v370 = vsub.f32 %v322, %v362
        %v371 = vsub.f32 %v323, %v363
        %v372 = vsub.f32 %v324, %v364
        %v373 = vsub.f32 %v325, %v365
        %v374 = vsub.f32 %v326, %v366
        %v375 = vsub.f32 %v327, %v367
        %v376 = vsub.f32 %v328, %v368
        %v377 = vmul.f32 %v369, %v369
        %v378 = vmul.f32 %v370, %v370
        %v379 = vmul.f32 %v371, %v371
        %v380 = vmul.f32 %v372, %v372
        %v381 = vmul.f32 %v373, %v373
        %v382 = vmul.f32 %v374, %v374
        %v383 = vmul.f32 %v375, %v375
        %v384 = vmul.f32 %v376, %v376
        %v385 = vsel %vm329, %v377, 0.0
        %386 = vadd.xlane.f32.xlu0 %v385
        %v387 = vpop.xlane.xlu0 %386
        %v388 = vsel %vm329, %v378, 0.0
        %389 = vadd.xlane.f32.xlu0 %v388
        %v390 = vpop.xlane.xlu0 %389
        %v391 = vsel %vm329, %v379, 0.0
        %392 = vadd.xlane.f32.xlu0 %v391
        %v393 = vpop.xlane.xlu0 %392
        %v394 = vsel %vm329, %v380, 0.0
        %395 = vadd.xlane.f32.xlu0 %v394
        %v396 = vpop.xlane.xlu0 %395
        %v397 = vsel %vm329, %v381, 0.0
        %398 = vadd.xlane.f32.xlu0 %v397
        %v399 = vpop.xlane.xlu0 %398
        %v400 = vsel %vm329, %v382, 0.0
        %401 = vadd.xlane.f32.xlu0 %v400
        %v402 = vpop.xlane.xlu0 %401
        %v403 = vsel %vm329, %v383, 0.0
        %404 = vadd.xlane.f32.xlu0 %v403
        %v405 = vpop.xlane.xlu0 %404
        %v406 = vsel %vm329, %v384, 0.0
        %407 = vadd.xlane.f32.xlu0 %v406
        %v408 = vpop.xlane.xlu0 %407
        %v409 = vmul.f32 %v387, %v360
        %v410 = vmul.f32 %v390, %v360
        %v411 = vmul.f32 %v393, %v360
        %v412 = vmul.f32 %v396, %v360
        %v413 = vmul.f32 %v399, %v360
        %v414 = vmul.f32 %v402, %v360
        %v415 = vmul.f32 %v405, %v360
        %v416 = vmul.f32 %v408, %v360
        %v417 = vadd.f32 %v409, 1e-05
        %v418 = vadd.f32 %v410, 1e-05
        %v419 = vadd.f32 %v411, 1e-05
        %v420 = vadd.f32 %v412, 1e-05
        %v421 = vadd.f32 %v413, 1e-05
        %v422 = vadd.f32 %v414, 1e-05
        %v423 = vadd.f32 %v415, 1e-05
        %v424 = vadd.f32 %v416, 1e-05
        %v425 = vrsqrt.pop %v417
        %v426 = vmul.f32 %v425, %v417
        %v427 = vmul.f32 %v426, %v425
        %v428 = vmul.f32 0.5, %v427
        %v429 = vsub.f32 1.5, %v428
        %v430 = vmul.f32 %v425, %v429
        %vm431 = vweird.f32 %v417
        %vm432 = vweird.f32 %v425
        %vm433 = vmor %vm431, %vm432
        %v434 = vsel %vm433, %v425, %v430
        %v435 = vrsqrt.pop %v418
        %v436 = vmul.f32 %v435, %v418
        %v437 = vmul.f32 %v436, %v435
        %v438 = vmul.f32 0.5, %v437
        %v439 = vsub.f32 1.5, %v438
        %v440 = vmul.f32 %v435, %v439
        %vm441 = vweird.f32 %v418
        %vm442 = vweird.f32 %v435
        %vm443 = vmor %vm441, %vm442
        %v444 = vsel %vm443, %v435, %v440
        %v445 = vrsqrt.pop %v419
        %v446 = vmul.f32 %v445, %v419
        %v447 = vmul.f32 %v446, %v445
        %v448 = vmul.f32 0.5, %v447
        %v449 = vsub.f32 1.5, %v448
        %v450 = vmul.f32 %v445, %v449
        %vm451 = vweird.f32 %v419
        %vm452 = vweird.f32 %v445
        %vm453 = vmor %vm451, %vm452
        %v454 = vsel %vm453, %v445, %v450
        %v455 = vrsqrt.pop %v420
        %v456 = vmul.f32 %v455, %v420
        %v457 = vmul.f32 %v456, %v455
        %v458 = vmul.f32 0.5, %v457
        %v459 = vsub.f32 1.5, %v458
        %v460 = vmul.f32 %v455, %v459
        %vm461 = vweird.f32 %v420
        %vm462 = vweird.f32 %v455
        %vm463 = vmor %vm461, %vm462
        %v464 = vsel %vm463, %v455, %v460
        %v465 = vrsqrt.pop %v421
        %v466 = vmul.f32 %v465, %v421
        %v467 = vmul.f32 %v466, %v465
        %v468 = vmul.f32 0.5, %v467
        %v469 = vsub.f32 1.5, %v468
        %v470 = vmul.f32 %v465, %v469
        %vm471 = vweird.f32 %v421
        %vm472 = vweird.f32 %v465
        %vm473 = vmor %vm471, %vm472
        %v474 = vsel %vm473, %v465, %v470
        %v475 = vrsqrt.pop %v422
        %v476 = vmul.f32 %v475, %v422
        %v477 = vmul.f32 %v476, %v475
        %v478 = vmul.f32 0.5, %v477
        %v479 = vsub.f32 1.5, %v478
        %v480 = vmul.f32 %v475, %v479
        %vm481 = vweird.f32 %v422
        %vm482 = vweird.f32 %v475
        %vm483 = vmor %vm481, %vm482
        %v484 = vsel %vm483, %v475, %v480
        %v485 = vrsqrt.pop %v423
        %v486 = vmul.f32 %v485, %v423
        %v487 = vmul.f32 %v486, %v485
        %v488 = vmul.f32 0.5, %v487
        %v489 = vsub.f32 1.5, %v488
        %v490 = vmul.f32 %v485, %v489
        %vm491 = vweird.f32 %v423
        %vm492 = vweird.f32 %v485
        %vm493 = vmor %vm491, %vm492
        %v494 = vsel %vm493, %v485, %v490
        %v495 = vrsqrt.pop %v424
        %v496 = vmul.f32 %v495, %v424
        %v497 = vmul.f32 %v496, %v495
        %v498 = vmul.f32 0.5, %v497
        %v499 = vsub.f32 1.5, %v498
        %v500 = vmul.f32 %v495, %v499
        %vm501 = vweird.f32 %v424
        %vm502 = vweird.f32 %v495
        %vm503 = vmor %vm501, %vm502
        %v504 = vsel %vm503, %v495, %v500
        %v505 = vmul.f32 %v369, %v434
        %v506 = vmul.f32 %v370, %v444
        %v507 = vmul.f32 %v371, %v454
        %v508 = vmul.f32 %v372, %v464
        %v509 = vmul.f32 %v373, %v474
        %v510 = vmul.f32 %v374, %v484
        %v511 = vmul.f32 %v375, %v494
        %v512 = vmul.f32 %v376, %v504
        %v513 = vld [vmem:[%s1] sm:$0x1]
        %v515 = vperm.slane %v513, 0
        %v517 = vmul.f32 %v505, %v515
        %v518 = vmul.f32 %v506, %v515
        %v519 = vmul.f32 %v507, %v515
        %v520 = vmul.f32 %v508, %v515
        %v521 = vmul.f32 %v509, %v515
        %v522 = vmul.f32 %v510, %v515
        %v523 = vmul.f32 %v511, %v515
        %v524 = vmul.f32 %v512, %v515
        %v525 = vld [vmem:[%s2] sm:$0x1]
        %v527 = vperm.slane %v525, 0
        %v529 = vadd.f32 %v517, %v527
        %v530 = vadd.f32 %v518, %v527
        %v531 = vadd.f32 %v519, %v527
        %v532 = vadd.f32 %v520, %v527
        %v533 = vadd.f32 %v521, %v527
        %v534 = vadd.f32 %v522, %v527
        %v535 = vadd.f32 %v523, %v527
        %v536 = vadd.f32 %v524, %v527
        %v537 = vpack.c.bf16 %v530, %v529
        %v538 = vpack.c.bf16 %v532, %v531
        %v539 = vpack.c.bf16 %v534, %v533
        %v540 = vpack.c.bf16 %v536, %v535
        %v541 = vld [vmem:[%s3] sm:$0xf]
        %v542 = vld [vmem:[%s3 + $0x4] sm:$0xf]
        %v543 = vld [vmem:[%s3 + $0x8] sm:$0xf]
        %v544 = vld [vmem:[%s3 + $0xc] sm:$0xf]
        %v549 = vunpack.c.l.b16 %v541
        %v550 = vunpack.c.l.b16 %v542
        %v551 = vunpack.c.l.b16 %v543
        %v552 = vunpack.c.l.b16 %v544
        %v553 = vpack.c.b16 %v550, %v549
        %v554 = vpack.c.b16 %v552, %v551
        %v558 = vsel %vm329, %v537, 0
        %v561 = vsel %vm329, %v538, 0
        %v564 = vsel %vm329, %v539, 0
        %v567 = vsel %vm329, %v540, 0
        %569 = vmatpush.bf16.msra.mxu0 0
        %570 = vmatpush.bf16.msra.mxu0 0
        %571 = vmatpush.bf16.msra.mxu0 0
        %572 = vmatpush.bf16.msra.mxu0 0
        %573 = vmatpush.bf16.msra.mxu0 0
        %574 = vmatpush.bf16.msra.mxu0 0
        %575 = vmatpush.bf16.msra.mxu0 %v554
        %576 = vmatpush.bf16.msra.mxu0 %v553
        %577 = vmatmul.bf16.gmra.mxu0 %v558
        %v578 = vpop.f32.mrf.mxu0
        %v579 = vadd.f32 0.0, %v578
        %v580 = vpop.f32.mrf.mxu0
        %v581 = vadd.f32 0.0, %v580
        %582 = vmatmul.bf16.gmra.mxu0 %v561
        %v583 = vpop.f32.mrf.mxu0
        %v584 = vadd.f32 0.0, %v583
        %v585 = vpop.f32.mrf.mxu0
        %v586 = vadd.f32 0.0, %v585
        %587 = vmatmul.bf16.gmra.mxu0 %v564
        %v588 = vpop.f32.mrf.mxu0
        %v589 = vadd.f32 0.0, %v588
        %v590 = vpop.f32.mrf.mxu0
        %v591 = vadd.f32 0.0, %v590
        %592 = vmatmul.bf16.gmra.mxu0 %v567
        %v593 = vpop.f32.mrf.mxu0
        %v594 = vadd.f32 0.0, %v593
        %v595 = vpop.f32.mrf.mxu0
        %v596 = vadd.f32 0.0, %v595
        %597 = vdwg.mxu0
        %v598 = vpack.c.bf16 %v579, %v579
        %v599 = vpack.c.bf16 %v581, %v581
        %v600 = vpack.c.bf16 %v584, %v584
        %v601 = vpack.c.bf16 %v586, %v586
        %v602 = vpack.c.bf16 %v589, %v589
        %v603 = vpack.c.bf16 %v591, %v591
        %v604 = vpack.c.bf16 %v594, %v594
        %v605 = vpack.c.bf16 %v596, %v596
        %v606 = vld [vmem:[#allocation4] sm:$0xf]
        %v607 = vld [vmem:[#allocation4 + $0x4] sm:$0xf]
        %v608 = vld [vmem:[#allocation4 + $0x8] sm:$0xf]
        %v609 = vld [vmem:[#allocation4 + $0xc] sm:$0xf]
        %v610 = vld [vmem:[%s6] sm:$0xff]
        %v611 = vld [vmem:[%s6 + $0x8] sm:$0xff]
        %v614 = vunpack.c.l.b16 %v598
        %v615 = vunpack.c.l.b16 %v599
        %v616 = vpack.c.b16 %v615, %v614
        %617 = vrot.lane.b32.xlu0 %v616, 96
        %v618 = vpop.permute.xlu0 %617
        %vm619 = vcmask 130048
        %v621 = vsel %vm619, %v616, 0
        %v624 = vsel %vm619, %v618, 0
        %626 = vmatpush.bf16.xpose.msra.mxu0 0
        %627 = vmatpush.bf16.xpose.msra.mxu0 0
        %628 = vmatpush.bf16.xpose.msra.mxu0 0
        %629 = vmatpush.bf16.xpose.msra.mxu0 0
        %630 = vmatpush.bf16.xpose.msra.mxu0 0
        %631 = vmatpush.bf16.xpose.msra.mxu0 0
        %632 = vmatpush.bf16.xpose.msra.mxu0 0
        %633 = vmatpush.bf16.xpose.msra.mxu0 %v624
        %634 = vmatmul.bf16.gmra.mxu0 %v621
        %v635 = vpop.f32.mrf.mxu0
        %v636 = vadd.f32 %v610, %v635
        %v637 = vpop.f32.mrf.mxu0
        %v638 = vadd.f32 %v611, %v637
        %639 = vdwg.mxu0
        %v640 = vsel %vm619, %v636, -inf
        %641 = vmax.xlane.f32.xlu0 %v640
        %v642 = vpop.xlane.xlu0 %641
        %v643 = vsel %vm619, %v638, -inf
        %644 = vmax.xlane.f32.xlu0 %v643
        %v645 = vpop.xlane.xlu0 %644
        %v646 = vsub.f32 %v636, %v642
        %v647 = vsub.f32 %v638, %v645
        %v648 = vmul.f32 %v646, 1.442695
        %v649 = vpow.pop %v648
        %v650 = vmul.f32 %v647, 1.442695
        %v651 = vpow.pop %v650
        %v652 = vsel %vm619, %v649, 0.0
        %653 = vadd.xlane.f32.xlu0 %v652
        %v654 = vpop.xlane.xlu0 %653
        %v655 = vsel %vm619, %v651, 0.0
        %656 = vadd.xlane.f32.xlu0 %v655
        %v657 = vpop.xlane.xlu0 %656
        %v658 = vrcp.pop %v654
        %v659 = vrcp.pop %v657
        %v660 = vmul.f32 %v649, %v658
        %v661 = vmul.f32 %v651, %v659
        %v662 = vpack.c.bf16 %v661, %v660
        %663 = vrot.lane.b32.xlu0 %v616, 64
        %v664 = vpop.permute.xlu0 %663
        %v667 = vsel %vm619, %v662, 0
        %669 = vmatpush.bf16.msra.mxu0 0
        %670 = vmatpush.bf16.msra.mxu0 0
        %671 = vmatpush.bf16.msra.mxu0 0
        %672 = vmatpush.bf16.msra.mxu0 0
        %673 = vmatpush.bf16.msra.mxu0 0
        %674 = vmatpush.bf16.msra.mxu0 0
        %675 = vmatpush.bf16.msra.mxu0 0
        %676 = vmatpush.bf16.msra.mxu0 %v664
        %677 = vmatmul.bf16.gmra.mxu0 %v667
        %v678 = vpop.f32.mrf.mxu0
        %v679 = vadd.f32 0.0, %v678
        %v680 = vpop.f32.mrf.mxu0
        %v681 = vadd.f32 0.0, %v680
        %682 = vdwg.mxu0
        %s683 = scalar_lea.vmem %s6, 16
        %v684 = vld [vmem:[%s683] sm:$0xff]
        %v685 = vld [vmem:[%s683 + $0x8] sm:$0xff]
        %686 = vrot.lane.b32.xlu0 %v616, 112
        %v687 = vpop.permute.xlu0 %686
        %688 = vrot.lane.b32.xlu0 %v616, 80
        %v689 = vpop.permute.xlu0 %688
        %v691 = vsel %vm619, %v687, 0
        %v694 = vsel %vm619, %v689, 0
        %696 = vmatpush.bf16.xpose.msra.mxu0 0
        %697 = vmatpush.bf16.xpose.msra.mxu0 0
        %698 = vmatpush.bf16.xpose.msra.mxu0 0
        %699 = vmatpush.bf16.xpose.msra.mxu0 0
        %700 = vmatpush.bf16.xpose.msra.mxu0 0
        %701 = vmatpush.bf16.xpose.msra.mxu0 0
        %702 = vmatpush.bf16.xpose.msra.mxu0 0
        %703 = vmatpush.bf16.xpose.msra.mxu0 %v694
        %704 = vmatmul.bf16.gmra.mxu0 %v691
        %v705 = vpop.f32.mrf.mxu0
        %v706 = vadd.f32 %v684, %v705
        %v707 = vpop.f32.mrf.mxu0
        %v708 = vadd.f32 %v685, %v707
        %709 = vdwg.mxu0
        %v710 = vsel %vm619, %v706, -inf
        %711 = vmax.xlane.f32.xlu0 %v710
        %v712 = vpop.xlane.xlu0 %711
        %v713 = vsel %vm619, %v708, -inf
        %714 = vmax.xlane.f32.xlu0 %v713
        %v715 = vpop.xlane.xlu0 %714
        %v716 = vsub.f32 %v706, %v712
        %v717 = vsub.f32 %v708, %v715
        %v718 = vmul.f32 %v716, 1.442695
        %v719 = vpow.pop %v718
        %v720 = vmul.f32 %v717, 1.442695
        %v721 = vpow.pop %v720
        %v722 = vsel %vm619, %v719, 0.0
        %723 = vadd.xlane.f32.xlu0 %v722
        %v724 = vpop.xlane.xlu0 %723
        %v725 = vsel %vm619, %v721, 0.0
        %726 = vadd.xlane.f32.xlu0 %v725
        %v727 = vpop.xlane.xlu0 %726
        %v728 = vrcp.pop %v724
        %v729 = vrcp.pop %v727
        %v730 = vmul.f32 %v719, %v728
        %v731 = vmul.f32 %v721, %v729
        %v732 = vpack.c.bf16 %v731, %v730
        %733 = vrot.lane.b32.xlu0 %v616, 48
        %v734 = vpop.permute.xlu0 %733
        %v737 = vsel %vm619, %v732, 0
        %739 = vmatpush.bf16.msra.mxu0 0
        %740 = vmatpush.bf16.msra.mxu0 0
        %741 = vmatpush.bf16.msra.mxu0 0
        %742 = vmatpush.bf16.msra.mxu0 0
        %743 = vmatpush.bf16.msra.mxu0 0
        %744 = vmatpush.bf16.msra.mxu0 0
        %745 = vmatpush.bf16.msra.mxu0 0
        %746 = vmatpush.bf16.msra.mxu0 %v734
        %747 = vmatmul.bf16.gmra.mxu0 %v737
        %v748 = vpop.f32.mrf.mxu0
        %v749 = vadd.f32 0.0, %v748
        %v750 = vpop.f32.mrf.mxu0
        %v751 = vadd.f32 0.0, %v750
        %752 = vdwg.mxu0
        %755 = vrot.lane.b32.xlu0 %v749, 16
        %v756 = vpop.permute.xlu0 %755
        %757 = vrot.lane.b32.xlu0 %v751, 16
        %v758 = vpop.permute.xlu0 %757
        %v761 = vsel %vm619, %v679, %v756
        %v762 = vsel %vm619, %v681, %v758
        %v765 = vunpack.c.l.b16 %v600
        %v766 = vunpack.c.l.b16 %v601
        %v767 = vpack.c.b16 %v766, %v765
        %768 = vrot.lane.b32.xlu0 %v767, 96
        %v769 = vpop.permute.xlu0 %768
        %v771 = vsel %vm619, %v767, 0
        %v774 = vsel %vm619, %v769, 0
        %776 = vmatpush.bf16.xpose.msra.mxu0 0
        %777 = vmatpush.bf16.xpose.msra.mxu0 0
        %778 = vmatpush.bf16.xpose.msra.mxu0 0
        %779 = vmatpush.bf16.xpose.msra.mxu0 0
        %780 = vmatpush.bf16.xpose.msra.mxu0 0
        %781 = vmatpush.bf16.xpose.msra.mxu0 0
        %782 = vmatpush.bf16.xpose.msra.mxu0 0
        %783 = vmatpush.bf16.xpose.msra.mxu0 %v774
        %784 = vmatmul.bf16.gmra.mxu0 %v771
        %v785 = vpop.f32.mrf.mxu0
        %v786 = vadd.f32 %v610, %v785
        %v787 = vpop.f32.mrf.mxu0
        %v788 = vadd.f32 %v611, %v787
        %789 = vdwg.mxu0
        %v790 = vsel %vm619, %v786, -inf
        %791 = vmax.xlane.f32.xlu0 %v790
        %v792 = vpop.xlane.xlu0 %791
        %v793 = vsel %vm619, %v788, -inf
        %794 = vmax.xlane.f32.xlu0 %v793
        %v795 = vpop.xlane.xlu0 %794
        %v796 = vsub.f32 %v786, %v792
        %v797 = vsub.f32 %v788, %v795
        %v798 = vmul.f32 %v796, 1.442695
        %v799 = vpow.pop %v798
        %v800 = vmul.f32 %v797, 1.442695
        %v801 = vpow.pop %v800
        %v802 = vsel %vm619, %v799, 0.0
        %803 = vadd.xlane.f32.xlu0 %v802
        %v804 = vpop.xlane.xlu0 %803
        %v805 = vsel %vm619, %v801, 0.0
        %806 = vadd.xlane.f32.xlu0 %v805
        %v807 = vpop.xlane.xlu0 %806
        %v808 = vrcp.pop %v804
        %v809 = vrcp.pop %v807
        %v810 = vmul.f32 %v799, %v808
        %v811 = vmul.f32 %v801, %v809
        %v812 = vpack.c.bf16 %v811, %v810
        %813 = vrot.lane.b32.xlu0 %v767, 64
        %v814 = vpop.permute.xlu0 %813
        %v817 = vsel %vm619, %v812, 0
        %819 = vmatpush.bf16.msra.mxu0 0
        %820 = vmatpush.bf16.msra.mxu0 0
        %821 = vmatpush.bf16.msra.mxu0 0
        %822 = vmatpush.bf16.msra.mxu0 0
        %823 = vmatpush.bf16.msra.mxu0 0
        %824 = vmatpush.bf16.msra.mxu0 0
        %825 = vmatpush.bf16.msra.mxu0 0
        %826 = vmatpush.bf16.msra.mxu0 %v814
        %827 = vmatmul.bf16.gmra.mxu0 %v817
        %v828 = vpop.f32.mrf.mxu0
        %v829 = vadd.f32 0.0, %v828
        %v830 = vpop.f32.mrf.mxu0
        %v831 = vadd.f32 0.0, %v830
        %832 = vdwg.mxu0
        %833 = vrot.lane.b32.xlu0 %v767, 112
        %v834 = vpop.permute.xlu0 %833
        %835 = vrot.lane.b32.xlu0 %v767, 80
        %v836 = vpop.permute.xlu0 %835
        %v838 = vsel %vm619, %v834, 0
        %v841 = vsel %vm619, %v836, 0
        %843 = vmatpush.bf16.xpose.msra.mxu0 0
        %844 = vmatpush.bf16.xpose.msra.mxu0 0
        %845 = vmatpush.bf16.xpose.msra.mxu0 0
        %846 = vmatpush.bf16.xpose.msra.mxu0 0
        %847 = vmatpush.bf16.xpose.msra.mxu0 0
        %848 = vmatpush.bf16.xpose.msra.mxu0 0
        %849 = vmatpush.bf16.xpose.msra.mxu0 0
        %850 = vmatpush.bf16.xpose.msra.mxu0 %v841
        %851 = vmatmul.bf16.gmra.mxu0 %v838
        %v852 = vpop.f32.mrf.mxu0
        %v853 = vadd.f32 %v684, %v852
        %v854 = vpop.f32.mrf.mxu0
        %v855 = vadd.f32 %v685, %v854
        %856 = vdwg.mxu0
        %v857 = vsel %vm619, %v853, -inf
        %858 = vmax.xlane.f32.xlu0 %v857
        %v859 = vpop.xlane.xlu0 %858
        %v860 = vsel %vm619, %v855, -inf
        %861 = vmax.xlane.f32.xlu0 %v860
        %v862 = vpop.xlane.xlu0 %861
        %v863 = vsub.f32 %v853, %v859
        %v864 = vsub.f32 %v855, %v862
        %v865 = vmul.f32 %v863, 1.442695
        %v866 = vpow.pop %v865
        %v867 = vmul.f32 %v864, 1.442695
        %v868 = vpow.pop %v867
        %v869 = vsel %vm619, %v866, 0.0
        %870 = vadd.xlane.f32.xlu0 %v869
        %v871 = vpop.xlane.xlu0 %870
        %v872 = vsel %vm619, %v868, 0.0
        %873 = vadd.xlane.f32.xlu0 %v872
        %v874 = vpop.xlane.xlu0 %873
        %v875 = vrcp.pop %v871
        %v876 = vrcp.pop %v874
        %v877 = vmul.f32 %v866, %v875
        %v878 = vmul.f32 %v868, %v876
        %v879 = vpack.c.bf16 %v878, %v877
        %880 = vrot.lane.b32.xlu0 %v767, 48
        %v881 = vpop.permute.xlu0 %880
        %v884 = vsel %vm619, %v879, 0
        %886 = vmatpush.bf16.msra.mxu0 0
        %887 = vmatpush.bf16.msra.mxu0 0
        %888 = vmatpush.bf16.msra.mxu0 0
        %889 = vmatpush.bf16.msra.mxu0 0
        %890 = vmatpush.bf16.msra.mxu0 0
        %891 = vmatpush.bf16.msra.mxu0 0
        %892 = vmatpush.bf16.msra.mxu0 0
        %893 = vmatpush.bf16.msra.mxu0 %v881
        %894 = vmatmul.bf16.gmra.mxu0 %v884
        %v895 = vpop.f32.mrf.mxu0
        %v896 = vadd.f32 0.0, %v895
        %v897 = vpop.f32.mrf.mxu0
        %v898 = vadd.f32 0.0, %v897
        %899 = vdwg.mxu0
        %902 = vrot.lane.b32.xlu0 %v896, 16
        %v903 = vpop.permute.xlu0 %902
        %904 = vrot.lane.b32.xlu0 %v898, 16
        %v905 = vpop.permute.xlu0 %904
        %v908 = vsel %vm619, %v829, %v903
        %v909 = vsel %vm619, %v831, %v905
        %v912 = vunpack.c.l.b16 %v602
        %v913 = vunpack.c.l.b16 %v603
        %v914 = vpack.c.b16 %v913, %v912
        %915 = vrot.lane.b32.xlu0 %v914, 96
        %v916 = vpop.permute.xlu0 %915
        %v918 = vsel %vm619, %v914, 0
        %v921 = vsel %vm619, %v916, 0
        %923 = vmatpush.bf16.xpose.msra.mxu0 0
        %924 = vmatpush.bf16.xpose.msra.mxu0 0
        %925 = vmatpush.bf16.xpose.msra.mxu0 0
        %926 = vmatpush.bf16.xpose.msra.mxu0 0
        %927 = vmatpush.bf16.xpose.msra.mxu0 0
        %928 = vmatpush.bf16.xpose.msra.mxu0 0
        %929 = vmatpush.bf16.xpose.msra.mxu0 0
        %930 = vmatpush.bf16.xpose.msra.mxu0 %v921
        %931 = vmatmul.bf16.gmra.mxu0 %v918
        %v932 = vpop.f32.mrf.mxu0
        %v933 = vadd.f32 %v610, %v932
        %v934 = vpop.f32.mrf.mxu0
        %v935 = vadd.f32 %v611, %v934
        %936 = vdwg.mxu0
        %v937 = vsel %vm619, %v933, -inf
        %938 = vmax.xlane.f32.xlu0 %v937
        %v939 = vpop.xlane.xlu0 %938
        %v940 = vsel %vm619, %v935, -inf
        %941 = vmax.xlane.f32.xlu0 %v940
        %v942 = vpop.xlane.xlu0 %941
        %v943 = vsub.f32 %v933, %v939
        %v944 = vsub.f32 %v935, %v942
        %v945 = vmul.f32 %v943, 1.442695
        %v946 = vpow.pop %v945
        %v947 = vmul.f32 %v944, 1.442695
        %v948 = vpow.pop %v947
        %v949 = vsel %vm619, %v946, 0.0
        %950 = vadd.xlane.f32.xlu0 %v949
        %v951 = vpop.xlane.xlu0 %950
        %v952 = vsel %vm619, %v948, 0.0
        %953 = vadd.xlane.f32.xlu0 %v952
        %v954 = vpop.xlane.xlu0 %953
        %v955 = vrcp.pop %v951
        %v956 = vrcp.pop %v954
        %v957 = vmul.f32 %v946, %v955
        %v958 = vmul.f32 %v948, %v956
        %v959 = vpack.c.bf16 %v958, %v957
        %960 = vrot.lane.b32.xlu0 %v914, 64
        %v961 = vpop.permute.xlu0 %960
        %v964 = vsel %vm619, %v959, 0
        %966 = vmatpush.bf16.msra.mxu0 0
        %967 = vmatpush.bf16.msra.mxu0 0
        %968 = vmatpush.bf16.msra.mxu0 0
        %969 = vmatpush.bf16.msra.mxu0 0
        %970 = vmatpush.bf16.msra.mxu0 0
        %971 = vmatpush.bf16.msra.mxu0 0
        %972 = vmatpush.bf16.msra.mxu0 0
        %973 = vmatpush.bf16.msra.mxu0 %v961
        %974 = vmatmul.bf16.gmra.mxu0 %v964
        %v975 = vpop.f32.mrf.mxu0
        %v976 = vadd.f32 0.0, %v975
        %v977 = vpop.f32.mrf.mxu0
        %v978 = vadd.f32 0.0, %v977
        %979 = vdwg.mxu0
        %980 = vrot.lane.b32.xlu0 %v914, 112
        %v981 = vpop.permute.xlu0 %980
        %982 = vrot.lane.b32.xlu0 %v914, 80
        %v983 = vpop.permute.xlu0 %982
        %v985 = vsel %vm619, %v981, 0
        %v988 = vsel %vm619, %v983, 0
        %990 = vmatpush.bf16.xpose.msra.mxu0 0
        %991 = vmatpush.bf16.xpose.msra.mxu0 0
        %992 = vmatpush.bf16.xpose.msra.mxu0 0
        %993 = vmatpush.bf16.xpose.msra.mxu0 0
        %994 = vmatpush.bf16.xpose.msra.mxu0 0
        %995 = vmatpush.bf16.xpose.msra.mxu0 0
        %996 = vmatpush.bf16.xpose.msra.mxu0 0
        %997 = vmatpush.bf16.xpose.msra.mxu0 %v988
        %998 = vmatmul.bf16.gmra.mxu0 %v985
        %v999 = vpop.f32.mrf.mxu0
        %v1000 = vadd.f32 %v684, %v999
        %v1001 = vpop.f32.mrf.mxu0
        %v1002 = vadd.f32 %v685, %v1001
        %1003 = vdwg.mxu0
        %v1004 = vsel %vm619, %v1000, -inf
        %1005 = vmax.xlane.f32.xlu0 %v1004
        %v1006 = vpop.xlane.xlu0 %1005
        %v1007 = vsel %vm619, %v1002, -inf
        %1008 = vmax.xlane.f32.xlu0 %v1007
        %v1009 = vpop.xlane.xlu0 %1008
        %v1010 = vsub.f32 %v1000, %v1006
        %v1011 = vsub.f32 %v1002, %v1009
        %v1012 = vmul.f32 %v1010, 1.442695
        %v1013 = vpow.pop %v1012
        %v1014 = vmul.f32 %v1011, 1.442695
        %v1015 = vpow.pop %v1014
        %v1016 = vsel %vm619, %v1013, 0.0
        %1017 = vadd.xlane.f32.xlu0 %v1016
        %v1018 = vpop.xlane.xlu0 %1017
        %v1019 = vsel %vm619, %v1015, 0.0
        %1020 = vadd.xlane.f32.xlu0 %v1019
        %v1021 = vpop.xlane.xlu0 %1020
        %v1022 = vrcp.pop %v1018
        %v1023 = vrcp.pop %v1021
        %v1024 = vmul.f32 %v1013, %v1022
        %v1025 = vmul.f32 %v1015, %v1023
        %v1026 = vpack.c.bf16 %v1025, %v1024
        %1027 = vrot.lane.b32.xlu0 %v914, 48
        %v1028 = vpop.permute.xlu0 %1027
        %v1031 = vsel %vm619, %v1026, 0
        %1033 = vmatpush.bf16.msra.mxu0 0
        %1034 = vmatpush.bf16.msra.mxu0 0
        %1035 = vmatpush.bf16.msra.mxu0 0
        %1036 = vmatpush.bf16.msra.mxu0 0
        %1037 = vmatpush.bf16.msra.mxu0 0
        %1038 = vmatpush.bf16.msra.mxu0 0
        %1039 = vmatpush.bf16.msra.mxu0 0
        %1040 = vmatpush.bf16.msra.mxu0 %v1028
        %1041 = vmatmul.bf16.gmra.mxu0 %v1031
        %v1042 = vpop.f32.mrf.mxu0
        %v1043 = vadd.f32 0.0, %v1042
        %v1044 = vpop.f32.mrf.mxu0
        %v1045 = vadd.f32 0.0, %v1044
        %1046 = vdwg.mxu0
        %1049 = vrot.lane.b32.xlu0 %v1043, 16
        %v1050 = vpop.permute.xlu0 %1049
        %1051 = vrot.lane.b32.xlu0 %v1045, 16
        %v1052 = vpop.permute.xlu0 %1051
        %v1055 = vsel %vm619, %v976, %v1050
        %v1056 = vsel %vm619, %v978, %v1052
        %v1059 = vunpack.c.l.b16 %v604
        %v1060 = vunpack.c.l.b16 %v605
        %v1061 = vpack.c.b16 %v1060, %v1059
        %1062 = vrot.lane.b32.xlu0 %v1061, 96
        %v1063 = vpop.permute.xlu0 %1062
        %v1065 = vsel %vm619, %v1061, 0
        %v1068 = vsel %vm619, %v1063, 0
        %1070 = vmatpush.bf16.xpose.msra.mxu0 0
        %1071 = vmatpush.bf16.xpose.msra.mxu0 0
        %1072 = vmatpush.bf16.xpose.msra.mxu0 0
        %1073 = vmatpush.bf16.xpose.msra.mxu0 0
        %1074 = vmatpush.bf16.xpose.msra.mxu0 0
        %1075 = vmatpush.bf16.xpose.msra.mxu0 0
        %1076 = vmatpush.bf16.xpose.msra.mxu0 0
        %1077 = vmatpush.bf16.xpose.msra.mxu0 %v1068
        %1078 = vmatmul.bf16.gmra.mxu0 %v1065
        %v1079 = vpop.f32.mrf.mxu0
        %v1080 = vadd.f32 %v610, %v1079
        %v1081 = vpop.f32.mrf.mxu0
        %v1082 = vadd.f32 %v611, %v1081
        %1083 = vdwg.mxu0
        %v1084 = vsel %vm619, %v1080, -inf
        %1085 = vmax.xlane.f32.xlu0 %v1084
        %v1086 = vpop.xlane.xlu0 %1085
        %v1087 = vsel %vm619, %v1082, -inf
        %1088 = vmax.xlane.f32.xlu0 %v1087
        %v1089 = vpop.xlane.xlu0 %1088
        %v1090 = vsub.f32 %v1080, %v1086
        %v1091 = vsub.f32 %v1082, %v1089
        %v1092 = vmul.f32 %v1090, 1.442695
        %v1093 = vpow.pop %v1092
        %v1094 = vmul.f32 %v1091, 1.442695
        %v1095 = vpow.pop %v1094
        %v1096 = vsel %vm619, %v1093, 0.0
        %1097 = vadd.xlane.f32.xlu0 %v1096
        %v1098 = vpop.xlane.xlu0 %1097
        %v1099 = vsel %vm619, %v1095, 0.0
        %1100 = vadd.xlane.f32.xlu0 %v1099
        %v1101 = vpop.xlane.xlu0 %1100
        %v1102 = vrcp.pop %v1098
        %v1103 = vrcp.pop %v1101
        %v1104 = vmul.f32 %v1093, %v1102
        %v1105 = vmul.f32 %v1095, %v1103
        %v1106 = vpack.c.bf16 %v1105, %v1104
        %1107 = vrot.lane.b32.xlu0 %v1061, 64
        %v1108 = vpop.permute.xlu0 %1107
        %v1111 = vsel %vm619, %v1106, 0
        %1113 = vmatpush.bf16.msra.mxu0 0
        %1114 = vmatpush.bf16.msra.mxu0 0
        %1115 = vmatpush.bf16.msra.mxu0 0
        %1116 = vmatpush.bf16.msra.mxu0 0
        %1117 = vmatpush.bf16.msra.mxu0 0
        %1118 = vmatpush.bf16.msra.mxu0 0
        %1119 = vmatpush.bf16.msra.mxu0 0
        %1120 = vmatpush.bf16.msra.mxu0 %v1108
        %1121 = vmatmul.bf16.gmra.mxu0 %v1111
        %v1122 = vpop.f32.mrf.mxu0
        %v1123 = vadd.f32 0.0, %v1122
        %v1124 = vpop.f32.mrf.mxu0
        %v1125 = vadd.f32 0.0, %v1124
        %1126 = vdwg.mxu0
        %1127 = vrot.lane.b32.xlu0 %v1061, 112
        %v1128 = vpop.permute.xlu0 %1127
        %1129 = vrot.lane.b32.xlu0 %v1061, 80
        %v1130 = vpop.permute.xlu0 %1129
        %v1132 = vsel %vm619, %v1128, 0
        %v1135 = vsel %vm619, %v1130, 0
        %1137 = vmatpush.bf16.xpose.msra.mxu0 0
        %1138 = vmatpush.bf16.xpose.msra.mxu0 0
        %1139 = vmatpush.bf16.xpose.msra.mxu0 0
        %1140 = vmatpush.bf16.xpose.msra.mxu0 0
        %1141 = vmatpush.bf16.xpose.msra.mxu0 0
        %1142 = vmatpush.bf16.xpose.msra.mxu0 0
        %1143 = vmatpush.bf16.xpose.msra.mxu0 0
        %1144 = vmatpush.bf16.xpose.msra.mxu0 %v1135
        %1145 = vmatmul.bf16.gmra.mxu0 %v1132
        %v1146 = vpop.f32.mrf.mxu0
        %v1147 = vadd.f32 %v684, %v1146
        %v1148 = vpop.f32.mrf.mxu0
        %v1149 = vadd.f32 %v685, %v1148
        %1150 = vdwg.mxu0
        %v1151 = vsel %vm619, %v1147, -inf
        %1152 = vmax.xlane.f32.xlu0 %v1151
        %v1153 = vpop.xlane.xlu0 %1152
        %v1154 = vsel %vm619, %v1149, -inf
        %1155 = vmax.xlane.f32.xlu0 %v1154
        %v1156 = vpop.xlane.xlu0 %1155
        %v1157 = vsub.f32 %v1147, %v1153
        %v1158 = vsub.f32 %v1149, %v1156
        %v1159 = vmul.f32 %v1157, 1.442695
        %v1160 = vpow.pop %v1159
        %v1161 = vmul.f32 %v1158, 1.442695
        %v1162 = vpow.pop %v1161
        %v1163 = vsel %vm619, %v1160, 0.0
        %1164 = vadd.xlane.f32.xlu0 %v1163
        %v1165 = vpop.xlane.xlu0 %1164
        %v1166 = vsel %vm619, %v1162, 0.0
        %1167 = vadd.xlane.f32.xlu0 %v1166
        %v1168 = vpop.xlane.xlu0 %1167
        %v1169 = vrcp.pop %v1165
        %v1170 = vrcp.pop %v1168
        %v1171 = vmul.f32 %v1160, %v1169
        %v1172 = vmul.f32 %v1162, %v1170
        %v1173 = vpack.c.bf16 %v1172, %v1171
        %1174 = vrot.lane.b32.xlu0 %v1061, 48
        %v1175 = vpop.permute.xlu0 %1174
        %v1178 = vsel %vm619, %v1173, 0
        %1180 = vmatpush.bf16.msra.mxu0 0
        %1181 = vmatpush.bf16.msra.mxu0 0
        %1182 = vmatpush.bf16.msra.mxu0 0
        %1183 = vmatpush.bf16.msra.mxu0 0
        %1184 = vmatpush.bf16.msra.mxu0 0
        %1185 = vmatpush.bf16.msra.mxu0 0
        %1186 = vmatpush.bf16.msra.mxu0 0
        %1187 = vmatpush.bf16.msra.mxu0 %v1175
        %1188 = vmatmul.bf16.gmra.mxu0 %v1178
        %v1189 = vpop.f32.mrf.mxu0
        %v1190 = vadd.f32 0.0, %v1189
        %v1191 = vpop.f32.mrf.mxu0
        %v1192 = vadd.f32 0.0, %v1191
        %1193 = vdwg.mxu0
        %1196 = vrot.lane.b32.xlu0 %v1190, 16
        %v1197 = vpop.permute.xlu0 %1196
        %1198 = vrot.lane.b32.xlu0 %v1192, 16
        %v1199 = vpop.permute.xlu0 %1198
        %v1202 = vsel %vm619, %v1123, %v1197
        %v1203 = vsel %vm619, %v1125, %v1199
        %v1204 = vpack.c.bf16 %v762, %v761
        %v1205 = vpack.c.bf16 %v909, %v908
        %v1206 = vpack.c.bf16 %v1056, %v1055
        %v1207 = vpack.c.bf16 %v1203, %v1202
        %v1212 = vunpack.c.l.b16 %v606
        %v1213 = vunpack.c.l.b16 %v607
        %v1214 = vunpack.c.l.b16 %v608
        %v1215 = vunpack.c.l.b16 %v609
        %v1216 = vpack.c.b16 %v1213, %v1212
        %v1217 = vpack.c.b16 %v1215, %v1214
        %v1221 = vsel %vm329, %v1204, 0
        %v1224 = vsel %vm329, %v1205, 0
        %v1227 = vsel %vm329, %v1206, 0
        %v1230 = vsel %vm329, %v1207, 0
        %1232 = vmatpush.bf16.msra.mxu0 0
        %1233 = vmatpush.bf16.msra.mxu0 0
        %1234 = vmatpush.bf16.msra.mxu0 0
        %1235 = vmatpush.bf16.msra.mxu0 0
        %1236 = vmatpush.bf16.msra.mxu0 0
        %1237 = vmatpush.bf16.msra.mxu0 0
        %1238 = vmatpush.bf16.msra.mxu0 %v1217
        %1239 = vmatpush.bf16.msra.mxu0 %v1216
        %1240 = vmatmul.bf16.gmra.mxu0 %v1221
        %v1241 = vpop.f32.mrf.mxu0
        %v1242 = vadd.f32 0.0, %v1241
        %v1243 = vpop.f32.mrf.mxu0
        %v1244 = vadd.f32 0.0, %v1243
        %1245 = vmatmul.bf16.gmra.mxu0 %v1224
        %v1246 = vpop.f32.mrf.mxu0
        %v1247 = vadd.f32 0.0, %v1246
        %v1248 = vpop.f32.mrf.mxu0
        %v1249 = vadd.f32 0.0, %v1248
        %1250 = vmatmul.bf16.gmra.mxu0 %v1227
        %v1251 = vpop.f32.mrf.mxu0
        %v1252 = vadd.f32 0.0, %v1251
        %v1253 = vpop.f32.mrf.mxu0
        %v1254 = vadd.f32 0.0, %v1253
        %1255 = vmatmul.bf16.gmra.mxu0 %v1230
        %v1256 = vpop.f32.mrf.mxu0
        %v1257 = vadd.f32 0.0, %v1256
        %v1258 = vpop.f32.mrf.mxu0
        %v1259 = vadd.f32 0.0, %v1258
        %1260 = vdwg.mxu0
        %v1261 = vadd.f32 %v321, %v1242
        %v1262 = vadd.f32 %v322, %v1244
        %v1263 = vadd.f32 %v323, %v1247
        %v1264 = vadd.f32 %v324, %v1249
        %v1265 = vadd.f32 %v325, %v1252
        %v1266 = vadd.f32 %v326, %v1254
        %v1267 = vadd.f32 %v327, %v1257
        %v1268 = vadd.f32 %v328, %v1259
        %v1269 = vld [vmem:[%s5] sm:$0x1]
        %v1271 = vperm.slane %v1269, 0
        %v1273 = vadd.f32 %v1261, %v1271
        %v1274 = vadd.f32 %v1262, %v1271
        %v1275 = vadd.f32 %v1263, %v1271
        %v1276 = vadd.f32 %v1264, %v1271
        %v1277 = vadd.f32 %v1265, %v1271
        %v1278 = vadd.f32 %v1266, %v1271
        %v1279 = vadd.f32 %v1267, %v1271
        %v1280 = vadd.f32 %v1268, %v1271
        %1281 = vst.msk [vmem:[%s318] sm:$0xff] %vm329, %v1273
        %1282 = vst.msk [vmem:[%s318 + $0x8] sm:$0xff] %vm329, %v1274
        %1283 = vst.msk [vmem:[%s318 + $0x10] sm:$0xff] %vm329, %v1275
        %1284 = vst.msk [vmem:[%s318 + $0x18] sm:$0xff] %vm329, %v1276
        %1285 = vst.msk [vmem:[%s318 + $0x20] sm:$0xff] %vm329, %v1277
        %1286 = vst.msk [vmem:[%s318 + $0x28] sm:$0xff] %vm329, %v1278
        %1287 = vst.msk [vmem:[%s318 + $0x30] sm:$0xff] %vm329, %v1279
        %1288 = vst.msk [vmem:[%s318 + $0x38] sm:$0xff] %vm329, %v1280
        %s1289 = smul.u32 8, %s22
        %p1290 = scmp.lt.s32.totalorder %s1289, 15
        %s1291 = scalar_select %p1290, %s1289, 15
        %s1292 = smul.addr %s1291, 8
        %s1293 = scalar_lea.vmem %s7, %s1292
        // Predicated region
        $region57: #{video_encoder_forward.6} parent=47 // pred_check
          %p1294 = pneg %p192
        $region58: #{video_encoder_forward.6} parent=47 // pred_check_branch
          %1296 = sbr.rel (%p1294) target = $region60
        $region59: #{video_encoder_forward.6} parent=47 // pred_region
          %s1297 = smul.u32 8, %s22
        $region60: #{video_encoder_forward.6} parent=47 // pred_fallthru
          _
      $region48: #{video_encoder_forward.6} parent=5 // pred_fallthru
        _
      %p1298 = scmp.le.s32.totalorder 2, %s17
      // Predicated region
      $region61: #{video_encoder_forward.6} parent=5 // pred_check
        %p1299 = pneg %p1298
      $region62: #{video_encoder_forward.6} parent=5 // pred_check_branch
        %1301 = sbr.rel (%p1299) target = $region64
      $region63: #{video_encoder_forward.6} parent=5 // pred_region
        %s1302 = ssub.s32 %s17, 2
        // Predicated region
        $region65: #{video_encoder_forward.6} parent=63 // pred_check
          %p1303 = pneg %p198
        $region66: #{video_encoder_forward.6} parent=63 // pred_check_branch
          %1305 = sbr.rel (%p1303) target = $region68
        $region67: #{video_encoder_forward.6} parent=63 // pred_region
          %s1306 = smul.u32 8, %s23
          %p1307 = scmp.lt.s32.totalorder %s1306, 15
          %s1308 = scalar_select %p1307, %s1306, 15
          %s1309 = smul.addr %s1308, 8
          %s1310 = scalar_lea.vmem %s7, %s1309
        $region68: #{video_encoder_forward.6} parent=63 // pred_fallthru
          _
      $region64: #{video_encoder_forward.6} parent=5 // pred_fallthru
        _
    $region6: #{video_encoder_forward.6} parent=1 // loop_footer
      %s21 = sadd.s32 1, %s17
    $region7: #{video_encoder_forward.6} parent=1 // loop_footer_branch
      %16 = sbr.rel target = $region3
    $region8: #{video_encoder_forward.6} parent=1 // loop_exit
      _
    %1311 = vsyncpa [#allocation3], 1
    %s1312 = scalar_lea.sflag [#allocation3], 1
    %1313 = vsyncpa %s1312, 1
    %1314 = vsyncpa [#allocation5], 1

// kernel: video_encoder_forward.7
$region0: #{video_encoder_forward.7}
  #allocation0 [shape = 'u32[]', space=smem, size = 0x4, offset = 0x4, fixed_abs, tag = 'smem constant byte address 0x4 - core index']
  #allocation1 [shape = 'u32[72,128]{1,0:T(1,128)}', space=vmem, size = 0x9000, scoped, tag = 'internal scratch']
  %s0 = inlined_call_operand.vmem [shape: f32[128,32], index: 0, kind: input, shape index: {}]
  %s1 = inlined_call_operand.vmem [shape: f32[1,32], index: 1, kind: input, shape index: {}]
  %s2 = inlined_call_operand.vmem [shape: f32[1,32], index: 2, kind: input, shape index: {}]
  %s3 = inlined_call_operand.vmem [shape: bf16[32,96], index: 3, kind: input, shape index: {}]
  %s4 = inlined_call_operand.vmem [shape: bf16[32,32], index: 4, kind: input, shape index: {}]
  %s5 = inlined_call_operand.vmem [shape: f32[1,32], index: 5, kind: input, shape index: {}]
  %s6 = inlined_call_operand.vmem [shape: f32[2,4,4], index: 6, kind: input, shape index: {}]
  %s7 = inlined_call_operand.vmem [shape: f32[32,1,4], index: 7, kind: input, shape index: {}]
  %s8 = inlined_call_operand.vmem [shape: f32[128,32], index: 8, kind: output, shape index: {}]
  %s9 = sld [smem:[#allocation0]]
  $region65: #{video_encoder_forward.7} parent=0
    _
  %s11 = ssub.s32 1, %s9
  %s12 = scalar_select 0, %s11, %s9
  loop: start=0, step=1, limit=6
  $region2: #{video_encoder_forward.7} parent=0 // loop_pre_header
    _
  $region3: #{video_encoder_forward.7} parent=0 // loop_header
    %s14 = sphi 0, %s18
    %p15 = scmp.ge.s32.totalorder %s14, 6
    %s24 = sphi 0, %s26
    %s27 = sphi 0, %s24
    %s28 = sphi 0, %s27
    %s44 = sphi 0, %s28
    %s48 = sphi 0, %s48
    %s50 = sphi 0, %s48
    %s51 = sphi 0, %s50
    %s65 = sphi 0, %s51
    %s69 = sphi 0, %s69
    %s71 = sphi 0, %s69
    %s72 = sphi 0, %s71
    %s86 = sphi 0, %s72
    %s90 = sphi 0, %s90
    %s92 = sphi 0, %s90
    %s93 = sphi 0, %s92
    %s107 = sphi 0, %s93
    %s111 = sphi 0, %s111
    %s113 = sphi 0, %s111
    %s114 = sphi 0, %s113
    %s128 = sphi 0, %s114
    %s132 = sphi 0, %s132
    %s134 = sphi 0, %s132
    %s135 = sphi 0, %s134
    %s149 = sphi 0, %s135
    %s153 = sphi 0, %s153
    %s155 = sphi 0, %s153
    %s156 = sphi 0, %s155
    %s170 = sphi 0, %s156
    %s176 = sphi 0, %s178
    %s179 = sphi 0, %s176
    %s180 = sphi 0, %s179
    %s196 = sphi 0, %s180
    %s202 = sphi 0, %s204
    %s205 = sphi 0, %s202
    %s206 = sphi 0, %s205
    %s222 = sphi 0, %s206
  $region4: #{video_encoder_forward.7} parent=0 // loop_header_branch
    %17 = sbr.rel (%p15) target = $region8
  $region5: #{video_encoder_forward.7} parent=0 // loop_body
    %s19 = ssub.s32 %s14, 1
    %s20 = ssub.s32 %s14, 2
    %s21 = sadd.s32 %s14, 1
    %s22 = ssub.s32 %s14, %s21
    %p23 = scmp.eq.s32.totalorder %s22, 0
    %s25 = sadd.s32 %s24, 1
    %s26 = scalar_select %p23, %s24, %s25
    %p29 = pneg %p23
    %p30 = scmp.eq.s32.totalorder %s14, 3
    %p31 = por %p29, %p30
    %p32 = scmp.ne.s32.totalorder %s24, %s27
    %p33 = scmp.eq.s32.totalorder %s14, 0
    %p34 = por %p32, %p33
    %p35 = scmp.ne.s32.totalorder %s24, %s27
    %p36 = scmp.eq.s32.totalorder %s19, 3
    %p37 = por %p35, %p36
    %p38 = scmp.ne.s32.totalorder %s27, %s28
    %p39 = scmp.eq.s32.totalorder %s19, 0
    %p40 = por %p38, %p39
    %p41 = scmp.ne.s32.totalorder %s27, %s28
    %p42 = scmp.eq.s32.totalorder %s20, 3
    %p43 = por %p41, %p42
    %p45 = scmp.ne.s32.totalorder %s28, %s44
    %p46 = scmp.eq.s32.totalorder %s20, 0
    %p47 = por %p45, %p46
    %s49 = sadd.s32 %s48, 1
    %p52 = scmp.eq.s32.totalorder %s14, 3
    %p53 = scmp.ne.s32.totalorder %s48, %s50
    %p54 = scmp.eq.s32.totalorder %s14, 0
    %p55 = por %p53, %p54
    %p56 = scmp.ne.s32.totalorder %s48, %s50
    %p57 = scmp.eq.s32.totalorder %s19, 3
    %p58 = por %p56, %p57
    %p59 = scmp.ne.s32.totalorder %s50, %s51
    %p60 = scmp.eq.s32.totalorder %s19, 0
    %p61 = por %p59, %p60
    %p62 = scmp.ne.s32.totalorder %s50, %s51
    %p63 = scmp.eq.s32.totalorder %s20, 3
    %p64 = por %p62, %p63
    %p66 = scmp.ne.s32.totalorder %s51, %s65
    %p67 = scmp.eq.s32.totalorder %s20, 0
    %p68 = por %p66, %p67
    %s70 = sadd.s32 %s69, 1
    %p73 = scmp.eq.s32.totalorder %s14, 3
    %p74 = scmp.ne.s32.totalorder %s69, %s71
    %p75 = scmp.eq.s32.totalorder %s14, 0
    %p76 = por %p74, %p75
    %p77 = scmp.ne.s32.totalorder %s69, %s71
    %p78 = scmp.eq.s32.totalorder %s19, 3
    %p79 = por %p77, %p78
    %p80 = scmp.ne.s32.totalorder %s71, %s72
    %p81 = scmp.eq.s32.totalorder %s19, 0
    %p82 = por %p80, %p81
    %p83 = scmp.ne.s32.totalorder %s71, %s72
    %p84 = scmp.eq.s32.totalorder %s20, 3
    %p85 = por %p83, %p84
    %p87 = scmp.ne.s32.totalorder %s72, %s86
    %p88 = scmp.eq.s32.totalorder %s20, 0
    %p89 = por %p87, %p88
    %s91 = sadd.s32 %s90, 1
    %p94 = scmp.eq.s32.totalorder %s14, 3
    %p95 = scmp.ne.s32.totalorder %s90, %s92
    %p96 = scmp.eq.s32.totalorder %s14, 0
    %p97 = por %p95, %p96
    %p98 = scmp.ne.s32.totalorder %s90, %s92
    %p99 = scmp.eq.s32.totalorder %s19, 3
    %p100 = por %p98, %p99
    %p101 = scmp.ne.s32.totalorder %s92, %s93
    %p102 = scmp.eq.s32.totalorder %s19, 0
    %p103 = por %p101, %p102
    %p104 = scmp.ne.s32.totalorder %s92, %s93
    %p105 = scmp.eq.s32.totalorder %s20, 3
    %p106 = por %p104, %p105
    %p108 = scmp.ne.s32.totalorder %s93, %s107
    %p109 = scmp.eq.s32.totalorder %s20, 0
    %p110 = por %p108, %p109
    %s112 = sadd.s32 %s111, 1
    %p115 = scmp.eq.s32.totalorder %s14, 3
    %p116 = scmp.ne.s32.totalorder %s111, %s113
    %p117 = scmp.eq.s32.totalorder %s14, 0
    %p118 = por %p116, %p117
    %p119 = scmp.ne.s32.totalorder %s111, %s113
    %p120 = scmp.eq.s32.totalorder %s19, 3
    %p121 = por %p119, %p120
    %p122 = scmp.ne.s32.totalorder %s113, %s114
    %p123 = scmp.eq.s32.totalorder %s19, 0
    %p124 = por %p122, %p123
    %p125 = scmp.ne.s32.totalorder %s113, %s114
    %p126 = scmp.eq.s32.totalorder %s20, 3
    %p127 = por %p125, %p126
    %p129 = scmp.ne.s32.totalorder %s114, %s128
    %p130 = scmp.eq.s32.totalorder %s20, 0
    %p131 = por %p129, %p130
    %s133 = sadd.s32 %s132, 1
    %p136 = scmp.eq.s32.totalorder %s14, 3
    %p137 = scmp.ne.s32.totalorder %s132, %s134
    %p138 = scmp.eq.s32.totalorder %s14, 0
    %p139 = por %p137, %p138
    %p140 = scmp.ne.s32.totalorder %s132, %s134
    %p141 = scmp.eq.s32.totalorder %s19, 3
    %p142 = por %p140, %p141
    %p143 = scmp.ne.s32.totalorder %s134, %s135
    %p144 = scmp.eq.s32.totalorder %s19, 0
    %p145 = por %p143, %p144
    %p146 = scmp.ne.s32.totalorder %s134, %s135
    %p147 = scmp.eq.s32.totalorder %s20, 3
    %p148 = por %p146, %p147
    %p150 = scmp.ne.s32.totalorder %s135, %s149
    %p151 = scmp.eq.s32.totalorder %s20, 0
    %p152 = por %p150, %p151
    %s154 = sadd.s32 %s153, 1
    %p157 = scmp.eq.s32.totalorder %s14, 3
    %p158 = scmp.ne.s32.totalorder %s153, %s155
    %p159 = scmp.eq.s32.totalorder %s14, 0
    %p160 = por %p158, %p159
    %p161 = scmp.ne.s32.totalorder %s153, %s155
    %p162 = scmp.eq.s32.totalorder %s19, 3
    %p163 = por %p161, %p162
    %p164 = scmp.ne.s32.totalorder %s155, %s156
    %p165 = scmp.eq.s32.totalorder %s19, 0
    %p166 = por %p164, %p165
    %p167 = scmp.ne.s32.totalorder %s155, %s156
    %p168 = scmp.eq.s32.totalorder %s20, 3
    %p169 = por %p167, %p168
    %p171 = scmp.ne.s32.totalorder %s156, %s170
    %p172 = scmp.eq.s32.totalorder %s20, 0
    %p173 = por %p171, %p172
    %s174 = ssub.s32 %s14, %s21
    %p175 = scmp.eq.s32.totalorder %s174, 0
    %s177 = sadd.s32 %s176, 1
    %s178 = scalar_select %p175, %s176, %s177
    %p181 = pneg %p175
    %p182 = scmp.eq.s32.totalorder %s14, 3
    %p183 = por %p181, %p182
    %p184 = scmp.ne.s32.totalorder %s176, %s179
    %p185 = scmp.eq.s32.totalorder %s14, 0
    %p186 = por %p184, %p185
    %p187 = scmp.ne.s32.totalorder %s176, %s179
    %p188 = scmp.eq.s32.totalorder %s19, 3
    %p189 = por %p187, %p188
    %p190 = scmp.ne.s32.totalorder %s179, %s180
    %p191 = scmp.eq.s32.totalorder %s19, 0
    %p192 = por %p190, %p191
    %p193 = scmp.ne.s32.totalorder %s179, %s180
    %p194 = scmp.eq.s32.totalorder %s20, 3
    %p195 = por %p193, %p194
    %p197 = scmp.ne.s32.totalorder %s180, %s196
    %p198 = scmp.eq.s32.totalorder %s20, 0
    %p199 = por %p197, %p198
    %s200 = ssub.s32 %s14, %s21
    %p201 = scmp.eq.s32.totalorder %s200, 0
    %s203 = sadd.s32 %s202, 1
    %s204 = scalar_select %p201, %s202, %s203
    %p207 = pneg %p201
    %p208 = scmp.eq.s32.totalorder %s14, 3
    %p209 = por %p207, %p208
    %p210 = scmp.ne.s32.totalorder %s202, %s205
    %p211 = scmp.eq.s32.totalorder %s14, 0
    %p212 = por %p210, %p211
    %p213 = scmp.ne.s32.totalorder %s202, %s205
    %p214 = scmp.eq.s32.totalorder %s19, 3
    %p215 = por %p213, %p214
    %p216 = scmp.ne.s32.totalorder %s205, %s206
    %p217 = scmp.eq.s32.totalorder %s19, 0
    %p218 = por %p216, %p217
    %p219 = scmp.ne.s32.totalorder %s205, %s206
    %p220 = scmp.eq.s32.totalorder %s20, 3
    %p221 = por %p219, %p220
    %p223 = scmp.ne.s32.totalorder %s206, %s222
    %p224 = scmp.eq.s32.totalorder %s20, 0
    %p225 = por %p223, %p224
    %p226 = scmp.le.s32.totalorder 1, %s14
    %p227 = scmp.lt.s32.totalorder %s14, 5
    %p228 = pnand %p226, %p227
    %p229 = pneg %p228
    // Predicated region
    $region9: #{video_encoder_forward.7} parent=5 // pred_check
      _
    $region10: #{video_encoder_forward.7} parent=5 // pred_check_branch
      %231 = sbr.rel (%p228) target = $region12
    $region11: #{video_encoder_forward.7} parent=5 // pred_region
      %s232 = ssub.s32 %s14, 1
      // Predicated region
      $region13: #{video_encoder_forward.7} parent=11 // pred_check
        %p233 = pneg %p61
      $region14: #{video_encoder_forward.7} parent=11 // pred_check_branch
        %235 = sbr.rel (%p233) target = $region16
      $region15: #{video_encoder_forward.7} parent=11 // pred_region
        _
      $region16: #{video_encoder_forward.7} parent=11 // pred_fallthru
        _
      // Predicated region
      $region17: #{video_encoder_forward.7} parent=11 // pred_check
        %p236 = pneg %p82
      $region18: #{video_encoder_forward.7} parent=11 // pred_check_branch
        %238 = sbr.rel (%p236) target = $region20
      $region19: #{video_encoder_forward.7} parent=11 // pred_region
        _
      $region20: #{video_encoder_forward.7} parent=11 // pred_fallthru
        _
      // Predicated region
      $region21: #{video_encoder_forward.7} parent=11 // pred_check
        %p239 = pneg %p103
      $region22: #{video_encoder_forward.7} parent=11 // pred_check_branch
        %241 = sbr.rel (%p239) target = $region24
      $region23: #{video_encoder_forward.7} parent=11 // pred_region
        _
      $region24: #{video_encoder_forward.7} parent=11 // pred_fallthru
        _
      // Predicated region
      $region25: #{video_encoder_forward.7} parent=11 // pred_check
        %p242 = pneg %p124
      $region26: #{video_encoder_forward.7} parent=11 // pred_check_branch
        %244 = sbr.rel (%p242) target = $region28
      $region27: #{video_encoder_forward.7} parent=11 // pred_region
        _
      $region28: #{video_encoder_forward.7} parent=11 // pred_fallthru
        _
      // Predicated region
      $region29: #{video_encoder_forward.7} parent=11 // pred_check
        %p245 = pneg %p145
      $region30: #{video_encoder_forward.7} parent=11 // pred_check_branch
        %247 = sbr.rel (%p245) target = $region32
      $region31: #{video_encoder_forward.7} parent=11 // pred_region
        _
      $region32: #{video_encoder_forward.7} parent=11 // pred_fallthru
        _
      // Predicated region
      $region33: #{video_encoder_forward.7} parent=11 // pred_check
        %p248 = pneg %p166
      $region34: #{video_encoder_forward.7} parent=11 // pred_check_branch
        %250 = sbr.rel (%p248) target = $region36
      $region35: #{video_encoder_forward.7} parent=11 // pred_region
        _
      $region36: #{video_encoder_forward.7} parent=11 // pred_fallthru
        _
    $region12: #{video_encoder_forward.7} parent=5 // pred_fallthru
      _
    %p251 = scmp.lt.s32.totalorder %s14, 4
    // Predicated region
    $region37: #{video_encoder_forward.7} parent=5 // pred_check
      %p252 = pneg %p251
    $region38: #{video_encoder_forward.7} parent=5 // pred_check_branch
      %254 = sbr.rel (%p252) target = $region40
    $region39: #{video_encoder_forward.7} parent=5 // pred_region
      // Predicated region
      $region41: #{video_encoder_forward.7} parent=39 // pred_check
        %p255 = pneg %p34
      $region42: #{video_encoder_forward.7} parent=39 // pred_check_branch
        %257 = sbr.rel (%p255) target = $region44
      $region43: #{video_encoder_forward.7} parent=39 // pred_region
        %s258 = smul.u32 4, %s14
        %p259 = scmp.lt.s32.totalorder %s258, 15
        %s260 = scalar_select %p259, %s258, 15
        %s261 = smul.addr %s260, 8
        %s262 = scalar_lea.vmem %s0, %s261
        %s263 = smul.u32 4, %s14
      $region44: #{video_encoder_forward.7} parent=39 // pred_fallthru
        _
      // Predicated region
      $region45: #{video_encoder_forward.7} parent=39 // pred_check
        %p264 = pneg %p186
      $region46: #{video_encoder_forward.7} parent=39 // pred_check_branch
        %266 = sbr.rel (%p264) target = $region48
      $region47: #{video_encoder_forward.7} parent=39 // pred_region
        %s267 = smul.u32 8, %s14
        %p268 = scmp.lt.s32.totalorder %s267, 31
        %s269 = scalar_select %p268, %s267, 31
        %s270 = scalar_lea.vmem %s7, %s269
        %s271 = smul.u32 8, %s14
      $region48: #{video_encoder_forward.7} parent=39 // pred_fallthru
        _
    $region40: #{video_encoder_forward.7} parent=5 // pred_fallthru
      _
    %p272 = scmp.le.s32.totalorder 1, %s14
    %p273 = scmp.lt.s32.totalorder %s14, 5
    %p274 = pnand %p272, %p273
    %p275 = pneg %p274
    // Predicated region
    $region49: #{video_encoder_forward.7} parent=5 // pred_check
      _
    $region50: #{video_encoder_forward.7} parent=5 // pred_check_branch
      %277 = sbr.rel (%p274) target = $region52
    $region51: #{video_encoder_forward.7} parent=5 // pred_region
      %s278 = ssub.s32 %s14, 1
      %s279 = smul.u32 4, %s19
      %p280 = scmp.lt.s32.totalorder %s279, 15
      %s281 = scalar_select %p280, %s279, 15
      %s282 = smul.addr %s281, 8
      %s283 = scalar_lea.vmem %s0, %s282
      %p284 = pneg %p40
      %p285 = pneg %p37
      %p286 = pneg %p61
      %p287 = pneg %p58
      %p288 = pneg %p82
      %p289 = pneg %p79
      %p290 = pneg %p103
      %p291 = pneg %p100
      %p292 = pneg %p124
      %p293 = pneg %p121
      %p294 = pneg %p145
      %p295 = pneg %p142
      %p296 = pneg %p166
      %p297 = pneg %p163
      %s298 = smul.u32 8, %s19
      %p299 = scmp.lt.s32.totalorder %s298, 31
      %s300 = scalar_select %p299, %s298, 31
      %s301 = scalar_lea.vmem %s7, %s300
      %p302 = pneg %p192
      %p303 = pneg %p189
      %p304 = pneg %p218
      %p305 = pneg %p215
      %s306 = smul.u32 4, %s19
      %p307 = scmp.lt.s32.totalorder %s306, 15
      %s308 = scalar_select %p307, %s306, 15
      %s309 = smul.addr %s308, 8
      %s310 = scalar_lea.vmem %s8, %s309
      %s311 = smul.u32 4, %s19
      %p312 = scmp.lt.s32.totalorder %s311, 15
      %s313 = scalar_select %p312, %s311, 15
      %s314 = smul.addr %s313, 8
      %s315 = scalar_lea.vmem %s0, %s314
      %s316 = smul.u32 4, %s19
      %s317 = smul.u32 8, %s19
      %p318 = scmp.lt.s32.totalorder %s317, 31
      %s319 = scalar_select %p318, %s317, 31
      %s320 = scalar_lea.vmem %s7, %s319
      %s321 = smul.u32 8, %s19
      %s322 = smul.u32 4, %s19
      %p323 = scmp.lt.s32.totalorder %s322, 15
      %s324 = scalar_select %p323, %s322, 15
      %s325 = smul.addr %s324, 8
      %s326 = scalar_lea.vmem %s8, %s325
      %s327 = smul.u32 4, %s19
      %v329 = vld [vmem:[%s315] sm:$0xff]
      %v330 = vld [vmem:[%s315 + $0x8] sm:$0xff]
      %v331 = vld [vmem:[%s315 + $0x10] sm:$0xff]
      %v332 = vld [vmem:[%s315 + $0x18] sm:$0xff]
      %vm333 = vcmask 261120
      %v334 = vsel %vm333, %v329, 0.0
      %335 = vadd.xlane.f32.xlu0 %v334
      %v336 = vpop.xlane.xlu0 %335
      %v337 = vsel %vm333, %v330, 0.0
      %338 = vadd.xlane.f32.xlu0 %v337
      %v339 = vpop.xlane.xlu0 %338
      %v340 = vsel %vm333, %v331, 0.0
      %341 = vadd.xlane.f32.xlu0 %v340
      %v342 = vpop.xlane.xlu0 %341
      %v343 = vsel %vm333, %v332, 0.0
      %344 = vadd.xlane.f32.xlu0 %v343
      %v345 = vpop.xlane.xlu0 %344
      %v346 = vrcp.pop 32.0
      %v347 = vmul.f32 32.0, %v346
      %v348 = vsub.f32 1.0, %v347
      %v349 = vmul.f32 %v346, %v348
      %v350 = vadd.f32 %v346, %v349
      %vm351 = vweird.f32 %v346
      %v352 = vsel %vm351, %v346, %v350
      %v353 = vmul.f32 %v336, %v352
      %v354 = vmul.f32 %v339, %v352
      %v355 = vmul.f32 %v342, %v352
      %v356 = vmul.f32 %v345, %v352
      %v357 = vsub.f32 %v329, %v353
      %v358 = vsub.f32 %v330, %v354
      %v359 = vsub.f32 %v331, %v355
      %v360 = vsub.f32 %v332, %v356
      %v361 = vmul.f32 %v357, %v357
      %v362 = vmul.f32 %v358, %v358
      %v363 = vmul.f32 %v359, %v359
      %v364 = vmul.f32 %v360, %v360
      %v365 = vsel %vm333, %v361, 0.0
      %366 = vadd.xlane.f32.xlu0 %v365
      %v367 = vpop.xlane.xlu0 %366
      %v368 = vsel %vm333, %v362, 0.0
      %369 = vadd.xlane.f32.xlu0 %v368
      %v370 = vpop.xlane.xlu0 %369
      %v371 = vsel %vm333, %v363, 0.0
      %372 = vadd.xlane.f32.xlu0 %v371
      %v373 = vpop.xlane.xlu0 %372
      %v374 = vsel %vm333, %v364, 0.0
      %375 = vadd.xlane.f32.xlu0 %v374
      %v376 = vpop.xlane.xlu0 %375
      %v377 = vmul.f32 %v367, %v352
      %v378 = vmul.f32 %v370, %v352
      %v379 = vmul.f32 %v373, %v352
      %v380 = vmul.f32 %v376, %v352
      %v381 = vadd.f32 %v377, 1e-05
      %v382 = vadd.f32 %v378, 1e-05
      %v383 = vadd.f32 %v379, 1e-05
      %v384 = vadd.f32 %v380, 1e-05
      %v385 = vrsqrt.pop %v381
      %v386 = vmul.f32 %v385, %v381
      %v387 = vmul.f32 %v386, %v385
      %v388 = vmul.f32 0.5, %v387
      %v389 = vsub.f32 1.5, %v388
      %v390 = vmul.f32 %v385, %v389
      %vm391 = vweird.f32 %v381
      %vm392 = vweird.f32 %v385
      %vm393 = vmor %vm391, %vm392
      %v394 = vsel %vm393, %v385, %v390
      %v395 = vrsqrt.pop %v382
      %v396 = vmul.f32 %v395, %v382
      %v397 = vmul.f32 %v396, %v395
      %v398 = vmul.f32 0.5, %v397
      %v399 = vsub.f32 1.5, %v398
      %v400 = vmul.f32 %v395, %v399
      %vm401 = vweird.f32 %v382
      %vm402 = vweird.f32 %v395
      %vm403 = vmor %vm401, %vm402
      %v404 = vsel %vm403, %v395, %v400
      %v405 = vrsqrt.pop %v383
      %v406 = vmul.f32 %v405, %v383
      %v407 = vmul.f32 %v406, %v405
      %v408 = vmul.f32 0.5, %v407
      %v409 = vsub.f32 1.5, %v408
      %v410 = vmul.f32 %v405, %v409
      %vm411 = vweird.f32 %v383
      %vm412 = vweird.f32 %v405
      %vm413 = vmor %vm411, %vm412
      %v414 = vsel %vm413, %v405, %v410
      %v415 = vrsqrt.pop %v384
      %v416 = vmul.f32 %v415, %v384
      %v417 = vmul.f32 %v416, %v415
      %v418 = vmul.f32 0.5, %v417
      %v419 = vsub.f32 1.5, %v418
      %v420 = vmul.f32 %v415, %v419
      %vm421 = vweird.f32 %v384
      %vm422 = vweird.f32 %v415
      %vm423 = vmor %vm421, %vm422
      %v424 = vsel %vm423, %v415, %v420
      %v425 = vmul.f32 %v357, %v394
      %v426 = vmul.f32 %v358, %v404
      %v427 = vmul.f32 %v359, %v414
      %v428 = vmul.f32 %v360, %v424
      %v429 = vld [vmem:[%s1] sm:$0x1]
      %v431 = vperm.slane %v429, 0
      %v433 = vmul.f32 %v425, %v431
      %v434 = vmul.f32 %v426, %v431
      %v435 = vmul.f32 %v427, %v431
      %v436 = vmul.f32 %v428, %v431
      %v437 = vld [vmem:[%s2] sm:$0x1]
      %v439 = vperm.slane %v437, 0
      %v441 = vadd.f32 %v433, %v439
      %v442 = vadd.f32 %v434, %v439
      %v443 = vadd.f32 %v435, %v439
      %v444 = vadd.f32 %v436, %v439
      %v445 = vpack.c.bf16 %v442, %v441
      %v446 = vpack.c.bf16 %v444, %v443
      %v447 = vld [vmem:[%s3] sm:$0xf]
      %v448 = vld [vmem:[%s3 + $0x4] sm:$0xf]
      %v449 = vld [vmem:[%s3 + $0x8] sm:$0xf]
      %v450 = vld [vmem:[%s3 + $0xc] sm:$0xf]
      %v455 = vunpack.c.l.b16 %v447
      %v456 = vunpack.c.l.b16 %v448
      %v457 = vunpack.c.l.b16 %v449
      %v458 = vunpack.c.l.b16 %v450
      %v459 = vpack.c.b16 %v456, %v455
      %v460 = vpack.c.b16 %v458, %v457
      %v464 = vsel %vm333, %v445, 0
      %v467 = vsel %vm333, %v446, 0
      %469 = vmatpush.bf16.msra.mxu0 0
      %470 = vmatpush.bf16.msra.mxu0 0
      %471 = vmatpush.bf16.msra.mxu0 0
      %472 = vmatpush.bf16.msra.mxu0 0
      %473 = vmatpush.bf16.msra.mxu0 0
      %474 = vmatpush.bf16.msra.mxu0 0
      %475 = vmatpush.bf16.msra.mxu0 %v460
      %476 = vmatpush.bf16.msra.mxu0 %v459
      %477 = vmatmul.bf16.gmra.mxu0 %v464
      %v478 = vpop.f32.mrf.mxu0
      %v479 = vadd.f32 0.0, %v478
      %v480 = vpop.f32.mrf.mxu0
      %v481 = vadd.f32 0.0, %v480
      %482 = vmatmul.bf16.gmra.mxu0 %v467
      %v483 = vpop.f32.mrf.mxu0
      %v484 = vadd.f32 0.0, %v483
      %v485 = vpop.f32.mrf.mxu0
      %v486 = vadd.f32 0.0, %v485
      %487 = vdwg.mxu0
      %v488 = vpack.c.bf16 %v479, %v479
      %v489 = vpack.c.bf16 %v481, %v481
      %v490 = vpack.c.bf16 %v484, %v484
      %v491 = vpack.c.bf16 %v486, %v486
      %v492 = vld [vmem:[%s4] sm:$0xf]
      %v493 = vld [vmem:[%s4 + $0x4] sm:$0xf]
      %v494 = vld [vmem:[%s4 + $0x8] sm:$0xf]
      %v495 = vld [vmem:[%s4 + $0xc] sm:$0xf]
      %v496 = vld [vmem:[%s6] sm:$0xf]
      %v498 = vunpack.c.l.b16 %v488
      %v499 = vpack.c.b16 %v498, %v498
      %500 = vrot.lane.b32.xlu0 %v499, 96
      %v501 = vpop.permute.xlu0 %500
      %vm502 = vcmask 130048
      %v504 = vsel %vm502, %v488, 0
      %v507 = vsel %vm502, %v501, 0
      %509 = vmatpush.bf16.xpose.msra.mxu0 0
      %510 = vmatpush.bf16.xpose.msra.mxu0 0
      %511 = vmatpush.bf16.xpose.msra.mxu0 0
      %512 = vmatpush.bf16.xpose.msra.mxu0 0
      %513 = vmatpush.bf16.xpose.msra.mxu0 0
      %514 = vmatpush.bf16.xpose.msra.mxu0 0
      %515 = vmatpush.bf16.xpose.msra.mxu0 0
      %516 = vmatpush.bf16.xpose.msra.mxu0 %v507
      %517 = vmatmul.bf16.gmra.mxu0 %v504
      %v518 = vpop.f32.mrf.mxu0
      %v519 = vadd.f32 %v496, %v518
      %v520 = vpop.f32.mrf.mxu0
      %521 = vdwg.mxu0
      %v522 = vld [vmem:[%s320] sm:$0x1]
      %v524 = vperm.slane %v522, 0
      %v526 = vadd.f32 %v519, %v524
      %vm527 = vcmask 27648
      %v528 = vsel %vm527, %v526, -inf
      %529 = vmax.xlane.f32.xlu0 %v528
      %v530 = vpop.xlane.xlu0 %529
      %v531 = vsub.f32 %v526, %v530
      %v532 = vmul.f32 %v531, 1.442695
      %v533 = vpow.pop %v532
      %v534 = vsel %vm527, %v533, 0.0
      %535 = vadd.xlane.f32.xlu0 %v534
      %v536 = vpop.xlane.xlu0 %535
      %v537 = vrcp.pop %v536
      %v538 = vmul.f32 %v533, %v537
      %v539 = vpack.c.bf16 %v538, %v538
      %540 = vrot.lane.b32.xlu0 %v499, 64
      %v541 = vpop.permute.xlu0 %540
      %vm542 = vcmask 31744
      %v544 = vsel %vm542, %v539, 0
      %vm546 = vcmask 1041408
      %v548 = vsel %vm546, %v541, 0
      %550 = vmatpush.bf16.msra.mxu0 0
      %551 = vmatpush.bf16.msra.mxu0 0
      %552 = vmatpush.bf16.msra.mxu0 0
      %553 = vmatpush.bf16.msra.mxu0 0
      %554 = vmatpush.bf16.msra.mxu0 0
      %555 = vmatpush.bf16.msra.mxu0 0
      %556 = vmatpush.bf16.msra.mxu0 0
      %557 = vmatpush.bf16.msra.mxu0 %v548
      %558 = vmatmul.bf16.gmra.mxu0 %v544
      %v559 = vpop.f32.mrf.mxu0
      %v560 = vadd.f32 0.0, %v559
      %v561 = vpop.f32.mrf.mxu0
      %562 = vdwg.mxu0
      %s563 = scalar_lea.vmem %s6, 4
      %v564 = vld [vmem:[%s563] sm:$0xf]
      %565 = vrot.lane.b32.xlu0 %v499, 112
      %v566 = vpop.permute.xlu0 %565
      %567 = vrot.lane.b32.xlu0 %v499, 80
      %v568 = vpop.permute.xlu0 %567
      %v570 = vsel %vm502, %v566, 0
      %v573 = vsel %vm502, %v568, 0
      %575 = vmatpush.bf16.xpose.msra.mxu0 0
      %576 = vmatpush.bf16.xpose.msra.mxu0 0
      %577 = vmatpush.bf16.xpose.msra.mxu0 0
      %578 = vmatpush.bf16.xpose.msra.mxu0 0
      %579 = vmatpush.bf16.xpose.msra.mxu0 0
      %580 = vmatpush.bf16.xpose.msra.mxu0 0
      %581 = vmatpush.bf16.xpose.msra.mxu0 0
      %582 = vmatpush.bf16.xpose.msra.mxu0 %v573
      %583 = vmatmul.bf16.gmra.mxu0 %v570
      %v584 = vpop.f32.mrf.mxu0
      %v585 = vadd.f32 %v564, %v584
      %v586 = vpop.f32.mrf.mxu0
      %587 = vdwg.mxu0
      %v588 = vadd.f32 %v585, %v524
      %v589 = vsel %vm527, %v588, -inf
      %590 = vmax.xlane.f32.xlu0 %v589
      %v591 = vpop.xlane.xlu0 %590
      %v592 = vsub.f32 %v588, %v591
      %v593 = vmul.f32 %v592, 1.442695
      %v594 = vpow.pop %v593
      %v595 = vsel %vm527, %v594, 0.0
      %596 = vadd.xlane.f32.xlu0 %v595
      %v597 = vpop.xlane.xlu0 %596
      %v598 = vrcp.pop %v597
      %v599 = vmul.f32 %v594, %v598
      %v600 = vpack.c.bf16 %v599, %v599
      %601 = vrot.lane.b32.xlu0 %v499, 48
      %v602 = vpop.permute.xlu0 %601
      %v604 = vsel %vm542, %v600, 0
      %v607 = vsel %vm546, %v602, 0
      %609 = vmatpush.bf16.msra.mxu0 0
      %610 = vmatpush.bf16.msra.mxu0 0
      %611 = vmatpush.bf16.msra.mxu0 0
      %612 = vmatpush.bf16.msra.mxu0 0
      %613 = vmatpush.bf16.msra.mxu0 0
      %614 = vmatpush.bf16.msra.mxu0 0
      %615 = vmatpush.bf16.msra.mxu0 0
      %616 = vmatpush.bf16.msra.mxu0 %v607
      %617 = vmatmul.bf16.gmra.mxu0 %v604
      %v618 = vpop.f32.mrf.mxu0
      %v619 = vadd.f32 0.0, %v618
      %v620 = vpop.f32.mrf.mxu0
      %621 = vdwg.mxu0
      %623 = vrot.lane.b32.xlu0 %v619, 16
      %v624 = vpop.permute.xlu0 %623
      %v626 = vsel %vm502, %v560, %v624
      %v627 = vrot.slane %v499, 2
      %628 = vrot.lane.b32.xlu0 %v627, 96
      %v629 = vpop.permute.xlu0 %628
      %v631 = vsel %vm502, %v627, 0
      %v634 = vsel %vm502, %v629, 0
      %636 = vmatpush.bf16.xpose.msra.mxu0 0
      %637 = vmatpush.bf16.xpose.msra.mxu0 0
      %638 = vmatpush.bf16.xpose.msra.mxu0 0
      %639 = vmatpush.bf16.xpose.msra.mxu0 0
      %640 = vmatpush.bf16.xpose.msra.mxu0 0
      %641 = vmatpush.bf16.xpose.msra.mxu0 0
      %642 = vmatpush.bf16.xpose.msra.mxu0 0
      %643 = vmatpush.bf16.xpose.msra.mxu0 %v634
      %644 = vmatmul.bf16.gmra.mxu0 %v631
      %v645 = vpop.f32.mrf.mxu0
      %v646 = vadd.f32 %v496, %v645
      %v647 = vpop.f32.mrf.mxu0
      %648 = vdwg.mxu0
      %s649 = scalar_lea.vmem %s320, 1
      %v650 = vld [vmem:[%s649] sm:$0x1]
      %v652 = vperm.slane %v650, 0
      %v654 = vadd.f32 %v646, %v652
      %v655 = vsel %vm527, %v654, -inf
      %656 = vmax.xlane.f32.xlu0 %v655
      %v657 = vpop.xlane.xlu0 %656
      %v658 = vsub.f32 %v654, %v657
      %v659 = vmul.f32 %v658, 1.442695
      %v660 = vpow.pop %v659
      %v661 = vsel %vm527, %v660, 0.0
      %662 = vadd.xlane.f32.xlu0 %v661
      %v663 = vpop.xlane.xlu0 %662
      %v664 = vrcp.pop %v663
      %v665 = vmul.f32 %v660, %v664
      %v666 = vpack.c.bf16 %v665, %v665
      %667 = vrot.lane.b32.xlu0 %v627, 64
      %v668 = vpop.permute.xlu0 %667
      %v670 = vsel %vm542, %v666, 0
      %v673 = vsel %vm546, %v668, 0
      %675 = vmatpush.bf16.msra.mxu0 0
      %676 = vmatpush.bf16.msra.mxu0 0
      %677 = vmatpush.bf16.msra.mxu0 0
      %678 = vmatpush.bf16.msra.mxu0 0
      %679 = vmatpush.bf16.msra.mxu0 0
      %680 = vmatpush.bf16.msra.mxu0 0
      %681 = vmatpush.bf16.msra.mxu0 0
      %682 = vmatpush.bf16.msra.mxu0 %v673
      %683 = vmatmul.bf16.gmra.mxu0 %v670
      %v684 = vpop.f32.mrf.mxu0
      %v685 = vadd.f32 0.0, %v684
      %v686 = vpop.f32.mrf.mxu0
      %687 = vdwg.mxu0
      %688 = vrot.lane.b32.xlu0 %v627, 112
      %v689 = vpop.permute.xlu0 %688
      %690 = vrot.lane.b32.xlu0 %v627, 80
      %v691 = vpop.permute.xlu0 %690
      %v693 = vsel %vm502, %v689, 0
      %v696 = vsel %vm502, %v691, 0
      %698 = vmatpush.bf16.xpose.msra.mxu0 0
      %699 = vmatpush.bf16.xpose.msra.mxu0 0
      %700 = vmatpush.bf16.xpose.msra.mxu0 0
      %701 = vmatpush.bf16.xpose.msra.mxu0 0
      %702 = vmatpush.bf16.xpose.msra.mxu0 0
      %703 = vmatpush.bf16.xpose.msra.mxu0 0
      %704 = vmatpush.bf16.xpose.msra.mxu0 0
      %705 = vmatpush.bf16.xpose.msra.mxu0 %v696
      %706 = vmatmul.bf16.gmra.mxu0 %v693
      %v707 = vpop.f32.mrf.mxu0
      %v708 = vadd.f32 %v564, %v707
      %v709 = vpop.f32.mrf.mxu0
      %710 = vdwg.mxu0
      %v711 = vadd.f32 %v708, %v652
      %v712 = vsel %vm527, %v711, -inf
      %713 = vmax.xlane.f32.xlu0 %v712
      %v714 = vpop.xlane.xlu0 %713
      %v715 = vsub.f32 %v711, %v714
      %v716 = vmul.f32 %v715, 1.442695
      %v717 = vpow.pop %v716
      %v718 = vsel %vm527, %v717, 0.0
      %719 = vadd.xlane.f32.xlu0 %v718
      %v720 = vpop.xlane.xlu0 %719
      %v721 = vrcp.pop %v720
      %v722 = vmul.f32 %v717, %v721
      %v723 = vpack.c.bf16 %v722, %v722
      %724 = vrot.lane.b32.xlu0 %v627, 48
      %v725 = vpop.permute.xlu0 %724
      %v727 = vsel %vm542, %v723, 0
      %v730 = vsel %vm546, %v725, 0
      %732 = vmatpush.bf16.msra.mxu0 0
      %733 = vmatpush.bf16.msra.mxu0 0
      %734 = vmatpush.bf16.msra.mxu0 0
      %735 = vmatpush.bf16.msra.mxu0 0
      %736 = vmatpush.bf16.msra.mxu0 0
      %737 = vmatpush.bf16.msra.mxu0 0
      %738 = vmatpush.bf16.msra.mxu0 0
      %739 = vmatpush.bf16.msra.mxu0 %v730
      %740 = vmatmul.bf16.gmra.mxu0 %v727
      %v741 = vpop.f32.mrf.mxu0
      %v742 = vadd.f32 0.0, %v741
      %v743 = vpop.f32.mrf.mxu0
      %744 = vdwg.mxu0
      %746 = vrot.lane.b32.xlu0 %v742, 16
      %v747 = vpop.permute.xlu0 %746
      %v749 = vsel %vm502, %v685, %v747
      %v751 = vunpack.c.l.b16 %v489
      %v752 = vpack.c.b16 %v751, %v751
      %753 = vrot.lane.b32.xlu0 %v752, 96
      %v754 = vpop.permute.xlu0 %753
      %v756 = vsel %vm502, %v489, 0
      %v759 = vsel %vm502, %v754, 0
      %761 = vmatpush.bf16.xpose.msra.mxu0 0
      %762 = vmatpush.bf16.xpose.msra.mxu0 0
      %763 = vmatpush.bf16.xpose.msra.mxu0 0
      %764 = vmatpush.bf16.xpose.msra.mxu0 0
      %765 = vmatpush.bf16.xpose.msra.mxu0 0
      %766 = vmatpush.bf16.xpose.msra.mxu0 0
      %767 = vmatpush.bf16.xpose.msra.mxu0 0
      %768 = vmatpush.bf16.xpose.msra.mxu0 %v759
      %769 = vmatmul.bf16.gmra.mxu0 %v756
      %v770 = vpop.f32.mrf.mxu0
      %v771 = vadd.f32 %v496, %v770
      %v772 = vpop.f32.mrf.mxu0
      %773 = vdwg.mxu0
      %s774 = scalar_lea.vmem %s320, 2
      %v775 = vld [vmem:[%s774] sm:$0x1]
      %v777 = vperm.slane %v775, 0
      %v779 = vadd.f32 %v771, %v777
      %v780 = vsel %vm527, %v779, -inf
      %781 = vmax.xlane.f32.xlu0 %v780
      %v782 = vpop.xlane.xlu0 %781
      %v783 = vsub.f32 %v779, %v782
      %v784 = vmul.f32 %v783, 1.442695
      %v785 = vpow.pop %v784
      %v786 = vsel %vm527, %v785, 0.0
      %787 = vadd.xlane.f32.xlu0 %v786
      %v788 = vpop.xlane.xlu0 %787
      %v789 = vrcp.pop %v788
      %v790 = vmul.f32 %v785, %v789
      %v791 = vpack.c.bf16 %v790, %v790
      %792 = vrot.lane.b32.xlu0 %v752, 64
      %v793 = vpop.permute.xlu0 %792
      %v795 = vsel %vm542, %v791, 0
      %v798 = vsel %vm546, %v793, 0
      %800 = vmatpush.bf16.msra.mxu0 0
      %801 = vmatpush.bf16.msra.mxu0 0
      %802 = vmatpush.bf16.msra.mxu0 0
      %803 = vmatpush.bf16.msra.mxu0 0
      %804 = vmatpush.bf16.msra.mxu0 0
      %805 = vmatpush.bf16.msra.mxu0 0
      %806 = vmatpush.bf16.msra.mxu0 0
      %807 = vmatpush.bf16.msra.mxu0 %v798
      %808 = vmatmul.bf16.gmra.mxu0 %v795
      %v809 = vpop.f32.mrf.mxu0
      %v810 = vadd.f32 0.0, %v809
      %v811 = vpop.f32.mrf.mxu0
      %812 = vdwg.mxu0
      %813 = vrot.lane.b32.xlu0 %v752, 112
      %v814 = vpop.permute.xlu0 %813
      %815 = vrot.lane.b32.xlu0 %v752, 80
      %v816 = vpop.permute.xlu0 %815
      %v818 = vsel %vm502, %v814, 0
      %v821 = vsel %vm502, %v816, 0
      %823 = vmatpush.bf16.xpose.msra.mxu0 0
      %824 = vmatpush.bf16.xpose.msra.mxu0 0
      %825 = vmatpush.bf16.xpose.msra.mxu0 0
      %826 = vmatpush.bf16.xpose.msra.mxu0 0
      %827 = vmatpush.bf16.xpose.msra.mxu0 0
      %828 = vmatpush.bf16.xpose.msra.mxu0 0
      %829 = vmatpush.bf16.xpose.msra.mxu0 0
      %830 = vmatpush.bf16.xpose.msra.mxu0 %v821
      %831 = vmatmul.bf16.gmra.mxu0 %v818
      %v832 = vpop.f32.mrf.mxu0
      %v833 = vadd.f32 %v564, %v832
      %v834 = vpop.f32.mrf.mxu0
      %835 = vdwg.mxu0
      %v836 = vadd.f32 %v833, %v777
      %v837 = vsel %vm527, %v836, -inf
      %838 = vmax.xlane.f32.xlu0 %v837
      %v839 = vpop.xlane.xlu0 %838
      %v840 = vsub.f32 %v836, %v839
      %v841 = vmul.f32 %v840, 1.442695
      %v842 = vpow.pop %v841
      %v843 = vsel %vm527, %v842, 0.0
      %844 = vadd.xlane.f32.xlu0 %v843
      %v845 = vpop.xlane.xlu0 %844
      %v846 = vrcp.pop %v845
      %v847 = vmul.f32 %v842, %v846
      %v848 = vpack.c.bf16 %v847, %v847
      %849 = vrot.lane.b32.xlu0 %v752, 48
      %v850 = vpop.permute.xlu0 %849
      %v852 = vsel %vm542, %v848, 0
      %v855 = vsel %vm546, %v850, 0
      %857 = vmatpush.bf16.msra.mxu0 0
      %858 = vmatpush.bf16.msra.mxu0 0
      %859 = vmatpush.bf16.msra.mxu0 0
      %860 = vmatpush.bf16.msra.mxu0 0
      %861 = vmatpush.bf16.msra.mxu0 0
      %862 = vmatpush.bf16.msra.mxu0 0
      %863 = vmatpush.bf16.msra.mxu0 0
      %864 = vmatpush.bf16.msra.mxu0 %v855
      %865 = vmatmul.bf16.gmra.mxu0 %v852
      %v866 = vpop.f32.mrf.mxu0
      %v867 = vadd.f32 0.0, %v866
      %v868 = vpop.f32.mrf.mxu0
      %869 = vdwg.mxu0
      %871 = vrot.lane.b32.xlu0 %v867, 16
      %v872 = vpop.permute.xlu0 %871
      %v874 = vsel %vm502, %v810, %v872
      %v875 = vrot.slane %v752, 2
      %876 = vrot.lane.b32.xlu0 %v875, 96
      %v877 = vpop.permute.xlu0 %876
      %v879 = vsel %vm502, %v875, 0
      %v882 = vsel %vm502, %v877, 0
      %884 = vmatpush.bf16.xpose.msra.mxu0 0
      %885 = vmatpush.bf16.xpose.msra.mxu0 0
      %886 = vmatpush.bf16.xpose.msra.mxu0 0
      %887 = vmatpush.bf16.xpose.msra.mxu0 0
      %888 = vmatpush.bf16.xpose.msra.mxu0 0
      %889 = vmatpush.bf16.xpose.msra.mxu0 0
      %890 = vmatpush.bf16.xpose.msra.mxu0 0
      %891 = vmatpush.bf16.xpose.msra.mxu0 %v882
      %892 = vmatmul.bf16.gmra.mxu0 %v879
      %v893 = vpop.f32.mrf.mxu0
      %v894 = vadd.f32 %v496, %v893
      %v895 = vpop.f32.mrf.mxu0
      %896 = vdwg.mxu0
      %s897 = scalar_lea.vmem %s320, 3
      %v898 = vld [vmem:[%s897] sm:$0x1]
      %v900 = vperm.slane %v898, 0
      %v902 = vadd.f32 %v894, %v900
      %v903 = vsel %vm527, %v902, -inf
      %904 = vmax.xlane.f32.xlu0 %v903
      %v905 = vpop.xlane.xlu0 %904
      %v906 = vsub.f32 %v902, %v905
      %v907 = vmul.f32 %v906, 1.442695
      %v908 = vpow.pop %v907
      %v909 = vsel %vm527, %v908, 0.0
      %910 = vadd.xlane.f32.xlu0 %v909
      %v911 = vpop.xlane.xlu0 %910
      %v912 = vrcp.pop %v911
      %v913 = vmul.f32 %v908, %v912
      %v914 = vpack.c.bf16 %v913, %v913
      %915 = vrot.lane.b32.xlu0 %v875, 64
      %v916 = vpop.permute.xlu0 %915
      %v918 = vsel %vm542, %v914, 0
      %v921 = vsel %vm546, %v916, 0
      %923 = vmatpush.bf16.msra.mxu0 0
      %924 = vmatpush.bf16.msra.mxu0 0
      %925 = vmatpush.bf16.msra.mxu0 0
      %926 = vmatpush.bf16.msra.mxu0 0
      %927 = vmatpush.bf16.msra.mxu0 0
      %928 = vmatpush.bf16.msra.mxu0 0
      %929 = vmatpush.bf16.msra.mxu0 0
      %930 = vmatpush.bf16.msra.mxu0 %v921
      %931 = vmatmul.bf16.gmra.mxu0 %v918
      %v932 = vpop.f32.mrf.mxu0
      %v933 = vadd.f32 0.0, %v932
      %v934 = vpop.f32.mrf.mxu0
      %935 = vdwg.mxu0
      %936 = vrot.lane.b32.xlu0 %v875, 112
      %v937 = vpop.permute.xlu0 %936
      %938 = vrot.lane.b32.xlu0 %v875, 80
      %v939 = vpop.permute.xlu0 %938
      %v941 = vsel %vm502, %v937, 0
      %v944 = vsel %vm502, %v939, 0
      %946 = vmatpush.bf16.xpose.msra.mxu0 0
      %947 = vmatpush.bf16.xpose.msra.mxu0 0
      %948 = vmatpush.bf16.xpose.msra.mxu0 0
      %949 = vmatpush.bf16.xpose.msra.mxu0 0
      %950 = vmatpush.bf16.xpose.msra.mxu0 0
      %951 = vmatpush.bf16.xpose.msra.mxu0 0
      %952 = vmatpush.bf16.xpose.msra.mxu0 0
      %953 = vmatpush.bf16.xpose.msra.mxu0 %v944
      %954 = vmatmul.bf16.gmra.mxu0 %v941
      %v955 = vpop.f32.mrf.mxu0
      %v956 = vadd.f32 %v564, %v955
      %v957 = vpop.f32.mrf.mxu0
      %958 = vdwg.mxu0
      %v959 = vadd.f32 %v956, %v900
      %v960 = vsel %vm527, %v959, -inf
      %961 = vmax.xlane.f32.xlu0 %v960
      %v962 = vpop.xlane.xlu0 %961
      %v963 = vsub.f32 %v959, %v962
      %v964 = vmul.f32 %v963, 1.442695
      %v965 = vpow.pop %v964
      %v966 = vsel %vm527, %v965, 0.0
      %967 = vadd.xlane.f32.xlu0 %v966
      %v968 = vpop.xlane.xlu0 %967
      %v969 = vrcp.pop %v968
      %v970 = vmul.f32 %v965, %v969
      %v971 = vpack.c.bf16 %v970, %v970
      %972 = vrot.lane.b32.xlu0 %v875, 48
      %v973 = vpop.permute.xlu0 %972
      %v975 = vsel %vm542, %v971, 0
      %v978 = vsel %vm546, %v973, 0
      %980 = vmatpush.bf16.msra.mxu0 0
      %981 = vmatpush.bf16.msra.mxu0 0
      %982 = vmatpush.bf16.msra.mxu0 0
      %983 = vmatpush.bf16.msra.mxu0 0
      %984 = vmatpush.bf16.msra.mxu0 0
      %985 = vmatpush.bf16.msra.mxu0 0
      %986 = vmatpush.bf16.msra.mxu0 0
      %987 = vmatpush.bf16.msra.mxu0 %v978
      %988 = vmatmul.bf16.gmra.mxu0 %v975
      %v989 = vpop.f32.mrf.mxu0
      %v990 = vadd.f32 0.0, %v989
      %v991 = vpop.f32.mrf.mxu0
      %992 = vdwg.mxu0
      %994 = vrot.lane.b32.xlu0 %v990, 16
      %v995 = vpop.permute.xlu0 %994
      %v997 = vsel %vm502, %v933, %v995
      %v999 = vunpack.c.l.b16 %v490
      %v1000 = vpack.c.b16 %v999, %v999
      %1001 = vrot.lane.b32.xlu0 %v1000, 96
      %v1002 = vpop.permute.xlu0 %1001
      %v1004 = vsel %vm502, %v490, 0
      %v1007 = vsel %vm502, %v1002, 0
      %1009 = vmatpush.bf16.xpose.msra.mxu0 0
      %1010 = vmatpush.bf16.xpose.msra.mxu0 0
      %1011 = vmatpush.bf16.xpose.msra.mxu0 0
      %1012 = vmatpush.bf16.xpose.msra.mxu0 0
      %1013 = vmatpush.bf16.xpose.msra.mxu0 0
      %1014 = vmatpush.bf16.xpose.msra.mxu0 0
      %1015 = vmatpush.bf16.xpose.msra.mxu0 0
      %1016 = vmatpush.bf16.xpose.msra.mxu0 %v1007
      %1017 = vmatmul.bf16.gmra.mxu0 %v1004
      %v1018 = vpop.f32.mrf.mxu0
      %v1019 = vadd.f32 %v496, %v1018
      %v1020 = vpop.f32.mrf.mxu0
      %1021 = vdwg.mxu0
      %s1022 = scalar_lea.vmem %s320, 4
      %v1023 = vld [vmem:[%s1022] sm:$0x1]
      %v1025 = vperm.slane %v1023, 0
      %v1027 = vadd.f32 %v1019, %v1025
      %v1028 = vsel %vm527, %v1027, -inf
      %1029 = vmax.xlane.f32.xlu0 %v1028
      %v1030 = vpop.xlane.xlu0 %1029
      %v1031 = vsub.f32 %v1027, %v1030
      %v1032 = vmul.f32 %v1031, 1.442695
      %v1033 = vpow.pop %v1032
      %v1034 = vsel %vm527, %v1033, 0.0
      %1035 = vadd.xlane.f32.xlu0 %v1034
      %v1036 = vpop.xlane.xlu0 %1035
      %v1037 = vrcp.pop %v1036
      %v1038 = vmul.f32 %v1033, %v1037
      %v1039 = vpack.c.bf16 %v1038, %v1038
      %1040 = vrot.lane.b32.xlu0 %v1000, 64
      %v1041 = vpop.permute.xlu0 %1040
      %v1043 = vsel %vm542, %v1039, 0
      %v1046 = vsel %vm546, %v1041, 0
      %1048 = vmatpush.bf16.msra.mxu0 0
      %1049 = vmatpush.bf16.msra.mxu0 0
      %1050 = vmatpush.bf16.msra.mxu0 0
      %1051 = vmatpush.bf16.msra.mxu0 0
      %1052 = vmatpush.bf16.msra.mxu0 0
      %1053 = vmatpush.bf16.msra.mxu0 0
      %1054 = vmatpush.bf16.msra.mxu0 0
      %1055 = vmatpush.bf16.msra.mxu0 %v1046
      %1056 = vmatmul.bf16.gmra.mxu0 %v1043
      %v1057 = vpop.f32.mrf.mxu0
      %v1058 = vadd.f32 0.0, %v1057
      %v1059 = vpop.f32.mrf.mxu0
      %1060 = vdwg.mxu0
      %1061 = vrot.lane.b32.xlu0 %v1000, 112
      %v1062 = vpop.permute.xlu0 %1061
      %1063 = vrot.lane.b32.xlu0 %v1000, 80
      %v1064 = vpop.permute.xlu0 %1063
      %v1066 = vsel %vm502, %v1062, 0
      %v1069 = vsel %vm502, %v1064, 0
      %1071 = vmatpush.bf16.xpose.msra.mxu0 0
      %1072 = vmatpush.bf16.xpose.msra.mxu0 0
      %1073 = vmatpush.bf16.xpose.msra.mxu0 0
      %1074 = vmatpush.bf16.xpose.msra.mxu0 0
      %1075 = vmatpush.bf16.xpose.msra.mxu0 0
      %1076 = vmatpush.bf16.xpose.msra.mxu0 0
      %1077 = vmatpush.bf16.xpose.msra.mxu0 0
      %1078 = vmatpush.bf16.xpose.msra.mxu0 %v1069
      %1079 = vmatmul.bf16.gmra.mxu0 %v1066
      %v1080 = vpop.f32.mrf.mxu0
      %v1081 = vadd.f32 %v564, %v1080
      %v1082 = vpop.f32.mrf.mxu0
      %1083 = vdwg.mxu0
      %v1084 = vadd.f32 %v1081, %v1025
      %v1085 = vsel %vm527, %v1084, -inf
      %1086 = vmax.xlane.f32.xlu0 %v1085
      %v1087 = vpop.xlane.xlu0 %1086
      %v1088 = vsub.f32 %v1084, %v1087
      %v1089 = vmul.f32 %v1088, 1.442695
      %v1090 = vpow.pop %v1089
      %v1091 = vsel %vm527, %v1090, 0.0
      %1092 = vadd.xlane.f32.xlu0 %v1091
      %v1093 = vpop.xlane.xlu0 %1092
      %v1094 = vrcp.pop %v1093
      %v1095 = vmul.f32 %v1090, %v1094
      %v1096 = vpack.c.bf16 %v1095, %v1095
      %1097 = vrot.lane.b32.xlu0 %v1000, 48
      %v1098 = vpop.permute.xlu0 %1097
      %v1100 = vsel %vm542, %v1096, 0
      %v1103 = vsel %vm546, %v1098, 0
      %1105 = vmatpush.bf16.msra.mxu0 0
      %1106 = vmatpush.bf16.msra.mxu0 0
      %1107 = vmatpush.bf16.msra.mxu0 0
      %1108 = vmatpush.bf16.msra.mxu0 0
      %1109 = vmatpush.bf16.msra.mxu0 0
      %1110 = vmatpush.bf16.msra.mxu0 0
      %1111 = vmatpush.bf16.msra.mxu0 0
      %1112 = vmatpush.bf16.msra.mxu0 %v1103
      %1113 = vmatmul.bf16.gmra.mxu0 %v1100
      %v1114 = vpop.f32.mrf.mxu0
      %v1115 = vadd.f32 0.0, %v1114
      %v1116 = vpop.f32.mrf.mxu0
      %1117 = vdwg.mxu0
      %1119 = vrot.lane.b32.xlu0 %v1115, 16
      %v1120 = vpop.permute.xlu0 %1119
      %v1122 = vsel %vm502, %v1058, %v1120
      %v1123 = vrot.slane %v1000, 2
      %1124 = vrot.lane.b32.xlu0 %v1123, 96
      %v1125 = vpop.permute.xlu0 %1124
      %v1127 = vsel %vm502, %v1123, 0
      %v1130 = vsel %vm502, %v1125, 0
      %1132 = vmatpush.bf16.xpose.msra.mxu0 0
      %1133 = vmatpush.bf16.xpose.msra.mxu0 0
      %1134 = vmatpush.bf16.xpose.msra.mxu0 0
      %1135 = vmatpush.bf16.xpose.msra.mxu0 0
      %1136 = vmatpush.bf16.xpose.msra.mxu0 0
      %1137 = vmatpush.bf16.xpose.msra.mxu0 0
      %1138 = vmatpush.bf16.xpose.msra.mxu0 0
      %1139 = vmatpush.bf16.xpose.msra.mxu0 %v1130
      %1140 = vmatmul.bf16.gmra.mxu0 %v1127
      %v1141 = vpop.f32.mrf.mxu0
      %v1142 = vadd.f32 %v496, %v1141
      %v1143 = vpop.f32.mrf.mxu0
      %1144 = vdwg.mxu0
      %s1145 = scalar_lea.vmem %s320, 5
      %v1146 = vld [vmem:[%s1145] sm:$0x1]
      %v1148 = vperm.slane %v1146, 0
      %v1150 = vadd.f32 %v1142, %v1148
      %v1151 = vsel %vm527, %v1150, -inf
      %1152 = vmax.xlane.f32.xlu0 %v1151
      %v1153 = vpop.xlane.xlu0 %1152
      %v1154 = vsub.f32 %v1150, %v1153
      %v1155 = vmul.f32 %v1154, 1.442695
      %v1156 = vpow.pop %v1155
      %v1157 = vsel %vm527, %v1156, 0.0
      %1158 = vadd.xlane.f32.xlu0 %v1157
      %v1159 = vpop.xlane.xlu0 %1158
      %v1160 = vrcp.pop %v1159
      %v1161 = vmul.f32 %v1156, %v1160
      %v1162 = vpack.c.bf16 %v1161, %v1161
      %1163 = vrot.lane.b32.xlu0 %v1123, 64
      %v1164 = vpop.permute.xlu0 %1163
      %v1166 = vsel %vm542, %v1162, 0
      %v1169 = vsel %vm546, %v1164, 0
      %1171 = vmatpush.bf16.msra.mxu0 0
      %1172 = vmatpush.bf16.msra.mxu0 0
      %1173 = vmatpush.bf16.msra.mxu0 0
      %1174 = vmatpush.bf16.msra.mxu0 0
      %1175 = vmatpush.bf16.msra.mxu0 0
      %1176 = vmatpush.bf16.msra.mxu0 0
      %1177 = vmatpush.bf16.msra.mxu0 0
      %1178 = vmatpush.bf16.msra.mxu0 %v1169
      %1179 = vmatmul.bf16.gmra.mxu0 %v1166
      %v1180 = vpop.f32.mrf.mxu0
      %v1181 = vadd.f32 0.0, %v1180
      %v1182 = vpop.f32.mrf.mxu0
      %1183 = vdwg.mxu0
      %1184 = vrot.lane.b32.xlu0 %v1123, 112
      %v1185 = vpop.permute.xlu0 %1184
      %1186 = vrot.lane.b32.xlu0 %v1123, 80
      %v1187 = vpop.permute.xlu0 %1186
      %v1189 = vsel %vm502, %v1185, 0
      %v1192 = vsel %vm502, %v1187, 0
      %1194 = vmatpush.bf16.xpose.msra.mxu0 0
      %1195 = vmatpush.bf16.xpose.msra.mxu0 0
      %1196 = vmatpush.bf16.xpose.msra.mxu0 0
      %1197 = vmatpush.bf16.xpose.msra.mxu0 0
      %1198 = vmatpush.bf16.xpose.msra.mxu0 0
      %1199 = vmatpush.bf16.xpose.msra.mxu0 0
      %1200 = vmatpush.bf16.xpose.msra.mxu0 0
      %1201 = vmatpush.bf16.xpose.msra.mxu0 %v1192
      %1202 = vmatmul.bf16.gmra.mxu0 %v1189
      %v1203 = vpop.f32.mrf.mxu0
      %v1204 = vadd.f32 %v564, %v1203
      %v1205 = vpop.f32.mrf.mxu0
      %1206 = vdwg.mxu0
      %v1207 = vadd.f32 %v1204, %v1148
      %v1208 = vsel %vm527, %v1207, -inf
      %1209 = vmax.xlane.f32.xlu0 %v1208
      %v1210 = vpop.xlane.xlu0 %1209
      %v1211 = vsub.f32 %v1207, %v1210
      %v1212 = vmul.f32 %v1211, 1.442695
      %v1213 = vpow.pop %v1212
      %v1214 = vsel %vm527, %v1213, 0.0
      %1215 = vadd.xlane.f32.xlu0 %v1214
      %v1216 = vpop.xlane.xlu0 %1215
      %v1217 = vrcp.pop %v1216
      %v1218 = vmul.f32 %v1213, %v1217
      %v1219 = vpack.c.bf16 %v1218, %v1218
      %1220 = vrot.lane.b32.xlu0 %v1123, 48
      %v1221 = vpop.permute.xlu0 %1220
      %v1223 = vsel %vm542, %v1219, 0
      %v1226 = vsel %vm546, %v1221, 0
      %1228 = vmatpush.bf16.msra.mxu0 0
      %1229 = vmatpush.bf16.msra.mxu0 0
      %1230 = vmatpush.bf16.msra.mxu0 0
      %1231 = vmatpush.bf16.msra.mxu0 0
      %1232 = vmatpush.bf16.msra.mxu0 0
      %1233 = vmatpush.bf16.msra.mxu0 0
      %1234 = vmatpush.bf16.msra.mxu0 0
      %1235 = vmatpush.bf16.msra.mxu0 %v1226
      %1236 = vmatmul.bf16.gmra.mxu0 %v1223
      %v1237 = vpop.f32.mrf.mxu0
      %v1238 = vadd.f32 0.0, %v1237
      %v1239 = vpop.f32.mrf.mxu0
      %1240 = vdwg.mxu0
      %1242 = vrot.lane.b32.xlu0 %v1238, 16
      %v1243 = vpop.permute.xlu0 %1242
      %v1245 = vsel %vm502, %v1181, %v1243
      %v1247 = vunpack.c.l.b16 %v491
      %v1248 = vpack.c.b16 %v1247, %v1247
      %1249 = vrot.lane.b32.xlu0 %v1248, 96
      %v1250 = vpop.permute.xlu0 %1249
      %v1252 = vsel %vm502, %v491, 0
      %v1255 = vsel %vm502, %v1250, 0
      %1257 = vmatpush.bf16.xpose.msra.mxu0 0
      %1258 = vmatpush.bf16.xpose.msra.mxu0 0
      %1259 = vmatpush.bf16.xpose.msra.mxu0 0
      %1260 = vmatpush.bf16.xpose.msra.mxu0 0
      %1261 = vmatpush.bf16.xpose.msra.mxu0 0
      %1262 = vmatpush.bf16.xpose.msra.mxu0 0
      %1263 = vmatpush.bf16.xpose.msra.mxu0 0
      %1264 = vmatpush.bf16.xpose.msra.mxu0 %v1255
      %1265 = vmatmul.bf16.gmra.mxu0 %v1252
      %v1266 = vpop.f32.mrf.mxu0
      %v1267 = vadd.f32 %v496, %v1266
      %v1268 = vpop.f32.mrf.mxu0
      %1269 = vdwg.mxu0
      %s1270 = scalar_lea.vmem %s320, 6
      %v1271 = vld [vmem:[%s1270] sm:$0x1]
      %v1273 = vperm.slane %v1271, 0
      %v1275 = vadd.f32 %v1267, %v1273
      %v1276 = vsel %vm527, %v1275, -inf
      %1277 = vmax.xlane.f32.xlu0 %v1276
      %v1278 = vpop.xlane.xlu0 %1277
      %v1279 = vsub.f32 %v1275, %v1278
      %v1280 = vmul.f32 %v1279, 1.442695
      %v1281 = vpow.pop %v1280
      %v1282 = vsel %vm527, %v1281, 0.0
      %1283 = vadd.xlane.f32.xlu0 %v1282
      %v1284 = vpop.xlane.xlu0 %1283
      %v1285 = vrcp.pop %v1284
      %v1286 = vmul.f32 %v1281, %v1285
      %v1287 = vpack.c.bf16 %v1286, %v1286
      %1288 = vrot.lane.b32.xlu0 %v1248, 64
      %v1289 = vpop.permute.xlu0 %1288
      %v1291 = vsel %vm542, %v1287, 0
      %v1294 = vsel %vm546, %v1289, 0
      %1296 = vmatpush.bf16.msra.mxu0 0
      %1297 = vmatpush.bf16.msra.mxu0 0
      %1298 = vmatpush.bf16.msra.mxu0 0
      %1299 = vmatpush.bf16.msra.mxu0 0
      %1300 = vmatpush.bf16.msra.mxu0 0
      %1301 = vmatpush.bf16.msra.mxu0 0
      %1302 = vmatpush.bf16.msra.mxu0 0
      %1303 = vmatpush.bf16.msra.mxu0 %v1294
      %1304 = vmatmul.bf16.gmra.mxu0 %v1291
      %v1305 = vpop.f32.mrf.mxu0
      %v1306 = vadd.f32 0.0, %v1305
      %v1307 = vpop.f32.mrf.mxu0
      %1308 = vdwg.mxu0
      %1309 = vrot.lane.b32.xlu0 %v1248, 112
      %v1310 = vpop.permute.xlu0 %1309
      %1311 = vrot.lane.b32.xlu0 %v1248, 80
      %v1312 = vpop.permute.xlu0 %1311
      %v1314 = vsel %vm502, %v1310, 0
      %v1317 = vsel %vm502, %v1312, 0
      %1319 = vmatpush.bf16.xpose.msra.mxu0 0
      %1320 = vmatpush.bf16.xpose.msra.mxu0 0
      %1321 = vmatpush.bf16.xpose.msra.mxu0 0
      %1322 = vmatpush.bf16.xpose.msra.mxu0 0
      %1323 = vmatpush.bf16.xpose.msra.mxu0 0
      %1324 = vmatpush.bf16.xpose.msra.mxu0 0
      %1325 = vmatpush.bf16.xpose.msra.mxu0 0
      %1326 = vmatpush.bf16.xpose.msra.mxu0 %v1317
      %1327 = vmatmul.bf16.gmra.mxu0 %v1314
      %v1328 = vpop.f32.mrf.mxu0
      %v1329 = vadd.f32 %v564, %v1328
      %v1330 = vpop.f32.mrf.mxu0
      %1331 = vdwg.mxu0
      %v1332 = vadd.f32 %v1329, %v1273
      %v1333 = vsel %vm527, %v1332, -inf
      %1334 = vmax.xlane.f32.xlu0 %v1333
      %v1335 = vpop.xlane.xlu0 %1334
      %v1336 = vsub.f32 %v1332, %v1335
      %v1337 = vmul.f32 %v1336, 1.442695
      %v1338 = vpow.pop %v1337
      %v1339 = vsel %vm527, %v1338, 0.0
      %1340 = vadd.xlane.f32.xlu0 %v1339
      %v1341 = vpop.xlane.xlu0 %1340
      %v1342 = vrcp.pop %v1341
      %v1343 = vmul.f32 %v1338, %v1342
      %v1344 = vpack.c.bf16 %v1343, %v1343
      %1345 = vrot.lane.b32.xlu0 %v1248, 48
      %v1346 = vpop.permute.xlu0 %1345
      %v1348 = vsel %vm542, %v1344, 0
      %v1351 = vsel %vm546, %v1346, 0
      %1353 = vmatpush.bf16.msra.mxu0 0
      %1354 = vmatpush.bf16.msra.mxu0 0
      %1355 = vmatpush.bf16.msra.mxu0 0
      %1356 = vmatpush.bf16.msra.mxu0 0
      %1357 = vmatpush.bf16.msra.mxu0 0
      %1358 = vmatpush.bf16.msra.mxu0 0
      %1359 = vmatpush.bf16.msra.mxu0 0
      %1360 = vmatpush.bf16.msra.mxu0 %v1351
      %1361 = vmatmul.bf16.gmra.mxu0 %v1348
      %v1362 = vpop.f32.mrf.mxu0
      %v1363 = vadd.f32 0.0, %v1362
      %v1364 = vpop.f32.mrf.mxu0
      %1365 = vdwg.mxu0
      %1367 = vrot.lane.b32.xlu0 %v1363, 16
      %v1368 = vpop.permute.xlu0 %1367
      %v1370 = vsel %vm502, %v1306, %v1368
      %v1371 = vrot.slane %v1248, 2
      %1372 = vrot.lane.b32.xlu0 %v1371, 96
      %v1373 = vpop.permute.xlu0 %1372
      %v1375 = vsel %vm502, %v1371, 0
      %v1378 = vsel %vm502, %v1373, 0
      %1380 = vmatpush.bf16.xpose.msra.mxu0 0
      %1381 = vmatpush.bf16.xpose.msra.mxu0 0
      %1382 = vmatpush.bf16.xpose.msra.mxu0 0
      %1383 = vmatpush.bf16.xpose.msra.mxu0 0
      %1384 = vmatpush.bf16.xpose.msra.mxu0 0
      %1385 = vmatpush.bf16.xpose.msra.mxu0 0
      %1386 = vmatpush.bf16.xpose.msra.mxu0 0
      %1387 = vmatpush.bf16.xpose.msra.mxu0 %v1378
      %1388 = vmatmul.bf16.gmra.mxu0 %v1375
      %v1389 = vpop.f32.mrf.mxu0
      %v1390 = vadd.f32 %v496, %v1389
      %v1391 = vpop.f32.mrf.mxu0
      %1392 = vdwg.mxu0
      %s1393 = scalar_lea.vmem %s320, 7
      %v1394 = vld [vmem:[%s1393] sm:$0x1]
      %v1396 = vperm.slane %v1394, 0
      %v1398 = vadd.f32 %v1390, %v1396
      %v1399 = vsel %vm527, %v1398, -inf
      %1400 = vmax.xlane.f32.xlu0 %v1399
      %v1401 = vpop.xlane.xlu0 %1400
      %v1402 = vsub.f32 %v1398, %v1401
      %v1403 = vmul.f32 %v1402, 1.442695
      %v1404 = vpow.pop %v1403
      %v1405 = vsel %vm527, %v1404, 0.0
      %1406 = vadd.xlane.f32.xlu0 %v1405
      %v1407 = vpop.xlane.xlu0 %1406
      %v1408 = vrcp.pop %v1407
      %v1409 = vmul.f32 %v1404, %v1408
      %v1410 = vpack.c.bf16 %v1409, %v1409
      %1411 = vrot.lane.b32.xlu0 %v1371, 64
      %v1412 = vpop.permute.xlu0 %1411
      %v1414 = vsel %vm542, %v1410, 0
      %v1417 = vsel %vm546, %v1412, 0
      %1419 = vmatpush.bf16.msra.mxu0 0
      %1420 = vmatpush.bf16.msra.mxu0 0
      %1421 = vmatpush.bf16.msra.mxu0 0
      %1422 = vmatpush.bf16.msra.mxu0 0
      %1423 = vmatpush.bf16.msra.mxu0 0
      %1424 = vmatpush.bf16.msra.mxu0 0
      %1425 = vmatpush.bf16.msra.mxu0 0
      %1426 = vmatpush.bf16.msra.mxu0 %v1417
      %1427 = vmatmul.bf16.gmra.mxu0 %v1414
      %v1428 = vpop.f32.mrf.mxu0
      %v1429 = vadd.f32 0.0, %v1428
      %v1430 = vpop.f32.mrf.mxu0
      %1431 = vdwg.mxu0
      %1432 = vrot.lane.b32.xlu0 %v1371, 112
      %v1433 = vpop.permute.xlu0 %1432
      %1434 = vrot.lane.b32.xlu0 %v1371, 80
      %v1435 = vpop.permute.xlu0 %1434
      %v1437 = vsel %vm502, %v1433, 0
      %v1440 = vsel %vm502, %v1435, 0
      %1442 = vmatpush.bf16.xpose.msra.mxu0 0
      %1443 = vmatpush.bf16.xpose.msra.mxu0 0
      %1444 = vmatpush.bf16.xpose.msra.mxu0 0
      %1445 = vmatpush.bf16.xpose.msra.mxu0 0
      %1446 = vmatpush.bf16.xpose.msra.mxu0 0
      %1447 = vmatpush.bf16.xpose.msra.mxu0 0
      %1448 = vmatpush.bf16.xpose.msra.mxu0 0
      %1449 = vmatpush.bf16.xpose.msra.mxu0 %v1440
      %1450 = vmatmul.bf16.gmra.mxu0 %v1437
      %v1451 = vpop.f32.mrf.mxu0
      %v1452 = vadd.f32 %v564, %v1451
      %v1453 = vpop.f32.mrf.mxu0
      %1454 = vdwg.mxu0
      %v1455 = vadd.f32 %v1452, %v1396
      %v1456 = vsel %vm527, %v1455, -inf
      %1457 = vmax.xlane.f32.xlu0 %v1456
      %v1458 = vpop.xlane.xlu0 %1457
      %v1459 = vsub.f32 %v1455, %v1458
      %v1460 = vmul.f32 %v1459, 1.442695
      %v1461 = vpow.pop %v1460
      %v1462 = vsel %vm527, %v1461, 0.0
      %1463 = vadd.xlane.f32.xlu0 %v1462
      %v1464 = vpop.xlane.xlu0 %1463
      %v1465 = vrcp.pop %v1464
      %v1466 = vmul.f32 %v1461, %v1465
      %v1467 = vpack.c.bf16 %v1466, %v1466
      %1468 = vrot.lane.b32.xlu0 %v1371, 48
      %v1469 = vpop.permute.xlu0 %1468
      %v1471 = vsel %vm542, %v1467, 0
      %v1474 = vsel %vm546, %v1469, 0
      %1476 = vmatpush.bf16.msra.mxu0 0
      %1477 = vmatpush.bf16.msra.mxu0 0
      %1478 = vmatpush.bf16.msra.mxu0 0
      %1479 = vmatpush.bf16.msra.mxu0 0
      %1480 = vmatpush.bf16.msra.mxu0 0
      %1481 = vmatpush.bf16.msra.mxu0 0
      %1482 = vmatpush.bf16.msra.mxu0 0
      %1483 = vmatpush.bf16.msra.mxu0 %v1474
      %1484 = vmatmul.bf16.gmra.mxu0 %v1471
      %v1485 = vpop.f32.mrf.mxu0
      %v1486 = vadd.f32 0.0, %v1485
      %v1487 = vpop.f32.mrf.mxu0
      %1488 = vdwg.mxu0
      %1490 = vrot.lane.b32.xlu0 %v1486, 16
      %v1491 = vpop.permute.xlu0 %1490
      %v1493 = vsel %vm502, %v1429, %v1491
      %v1495 = vrot.slane %v749, 4
      %v1498 = vrot.slane %v997, 4
      %v1501 = vrot.slane %v1245, 4
      %v1504 = vrot.slane %v1493, 4
      %vm1506 = vcmask 1043456
      %v1507 = vsel %vm1506, %v626, %v1495
      %v1508 = vsel %vm1506, %v874, %v1498
      %v1509 = vsel %vm1506, %v1122, %v1501
      %v1510 = vsel %vm1506, %v1370, %v1504
      %v1511 = vpack.c.bf16 %v1508, %v1507
      %v1512 = vpack.c.bf16 %v1510, %v1509
      %v1517 = vunpack.c.l.b16 %v492
      %v1518 = vunpack.c.l.b16 %v493
      %v1519 = vunpack.c.l.b16 %v494
      %v1520 = vunpack.c.l.b16 %v495
      %v1521 = vpack.c.b16 %v1518, %v1517
      %v1522 = vpack.c.b16 %v1520, %v1519
      %v1526 = vsel %vm333, %v1511, 0
      %v1529 = vsel %vm333, %v1512, 0
      %1531 = vmatpush.bf16.msra.mxu0 0
      %1532 = vmatpush.bf16.msra.mxu0 0
      %1533 = vmatpush.bf16.msra.mxu0 0
      %1534 = vmatpush.bf16.msra.mxu0 0
      %1535 = vmatpush.bf16.msra.mxu0 0
      %1536 = vmatpush.bf16.msra.mxu0 0
      %1537 = vmatpush.bf16.msra.mxu0 %v1522
      %1538 = vmatpush.bf16.msra.mxu0 %v1521
      %1539 = vmatmul.bf16.gmra.mxu0 %v1526
      %v1540 = vpop.f32.mrf.mxu0
      %v1541 = vadd.f32 0.0, %v1540
      %v1542 = vpop.f32.mrf.mxu0
      %v1543 = vadd.f32 0.0, %v1542
      %1544 = vmatmul.bf16.gmra.mxu0 %v1529
      %v1545 = vpop.f32.mrf.mxu0
      %v1546 = vadd.f32 0.0, %v1545
      %v1547 = vpop.f32.mrf.mxu0
      %v1548 = vadd.f32 0.0, %v1547
      %1549 = vdwg.mxu0
      %v1550 = vadd.f32 %v329, %v1541
      %v1551 = vadd.f32 %v330, %v1543
      %v1552 = vadd.f32 %v331, %v1546
      %v1553 = vadd.f32 %v332, %v1548
      %v1554 = vld [vmem:[%s5] sm:$0x1]
      %v1556 = vperm.slane %v1554, 0
      %v1558 = vadd.f32 %v1550, %v1556
      %v1559 = vadd.f32 %v1551, %v1556
      %v1560 = vadd.f32 %v1552, %v1556
      %v1561 = vadd.f32 %v1553, %v1556
      %1562 = vst.msk [vmem:[%s326] sm:$0xff] %vm333, %v1558
      %1563 = vst.msk [vmem:[%s326 + $0x8] sm:$0xff] %vm333, %v1559
      %1564 = vst.msk [vmem:[%s326 + $0x10] sm:$0xff] %vm333, %v1560
      %1565 = vst.msk [vmem:[%s326 + $0x18] sm:$0xff] %vm333, %v1561
      %s1566 = smul.u32 4, %s19
      %p1567 = scmp.lt.s32.totalorder %s1566, 15
      %s1568 = scalar_select %p1567, %s1566, 15
      %s1569 = smul.addr %s1568, 8
      %s1570 = scalar_lea.vmem %s8, %s1569
      // Predicated region
      $region53: #{video_encoder_forward.7} parent=51 // pred_check
        %p1571 = pneg %p215
      $region54: #{video_encoder_forward.7} parent=51 // pred_check_branch
        %1573 = sbr.rel (%p1571) target = $region56
      $region55: #{video_encoder_forward.7} parent=51 // pred_region
        %s1574 = smul.u32 4, %s19
      $region56: #{video_encoder_forward.7} parent=51 // pred_fallthru
        _
    $region52: #{video_encoder_forward.7} parent=5 // pred_fallthru
      _
    %p1575 = scmp.le.s32.totalorder 2, %s14
    // Predicated region
    $region57: #{video_encoder_forward.7} parent=5 // pred_check
      %p1576 = pneg %p1575
    $region58: #{video_encoder_forward.7} parent=5 // pred_check_branch
      %1578 = sbr.rel (%p1576) target = $region60
    $region59: #{video_encoder_forward.7} parent=5 // pred_region
      %s1579 = ssub.s32 %s14, 2
      // Predicated region
      $region61: #{video_encoder_forward.7} parent=59 // pred_check
        %p1580 = pneg %p221
      $region62: #{video_encoder_forward.7} parent=59 // pred_check_branch
        %1582 = sbr.rel (%p1580) target = $region64
      $region63: #{video_encoder_forward.7} parent=59 // pred_region
        %s1583 = smul.u32 4, %s20
        %p1584 = scmp.lt.s32.totalorder %s1583, 15
        %s1585 = scalar_select %p1584, %s1583, 15
        %s1586 = smul.addr %s1585, 8
        %s1587 = scalar_lea.vmem %s8, %s1586
      $region64: #{video_encoder_forward.7} parent=59 // pred_fallthru
        _
    $region60: #{video_encoder_forward.7} parent=5 // pred_fallthru
      _
  $region6: #{video_encoder_forward.7} parent=0 // loop_footer
    %s18 = sadd.s32 1, %s14
  $region7: #{video_encoder_forward.7} parent=0 // loop_footer_branch
    %13 = sbr.rel target = $region3
  $region8: #{video_encoder_forward.7} parent=0 // loop_exit
    _

// kernel: video_encoder_forward.9
$region0: #{video_encoder_forward.9}
  #allocation0 [shape = 'u32[]', space=smem, size = 0x4, offset = 0x4, fixed_abs, tag = 'smem constant byte address 0x4 - core index']
  #allocation1 [shape = 'u32[72,128]{1,0:T(1,128)}', space=vmem, size = 0x9000, scoped, tag = 'internal scratch']
  %s0 = inlined_call_operand.vmem [shape: f32[128,32], index: 0, kind: input, shape index: {}]
  %s1 = inlined_call_operand.vmem [shape: f32[1,32], index: 1, kind: input, shape index: {}]
  %s2 = inlined_call_operand.vmem [shape: f32[1,32], index: 2, kind: input, shape index: {}]
  %s3 = inlined_call_operand.vmem [shape: bf16[32,96], index: 3, kind: input, shape index: {}]
  %s4 = inlined_call_operand.vmem [shape: bf16[32,32], index: 4, kind: input, shape index: {}]
  %s5 = inlined_call_operand.vmem [shape: f32[1,32], index: 5, kind: input, shape index: {}]
  %s6 = inlined_call_operand.vmem [shape: f32[2,16,16], index: 6, kind: input, shape index: {}]
  %s7 = inlined_call_operand.vmem [shape: f32[128,32], index: 7, kind: output, shape index: {}]
  %s8 = sld [smem:[#allocation0]]
  $region61: #{video_encoder_forward.9} parent=0
    _
  %s10 = ssub.s32 1, %s8
  %s11 = scalar_select 0, %s10, %s8
  loop: start=0, step=1, limit=4
  $region2: #{video_encoder_forward.9} parent=0 // loop_pre_header
    _
  $region3: #{video_encoder_forward.9} parent=0 // loop_header
    %s13 = sphi 0, %s17
    %p14 = scmp.ge.s32.totalorder %s13, 4
    %s23 = sphi 0, %s25
    %s26 = sphi 0, %s23
    %s27 = sphi 0, %s26
    %s43 = sphi 0, %s27
    %s47 = sphi 0, %s47
    %s49 = sphi 0, %s47
    %s50 = sphi 0, %s49
    %s64 = sphi 0, %s50
    %s68 = sphi 0, %s68
    %s70 = sphi 0, %s68
    %s71 = sphi 0, %s70
    %s85 = sphi 0, %s71
    %s89 = sphi 0, %s89
    %s91 = sphi 0, %s89
    %s92 = sphi 0, %s91
    %s106 = sphi 0, %s92
    %s110 = sphi 0, %s110
    %s112 = sphi 0, %s110
    %s113 = sphi 0, %s112
    %s127 = sphi 0, %s113
    %s131 = sphi 0, %s131
    %s133 = sphi 0, %s131
    %s134 = sphi 0, %s133
    %s148 = sphi 0, %s134
    %s152 = sphi 0, %s152
    %s154 = sphi 0, %s152
    %s155 = sphi 0, %s154
    %s169 = sphi 0, %s155
    %s175 = sphi 0, %s177
    %s178 = sphi 0, %s175
    %s179 = sphi 0, %s178
    %s195 = sphi 0, %s179
  $region4: #{video_encoder_forward.9} parent=0 // loop_header_branch
    %16 = sbr.rel (%p14) target = $region8
  $region5: #{video_encoder_forward.9} parent=0 // loop_body
    %s18 = ssub.s32 %s13, 1
    %s19 = ssub.s32 %s13, 2
    %s20 = sadd.s32 %s13, 1
    %s21 = ssub.s32 %s13, %s20
    %p22 = scmp.eq.s32.totalorder %s21, 0
    %s24 = sadd.s32 %s23, 1
    %s25 = scalar_select %p22, %s23, %s24
    %p28 = pneg %p22
    %p29 = scmp.eq.s32.totalorder %s13, 1
    %p30 = por %p28, %p29
    %p31 = scmp.ne.s32.totalorder %s23, %s26
    %p32 = scmp.eq.s32.totalorder %s13, 0
    %p33 = por %p31, %p32
    %p34 = scmp.ne.s32.totalorder %s23, %s26
    %p35 = scmp.eq.s32.totalorder %s18, 1
    %p36 = por %p34, %p35
    %p37 = scmp.ne.s32.totalorder %s26, %s27
    %p38 = scmp.eq.s32.totalorder %s18, 0
    %p39 = por %p37, %p38
    %p40 = scmp.ne.s32.totalorder %s26, %s27
    %p41 = scmp.eq.s32.totalorder %s19, 1
    %p42 = por %p40, %p41
    %p44 = scmp.ne.s32.totalorder %s27, %s43
    %p45 = scmp.eq.s32.totalorder %s19, 0
    %p46 = por %p44, %p45
    %s48 = sadd.s32 %s47, 1
    %p51 = scmp.eq.s32.totalorder %s13, 1
    %p52 = scmp.ne.s32.totalorder %s47, %s49
    %p53 = scmp.eq.s32.totalorder %s13, 0
    %p54 = por %p52, %p53
    %p55 = scmp.ne.s32.totalorder %s47, %s49
    %p56 = scmp.eq.s32.totalorder %s18, 1
    %p57 = por %p55, %p56
    %p58 = scmp.ne.s32.totalorder %s49, %s50
    %p59 = scmp.eq.s32.totalorder %s18, 0
    %p60 = por %p58, %p59
    %p61 = scmp.ne.s32.totalorder %s49, %s50
    %p62 = scmp.eq.s32.totalorder %s19, 1
    %p63 = por %p61, %p62
    %p65 = scmp.ne.s32.totalorder %s50, %s64
    %p66 = scmp.eq.s32.totalorder %s19, 0
    %p67 = por %p65, %p66
    %s69 = sadd.s32 %s68, 1
    %p72 = scmp.eq.s32.totalorder %s13, 1
    %p73 = scmp.ne.s32.totalorder %s68, %s70
    %p74 = scmp.eq.s32.totalorder %s13, 0
    %p75 = por %p73, %p74
    %p76 = scmp.ne.s32.totalorder %s68, %s70
    %p77 = scmp.eq.s32.totalorder %s18, 1
    %p78 = por %p76, %p77
    %p79 = scmp.ne.s32.totalorder %s70, %s71
    %p80 = scmp.eq.s32.totalorder %s18, 0
    %p81 = por %p79, %p80
    %p82 = scmp.ne.s32.totalorder %s70, %s71
    %p83 = scmp.eq.s32.totalorder %s19, 1
    %p84 = por %p82, %p83
    %p86 = scmp.ne.s32.totalorder %s71, %s85
    %p87 = scmp.eq.s32.totalorder %s19, 0
    %p88 = por %p86, %p87
    %s90 = sadd.s32 %s89, 1
    %p93 = scmp.eq.s32.totalorder %s13, 1
    %p94 = scmp.ne.s32.totalorder %s89, %s91
    %p95 = scmp.eq.s32.totalorder %s13, 0
    %p96 = por %p94, %p95
    %p97 = scmp.ne.s32.totalorder %s89, %s91
    %p98 = scmp.eq.s32.totalorder %s18, 1
    %p99 = por %p97, %p98
    %p100 = scmp.ne.s32.totalorder %s91, %s92
    %p101 = scmp.eq.s32.totalorder %s18, 0
    %p102 = por %p100, %p101
    %p103 = scmp.ne.s32.totalorder %s91, %s92
    %p104 = scmp.eq.s32.totalorder %s19, 1
    %p105 = por %p103, %p104
    %p107 = scmp.ne.s32.totalorder %s92, %s106
    %p108 = scmp.eq.s32.totalorder %s19, 0
    %p109 = por %p107, %p108
    %s111 = sadd.s32 %s110, 1
    %p114 = scmp.eq.s32.totalorder %s13, 1
    %p115 = scmp.ne.s32.totalorder %s110, %s112
    %p116 = scmp.eq.s32.totalorder %s13, 0
    %p117 = por %p115, %p116
    %p118 = scmp.ne.s32.totalorder %s110, %s112
    %p119 = scmp.eq.s32.totalorder %s18, 1
    %p120 = por %p118, %p119
    %p121 = scmp.ne.s32.totalorder %s112, %s113
    %p122 = scmp.eq.s32.totalorder %s18, 0
    %p123 = por %p121, %p122
    %p124 = scmp.ne.s32.totalorder %s112, %s113
    %p125 = scmp.eq.s32.totalorder %s19, 1
    %p126 = por %p124, %p125
    %p128 = scmp.ne.s32.totalorder %s113, %s127
    %p129 = scmp.eq.s32.totalorder %s19, 0
    %p130 = por %p128, %p129
    %s132 = sadd.s32 %s131, 1
    %p135 = scmp.eq.s32.totalorder %s13, 1
    %p136 = scmp.ne.s32.totalorder %s131, %s133
    %p137 = scmp.eq.s32.totalorder %s13, 0
    %p138 = por %p136, %p137
    %p139 = scmp.ne.s32.totalorder %s131, %s133
    %p140 = scmp.eq.s32.totalorder %s18, 1
    %p141 = por %p139, %p140
    %p142 = scmp.ne.s32.totalorder %s133, %s134
    %p143 = scmp.eq.s32.totalorder %s18, 0
    %p144 = por %p142, %p143
    %p145 = scmp.ne.s32.totalorder %s133, %s134
    %p146 = scmp.eq.s32.totalorder %s19, 1
    %p147 = por %p145, %p146
    %p149 = scmp.ne.s32.totalorder %s134, %s148
    %p150 = scmp.eq.s32.totalorder %s19, 0
    %p151 = por %p149, %p150
    %s153 = sadd.s32 %s152, 1
    %p156 = scmp.eq.s32.totalorder %s13, 1
    %p157 = scmp.ne.s32.totalorder %s152, %s154
    %p158 = scmp.eq.s32.totalorder %s13, 0
    %p159 = por %p157, %p158
    %p160 = scmp.ne.s32.totalorder %s152, %s154
    %p161 = scmp.eq.s32.totalorder %s18, 1
    %p162 = por %p160, %p161
    %p163 = scmp.ne.s32.totalorder %s154, %s155
    %p164 = scmp.eq.s32.totalorder %s18, 0
    %p165 = por %p163, %p164
    %p166 = scmp.ne.s32.totalorder %s154, %s155
    %p167 = scmp.eq.s32.totalorder %s19, 1
    %p168 = por %p166, %p167
    %p170 = scmp.ne.s32.totalorder %s155, %s169
    %p171 = scmp.eq.s32.totalorder %s19, 0
    %p172 = por %p170, %p171
    %s173 = ssub.s32 %s13, %s20
    %p174 = scmp.eq.s32.totalorder %s173, 0
    %s176 = sadd.s32 %s175, 1
    %s177 = scalar_select %p174, %s175, %s176
    %p180 = pneg %p174
    %p181 = scmp.eq.s32.totalorder %s13, 1
    %p182 = por %p180, %p181
    %p183 = scmp.ne.s32.totalorder %s175, %s178
    %p184 = scmp.eq.s32.totalorder %s13, 0
    %p185 = por %p183, %p184
    %p186 = scmp.ne.s32.totalorder %s175, %s178
    %p187 = scmp.eq.s32.totalorder %s18, 1
    %p188 = por %p186, %p187
    %p189 = scmp.ne.s32.totalorder %s178, %s179
    %p190 = scmp.eq.s32.totalorder %s18, 0
    %p191 = por %p189, %p190
    %p192 = scmp.ne.s32.totalorder %s178, %s179
    %p193 = scmp.eq.s32.totalorder %s19, 1
    %p194 = por %p192, %p193
    %p196 = scmp.ne.s32.totalorder %s179, %s195
    %p197 = scmp.eq.s32.totalorder %s19, 0
    %p198 = por %p196, %p197
    %p199 = scmp.le.s32.totalorder 1, %s13
    %p200 = scmp.lt.s32.totalorder %s13, 3
    %p201 = pnand %p199, %p200
    %p202 = pneg %p201
    // Predicated region
    $region9: #{video_encoder_forward.9} parent=5 // pred_check
      _
    $region10: #{video_encoder_forward.9} parent=5 // pred_check_branch
      %204 = sbr.rel (%p201) target = $region12
    $region11: #{video_encoder_forward.9} parent=5 // pred_region
      %s205 = ssub.s32 %s13, 1
      // Predicated region
      $region13: #{video_encoder_forward.9} parent=11 // pred_check
        %p206 = pneg %p60
      $region14: #{video_encoder_forward.9} parent=11 // pred_check_branch
        %208 = sbr.rel (%p206) target = $region16
      $region15: #{video_encoder_forward.9} parent=11 // pred_region
        _
      $region16: #{video_encoder_forward.9} parent=11 // pred_fallthru
        _
      // Predicated region
      $region17: #{video_encoder_forward.9} parent=11 // pred_check
        %p209 = pneg %p81
      $region18: #{video_encoder_forward.9} parent=11 // pred_check_branch
        %211 = sbr.rel (%p209) target = $region20
      $region19: #{video_encoder_forward.9} parent=11 // pred_region
        _
      $region20: #{video_encoder_forward.9} parent=11 // pred_fallthru
        _
      // Predicated region
      $region21: #{video_encoder_forward.9} parent=11 // pred_check
        %p212 = pneg %p102
      $region22: #{video_encoder_forward.9} parent=11 // pred_check_branch
        %214 = sbr.rel (%p212) target = $region24
      $region23: #{video_encoder_forward.9} parent=11 // pred_region
        _
      $region24: #{video_encoder_forward.9} parent=11 // pred_fallthru
        _
      // Predicated region
      $region25: #{video_encoder_forward.9} parent=11 // pred_check
        %p215 = pneg %p123
      $region26: #{video_encoder_forward.9} parent=11 // pred_check_branch
        %217 = sbr.rel (%p215) target = $region28
      $region27: #{video_encoder_forward.9} parent=11 // pred_region
        _
      $region28: #{video_encoder_forward.9} parent=11 // pred_fallthru
        _
      // Predicated region
      $region29: #{video_encoder_forward.9} parent=11 // pred_check
        %p218 = pneg %p144
      $region30: #{video_encoder_forward.9} parent=11 // pred_check_branch
        %220 = sbr.rel (%p218) target = $region32
      $region31: #{video_encoder_forward.9} parent=11 // pred_region
        _
      $region32: #{video_encoder_forward.9} parent=11 // pred_fallthru
        _
      // Predicated region
      $region33: #{video_encoder_forward.9} parent=11 // pred_check
        %p221 = pneg %p165
      $region34: #{video_encoder_forward.9} parent=11 // pred_check_branch
        %223 = sbr.rel (%p221) target = $region36
      $region35: #{video_encoder_forward.9} parent=11 // pred_region
        _
      $region36: #{video_encoder_forward.9} parent=11 // pred_fallthru
        _
    $region12: #{video_encoder_forward.9} parent=5 // pred_fallthru
      _
    %p224 = scmp.lt.s32.totalorder %s13, 2
    // Predicated region
    $region37: #{video_encoder_forward.9} parent=5 // pred_check
      %p225 = pneg %p224
    $region38: #{video_encoder_forward.9} parent=5 // pred_check_branch
      %227 = sbr.rel (%p225) target = $region40
    $region39: #{video_encoder_forward.9} parent=5 // pred_region
      // Predicated region
      $region41: #{video_encoder_forward.9} parent=39 // pred_check
        %p228 = pneg %p33
      $region42: #{video_encoder_forward.9} parent=39 // pred_check_branch
        %230 = sbr.rel (%p228) target = $region44
      $region43: #{video_encoder_forward.9} parent=39 // pred_region
        %s231 = smul.u32 8, %s13
        %p232 = scmp.lt.s32.totalorder %s231, 15
        %s233 = scalar_select %p232, %s231, 15
        %s234 = smul.addr %s233, 8
        %s235 = scalar_lea.vmem %s0, %s234
        %s236 = smul.u32 8, %s13
      $region44: #{video_encoder_forward.9} parent=39 // pred_fallthru
        _
    $region40: #{video_encoder_forward.9} parent=5 // pred_fallthru
      _
    %p237 = scmp.le.s32.totalorder 1, %s13
    %p238 = scmp.lt.s32.totalorder %s13, 3
    %p239 = pnand %p237, %p238
    %p240 = pneg %p239
    // Predicated region
    $region45: #{video_encoder_forward.9} parent=5 // pred_check
      _
    $region46: #{video_encoder_forward.9} parent=5 // pred_check_branch
      %242 = sbr.rel (%p239) target = $region48
    $region47: #{video_encoder_forward.9} parent=5 // pred_region
      %s243 = ssub.s32 %s13, 1
      %s244 = smul.u32 8, %s18
      %p245 = scmp.lt.s32.totalorder %s244, 15
      %s246 = scalar_select %p245, %s244, 15
      %s247 = smul.addr %s246, 8
      %s248 = scalar_lea.vmem %s0, %s247
      %p249 = pneg %p39
      %p250 = pneg %p36
      %p251 = pneg %p60
      %p252 = pneg %p57
      %p253 = pneg %p81
      %p254 = pneg %p78
      %p255 = pneg %p102
      %p256 = pneg %p99
      %p257 = pneg %p123
      %p258 = pneg %p120
      %p259 = pneg %p144
      %p260 = pneg %p141
      %p261 = pneg %p165
      %p262 = pneg %p162
      %p263 = pneg %p191
      %p264 = pneg %p188
      %s265 = smul.u32 8, %s18
      %p266 = scmp.lt.s32.totalorder %s265, 15
      %s267 = scalar_select %p266, %s265, 15
      %s268 = smul.addr %s267, 8
      %s269 = scalar_lea.vmem %s7, %s268
      %s270 = smul.u32 8, %s18
      %p271 = scmp.lt.s32.totalorder %s270, 15
      %s272 = scalar_select %p271, %s270, 15
      %s273 = smul.addr %s272, 8
      %s274 = scalar_lea.vmem %s0, %s273
      %s275 = smul.u32 8, %s18
      %s276 = smul.u32 8, %s18
      %p277 = scmp.lt.s32.totalorder %s276, 15
      %s278 = scalar_select %p277, %s276, 15
      %s279 = smul.addr %s278, 8
      %s280 = scalar_lea.vmem %s7, %s279
      %s281 = smul.u32 8, %s18
      %v283 = vld [vmem:[%s274] sm:$0xff]
      %v284 = vld [vmem:[%s274 + $0x8] sm:$0xff]
      %v285 = vld [vmem:[%s274 + $0x10] sm:$0xff]
      %v286 = vld [vmem:[%s274 + $0x18] sm:$0xff]
      %v287 = vld [vmem:[%s274 + $0x20] sm:$0xff]
      %v288 = vld [vmem:[%s274 + $0x28] sm:$0xff]
      %v289 = vld [vmem:[%s274 + $0x30] sm:$0xff]
      %v290 = vld [vmem:[%s274 + $0x38] sm:$0xff]
      %vm291 = vcmask 261120
      %v292 = vsel %vm291, %v283, 0.0
      %293 = vadd.xlane.f32.xlu0 %v292
      %v294 = vpop.xlane.xlu0 %293
      %v295 = vsel %vm291, %v284, 0.0
      %296 = vadd.xlane.f32.xlu0 %v295
      %v297 = vpop.xlane.xlu0 %296
      %v298 = vsel %vm291, %v285, 0.0
      %299 = vadd.xlane.f32.xlu0 %v298
      %v300 = vpop.xlane.xlu0 %299
      %v301 = vsel %vm291, %v286, 0.0
      %302 = vadd.xlane.f32.xlu0 %v301
      %v303 = vpop.xlane.xlu0 %302
      %v304 = vsel %vm291, %v287, 0.0
      %305 = vadd.xlane.f32.xlu0 %v304
      %v306 = vpop.xlane.xlu0 %305
      %v307 = vsel %vm291, %v288, 0.0
      %308 = vadd.xlane.f32.xlu0 %v307
      %v309 = vpop.xlane.xlu0 %308
      %v310 = vsel %vm291, %v289, 0.0
      %311 = vadd.xlane.f32.xlu0 %v310
      %v312 = vpop.xlane.xlu0 %311
      %v313 = vsel %vm291, %v290, 0.0
      %314 = vadd.xlane.f32.xlu0 %v313
      %v315 = vpop.xlane.xlu0 %314
      %v316 = vrcp.pop 32.0
      %v317 = vmul.f32 32.0, %v316
      %v318 = vsub.f32 1.0, %v317
      %v319 = vmul.f32 %v316, %v318
      %v320 = vadd.f32 %v316, %v319
      %vm321 = vweird.f32 %v316
      %v322 = vsel %vm321, %v316, %v320
      %v323 = vmul.f32 %v294, %v322
      %v324 = vmul.f32 %v297, %v322
      %v325 = vmul.f32 %v300, %v322
      %v326 = vmul.f32 %v303, %v322
      %v327 = vmul.f32 %v306, %v322
      %v328 = vmul.f32 %v309, %v322
      %v329 = vmul.f32 %v312, %v322
      %v330 = vmul.f32 %v315, %v322
      %v331 = vsub.f32 %v283, %v323
      %v332 = vsub.f32 %v284, %v324
      %v333 = vsub.f32 %v285, %v325
      %v334 = vsub.f32 %v286, %v326
      %v335 = vsub.f32 %v287, %v327
      %v336 = vsub.f32 %v288, %v328
      %v337 = vsub.f32 %v289, %v329
      %v338 = vsub.f32 %v290, %v330
      %v339 = vmul.f32 %v331, %v331
      %v340 = vmul.f32 %v332, %v332
      %v341 = vmul.f32 %v333, %v333
      %v342 = vmul.f32 %v334, %v334
      %v343 = vmul.f32 %v335, %v335
      %v344 = vmul.f32 %v336, %v336
      %v345 = vmul.f32 %v337, %v337
      %v346 = vmul.f32 %v338, %v338
      %v347 = vsel %vm291, %v339, 0.0
      %348 = vadd.xlane.f32.xlu0 %v347
      %v349 = vpop.xlane.xlu0 %348
      %v350 = vsel %vm291, %v340, 0.0
      %351 = vadd.xlane.f32.xlu0 %v350
      %v352 = vpop.xlane.xlu0 %351
      %v353 = vsel %vm291, %v341, 0.0
      %354 = vadd.xlane.f32.xlu0 %v353
      %v355 = vpop.xlane.xlu0 %354
      %v356 = vsel %vm291, %v342, 0.0
      %357 = vadd.xlane.f32.xlu0 %v356
      %v358 = vpop.xlane.xlu0 %357
      %v359 = vsel %vm291, %v343, 0.0
      %360 = vadd.xlane.f32.xlu0 %v359
      %v361 = vpop.xlane.xlu0 %360
      %v362 = vsel %vm291, %v344, 0.0
      %363 = vadd.xlane.f32.xlu0 %v362
      %v364 = vpop.xlane.xlu0 %363
      %v365 = vsel %vm291, %v345, 0.0
      %366 = vadd.xlane.f32.xlu0 %v365
      %v367 = vpop.xlane.xlu0 %366
      %v368 = vsel %vm291, %v346, 0.0
      %369 = vadd.xlane.f32.xlu0 %v368
      %v370 = vpop.xlane.xlu0 %369
      %v371 = vmul.f32 %v349, %v322
      %v372 = vmul.f32 %v352, %v322
      %v373 = vmul.f32 %v355, %v322
      %v374 = vmul.f32 %v358, %v322
      %v375 = vmul.f32 %v361, %v322
      %v376 = vmul.f32 %v364, %v322
      %v377 = vmul.f32 %v367, %v322
      %v378 = vmul.f32 %v370, %v322
      %v379 = vadd.f32 %v371, 1e-05
      %v380 = vadd.f32 %v372, 1e-05
      %v381 = vadd.f32 %v373, 1e-05
      %v382 = vadd.f32 %v374, 1e-05
      %v383 = vadd.f32 %v375, 1e-05
      %v384 = vadd.f32 %v376, 1e-05
      %v385 = vadd.f32 %v377, 1e-05
      %v386 = vadd.f32 %v378, 1e-05
      %v387 = vrsqrt.pop %v379
      %v388 = vmul.f32 %v387, %v379
      %v389 = vmul.f32 %v388, %v387
      %v390 = vmul.f32 0.5, %v389
      %v391 = vsub.f32 1.5, %v390
      %v392 = vmul.f32 %v387, %v391
      %vm393 = vweird.f32 %v379
      %vm394 = vweird.f32 %v387
      %vm395 = vmor %vm393, %vm394
      %v396 = vsel %vm395, %v387, %v392
      %v397 = vrsqrt.pop %v380
      %v398 = vmul.f32 %v397, %v380
      %v399 = vmul.f32 %v398, %v397
      %v400 = vmul.f32 0.5, %v399
      %v401 = vsub.f32 1.5, %v400
      %v402 = vmul.f32 %v397, %v401
      %vm403 = vweird.f32 %v380
      %vm404 = vweird.f32 %v397
      %vm405 = vmor %vm403, %vm404
      %v406 = vsel %vm405, %v397, %v402
      %v407 = vrsqrt.pop %v381
      %v408 = vmul.f32 %v407, %v381
      %v409 = vmul.f32 %v408, %v407
      %v410 = vmul.f32 0.5, %v409
      %v411 = vsub.f32 1.5, %v410
      %v412 = vmul.f32 %v407, %v411
      %vm413 = vweird.f32 %v381
      %vm414 = vweird.f32 %v407
      %vm415 = vmor %vm413, %vm414
      %v416 = vsel %vm415, %v407, %v412
      %v417 = vrsqrt.pop %v382
      %v418 = vmul.f32 %v417, %v382
      %v419 = vmul.f32 %v418, %v417
      %v420 = vmul.f32 0.5, %v419
      %v421 = vsub.f32 1.5, %v420
      %v422 = vmul.f32 %v417, %v421
      %vm423 = vweird.f32 %v382
      %vm424 = vweird.f32 %v417
      %vm425 = vmor %vm423, %vm424
      %v426 = vsel %vm425, %v417, %v422
      %v427 = vrsqrt.pop %v383
      %v428 = vmul.f32 %v427, %v383
      %v429 = vmul.f32 %v428, %v427
      %v430 = vmul.f32 0.5, %v429
      %v431 = vsub.f32 1.5, %v430
      %v432 = vmul.f32 %v427, %v431
      %vm433 = vweird.f32 %v383
      %vm434 = vweird.f32 %v427
      %vm435 = vmor %vm433, %vm434
      %v436 = vsel %vm435, %v427, %v432
      %v437 = vrsqrt.pop %v384
      %v438 = vmul.f32 %v437, %v384
      %v439 = vmul.f32 %v438, %v437
      %v440 = vmul.f32 0.5, %v439
      %v441 = vsub.f32 1.5, %v440
      %v442 = vmul.f32 %v437, %v441
      %vm443 = vweird.f32 %v384
      %vm444 = vweird.f32 %v437
      %vm445 = vmor %vm443, %vm444
      %v446 = vsel %vm445, %v437, %v442
      %v447 = vrsqrt.pop %v385
      %v448 = vmul.f32 %v447, %v385
      %v449 = vmul.f32 %v448, %v447
      %v450 = vmul.f32 0.5, %v449
      %v451 = vsub.f32 1.5, %v450
      %v452 = vmul.f32 %v447, %v451
      %vm453 = vweird.f32 %v385
      %vm454 = vweird.f32 %v447
      %vm455 = vmor %vm453, %vm454
      %v456 = vsel %vm455, %v447, %v452
      %v457 = vrsqrt.pop %v386
      %v458 = vmul.f32 %v457, %v386
      %v459 = vmul.f32 %v458, %v457
      %v460 = vmul.f32 0.5, %v459
      %v461 = vsub.f32 1.5, %v460
      %v462 = vmul.f32 %v457, %v461
      %vm463 = vweird.f32 %v386
      %vm464 = vweird.f32 %v457
      %vm465 = vmor %vm463, %vm464
      %v466 = vsel %vm465, %v457, %v462
      %v467 = vmul.f32 %v331, %v396
      %v468 = vmul.f32 %v332, %v406
      %v469 = vmul.f32 %v333, %v416
      %v470 = vmul.f32 %v334, %v426
      %v471 = vmul.f32 %v335, %v436
      %v472 = vmul.f32 %v336, %v446
      %v473 = vmul.f32 %v337, %v456
      %v474 = vmul.f32 %v338, %v466
      %v475 = vld [vmem:[%s1] sm:$0x1]
      %v477 = vperm.slane %v475, 0
      %v479 = vmul.f32 %v467, %v477
      %v480 = vmul.f32 %v468, %v477
      %v481 = vmul.f32 %v469, %v477
      %v482 = vmul.f32 %v470, %v477
      %v483 = vmul.f32 %v471, %v477
      %v484 = vmul.f32 %v472, %v477
      %v485 = vmul.f32 %v473, %v477
      %v486 = vmul.f32 %v474, %v477
      %v487 = vld [vmem:[%s2] sm:$0x1]
      %v489 = vperm.slane %v487, 0
      %v491 = vadd.f32 %v479, %v489
      %v492 = vadd.f32 %v480, %v489
      %v493 = vadd.f32 %v481, %v489
      %v494 = vadd.f32 %v482, %v489
      %v495 = vadd.f32 %v483, %v489
      %v496 = vadd.f32 %v484, %v489
      %v497 = vadd.f32 %v485, %v489
      %v498 = vadd.f32 %v486, %v489
      %v499 = vpack.c.bf16 %v492, %v491
      %v500 = vpack.c.bf16 %v494, %v493
      %v501 = vpack.c.bf16 %v496, %v495
      %v502 = vpack.c.bf16 %v498, %v497
      %v503 = vld [vmem:[%s3] sm:$0xf]
      %v504 = vld [vmem:[%s3 + $0x4] sm:$0xf]
      %v505 = vld [vmem:[%s3 + $0x8] sm:$0xf]
      %v506 = vld [vmem:[%s3 + $0xc] sm:$0xf]
      %v511 = vunpack.c.l.b16 %v503
      %v512 = vunpack.c.l.b16 %v504
      %v513 = vunpack.c.l.b16 %v505
      %v514 = vunpack.c.l.b16 %v506
      %v515 = vpack.c.b16 %v512, %v511
      %v516 = vpack.c.b16 %v514, %v513
      %v520 = vsel %vm291, %v499, 0
      %v523 = vsel %vm291, %v500, 0
      %v526 = vsel %vm291, %v501, 0
      %v529 = vsel %vm291, %v502, 0
      %531 = vmatpush.bf16.msra.mxu0 0
      %532 = vmatpush.bf16.msra.mxu0 0
      %533 = vmatpush.bf16.msra.mxu0 0
      %534 = vmatpush.bf16.msra.mxu0 0
      %535 = vmatpush.bf16.msra.mxu0 0
      %536 = vmatpush.bf16.msra.mxu0 0
      %537 = vmatpush.bf16.msra.mxu0 %v516
      %538 = vmatpush.bf16.msra.mxu0 %v515
      %539 = vmatmul.bf16.gmra.mxu0 %v520
      %v540 = vpop.f32.mrf.mxu0
      %v541 = vadd.f32 0.0, %v540
      %v542 = vpop.f32.mrf.mxu0
      %v543 = vadd.f32 0.0, %v542
      %544 = vmatmul.bf16.gmra.mxu0 %v523
      %v545 = vpop.f32.mrf.mxu0
      %v546 = vadd.f32 0.0, %v545
      %v547 = vpop.f32.mrf.mxu0
      %v548 = vadd.f32 0.0, %v547
      %549 = vmatmul.bf16.gmra.mxu0 %v526
      %v550 = vpop.f32.mrf.mxu0
      %v551 = vadd.f32 0.0, %v550
      %v552 = vpop.f32.mrf.mxu0
      %v553 = vadd.f32 0.0, %v552
      %554 = vmatmul.bf16.gmra.mxu0 %v529
      %v555 = vpop.f32.mrf.mxu0
      %v556 = vadd.f32 0.0, %v555
      %v557 = vpop.f32.mrf.mxu0
      %v558 = vadd.f32 0.0, %v557
      %559 = vdwg.mxu0
      %v560 = vpack.c.bf16 %v541, %v541
      %v561 = vpack.c.bf16 %v543, %v543
      %v562 = vpack.c.bf16 %v546, %v546
      %v563 = vpack.c.bf16 %v548, %v548
      %v564 = vpack.c.bf16 %v551, %v551
      %v565 = vpack.c.bf16 %v553, %v553
      %v566 = vpack.c.bf16 %v556, %v556
      %v567 = vpack.c.bf16 %v558, %v558
      %v568 = vld [vmem:[%s4] sm:$0xf]
      %v569 = vld [vmem:[%s4 + $0x4] sm:$0xf]
      %v570 = vld [vmem:[%s4 + $0x8] sm:$0xf]
      %v571 = vld [vmem:[%s4 + $0xc] sm:$0xf]
      %v572 = vld [vmem:[%s6] sm:$0xff]
      %v573 = vld [vmem:[%s6 + $0x8] sm:$0xff]
      %v576 = vunpack.c.l.b16 %v560
      %v577 = vunpack.c.l.b16 %v561
      %v578 = vpack.c.b16 %v577, %v576
      %579 = vrot.lane.b32.xlu0 %v578, 96
      %v580 = vpop.permute.xlu0 %579
      %vm581 = vcmask 130048
      %v583 = vsel %vm581, %v578, 0
      %v586 = vsel %vm581, %v580, 0
      %588 = vmatpush.bf16.xpose.msra.mxu0 0
      %589 = vmatpush.bf16.xpose.msra.mxu0 0
      %590 = vmatpush.bf16.xpose.msra.mxu0 0
      %591 = vmatpush.bf16.xpose.msra.mxu0 0
      %592 = vmatpush.bf16.xpose.msra.mxu0 0
      %593 = vmatpush.bf16.xpose.msra.mxu0 0
      %594 = vmatpush.bf16.xpose.msra.mxu0 0
      %595 = vmatpush.bf16.xpose.msra.mxu0 %v586
      %596 = vmatmul.bf16.gmra.mxu0 %v583
      %v597 = vpop.f32.mrf.mxu0
      %v598 = vadd.f32 %v572, %v597
      %v599 = vpop.f32.mrf.mxu0
      %v600 = vadd.f32 %v573, %v599
      %601 = vdwg.mxu0
      %v602 = vsel %vm581, %v598, -inf
      %603 = vmax.xlane.f32.xlu0 %v602
      %v604 = vpop.xlane.xlu0 %603
      %v605 = vsel %vm581, %v600, -inf
      %606 = vmax.xlane.f32.xlu0 %v605
      %v607 = vpop.xlane.xlu0 %606
      %v608 = vsub.f32 %v598, %v604
      %v609 = vsub.f32 %v600, %v607
      %v610 = vmul.f32 %v608, 1.442695
      %v611 = vpow.pop %v610
      %v612 = vmul.f32 %v609, 1.442695
      %v613 = vpow.pop %v612
      %v614 = vsel %vm581, %v611, 0.0
      %615 = vadd.xlane.f32.xlu0 %v614
      %v616 = vpop.xlane.xlu0 %615
      %v617 = vsel %vm581, %v613, 0.0
      %618 = vadd.xlane.f32.xlu0 %v617
      %v619 = vpop.xlane.xlu0 %618
      %v620 = vrcp.pop %v616
      %v621 = vrcp.pop %v619
      %v622 = vmul.f32 %v611, %v620
      %v623 = vmul.f32 %v613, %v621
      %v624 = vpack.c.bf16 %v623, %v622
      %625 = vrot.lane.b32.xlu0 %v578, 64
      %v626 = vpop.permute.xlu0 %625
      %v629 = vsel %vm581, %v624, 0
      %631 = vmatpush.bf16.msra.mxu0 0
      %632 = vmatpush.bf16.msra.mxu0 0
      %633 = vmatpush.bf16.msra.mxu0 0
      %634 = vmatpush.bf16.msra.mxu0 0
      %635 = vmatpush.bf16.msra.mxu0 0
      %636 = vmatpush.bf16.msra.mxu0 0
      %637 = vmatpush.bf16.msra.mxu0 0
      %638 = vmatpush.bf16.msra.mxu0 %v626
      %639 = vmatmul.bf16.gmra.mxu0 %v629
      %v640 = vpop.f32.mrf.mxu0
      %v641 = vadd.f32 0.0, %v640
      %v642 = vpop.f32.mrf.mxu0
      %v643 = vadd.f32 0.0, %v642
      %644 = vdwg.mxu0
      %s645 = scalar_lea.vmem %s6, 16
      %v646 = vld [vmem:[%s645] sm:$0xff]
      %v647 = vld [vmem:[%s645 + $0x8] sm:$0xff]
      %648 = vrot.lane.b32.xlu0 %v578, 112
      %v649 = vpop.permute.xlu0 %648
      %650 = vrot.lane.b32.xlu0 %v578, 80
      %v651 = vpop.permute.xlu0 %650
      %v653 = vsel %vm581, %v649, 0
      %v656 = vsel %vm581, %v651, 0
      %658 = vmatpush.bf16.xpose.msra.mxu0 0
      %659 = vmatpush.bf16.xpose.msra.mxu0 0
      %660 = vmatpush.bf16.xpose.msra.mxu0 0
      %661 = vmatpush.bf16.xpose.msra.mxu0 0
      %662 = vmatpush.bf16.xpose.msra.mxu0 0
      %663 = vmatpush.bf16.xpose.msra.mxu0 0
      %664 = vmatpush.bf16.xpose.msra.mxu0 0
      %665 = vmatpush.bf16.xpose.msra.mxu0 %v656
      %666 = vmatmul.bf16.gmra.mxu0 %v653
      %v667 = vpop.f32.mrf.mxu0
      %v668 = vadd.f32 %v646, %v667
      %v669 = vpop.f32.mrf.mxu0
      %v670 = vadd.f32 %v647, %v669
      %671 = vdwg.mxu0
      %v672 = vsel %vm581, %v668, -inf
      %673 = vmax.xlane.f32.xlu0 %v672
      %v674 = vpop.xlane.xlu0 %673
      %v675 = vsel %vm581, %v670, -inf
      %676 = vmax.xlane.f32.xlu0 %v675
      %v677 = vpop.xlane.xlu0 %676
      %v678 = vsub.f32 %v668, %v674
      %v679 = vsub.f32 %v670, %v677
      %v680 = vmul.f32 %v678, 1.442695
      %v681 = vpow.pop %v680
      %v682 = vmul.f32 %v679, 1.442695
      %v683 = vpow.pop %v682
      %v684 = vsel %vm581, %v681, 0.0
      %685 = vadd.xlane.f32.xlu0 %v684
      %v686 = vpop.xlane.xlu0 %685
      %v687 = vsel %vm581, %v683, 0.0
      %688 = vadd.xlane.f32.xlu0 %v687
      %v689 = vpop.xlane.xlu0 %688
      %v690 = vrcp.pop %v686
      %v691 = vrcp.pop %v689
      %v692 = vmul.f32 %v681, %v690
      %v693 = vmul.f32 %v683, %v691
      %v694 = vpack.c.bf16 %v693, %v692
      %695 = vrot.lane.b32.xlu0 %v578, 48
      %v696 = vpop.permute.xlu0 %695
      %v699 = vsel %vm581, %v694, 0
      %701 = vmatpush.bf16.msra.mxu0 0
      %702 = vmatpush.bf16.msra.mxu0 0
      %703 = vmatpush.bf16.msra.mxu0 0
      %704 = vmatpush.bf16.msra.mxu0 0
      %705 = vmatpush.bf16.msra.mxu0 0
      %706 = vmatpush.bf16.msra.mxu0 0
      %707 = vmatpush.bf16.msra.mxu0 0
      %708 = vmatpush.bf16.msra.mxu0 %v696
      %709 = vmatmul.bf16.gmra.mxu0 %v699
      %v710 = vpop.f32.mrf.mxu0
      %v711 = vadd.f32 0.0, %v710
      %v712 = vpop.f32.mrf.mxu0
      %v713 = vadd.f32 0.0, %v712
      %714 = vdwg.mxu0
      %717 = vrot.lane.b32.xlu0 %v711, 16
      %v718 = vpop.permute.xlu0 %717
      %719 = vrot.lane.b32.xlu0 %v713, 16
      %v720 = vpop.permute.xlu0 %719
      %v723 = vsel %vm581, %v641, %v718
      %v724 = vsel %vm581, %v643, %v720
      %v727 = vunpack.c.l.b16 %v562
      %v728 = vunpack.c.l.b16 %v563
      %v729 = vpack.c.b16 %v728, %v727
      %730 = vrot.lane.b32.xlu0 %v729, 96
      %v731 = vpop.permute.xlu0 %730
      %v733 = vsel %vm581, %v729, 0
      %v736 = vsel %vm581, %v731, 0
      %738 = vmatpush.bf16.xpose.msra.mxu0 0
      %739 = vmatpush.bf16.xpose.msra.mxu0 0
      %740 = vmatpush.bf16.xpose.msra.mxu0 0
      %741 = vmatpush.bf16.xpose.msra.mxu0 0
      %742 = vmatpush.bf16.xpose.msra.mxu0 0
      %743 = vmatpush.bf16.xpose.msra.mxu0 0
      %744 = vmatpush.bf16.xpose.msra.mxu0 0
      %745 = vmatpush.bf16.xpose.msra.mxu0 %v736
      %746 = vmatmul.bf16.gmra.mxu0 %v733
      %v747 = vpop.f32.mrf.mxu0
      %v748 = vadd.f32 %v572, %v747
      %v749 = vpop.f32.mrf.mxu0
      %v750 = vadd.f32 %v573, %v749
      %751 = vdwg.mxu0
      %v752 = vsel %vm581, %v748, -inf
      %753 = vmax.xlane.f32.xlu0 %v752
      %v754 = vpop.xlane.xlu0 %753
      %v755 = vsel %vm581, %v750, -inf
      %756 = vmax.xlane.f32.xlu0 %v755
      %v757 = vpop.xlane.xlu0 %756
      %v758 = vsub.f32 %v748, %v754
      %v759 = vsub.f32 %v750, %v757
      %v760 = vmul.f32 %v758, 1.442695
      %v761 = vpow.pop %v760
      %v762 = vmul.f32 %v759, 1.442695
      %v763 = vpow.pop %v762
      %v764 = vsel %vm581, %v761, 0.0
      %765 = vadd.xlane.f32.xlu0 %v764
      %v766 = vpop.xlane.xlu0 %765
      %v767 = vsel %vm581, %v763, 0.0
      %768 = vadd.xlane.f32.xlu0 %v767
      %v769 = vpop.xlane.xlu0 %768
      %v770 = vrcp.pop %v766
      %v771 = vrcp.pop %v769
      %v772 = vmul.f32 %v761, %v770
      %v773 = vmul.f32 %v763, %v771
      %v774 = vpack.c.bf16 %v773, %v772
      %775 = vrot.lane.b32.xlu0 %v729, 64
      %v776 = vpop.permute.xlu0 %775
      %v779 = vsel %vm581, %v774, 0
      %781 = vmatpush.bf16.msra.mxu0 0
      %782 = vmatpush.bf16.msra.mxu0 0
      %783 = vmatpush.bf16.msra.mxu0 0
      %784 = vmatpush.bf16.msra.mxu0 0
      %785 = vmatpush.bf16.msra.mxu0 0
      %786 = vmatpush.bf16.msra.mxu0 0
      %787 = vmatpush.bf16.msra.mxu0 0
      %788 = vmatpush.bf16.msra.mxu0 %v776
      %789 = vmatmul.bf16.gmra.mxu0 %v779
      %v790 = vpop.f32.mrf.mxu0
      %v791 = vadd.f32 0.0, %v790
      %v792 = vpop.f32.mrf.mxu0
      %v793 = vadd.f32 0.0, %v792
      %794 = vdwg.mxu0
      %795 = vrot.lane.b32.xlu0 %v729, 112
      %v796 = vpop.permute.xlu0 %795
      %797 = vrot.lane.b32.xlu0 %v729, 80
      %v798 = vpop.permute.xlu0 %797
      %v800 = vsel %vm581, %v796, 0
      %v803 = vsel %vm581, %v798, 0
      %805 = vmatpush.bf16.xpose.msra.mxu0 0
      %806 = vmatpush.bf16.xpose.msra.mxu0 0
      %807 = vmatpush.bf16.xpose.msra.mxu0 0
      %808 = vmatpush.bf16.xpose.msra.mxu0 0
      %809 = vmatpush.bf16.xpose.msra.mxu0 0
      %810 = vmatpush.bf16.xpose.msra.mxu0 0
      %811 = vmatpush.bf16.xpose.msra.mxu0 0
      %812 = vmatpush.bf16.xpose.msra.mxu0 %v803
      %813 = vmatmul.bf16.gmra.mxu0 %v800
      %v814 = vpop.f32.mrf.mxu0
      %v815 = vadd.f32 %v646, %v814
      %v816 = vpop.f32.mrf.mxu0
      %v817 = vadd.f32 %v647, %v816
      %818 = vdwg.mxu0
      %v819 = vsel %vm581, %v815, -inf
      %820 = vmax.xlane.f32.xlu0 %v819
      %v821 = vpop.xlane.xlu0 %820
      %v822 = vsel %vm581, %v817, -inf
      %823 = vmax.xlane.f32.xlu0 %v822
      %v824 = vpop.xlane.xlu0 %823
      %v825 = vsub.f32 %v815, %v821
      %v826 = vsub.f32 %v817, %v824
      %v827 = vmul.f32 %v825, 1.442695
      %v828 = vpow.pop %v827
      %v829 = vmul.f32 %v826, 1.442695
      %v830 = vpow.pop %v829
      %v831 = vsel %vm581, %v828, 0.0
      %832 = vadd.xlane.f32.xlu0 %v831
      %v833 = vpop.xlane.xlu0 %832
      %v834 = vsel %vm581, %v830, 0.0
      %835 = vadd.xlane.f32.xlu0 %v834
      %v836 = vpop.xlane.xlu0 %835
      %v837 = vrcp.pop %v833
      %v838 = vrcp.pop %v836
      %v839 = vmul.f32 %v828, %v837
      %v840 = vmul.f32 %v830, %v838
      %v841 = vpack.c.bf16 %v840, %v839
      %842 = vrot.lane.b32.xlu0 %v729, 48
      %v843 = vpop.permute.xlu0 %842
      %v846 = vsel %vm581, %v841, 0
      %848 = vmatpush.bf16.msra.mxu0 0
      %849 = vmatpush.bf16.msra.mxu0 0
      %850 = vmatpush.bf16.msra.mxu0 0
      %851 = vmatpush.bf16.msra.mxu0 0
      %852 = vmatpush.bf16.msra.mxu0 0
      %853 = vmatpush.bf16.msra.mxu0 0
      %854 = vmatpush.bf16.msra.mxu0 0
      %855 = vmatpush.bf16.msra.mxu0 %v843
      %856 = vmatmul.bf16.gmra.mxu0 %v846
      %v857 = vpop.f32.mrf.mxu0
      %v858 = vadd.f32 0.0, %v857
      %v859 = vpop.f32.mrf.mxu0
      %v860 = vadd.f32 0.0, %v859
      %861 = vdwg.mxu0
      %864 = vrot.lane.b32.xlu0 %v858, 16
      %v865 = vpop.permute.xlu0 %864
      %866 = vrot.lane.b32.xlu0 %v860, 16
      %v867 = vpop.permute.xlu0 %866
      %v870 = vsel %vm581, %v791, %v865
      %v871 = vsel %vm581, %v793, %v867
      %v874 = vunpack.c.l.b16 %v564
      %v875 = vunpack.c.l.b16 %v565
      %v876 = vpack.c.b16 %v875, %v874
      %877 = vrot.lane.b32.xlu0 %v876, 96
      %v878 = vpop.permute.xlu0 %877
      %v880 = vsel %vm581, %v876, 0
      %v883 = vsel %vm581, %v878, 0
      %885 = vmatpush.bf16.xpose.msra.mxu0 0
      %886 = vmatpush.bf16.xpose.msra.mxu0 0
      %887 = vmatpush.bf16.xpose.msra.mxu0 0
      %888 = vmatpush.bf16.xpose.msra.mxu0 0
      %889 = vmatpush.bf16.xpose.msra.mxu0 0
      %890 = vmatpush.bf16.xpose.msra.mxu0 0
      %891 = vmatpush.bf16.xpose.msra.mxu0 0
      %892 = vmatpush.bf16.xpose.msra.mxu0 %v883
      %893 = vmatmul.bf16.gmra.mxu0 %v880
      %v894 = vpop.f32.mrf.mxu0
      %v895 = vadd.f32 %v572, %v894
      %v896 = vpop.f32.mrf.mxu0
      %v897 = vadd.f32 %v573, %v896
      %898 = vdwg.mxu0
      %v899 = vsel %vm581, %v895, -inf
      %900 = vmax.xlane.f32.xlu0 %v899
      %v901 = vpop.xlane.xlu0 %900
      %v902 = vsel %vm581, %v897, -inf
      %903 = vmax.xlane.f32.xlu0 %v902
      %v904 = vpop.xlane.xlu0 %903
      %v905 = vsub.f32 %v895, %v901
      %v906 = vsub.f32 %v897, %v904
      %v907 = vmul.f32 %v905, 1.442695
      %v908 = vpow.pop %v907
      %v909 = vmul.f32 %v906, 1.442695
      %v910 = vpow.pop %v909
      %v911 = vsel %vm581, %v908, 0.0
      %912 = vadd.xlane.f32.xlu0 %v911
      %v913 = vpop.xlane.xlu0 %912
      %v914 = vsel %vm581, %v910, 0.0
      %915 = vadd.xlane.f32.xlu0 %v914
      %v916 = vpop.xlane.xlu0 %915
      %v917 = vrcp.pop %v913
      %v918 = vrcp.pop %v916
      %v919 = vmul.f32 %v908, %v917
      %v920 = vmul.f32 %v910, %v918
      %v921 = vpack.c.bf16 %v920, %v919
      %922 = vrot.lane.b32.xlu0 %v876, 64
      %v923 = vpop.permute.xlu0 %922
      %v926 = vsel %vm581, %v921, 0
      %928 = vmatpush.bf16.msra.mxu0 0
      %929 = vmatpush.bf16.msra.mxu0 0
      %930 = vmatpush.bf16.msra.mxu0 0
      %931 = vmatpush.bf16.msra.mxu0 0
      %932 = vmatpush.bf16.msra.mxu0 0
      %933 = vmatpush.bf16.msra.mxu0 0
      %934 = vmatpush.bf16.msra.mxu0 0
      %935 = vmatpush.bf16.msra.mxu0 %v923
      %936 = vmatmul.bf16.gmra.mxu0 %v926
      %v937 = vpop.f32.mrf.mxu0
      %v938 = vadd.f32 0.0, %v937
      %v939 = vpop.f32.mrf.mxu0
      %v940 = vadd.f32 0.0, %v939
      %941 = vdwg.mxu0
      %942 = vrot.lane.b32.xlu0 %v876, 112
      %v943 = vpop.permute.xlu0 %942
      %944 = vrot.lane.b32.xlu0 %v876, 80
      %v945 = vpop.permute.xlu0 %944
      %v947 = vsel %vm581, %v943, 0
      %v950 = vsel %vm581, %v945, 0
      %952 = vmatpush.bf16.xpose.msra.mxu0 0
      %953 = vmatpush.bf16.xpose.msra.mxu0 0
      %954 = vmatpush.bf16.xpose.msra.mxu0 0
      %955 = vmatpush.bf16.xpose.msra.mxu0 0
      %956 = vmatpush.bf16.xpose.msra.mxu0 0
      %957 = vmatpush.bf16.xpose.msra.mxu0 0
      %958 = vmatpush.bf16.xpose.msra.mxu0 0
      %959 = vmatpush.bf16.xpose.msra.mxu0 %v950
      %960 = vmatmul.bf16.gmra.mxu0 %v947
      %v961 = vpop.f32.mrf.mxu0
      %v962 = vadd.f32 %v646, %v961
      %v963 = vpop.f32.mrf.mxu0
      %v964 = vadd.f32 %v647, %v963
      %965 = vdwg.mxu0
      %v966 = vsel %vm581, %v962, -inf
      %967 = vmax.xlane.f32.xlu0 %v966
      %v968 = vpop.xlane.xlu0 %967
      %v969 = vsel %vm581, %v964, -inf
      %970 = vmax.xlane.f32.xlu0 %v969
      %v971 = vpop.xlane.xlu0 %970
      %v972 = vsub.f32 %v962, %v968
      %v973 = vsub.f32 %v964, %v971
      %v974 = vmul.f32 %v972, 1.442695
      %v975 = vpow.pop %v974
      %v976 = vmul.f32 %v973, 1.442695
      %v977 = vpow.pop %v976
      %v978 = vsel %vm581, %v975, 0.0
      %979 = vadd.xlane.f32.xlu0 %v978
      %v980 = vpop.xlane.xlu0 %979
      %v981 = vsel %vm581, %v977, 0.0
      %982 = vadd.xlane.f32.xlu0 %v981
      %v983 = vpop.xlane.xlu0 %982
      %v984 = vrcp.pop %v980
      %v985 = vrcp.pop %v983
      %v986 = vmul.f32 %v975, %v984
      %v987 = vmul.f32 %v977, %v985
      %v988 = vpack.c.bf16 %v987, %v986
      %989 = vrot.lane.b32.xlu0 %v876, 48
      %v990 = vpop.permute.xlu0 %989
      %v993 = vsel %vm581, %v988, 0
      %995 = vmatpush.bf16.msra.mxu0 0
      %996 = vmatpush.bf16.msra.mxu0 0
      %997 = vmatpush.bf16.msra.mxu0 0
      %998 = vmatpush.bf16.msra.mxu0 0
      %999 = vmatpush.bf16.msra.mxu0 0
      %1000 = vmatpush.bf16.msra.mxu0 0
      %1001 = vmatpush.bf16.msra.mxu0 0
      %1002 = vmatpush.bf16.msra.mxu0 %v990
      %1003 = vmatmul.bf16.gmra.mxu0 %v993
      %v1004 = vpop.f32.mrf.mxu0
      %v1005 = vadd.f32 0.0, %v1004
      %v1006 = vpop.f32.mrf.mxu0
      %v1007 = vadd.f32 0.0, %v1006
      %1008 = vdwg.mxu0
      %1011 = vrot.lane.b32.xlu0 %v1005, 16
      %v1012 = vpop.permute.xlu0 %1011
      %1013 = vrot.lane.b32.xlu0 %v1007, 16
      %v1014 = vpop.permute.xlu0 %1013
      %v1017 = vsel %vm581, %v938, %v1012
      %v1018 = vsel %vm581, %v940, %v1014
      %v1021 = vunpack.c.l.b16 %v566
      %v1022 = vunpack.c.l.b16 %v567
      %v1023 = vpack.c.b16 %v1022, %v1021
      %1024 = vrot.lane.b32.xlu0 %v1023, 96
      %v1025 = vpop.permute.xlu0 %1024
      %v1027 = vsel %vm581, %v1023, 0
      %v1030 = vsel %vm581, %v1025, 0
      %1032 = vmatpush.bf16.xpose.msra.mxu0 0
      %1033 = vmatpush.bf16.xpose.msra.mxu0 0
      %1034 = vmatpush.bf16.xpose.msra.mxu0 0
      %1035 = vmatpush.bf16.xpose.msra.mxu0 0
      %1036 = vmatpush.bf16.xpose.msra.mxu0 0
      %1037 = vmatpush.bf16.xpose.msra.mxu0 0
      %1038 = vmatpush.bf16.xpose.msra.mxu0 0
      %1039 = vmatpush.bf16.xpose.msra.mxu0 %v1030
      %1040 = vmatmul.bf16.gmra.mxu0 %v1027
      %v1041 = vpop.f32.mrf.mxu0
      %v1042 = vadd.f32 %v572, %v1041
      %v1043 = vpop.f32.mrf.mxu0
      %v1044 = vadd.f32 %v573, %v1043
      %1045 = vdwg.mxu0
      %v1046 = vsel %vm581, %v1042, -inf
      %1047 = vmax.xlane.f32.xlu0 %v1046
      %v1048 = vpop.xlane.xlu0 %1047
      %v1049 = vsel %vm581, %v1044, -inf
      %1050 = vmax.xlane.f32.xlu0 %v1049
      %v1051 = vpop.xlane.xlu0 %1050
      %v1052 = vsub.f32 %v1042, %v1048
      %v1053 = vsub.f32 %v1044, %v1051
      %v1054 = vmul.f32 %v1052, 1.442695
      %v1055 = vpow.pop %v1054
      %v1056 = vmul.f32 %v1053, 1.442695
      %v1057 = vpow.pop %v1056
      %v1058 = vsel %vm581, %v1055, 0.0
      %1059 = vadd.xlane.f32.xlu0 %v1058
      %v1060 = vpop.xlane.xlu0 %1059
      %v1061 = vsel %vm581, %v1057, 0.0
      %1062 = vadd.xlane.f32.xlu0 %v1061
      %v1063 = vpop.xlane.xlu0 %1062
      %v1064 = vrcp.pop %v1060
      %v1065 = vrcp.pop %v1063
      %v1066 = vmul.f32 %v1055, %v1064
      %v1067 = vmul.f32 %v1057, %v1065
      %v1068 = vpack.c.bf16 %v1067, %v1066
      %1069 = vrot.lane.b32.xlu0 %v1023, 64
      %v1070 = vpop.permute.xlu0 %1069
      %v1073 = vsel %vm581, %v1068, 0
      %1075 = vmatpush.bf16.msra.mxu0 0
      %1076 = vmatpush.bf16.msra.mxu0 0
      %1077 = vmatpush.bf16.msra.mxu0 0
      %1078 = vmatpush.bf16.msra.mxu0 0
      %1079 = vmatpush.bf16.msra.mxu0 0
      %1080 = vmatpush.bf16.msra.mxu0 0
      %1081 = vmatpush.bf16.msra.mxu0 0
      %1082 = vmatpush.bf16.msra.mxu0 %v1070
      %1083 = vmatmul.bf16.gmra.mxu0 %v1073
      %v1084 = vpop.f32.mrf.mxu0
      %v1085 = vadd.f32 0.0, %v1084
      %v1086 = vpop.f32.mrf.mxu0
      %v1087 = vadd.f32 0.0, %v1086
      %1088 = vdwg.mxu0
      %1089 = vrot.lane.b32.xlu0 %v1023, 112
      %v1090 = vpop.permute.xlu0 %1089
      %1091 = vrot.lane.b32.xlu0 %v1023, 80
      %v1092 = vpop.permute.xlu0 %1091
      %v1094 = vsel %vm581, %v1090, 0
      %v1097 = vsel %vm581, %v1092, 0
      %1099 = vmatpush.bf16.xpose.msra.mxu0 0
      %1100 = vmatpush.bf16.xpose.msra.mxu0 0
      %1101 = vmatpush.bf16.xpose.msra.mxu0 0
      %1102 = vmatpush.bf16.xpose.msra.mxu0 0
      %1103 = vmatpush.bf16.xpose.msra.mxu0 0
      %1104 = vmatpush.bf16.xpose.msra.mxu0 0
      %1105 = vmatpush.bf16.xpose.msra.mxu0 0
      %1106 = vmatpush.bf16.xpose.msra.mxu0 %v1097
      %1107 = vmatmul.bf16.gmra.mxu0 %v1094
      %v1108 = vpop.f32.mrf.mxu0
      %v1109 = vadd.f32 %v646, %v1108
      %v1110 = vpop.f32.mrf.mxu0
      %v1111 = vadd.f32 %v647, %v1110
      %1112 = vdwg.mxu0
      %v1113 = vsel %vm581, %v1109, -inf
      %1114 = vmax.xlane.f32.xlu0 %v1113
      %v1115 = vpop.xlane.xlu0 %1114
      %v1116 = vsel %vm581, %v1111, -inf
      %1117 = vmax.xlane.f32.xlu0 %v1116
      %v1118 = vpop.xlane.xlu0 %1117
      %v1119 = vsub.f32 %v1109, %v1115
      %v1120 = vsub.f32 %v1111, %v1118
      %v1121 = vmul.f32 %v1119, 1.442695
      %v1122 = vpow.pop %v1121
      %v1123 = vmul.f32 %v1120, 1.442695
      %v1124 = vpow.pop %v1123
      %v1125 = vsel %vm581, %v1122, 0.0
      %1126 = vadd.xlane.f32.xlu0 %v1125
      %v1127 = vpop.xlane.xlu0 %1126
      %v1128 = vsel %vm581, %v1124, 0.0
      %1129 = vadd.xlane.f32.xlu0 %v1128
      %v1130 = vpop.xlane.xlu0 %1129
      %v1131 = vrcp.pop %v1127
      %v1132 = vrcp.pop %v1130
      %v1133 = vmul.f32 %v1122, %v1131
      %v1134 = vmul.f32 %v1124, %v1132
      %v1135 = vpack.c.bf16 %v1134, %v1133
      %1136 = vrot.lane.b32.xlu0 %v1023, 48
      %v1137 = vpop.permute.xlu0 %1136
      %v1140 = vsel %vm581, %v1135, 0
      %1142 = vmatpush.bf16.msra.mxu0 0
      %1143 = vmatpush.bf16.msra.mxu0 0
      %1144 = vmatpush.bf16.msra.mxu0 0
      %1145 = vmatpush.bf16.msra.mxu0 0
      %1146 = vmatpush.bf16.msra.mxu0 0
      %1147 = vmatpush.bf16.msra.mxu0 0
      %1148 = vmatpush.bf16.msra.mxu0 0
      %1149 = vmatpush.bf16.msra.mxu0 %v1137
      %1150 = vmatmul.bf16.gmra.mxu0 %v1140
      %v1151 = vpop.f32.mrf.mxu0
      %v1152 = vadd.f32 0.0, %v1151
      %v1153 = vpop.f32.mrf.mxu0
      %v1154 = vadd.f32 0.0, %v1153
      %1155 = vdwg.mxu0
      %1158 = vrot.lane.b32.xlu0 %v1152, 16
      %v1159 = vpop.permute.xlu0 %1158
      %1160 = vrot.lane.b32.xlu0 %v1154, 16
      %v1161 = vpop.permute.xlu0 %1160
      %v1164 = vsel %vm581, %v1085, %v1159
      %v1165 = vsel %vm581, %v1087, %v1161
      %v1166 = vpack.c.bf16 %v724, %v723
      %v1167 = vpack.c.bf16 %v871, %v870
      %v1168 = vpack.c.bf16 %v1018, %v1017
      %v1169 = vpack.c.bf16 %v1165, %v1164
      %v1174 = vunpack.c.l.b16 %v568
      %v1175 = vunpack.c.l.b16 %v569
      %v1176 = vunpack.c.l.b16 %v570
      %v1177 = vunpack.c.l.b16 %v571
      %v1178 = vpack.c.b16 %v1175, %v1174
      %v1179 = vpack.c.b16 %v1177, %v1176
      %v1183 = vsel %vm291, %v1166, 0
      %v1186 = vsel %vm291, %v1167, 0
      %v1189 = vsel %vm291, %v1168, 0
      %v1192 = vsel %vm291, %v1169, 0
      %1194 = vmatpush.bf16.msra.mxu0 0
      %1195 = vmatpush.bf16.msra.mxu0 0
      %1196 = vmatpush.bf16.msra.mxu0 0
      %1197 = vmatpush.bf16.msra.mxu0 0
      %1198 = vmatpush.bf16.msra.mxu0 0
      %1199 = vmatpush.bf16.msra.mxu0 0
      %1200 = vmatpush.bf16.msra.mxu0 %v1179
      %1201 = vmatpush.bf16.msra.mxu0 %v1178
      %1202 = vmatmul.bf16.gmra.mxu0 %v1183
      %v1203 = vpop.f32.mrf.mxu0
      %v1204 = vadd.f32 0.0, %v1203
      %v1205 = vpop.f32.mrf.mxu0
      %v1206 = vadd.f32 0.0, %v1205
      %1207 = vmatmul.bf16.gmra.mxu0 %v1186
      %v1208 = vpop.f32.mrf.mxu0
      %v1209 = vadd.f32 0.0, %v1208
      %v1210 = vpop.f32.mrf.mxu0
      %v1211 = vadd.f32 0.0, %v1210
      %1212 = vmatmul.bf16.gmra.mxu0 %v1189
      %v1213 = vpop.f32.mrf.mxu0
      %v1214 = vadd.f32 0.0, %v1213
      %v1215 = vpop.f32.mrf.mxu0
      %v1216 = vadd.f32 0.0, %v1215
      %1217 = vmatmul.bf16.gmra.mxu0 %v1192
      %v1218 = vpop.f32.mrf.mxu0
      %v1219 = vadd.f32 0.0, %v1218
      %v1220 = vpop.f32.mrf.mxu0
      %v1221 = vadd.f32 0.0, %v1220
      %1222 = vdwg.mxu0
      %v1223 = vadd.f32 %v283, %v1204
      %v1224 = vadd.f32 %v284, %v1206
      %v1225 = vadd.f32 %v285, %v1209
      %v1226 = vadd.f32 %v286, %v1211
      %v1227 = vadd.f32 %v287, %v1214
      %v1228 = vadd.f32 %v288, %v1216
      %v1229 = vadd.f32 %v289, %v1219
      %v1230 = vadd.f32 %v290, %v1221
      %v1231 = vld [vmem:[%s5] sm:$0x1]
      %v1233 = vperm.slane %v1231, 0
      %v1235 = vadd.f32 %v1223, %v1233
      %v1236 = vadd.f32 %v1224, %v1233
      %v1237 = vadd.f32 %v1225, %v1233
      %v1238 = vadd.f32 %v1226, %v1233
      %v1239 = vadd.f32 %v1227, %v1233
      %v1240 = vadd.f32 %v1228, %v1233
      %v1241 = vadd.f32 %v1229, %v1233
      %v1242 = vadd.f32 %v1230, %v1233
      %1243 = vst.msk [vmem:[%s280] sm:$0xff] %vm291, %v1235
      %1244 = vst.msk [vmem:[%s280 + $0x8] sm:$0xff] %vm291, %v1236
      %1245 = vst.msk [vmem:[%s280 + $0x10] sm:$0xff] %vm291, %v1237
      %1246 = vst.msk [vmem:[%s280 + $0x18] sm:$0xff] %vm291, %v1238
      %1247 = vst.msk [vmem:[%s280 + $0x20] sm:$0xff] %vm291, %v1239
      %1248 = vst.msk [vmem:[%s280 + $0x28] sm:$0xff] %vm291, %v1240
      %1249 = vst.msk [vmem:[%s280 + $0x30] sm:$0xff] %vm291, %v1241
      %1250 = vst.msk [vmem:[%s280 + $0x38] sm:$0xff] %vm291, %v1242
      %s1251 = smul.u32 8, %s18
      %p1252 = scmp.lt.s32.totalorder %s1251, 15
      %s1253 = scalar_select %p1252, %s1251, 15
      %s1254 = smul.addr %s1253, 8
      %s1255 = scalar_lea.vmem %s7, %s1254
      // Predicated region
      $region49: #{video_encoder_forward.9} parent=47 // pred_check
        %p1256 = pneg %p188
      $region50: #{video_encoder_forward.9} parent=47 // pred_check_branch
        %1258 = sbr.rel (%p1256) target = $region52
      $region51: #{video_encoder_forward.9} parent=47 // pred_region
        %s1259 = smul.u32 8, %s18
      $region52: #{video_encoder_forward.9} parent=47 // pred_fallthru
        _
    $region48: #{video_encoder_forward.9} parent=5 // pred_fallthru
      _
    %p1260 = scmp.le.s32.totalorder 2, %s13
    // Predicated region
    $region53: #{video_encoder_forward.9} parent=5 // pred_check
      %p1261 = pneg %p1260
    $region54: #{video_encoder_forward.9} parent=5 // pred_check_branch
      %1263 = sbr.rel (%p1261) target = $region56
    $region55: #{video_encoder_forward.9} parent=5 // pred_region
      %s1264 = ssub.s32 %s13, 2
      // Predicated region
      $region57: #{video_encoder_forward.9} parent=55 // pred_check
        %p1265 = pneg %p194
      $region58: #{video_encoder_forward.9} parent=55 // pred_check_branch
        %1267 = sbr.rel (%p1265) target = $region60
      $region59: #{video_encoder_forward.9} parent=55 // pred_region
        %s1268 = smul.u32 8, %s19
        %p1269 = scmp.lt.s32.totalorder %s1268, 15
        %s1270 = scalar_select %p1269, %s1268, 15
        %s1271 = smul.addr %s1270, 8
        %s1272 = scalar_lea.vmem %s7, %s1271
      $region60: #{video_encoder_forward.9} parent=55 // pred_fallthru
        _
    $region56: #{video_encoder_forward.9} parent=5 // pred_fallthru
      _
  $region6: #{video_encoder_forward.9} parent=0 // loop_footer
    %s17 = sadd.s32 1, %s13
  $region7: #{video_encoder_forward.9} parent=0 // loop_footer_branch
    %12 = sbr.rel target = $region3
  $region8: #{video_encoder_forward.9} parent=0 // loop_exit
    _

// kernel: video_encoder_forward.11
$region0: #{video_encoder_forward.11}
  #allocation0 [shape = 'u32[]', space=smem, size = 0x4, offset = 0x4, fixed_abs, tag = 'smem constant byte address 0x4 - core index']
  #allocation1 [shape = 'u32[72,128]{1,0:T(1,128)}', space=vmem, size = 0x9000, scoped, tag = 'internal scratch']
  %s0 = inlined_call_operand.vmem [shape: f32[128,32], index: 0, kind: input, shape index: {}]
  %s1 = inlined_call_operand.vmem [shape: f32[1,32], index: 1, kind: input, shape index: {}]
  %s2 = inlined_call_operand.vmem [shape: f32[1,32], index: 2, kind: input, shape index: {}]
  %s3 = inlined_call_operand.vmem [shape: bf16[32,128], index: 3, kind: input, shape index: {}]
  %s4 = inlined_call_operand.vmem [shape: f32[1,128], index: 4, kind: input, shape index: {}]
  %s5 = inlined_call_operand.vmem [shape: bf16[128,32], index: 5, kind: input, shape index: {}]
  %s6 = inlined_call_operand.vmem [shape: f32[1,32], index: 6, kind: input, shape index: {}]
  %s7 = inlined_call_operand.vmem [shape: f32[1,32], index: 7, kind: input, shape index: {}]
  %s8 = inlined_call_operand.vmem [shape: f32[1,32], index: 8, kind: input, shape index: {}]
  %s9 = inlined_call_operand.hbm [shape: f32[128,32], index: 9, kind: output, shape index: {}]
  %s10 = sld [smem:[#allocation0]]
  $region46: #{video_encoder_forward.11} parent=0
    _
  %s12 = ssub.s32 1, %s10
  %s13 = scalar_select 0, %s12, %s10
  $region1: #{video_encoder_forward.11} parent=0
    #allocation2 [shape = 'u8[65536]{0}', space=vmem, size = 0x10000, scoped, tag = 'output window, operand 0, single buffered']
    #allocation3 [shape = 's32[1]{0}', space=sflag, size = 0x4, scoped, tag = 'scoped memory for video_encoder_forward.11']
    %14 = vsyncpa [#allocation3], 0
    // Predicated region
    $region2: #{video_encoder_forward.11} parent=1 // pred_check
      _
    $region3: #{video_encoder_forward.11} parent=1 // pred_check_branch
      %16 = sbr.rel (0) target = $region5
    $region4: #{video_encoder_forward.11} parent=1 // pred_region
      _
    $region5: #{video_encoder_forward.11} parent=1 // pred_fallthru
      _
    // Predicated region
    $region6: #{video_encoder_forward.11} parent=1 // pred_check
      _
    $region7: #{video_encoder_forward.11} parent=1 // pred_check_branch
      %18 = sbr.rel (0) target = $region9
    $region8: #{video_encoder_forward.11} parent=1 // pred_region
      _
    $region9: #{video_encoder_forward.11} parent=1 // pred_fallthru
      _
    // Predicated region
    $region10: #{video_encoder_forward.11} parent=1 // pred_check
      _
    $region11: #{video_encoder_forward.11} parent=1 // pred_check_branch
      %20 = sbr.rel (0) target = $region13
    $region12: #{video_encoder_forward.11} parent=1 // pred_region
      _
    $region13: #{video_encoder_forward.11} parent=1 // pred_fallthru
      _
    // Predicated region
    $region14: #{video_encoder_forward.11} parent=1 // pred_check
      _
    $region15: #{video_encoder_forward.11} parent=1 // pred_check_branch
      %22 = sbr.rel (0) target = $region17
    $region16: #{video_encoder_forward.11} parent=1 // pred_region
      _
    $region17: #{video_encoder_forward.11} parent=1 // pred_fallthru
      _
    // Predicated region
    $region18: #{video_encoder_forward.11} parent=1 // pred_check
      _
    $region19: #{video_encoder_forward.11} parent=1 // pred_check_branch
      %24 = sbr.rel (0) target = $region21
    $region20: #{video_encoder_forward.11} parent=1 // pred_region
      _
    $region21: #{video_encoder_forward.11} parent=1 // pred_fallthru
      _
    // Predicated region
    $region22: #{video_encoder_forward.11} parent=1 // pred_check
      _
    $region23: #{video_encoder_forward.11} parent=1 // pred_check_branch
      %26 = sbr.rel (0) target = $region25
    $region24: #{video_encoder_forward.11} parent=1 // pred_region
      _
    $region25: #{video_encoder_forward.11} parent=1 // pred_fallthru
      _
    // Predicated region
    $region26: #{video_encoder_forward.11} parent=1 // pred_check
      _
    $region27: #{video_encoder_forward.11} parent=1 // pred_check_branch
      %28 = sbr.rel (0) target = $region29
    $region28: #{video_encoder_forward.11} parent=1 // pred_region
      _
    $region29: #{video_encoder_forward.11} parent=1 // pred_fallthru
      _
    // Predicated region
    $region30: #{video_encoder_forward.11} parent=1 // pred_check
      _
    $region31: #{video_encoder_forward.11} parent=1 // pred_check_branch
      %30 = sbr.rel (0) target = $region33
    $region32: #{video_encoder_forward.11} parent=1 // pred_region
      _
    $region33: #{video_encoder_forward.11} parent=1 // pred_fallthru
      _
    // Predicated region
    $region34: #{video_encoder_forward.11} parent=1 // pred_check
      _
    $region35: #{video_encoder_forward.11} parent=1 // pred_check_branch
      %32 = sbr.rel (0) target = $region37
    $region36: #{video_encoder_forward.11} parent=1 // pred_region
      _
    $region37: #{video_encoder_forward.11} parent=1 // pred_fallthru
      _
    %v34 = vld [vmem:[%s0] sm:$0xff]
    %v35 = vld [vmem:[%s0 + $0x8] sm:$0xff]
    %v36 = vld [vmem:[%s0 + $0x10] sm:$0xff]
    %v37 = vld [vmem:[%s0 + $0x18] sm:$0xff]
    %v38 = vld [vmem:[%s0 + $0x20] sm:$0xff]
    %v39 = vld [vmem:[%s0 + $0x28] sm:$0xff]
    %v40 = vld [vmem:[%s0 + $0x30] sm:$0xff]
    %v41 = vld [vmem:[%s0 + $0x38] sm:$0xff]
    %v42 = vld [vmem:[%s0 + $0x40] sm:$0xff]
    %v43 = vld [vmem:[%s0 + $0x48] sm:$0xff]
    %v44 = vld [vmem:[%s0 + $0x50] sm:$0xff]
    %v45 = vld [vmem:[%s0 + $0x58] sm:$0xff]
    %v46 = vld [vmem:[%s0 + $0x60] sm:$0xff]
    %v47 = vld [vmem:[%s0 + $0x68] sm:$0xff]
    %v48 = vld [vmem:[%s0 + $0x70] sm:$0xff]
    %v49 = vld [vmem:[%s0 + $0x78] sm:$0xff]
    %vm50 = vcmask 261120
    %v51 = vsel %vm50, %v34, 0.0
    %52 = vadd.xlane.f32.xlu0 %v51
    %v53 = vpop.xlane.xlu0 %52
    %v54 = vsel %vm50, %v35, 0.0
    %55 = vadd.xlane.f32.xlu0 %v54
    %v56 = vpop.xlane.xlu0 %55
    %v57 = vsel %vm50, %v36, 0.0
    %58 = vadd.xlane.f32.xlu0 %v57
    %v59 = vpop.xlane.xlu0 %58
    %v60 = vsel %vm50, %v37, 0.0
    %61 = vadd.xlane.f32.xlu0 %v60
    %v62 = vpop.xlane.xlu0 %61
    %v63 = vsel %vm50, %v38, 0.0
    %64 = vadd.xlane.f32.xlu0 %v63
    %v65 = vpop.xlane.xlu0 %64
    %v66 = vsel %vm50, %v39, 0.0
    %67 = vadd.xlane.f32.xlu0 %v66
    %v68 = vpop.xlane.xlu0 %67
    %v69 = vsel %vm50, %v40, 0.0
    %70 = vadd.xlane.f32.xlu0 %v69
    %v71 = vpop.xlane.xlu0 %70
    %v72 = vsel %vm50, %v41, 0.0
    %73 = vadd.xlane.f32.xlu0 %v72
    %v74 = vpop.xlane.xlu0 %73
    %v75 = vsel %vm50, %v42, 0.0
    %76 = vadd.xlane.f32.xlu0 %v75
    %v77 = vpop.xlane.xlu0 %76
    %v78 = vsel %vm50, %v43, 0.0
    %79 = vadd.xlane.f32.xlu0 %v78
    %v80 = vpop.xlane.xlu0 %79
    %v81 = vsel %vm50, %v44, 0.0
    %82 = vadd.xlane.f32.xlu0 %v81
    %v83 = vpop.xlane.xlu0 %82
    %v84 = vsel %vm50, %v45, 0.0
    %85 = vadd.xlane.f32.xlu0 %v84
    %v86 = vpop.xlane.xlu0 %85
    %v87 = vsel %vm50, %v46, 0.0
    %88 = vadd.xlane.f32.xlu0 %v87
    %v89 = vpop.xlane.xlu0 %88
    %v90 = vsel %vm50, %v47, 0.0
    %91 = vadd.xlane.f32.xlu0 %v90
    %v92 = vpop.xlane.xlu0 %91
    %v93 = vsel %vm50, %v48, 0.0
    %94 = vadd.xlane.f32.xlu0 %v93
    %v95 = vpop.xlane.xlu0 %94
    %v96 = vsel %vm50, %v49, 0.0
    %97 = vadd.xlane.f32.xlu0 %v96
    %v98 = vpop.xlane.xlu0 %97
    %v99 = vrcp.pop 32.0
    %v100 = vmul.f32 32.0, %v99
    %v101 = vsub.f32 1.0, %v100
    %v102 = vmul.f32 %v99, %v101
    %v103 = vadd.f32 %v99, %v102
    %vm104 = vweird.f32 %v99
    %v105 = vsel %vm104, %v99, %v103
    %v106 = vmul.f32 %v53, %v105
    %v107 = vmul.f32 %v56, %v105
    %v108 = vmul.f32 %v59, %v105
    %v109 = vmul.f32 %v62, %v105
    %v110 = vmul.f32 %v65, %v105
    %v111 = vmul.f32 %v68, %v105
    %v112 = vmul.f32 %v71, %v105
    %v113 = vmul.f32 %v74, %v105
    %v114 = vmul.f32 %v77, %v105
    %v115 = vmul.f32 %v80, %v105
    %v116 = vmul.f32 %v83, %v105
    %v117 = vmul.f32 %v86, %v105
    %v118 = vmul.f32 %v89, %v105
    %v119 = vmul.f32 %v92, %v105
    %v120 = vmul.f32 %v95, %v105
    %v121 = vmul.f32 %v98, %v105
    %v122 = vsub.f32 %v34, %v106
    %v123 = vsub.f32 %v35, %v107
    %v124 = vsub.f32 %v36, %v108
    %v125 = vsub.f32 %v37, %v109
    %v126 = vsub.f32 %v38, %v110
    %v127 = vsub.f32 %v39, %v111
    %v128 = vsub.f32 %v40, %v112
    %v129 = vsub.f32 %v41, %v113
    %v130 = vsub.f32 %v42, %v114
    %v131 = vsub.f32 %v43, %v115
    %v132 = vsub.f32 %v44, %v116
    %v133 = vsub.f32 %v45, %v117
    %v134 = vsub.f32 %v46, %v118
    %v135 = vsub.f32 %v47, %v119
    %v136 = vsub.f32 %v48, %v120
    %v137 = vsub.f32 %v49, %v121
    %v138 = vmul.f32 %v122, %v122
    %v139 = vmul.f32 %v123, %v123
    %v140 = vmul.f32 %v124, %v124
    %v141 = vmul.f32 %v125, %v125
    %v142 = vmul.f32 %v126, %v126
    %v143 = vmul.f32 %v127, %v127
    %v144 = vmul.f32 %v128, %v128
    %v145 = vmul.f32 %v129, %v129
    %v146 = vmul.f32 %v130, %v130
    %v147 = vmul.f32 %v131, %v131
    %v148 = vmul.f32 %v132, %v132
    %v149 = vmul.f32 %v133, %v133
    %v150 = vmul.f32 %v134, %v134
    %v151 = vmul.f32 %v135, %v135
    %v152 = vmul.f32 %v136, %v136
    %v153 = vmul.f32 %v137, %v137
    %v154 = vsel %vm50, %v138, 0.0
    %155 = vadd.xlane.f32.xlu0 %v154
    %v156 = vpop.xlane.xlu0 %155
    %v157 = vsel %vm50, %v139, 0.0
    %158 = vadd.xlane.f32.xlu0 %v157
    %v159 = vpop.xlane.xlu0 %158
    %v160 = vsel %vm50, %v140, 0.0
    %161 = vadd.xlane.f32.xlu0 %v160
    %v162 = vpop.xlane.xlu0 %161
    %v163 = vsel %vm50, %v141, 0.0
    %164 = vadd.xlane.f32.xlu0 %v163
    %v165 = vpop.xlane.xlu0 %164
    %v166 = vsel %vm50, %v142, 0.0
    %167 = vadd.xlane.f32.xlu0 %v166
    %v168 = vpop.xlane.xlu0 %167
    %v169 = vsel %vm50, %v143, 0.0
    %170 = vadd.xlane.f32.xlu0 %v169
    %v171 = vpop.xlane.xlu0 %170
    %v172 = vsel %vm50, %v144, 0.0
    %173 = vadd.xlane.f32.xlu0 %v172
    %v174 = vpop.xlane.xlu0 %173
    %v175 = vsel %vm50, %v145, 0.0
    %176 = vadd.xlane.f32.xlu0 %v175
    %v177 = vpop.xlane.xlu0 %176
    %v178 = vsel %vm50, %v146, 0.0
    %179 = vadd.xlane.f32.xlu0 %v178
    %v180 = vpop.xlane.xlu0 %179
    %v181 = vsel %vm50, %v147, 0.0
    %182 = vadd.xlane.f32.xlu0 %v181
    %v183 = vpop.xlane.xlu0 %182
    %v184 = vsel %vm50, %v148, 0.0
    %185 = vadd.xlane.f32.xlu0 %v184
    %v186 = vpop.xlane.xlu0 %185
    %v187 = vsel %vm50, %v149, 0.0
    %188 = vadd.xlane.f32.xlu0 %v187
    %v189 = vpop.xlane.xlu0 %188
    %v190 = vsel %vm50, %v150, 0.0
    %191 = vadd.xlane.f32.xlu0 %v190
    %v192 = vpop.xlane.xlu0 %191
    %v193 = vsel %vm50, %v151, 0.0
    %194 = vadd.xlane.f32.xlu0 %v193
    %v195 = vpop.xlane.xlu0 %194
    %v196 = vsel %vm50, %v152, 0.0
    %197 = vadd.xlane.f32.xlu0 %v196
    %v198 = vpop.xlane.xlu0 %197
    %v199 = vsel %vm50, %v153, 0.0
    %200 = vadd.xlane.f32.xlu0 %v199
    %v201 = vpop.xlane.xlu0 %200
    %v202 = vmul.f32 %v156, %v105
    %v203 = vmul.f32 %v159, %v105
    %v204 = vmul.f32 %v162, %v105
    %v205 = vmul.f32 %v165, %v105
    %v206 = vmul.f32 %v168, %v105
    %v207 = vmul.f32 %v171, %v105
    %v208 = vmul.f32 %v174, %v105
    %v209 = vmul.f32 %v177, %v105
    %v210 = vmul.f32 %v180, %v105
    %v211 = vmul.f32 %v183, %v105
    %v212 = vmul.f32 %v186, %v105
    %v213 = vmul.f32 %v189, %v105
    %v214 = vmul.f32 %v192, %v105
    %v215 = vmul.f32 %v195, %v105
    %v216 = vmul.f32 %v198, %v105
    %v217 = vmul.f32 %v201, %v105
    %v218 = vadd.f32 %v202, 1e-05
    %v219 = vadd.f32 %v203, 1e-05
    %v220 = vadd.f32 %v204, 1e-05
    %v221 = vadd.f32 %v205, 1e-05
    %v222 = vadd.f32 %v206, 1e-05
    %v223 = vadd.f32 %v207, 1e-05
    %v224 = vadd.f32 %v208, 1e-05
    %v225 = vadd.f32 %v209, 1e-05
    %v226 = vadd.f32 %v210, 1e-05
    %v227 = vadd.f32 %v211, 1e-05
    %v228 = vadd.f32 %v212, 1e-05
    %v229 = vadd.f32 %v213, 1e-05
    %v230 = vadd.f32 %v214, 1e-05
    %v231 = vadd.f32 %v215, 1e-05
    %v232 = vadd.f32 %v216, 1e-05
    %v233 = vadd.f32 %v217, 1e-05
    %v234 = vrsqrt.pop %v218
    %v235 = vmul.f32 %v234, %v218
    %v236 = vmul.f32 %v235, %v234
    %v237 = vmul.f32 0.5, %v236
    %v238 = vsub.f32 1.5, %v237
    %v239 = vmul.f32 %v234, %v238
    %vm240 = vweird.f32 %v218
    %vm241 = vweird.f32 %v234
    %vm242 = vmor %vm240, %vm241
    %v243 = vsel %vm242, %v234, %v239
    %v244 = vrsqrt.pop %v219
    %v245 = vmul.f32 %v244, %v219
    %v246 = vmul.f32 %v245, %v244
    %v247 = vmul.f32 0.5, %v246
    %v248 = vsub.f32 1.5, %v247
    %v249 = vmul.f32 %v244, %v248
    %vm250 = vweird.f32 %v219
    %vm251 = vweird.f32 %v244
    %vm252 = vmor %vm250, %vm251
    %v253 = vsel %vm252, %v244, %v249
    %v254 = vrsqrt.pop %v220
    %v255 = vmul.f32 %v254, %v220
    %v256 = vmul.f32 %v255, %v254
    %v257 = vmul.f32 0.5, %v256
    %v258 = vsub.f32 1.5, %v257
    %v259 = vmul.f32 %v254, %v258
    %vm260 = vweird.f32 %v220
    %vm261 = vweird.f32 %v254
    %vm262 = vmor %vm260, %vm261
    %v263 = vsel %vm262, %v254, %v259
    %v264 = vrsqrt.pop %v221
    %v265 = vmul.f32 %v264, %v221
    %v266 = vmul.f32 %v265, %v264
    %v267 = vmul.f32 0.5, %v266
    %v268 = vsub.f32 1.5, %v267
    %v269 = vmul.f32 %v264, %v268
    %vm270 = vweird.f32 %v221
    %vm271 = vweird.f32 %v264
    %vm272 = vmor %vm270, %vm271
    %v273 = vsel %vm272, %v264, %v269
    %v274 = vrsqrt.pop %v222
    %v275 = vmul.f32 %v274, %v222
    %v276 = vmul.f32 %v275, %v274
    %v277 = vmul.f32 0.5, %v276
    %v278 = vsub.f32 1.5, %v277
    %v279 = vmul.f32 %v274, %v278
    %vm280 = vweird.f32 %v222
    %vm281 = vweird.f32 %v274
    %vm282 = vmor %vm280, %vm281
    %v283 = vsel %vm282, %v274, %v279
    %v284 = vrsqrt.pop %v223
    %v285 = vmul.f32 %v284, %v223
    %v286 = vmul.f32 %v285, %v284
    %v287 = vmul.f32 0.5, %v286
    %v288 = vsub.f32 1.5, %v287
    %v289 = vmul.f32 %v284, %v288
    %vm290 = vweird.f32 %v223
    %vm291 = vweird.f32 %v284
    %vm292 = vmor %vm290, %vm291
    %v293 = vsel %vm292, %v284, %v289
    %v294 = vrsqrt.pop %v224
    %v295 = vmul.f32 %v294, %v224
    %v296 = vmul.f32 %v295, %v294
    %v297 = vmul.f32 0.5, %v296
    %v298 = vsub.f32 1.5, %v297
    %v299 = vmul.f32 %v294, %v298
    %vm300 = vweird.f32 %v224
    %vm301 = vweird.f32 %v294
    %vm302 = vmor %vm300, %vm301
    %v303 = vsel %vm302, %v294, %v299
    %v304 = vrsqrt.pop %v225
    %v305 = vmul.f32 %v304, %v225
    %v306 = vmul.f32 %v305, %v304
    %v307 = vmul.f32 0.5, %v306
    %v308 = vsub.f32 1.5, %v307
    %v309 = vmul.f32 %v304, %v308
    %vm310 = vweird.f32 %v225
    %vm311 = vweird.f32 %v304
    %vm312 = vmor %vm310, %vm311
    %v313 = vsel %vm312, %v304, %v309
    %v314 = vrsqrt.pop %v226
    %v315 = vmul.f32 %v314, %v226
    %v316 = vmul.f32 %v315, %v314
    %v317 = vmul.f32 0.5, %v316
    %v318 = vsub.f32 1.5, %v317
    %v319 = vmul.f32 %v314, %v318
    %vm320 = vweird.f32 %v226
    %vm321 = vweird.f32 %v314
    %vm322 = vmor %vm320, %vm321
    %v323 = vsel %vm322, %v314, %v319
    %v324 = vrsqrt.pop %v227
    %v325 = vmul.f32 %v324, %v227
    %v326 = vmul.f32 %v325, %v324
    %v327 = vmul.f32 0.5, %v326
    %v328 = vsub.f32 1.5, %v327
    %v329 = vmul.f32 %v324, %v328
    %vm330 = vweird.f32 %v227
    %vm331 = vweird.f32 %v324
    %vm332 = vmor %vm330, %vm331
    %v333 = vsel %vm332, %v324, %v329
    %v334 = vrsqrt.pop %v228
    %v335 = vmul.f32 %v334, %v228
    %v336 = vmul.f32 %v335, %v334
    %v337 = vmul.f32 0.5, %v336
    %v338 = vsub.f32 1.5, %v337
    %v339 = vmul.f32 %v334, %v338
    %vm340 = vweird.f32 %v228
    %vm341 = vweird.f32 %v334
    %vm342 = vmor %vm340, %vm341
    %v343 = vsel %vm342, %v334, %v339
    %v344 = vrsqrt.pop %v229
    %v345 = vmul.f32 %v344, %v229
    %v346 = vmul.f32 %v345, %v344
    %v347 = vmul.f32 0.5, %v346
    %v348 = vsub.f32 1.5, %v347
    %v349 = vmul.f32 %v344, %v348
    %vm350 = vweird.f32 %v229
    %vm351 = vweird.f32 %v344
    %vm352 = vmor %vm350, %vm351
    %v353 = vsel %vm352, %v344, %v349
    %v354 = vrsqrt.pop %v230
    %v355 = vmul.f32 %v354, %v230
    %v356 = vmul.f32 %v355, %v354
    %v357 = vmul.f32 0.5, %v356
    %v358 = vsub.f32 1.5, %v357
    %v359 = vmul.f32 %v354, %v358
    %vm360 = vweird.f32 %v230
    %vm361 = vweird.f32 %v354
    %vm362 = vmor %vm360, %vm361
    %v363 = vsel %vm362, %v354, %v359
    %v364 = vrsqrt.pop %v231
    %v365 = vmul.f32 %v364, %v231
    %v366 = vmul.f32 %v365, %v364
    %v367 = vmul.f32 0.5, %v366
    %v368 = vsub.f32 1.5, %v367
    %v369 = vmul.f32 %v364, %v368
    %vm370 = vweird.f32 %v231
    %vm371 = vweird.f32 %v364
    %vm372 = vmor %vm370, %vm371
    %v373 = vsel %vm372, %v364, %v369
    %v374 = vrsqrt.pop %v232
    %v375 = vmul.f32 %v374, %v232
    %v376 = vmul.f32 %v375, %v374
    %v377 = vmul.f32 0.5, %v376
    %v378 = vsub.f32 1.5, %v377
    %v379 = vmul.f32 %v374, %v378
    %vm380 = vweird.f32 %v232
    %vm381 = vweird.f32 %v374
    %vm382 = vmor %vm380, %vm381
    %v383 = vsel %vm382, %v374, %v379
    %v384 = vrsqrt.pop %v233
    %v385 = vmul.f32 %v384, %v233
    %v386 = vmul.f32 %v385, %v384
    %v387 = vmul.f32 0.5, %v386
    %v388 = vsub.f32 1.5, %v387
    %v389 = vmul.f32 %v384, %v388
    %vm390 = vweird.f32 %v233
    %vm391 = vweird.f32 %v384
    %vm392 = vmor %vm390, %vm391
    %v393 = vsel %vm392, %v384, %v389
    %v394 = vmul.f32 %v122, %v243
    %v395 = vmul.f32 %v123, %v253
    %v396 = vmul.f32 %v124, %v263
    %v397 = vmul.f32 %v125, %v273
    %v398 = vmul.f32 %v126, %v283
    %v399 = vmul.f32 %v127, %v293
    %v400 = vmul.f32 %v128, %v303
    %v401 = vmul.f32 %v129, %v313
    %v402 = vmul.f32 %v130, %v323
    %v403 = vmul.f32 %v131, %v333
    %v404 = vmul.f32 %v132, %v343
    %v405 = vmul.f32 %v133, %v353
    %v406 = vmul.f32 %v134, %v363
    %v407 = vmul.f32 %v135, %v373
    %v408 = vmul.f32 %v136, %v383
    %v409 = vmul.f32 %v137, %v393
    %v410 = vld [vmem:[%s1] sm:$0x1]
    %v412 = vperm.slane %v410, 0
    %v414 = vmul.f32 %v394, %v412
    %v415 = vmul.f32 %v395, %v412
    %v416 = vmul.f32 %v396, %v412
    %v417 = vmul.f32 %v397, %v412
    %v418 = vmul.f32 %v398, %v412
    %v419 = vmul.f32 %v399, %v412
    %v420 = vmul.f32 %v400, %v412
    %v421 = vmul.f32 %v401, %v412
    %v422 = vmul.f32 %v402, %v412
    %v423 = vmul.f32 %v403, %v412
    %v424 = vmul.f32 %v404, %v412
    %v425 = vmul.f32 %v405, %v412
    %v426 = vmul.f32 %v406, %v412
    %v427 = vmul.f32 %v407, %v412
    %v428 = vmul.f32 %v408, %v412
    %v429 = vmul.f32 %v409, %v412
    %v430 = vld [vmem:[%s2] sm:$0x1]
    %v432 = vperm.slane %v430, 0
    %v434 = vadd.f32 %v414, %v432
    %v435 = vadd.f32 %v415, %v432
    %v436 = vadd.f32 %v416, %v432
    %v437 = vadd.f32 %v417, %v432
    %v438 = vadd.f32 %v418, %v432
    %v439 = vadd.f32 %v419, %v432
    %v440 = vadd.f32 %v420, %v432
    %v441 = vadd.f32 %v421, %v432
    %v442 = vadd.f32 %v422, %v432
    %v443 = vadd.f32 %v423, %v432
    %v444 = vadd.f32 %v424, %v432
    %v445 = vadd.f32 %v425, %v432
    %v446 = vadd.f32 %v426, %v432
    %v447 = vadd.f32 %v427, %v432
    %v448 = vadd.f32 %v428, %v432
    %v449 = vadd.f32 %v429, %v432
    %v450 = vpack.c.bf16 %v435, %v434
    %v451 = vpack.c.bf16 %v437, %v436
    %v452 = vpack.c.bf16 %v439, %v438
    %v453 = vpack.c.bf16 %v441, %v440
    %v454 = vpack.c.bf16 %v443, %v442
    %v455 = vpack.c.bf16 %v445, %v444
    %v456 = vpack.c.bf16 %v447, %v446
    %v457 = vpack.c.bf16 %v449, %v448
    %v458 = vld [vmem:[%s3] sm:$0xf]
    %v459 = vld [vmem:[%s3 + $0x4] sm:$0xf]
    %v460 = vld [vmem:[%s3 + $0x8] sm:$0xf]
    %v461 = vld [vmem:[%s3 + $0xc] sm:$0xf]
    %v462 = vld [vmem:[%s4] sm:$0x1]
    %v464 = vperm.slane %v462, 0
    %v470 = vunpack.c.l.b16 %v458
    %v471 = vunpack.c.l.b16 %v459
    %v472 = vunpack.c.l.b16 %v460
    %v473 = vunpack.c.l.b16 %v461
    %v474 = vpack.c.b16 %v471, %v470
    %v475 = vpack.c.b16 %v473, %v472
    %v479 = vsel %vm50, %v450, 0
    %v482 = vsel %vm50, %v451, 0
    %v485 = vsel %vm50, %v452, 0
    %v488 = vsel %vm50, %v453, 0
    %v491 = vsel %vm50, %v454, 0
    %v494 = vsel %vm50, %v455, 0
    %v497 = vsel %vm50, %v456, 0
    %v500 = vsel %vm50, %v457, 0
    %502 = vmatpush.bf16.msra.mxu0 0
    %503 = vmatpush.bf16.msra.mxu0 0
    %504 = vmatpush.bf16.msra.mxu0 0
    %505 = vmatpush.bf16.msra.mxu0 0
    %506 = vmatpush.bf16.msra.mxu0 0
    %507 = vmatpush.bf16.msra.mxu0 0
    %508 = vmatpush.bf16.msra.mxu0 %v475
    %509 = vmatpush.bf16.msra.mxu0 %v474
    %510 = vmatmul.bf16.gmra.mxu0 %v479
    %v511 = vpop.f32.mrf.mxu0
    %v512 = vadd.f32 %v464, %v511
    %v513 = vpop.f32.mrf.mxu0
    %v514 = vadd.f32 %v464, %v513
    %515 = vmatmul.bf16.gmra.mxu0 %v482
    %v516 = vpop.f32.mrf.mxu0
    %v517 = vadd.f32 %v464, %v516
    %v518 = vpop.f32.mrf.mxu0
    %v519 = vadd.f32 %v464, %v518
    %520 = vmatmul.bf16.gmra.mxu0 %v485
    %v521 = vpop.f32.mrf.mxu0
    %v522 = vadd.f32 %v464, %v521
    %v523 = vpop.f32.mrf.mxu0
    %v524 = vadd.f32 %v464, %v523
    %525 = vmatmul.bf16.gmra.mxu0 %v488
    %v526 = vpop.f32.mrf.mxu0
    %v527 = vadd.f32 %v464, %v526
    %v528 = vpop.f32.mrf.mxu0
    %v529 = vadd.f32 %v464, %v528
    %530 = vmatmul.bf16.gmra.mxu0 %v491
    %v531 = vpop.f32.mrf.mxu0
    %v532 = vadd.f32 %v464, %v531
    %v533 = vpop.f32.mrf.mxu0
    %v534 = vadd.f32 %v464, %v533
    %535 = vmatmul.bf16.gmra.mxu0 %v494
    %v536 = vpop.f32.mrf.mxu0
    %v537 = vadd.f32 %v464, %v536
    %v538 = vpop.f32.mrf.mxu0
    %v539 = vadd.f32 %v464, %v538
    %540 = vmatmul.bf16.gmra.mxu0 %v497
    %v541 = vpop.f32.mrf.mxu0
    %v542 = vadd.f32 %v464, %v541
    %v543 = vpop.f32.mrf.mxu0
    %v544 = vadd.f32 %v464, %v543
    %545 = vmatmul.bf16.gmra.mxu0 %v500
    %v546 = vpop.f32.mrf.mxu0
    %v547 = vadd.f32 %v464, %v546
    %v548 = vpop.f32.mrf.mxu0
    %v549 = vadd.f32 %v464, %v548
    %550 = vdwg.mxu0
    %v551 = vmul.f32 %v512, %v512
    %v552 = vmul.f32 %v514, %v514
    %v553 = vmul.f32 %v517, %v517
    %v554 = vmul.f32 %v519, %v519
    %v555 = vmul.f32 %v522, %v522
    %v556 = vmul.f32 %v524, %v524
    %v557 = vmul.f32 %v527, %v527
    %v558 = vmul.f32 %v529, %v529
    %v559 = vmul.f32 %v532, %v532
    %v560 = vmul.f32 %v534, %v534
    %v561 = vmul.f32 %v537, %v537
    %v562 = vmul.f32 %v539, %v539
    %v563 = vmul.f32 %v542, %v542
    %v564 = vmul.f32 %v544, %v544
    %v565 = vmul.f32 %v547, %v547
    %v566 = vmul.f32 %v549, %v549
    %v567 = vmul.f32 %v512, %v551
    %v568 = vmul.f32 %v514, %v552
    %v569 = vmul.f32 %v517, %v553
    %v570 = vmul.f32 %v519, %v554
    %v571 = vmul.f32 %v522, %v555
    %v572 = vmul.f32 %v524, %v556
    %v573 = vmul.f32 %v527, %v557
    %v574 = vmul.f32 %v529, %v558
    %v575 = vmul.f32 %v532, %v559
    %v576 = vmul.f32 %v534, %v560
    %v577 = vmul.f32 %v537, %v561
    %v578 = vmul.f32 %v539, %v562
    %v579 = vmul.f32 %v542, %v563
    %v580 = vmul.f32 %v544, %v564
    %v581 = vmul.f32 %v547, %v565
    %v582 = vmul.f32 %v549, %v566
    %v583 = vmul.f32 %v567, 0.044715
    %v584 = vmul.f32 %v568, 0.044715
    %v585 = vmul.f32 %v569, 0.044715
    %v586 = vmul.f32 %v570, 0.044715
    %v587 = vmul.f32 %v571, 0.044715
    %v588 = vmul.f32 %v572, 0.044715
    %v589 = vmul.f32 %v573, 0.044715
    %v590 = vmul.f32 %v574, 0.044715
    %v591 = vmul.f32 %v575, 0.044715
    %v592 = vmul.f32 %v576, 0.044715
    %v593 = vmul.f32 %v577, 0.044715
    %v594 = vmul.f32 %v578, 0.044715
    %v595 = vmul.f32 %v579, 0.044715
    %v596 = vmul.f32 %v580, 0.044715
    %v597 = vmul.f32 %v581, 0.044715
    %v598 = vmul.f32 %v582, 0.044715
    %v599 = vadd.f32 %v512, %v583
    %v600 = vadd.f32 %v514, %v584
    %v601 = vadd.f32 %v517, %v585
    %v602 = vadd.f32 %v519, %v586
    %v603 = vadd.f32 %v522, %v587
    %v604 = vadd.f32 %v524, %v588
    %v605 = vadd.f32 %v527, %v589
    %v606 = vadd.f32 %v529, %v590
    %v607 = vadd.f32 %v532, %v591
    %v608 = vadd.f32 %v534, %v592
    %v609 = vadd.f32 %v537, %v593
    %v610 = vadd.f32 %v539, %v594
    %v611 = vadd.f32 %v542, %v595
    %v612 = vadd.f32 %v544, %v596
    %v613 = vadd.f32 %v547, %v597
    %v614 = vadd.f32 %v549, %v598
    %v615 = vmul.f32 %v599, 0.7978846
    %v616 = vmul.f32 %v600, 0.7978846
    %v617 = vmul.f32 %v601, 0.7978846
    %v618 = vmul.f32 %v602, 0.7978846
    %v619 = vmul.f32 %v603, 0.7978846
    %v620 = vmul.f32 %v604, 0.7978846
    %v621 = vmul.f32 %v605, 0.7978846
    %v622 = vmul.f32 %v606, 0.7978846
    %v623 = vmul.f32 %v607, 0.7978846
    %v624 = vmul.f32 %v608, 0.7978846
    %v625 = vmul.f32 %v609, 0.7978846
    %v626 = vmul.f32 %v610, 0.7978846
    %v627 = vmul.f32 %v611, 0.7978846
    %v628 = vmul.f32 %v612, 0.7978846
    %v629 = vmul.f32 %v613, 0.7978846
    %v630 = vmul.f32 %v614, 0.7978846
    %v631 = vtanh.pop %v615
    %v632 = vtanh.pop %v616
    %v633 = vtanh.pop %v617
    %v634 = vtanh.pop %v618
    %v635 = vtanh.pop %v619
    %v636 = vtanh.pop %v620
    %v637 = vtanh.pop %v621
    %v638 = vtanh.pop %v622
    %v639 = vtanh.pop %v623
    %v640 = vtanh.pop %v624
    %v641 = vtanh.pop %v625
    %v642 = vtanh.pop %v626
    %v643 = vtanh.pop %v627
    %v644 = vtanh.pop %v628
    %v645 = vtanh.pop %v629
    %v646 = vtanh.pop %v630
    %v647 = vadd.f32 %v631, 1.0
    %v648 = vadd.f32 %v632, 1.0
    %v649 = vadd.f32 %v633, 1.0
    %v650 = vadd.f32 %v634, 1.0
    %v651 = vadd.f32 %v635, 1.0
    %v652 = vadd.f32 %v636, 1.0
    %v653 = vadd.f32 %v637, 1.0
    %v654 = vadd.f32 %v638, 1.0
    %v655 = vadd.f32 %v639, 1.0
    %v656 = vadd.f32 %v640, 1.0
    %v657 = vadd.f32 %v641, 1.0
    %v658 = vadd.f32 %v642, 1.0
    %v659 = vadd.f32 %v643, 1.0
    %v660 = vadd.f32 %v644, 1.0
    %v661 = vadd.f32 %v645, 1.0
    %v662 = vadd.f32 %v646, 1.0
    %v663 = vmul.f32 %v647, 0.5
    %v664 = vmul.f32 %v648, 0.5
    %v665 = vmul.f32 %v649, 0.5
    %v666 = vmul.f32 %v650, 0.5
    %v667 = vmul.f32 %v651, 0.5
    %v668 = vmul.f32 %v652, 0.5
    %v669 = vmul.f32 %v653, 0.5
    %v670 = vmul.f32 %v654, 0.5
    %v671 = vmul.f32 %v655, 0.5
    %v672 = vmul.f32 %v656, 0.5
    %v673 = vmul.f32 %v657, 0.5
    %v674 = vmul.f32 %v658, 0.5
    %v675 = vmul.f32 %v659, 0.5
    %v676 = vmul.f32 %v660, 0.5
    %v677 = vmul.f32 %v661, 0.5
    %v678 = vmul.f32 %v662, 0.5
    %v679 = vmul.f32 %v512, %v663
    %v680 = vmul.f32 %v514, %v664
    %v681 = vmul.f32 %v517, %v665
    %v682 = vmul.f32 %v519, %v666
    %v683 = vmul.f32 %v522, %v667
    %v684 = vmul.f32 %v524, %v668
    %v685 = vmul.f32 %v527, %v669
    %v686 = vmul.f32 %v529, %v670
    %v687 = vmul.f32 %v532, %v671
    %v688 = vmul.f32 %v534, %v672
    %v689 = vmul.f32 %v537, %v673
    %v690 = vmul.f32 %v539, %v674
    %v691 = vmul.f32 %v542, %v675
    %v692 = vmul.f32 %v544, %v676
    %v693 = vmul.f32 %v547, %v677
    %v694 = vmul.f32 %v549, %v678
    %v695 = vpack.c.bf16 %v680, %v679
    %v696 = vpack.c.bf16 %v682, %v681
    %v697 = vpack.c.bf16 %v684, %v683
    %v698 = vpack.c.bf16 %v686, %v685
    %v699 = vpack.c.bf16 %v688, %v687
    %v700 = vpack.c.bf16 %v690, %v689
    %v701 = vpack.c.bf16 %v692, %v691
    %v702 = vpack.c.bf16 %v694, %v693
    %v703 = vld [vmem:[%s5] sm:$0xf]
    %v704 = vld [vmem:[%s5 + $0x4] sm:$0xf]
    %v705 = vld [vmem:[%s5 + $0x8] sm:$0xf]
    %v706 = vld [vmem:[%s5 + $0xc] sm:$0xf]
    %v707 = vld [vmem:[%s5 + $0x10] sm:$0xf]
    %v708 = vld [vmem:[%s5 + $0x14] sm:$0xf]
    %v709 = vld [vmem:[%s5 + $0x18] sm:$0xf]
    %v710 = vld [vmem:[%s5 + $0x1c] sm:$0xf]
    %v711 = vld [vmem:[%s5 + $0x20] sm:$0xf]
    %v712 = vld [vmem:[%s5 + $0x24] sm:$0xf]
    %v713 = vld [vmem:[%s5 + $0x28] sm:$0xf]
    %v714 = vld [vmem:[%s5 + $0x2c] sm:$0xf]
    %v715 = vld [vmem:[%s5 + $0x30] sm:$0xf]
    %v716 = vld [vmem:[%s5 + $0x34] sm:$0xf]
    %v717 = vld [vmem:[%s5 + $0x38] sm:$0xf]
    %v718 = vld [vmem:[%s5 + $0x3c] sm:$0xf]
    %v719 = vld [vmem:[%s6] sm:$0x1]
    %v721 = vperm.slane %v719, 0
    %v739 = vunpack.c.l.b16 %v703
    %v740 = vunpack.c.l.b16 %v704
    %v741 = vunpack.c.l.b16 %v705
    %v742 = vunpack.c.l.b16 %v706
    %v743 = vunpack.c.l.b16 %v707
    %v744 = vunpack.c.l.b16 %v708
    %v745 = vunpack.c.l.b16 %v709
    %v746 = vunpack.c.l.b16 %v710
    %v747 = vunpack.c.l.b16 %v711
    %v748 = vunpack.c.l.b16 %v712
    %v749 = vunpack.c.l.b16 %v713
    %v750 = vunpack.c.l.b16 %v714
    %v751 = vunpack.c.l.b16 %v715
    %v752 = vunpack.c.l.b16 %v716
    %v753 = vunpack.c.l.b16 %v717
    %v754 = vunpack.c.l.b16 %v718
    %v755 = vpack.c.b16 %v740, %v739
    %v756 = vpack.c.b16 %v742, %v741
    %v757 = vpack.c.b16 %v744, %v743
    %v758 = vpack.c.b16 %v746, %v745
    %v759 = vpack.c.b16 %v748, %v747
    %v760 = vpack.c.b16 %v750, %v749
    %v761 = vpack.c.b16 %v752, %v751
    %v762 = vpack.c.b16 %v754, %v753
    %771 = vmatpush.bf16.msra.mxu0 %v762
    %772 = vmatpush.bf16.msra.mxu0 %v761
    %773 = vmatpush.bf16.msra.mxu0 %v760
    %774 = vmatpush.bf16.msra.mxu0 %v759
    %775 = vmatpush.bf16.msra.mxu0 %v758
    %776 = vmatpush.bf16.msra.mxu0 %v757
    %777 = vmatpush.bf16.msra.mxu0 %v756
    %778 = vmatpush.bf16.msra.mxu0 %v755
    %779 = vmatmul.bf16.gmra.mxu0 %v695
    %v780 = vpop.f32.mrf.mxu0
    %v781 = vadd.f32 %v721, %v780
    %v782 = vpop.f32.mrf.mxu0
    %v783 = vadd.f32 %v721, %v782
    %784 = vmatmul.bf16.gmra.mxu0 %v696
    %v785 = vpop.f32.mrf.mxu0
    %v786 = vadd.f32 %v721, %v785
    %v787 = vpop.f32.mrf.mxu0
    %v788 = vadd.f32 %v721, %v787
    %789 = vmatmul.bf16.gmra.mxu0 %v697
    %v790 = vpop.f32.mrf.mxu0
    %v791 = vadd.f32 %v721, %v790
    %v792 = vpop.f32.mrf.mxu0
    %v793 = vadd.f32 %v721, %v792
    %794 = vmatmul.bf16.gmra.mxu0 %v698
    %v795 = vpop.f32.mrf.mxu0
    %v796 = vadd.f32 %v721, %v795
    %v797 = vpop.f32.mrf.mxu0
    %v798 = vadd.f32 %v721, %v797
    %799 = vmatmul.bf16.gmra.mxu0 %v699
    %v800 = vpop.f32.mrf.mxu0
    %v801 = vadd.f32 %v721, %v800
    %v802 = vpop.f32.mrf.mxu0
    %v803 = vadd.f32 %v721, %v802
    %804 = vmatmul.bf16.gmra.mxu0 %v700
    %v805 = vpop.f32.mrf.mxu0
    %v806 = vadd.f32 %v721, %v805
    %v807 = vpop.f32.mrf.mxu0
    %v808 = vadd.f32 %v721, %v807
    %809 = vmatmul.bf16.gmra.mxu0 %v701
    %v810 = vpop.f32.mrf.mxu0
    %v811 = vadd.f32 %v721, %v810
    %v812 = vpop.f32.mrf.mxu0
    %v813 = vadd.f32 %v721, %v812
    %814 = vmatmul.bf16.gmra.mxu0 %v702
    %v815 = vpop.f32.mrf.mxu0
    %v816 = vadd.f32 %v721, %v815
    %v817 = vpop.f32.mrf.mxu0
    %v818 = vadd.f32 %v721, %v817
    %819 = vdwg.mxu0
    %v820 = vadd.f32 %v34, %v781
    %v821 = vadd.f32 %v35, %v783
    %v822 = vadd.f32 %v36, %v786
    %v823 = vadd.f32 %v37, %v788
    %v824 = vadd.f32 %v38, %v791
    %v825 = vadd.f32 %v39, %v793
    %v826 = vadd.f32 %v40, %v796
    %v827 = vadd.f32 %v41, %v798
    %v828 = vadd.f32 %v42, %v801
    %v829 = vadd.f32 %v43, %v803
    %v830 = vadd.f32 %v44, %v806
    %v831 = vadd.f32 %v45, %v808
    %v832 = vadd.f32 %v46, %v811
    %v833 = vadd.f32 %v47, %v813
    %v834 = vadd.f32 %v48, %v816
    %v835 = vadd.f32 %v49, %v818
    %v836 = vsel %vm50, %v820, 0.0
    %837 = vadd.xlane.f32.xlu0 %v836
    %v838 = vpop.xlane.xlu0 %837
    %v839 = vsel %vm50, %v821, 0.0
    %840 = vadd.xlane.f32.xlu0 %v839
    %v841 = vpop.xlane.xlu0 %840
    %v842 = vsel %vm50, %v822, 0.0
    %843 = vadd.xlane.f32.xlu0 %v842
    %v844 = vpop.xlane.xlu0 %843
    %v845 = vsel %vm50, %v823, 0.0
    %846 = vadd.xlane.f32.xlu0 %v845
    %v847 = vpop.xlane.xlu0 %846
    %v848 = vsel %vm50, %v824, 0.0
    %849 = vadd.xlane.f32.xlu0 %v848
    %v850 = vpop.xlane.xlu0 %849
    %v851 = vsel %vm50, %v825, 0.0
    %852 = vadd.xlane.f32.xlu0 %v851
    %v853 = vpop.xlane.xlu0 %852
    %v854 = vsel %vm50, %v826, 0.0
    %855 = vadd.xlane.f32.xlu0 %v854
    %v856 = vpop.xlane.xlu0 %855
    %v857 = vsel %vm50, %v827, 0.0
    %858 = vadd.xlane.f32.xlu0 %v857
    %v859 = vpop.xlane.xlu0 %858
    %v860 = vsel %vm50, %v828, 0.0
    %861 = vadd.xlane.f32.xlu0 %v860
    %v862 = vpop.xlane.xlu0 %861
    %v863 = vsel %vm50, %v829, 0.0
    %864 = vadd.xlane.f32.xlu0 %v863
    %v865 = vpop.xlane.xlu0 %864
    %v866 = vsel %vm50, %v830, 0.0
    %867 = vadd.xlane.f32.xlu0 %v866
    %v868 = vpop.xlane.xlu0 %867
    %v869 = vsel %vm50, %v831, 0.0
    %870 = vadd.xlane.f32.xlu0 %v869
    %v871 = vpop.xlane.xlu0 %870
    %v872 = vsel %vm50, %v832, 0.0
    %873 = vadd.xlane.f32.xlu0 %v872
    %v874 = vpop.xlane.xlu0 %873
    %v875 = vsel %vm50, %v833, 0.0
    %876 = vadd.xlane.f32.xlu0 %v875
    %v877 = vpop.xlane.xlu0 %876
    %v878 = vsel %vm50, %v834, 0.0
    %879 = vadd.xlane.f32.xlu0 %v878
    %v880 = vpop.xlane.xlu0 %879
    %v881 = vsel %vm50, %v835, 0.0
    %882 = vadd.xlane.f32.xlu0 %v881
    %v883 = vpop.xlane.xlu0 %882
    %v884 = vmul.f32 %v838, %v105
    %v885 = vmul.f32 %v841, %v105
    %v886 = vmul.f32 %v844, %v105
    %v887 = vmul.f32 %v847, %v105
    %v888 = vmul.f32 %v850, %v105
    %v889 = vmul.f32 %v853, %v105
    %v890 = vmul.f32 %v856, %v105
    %v891 = vmul.f32 %v859, %v105
    %v892 = vmul.f32 %v862, %v105
    %v893 = vmul.f32 %v865, %v105
    %v894 = vmul.f32 %v868, %v105
    %v895 = vmul.f32 %v871, %v105
    %v896 = vmul.f32 %v874, %v105
    %v897 = vmul.f32 %v877, %v105
    %v898 = vmul.f32 %v880, %v105
    %v899 = vmul.f32 %v883, %v105
    %v900 = vsub.f32 %v820, %v884
    %v901 = vsub.f32 %v821, %v885
    %v902 = vsub.f32 %v822, %v886
    %v903 = vsub.f32 %v823, %v887
    %v904 = vsub.f32 %v824, %v888
    %v905 = vsub.f32 %v825, %v889
    %v906 = vsub.f32 %v826, %v890
    %v907 = vsub.f32 %v827, %v891
    %v908 = vsub.f32 %v828, %v892
    %v909 = vsub.f32 %v829, %v893
    %v910 = vsub.f32 %v830, %v894
    %v911 = vsub.f32 %v831, %v895
    %v912 = vsub.f32 %v832, %v896
    %v913 = vsub.f32 %v833, %v897
    %v914 = vsub.f32 %v834, %v898
    %v915 = vsub.f32 %v835, %v899
    %v916 = vmul.f32 %v900, %v900
    %v917 = vmul.f32 %v901, %v901
    %v918 = vmul.f32 %v902, %v902
    %v919 = vmul.f32 %v903, %v903
    %v920 = vmul.f32 %v904, %v904
    %v921 = vmul.f32 %v905, %v905
    %v922 = vmul.f32 %v906, %v906
    %v923 = vmul.f32 %v907, %v907
    %v924 = vmul.f32 %v908, %v908
    %v925 = vmul.f32 %v909, %v909
    %v926 = vmul.f32 %v910, %v910
    %v927 = vmul.f32 %v911, %v911
    %v928 = vmul.f32 %v912, %v912
    %v929 = vmul.f32 %v913, %v913
    %v930 = vmul.f32 %v914, %v914
    %v931 = vmul.f32 %v915, %v915
    %v932 = vsel %vm50, %v916, 0.0
    %933 = vadd.xlane.f32.xlu0 %v932
    %v934 = vpop.xlane.xlu0 %933
    %v935 = vsel %vm50, %v917, 0.0
    %936 = vadd.xlane.f32.xlu0 %v935
    %v937 = vpop.xlane.xlu0 %936
    %v938 = vsel %vm50, %v918, 0.0
    %939 = vadd.xlane.f32.xlu0 %v938
    %v940 = vpop.xlane.xlu0 %939
    %v941 = vsel %vm50, %v919, 0.0
    %942 = vadd.xlane.f32.xlu0 %v941
    %v943 = vpop.xlane.xlu0 %942
    %v944 = vsel %vm50, %v920, 0.0
    %945 = vadd.xlane.f32.xlu0 %v944
    %v946 = vpop.xlane.xlu0 %945
    %v947 = vsel %vm50, %v921, 0.0
    %948 = vadd.xlane.f32.xlu0 %v947
    %v949 = vpop.xlane.xlu0 %948
    %v950 = vsel %vm50, %v922, 0.0
    %951 = vadd.xlane.f32.xlu0 %v950
    %v952 = vpop.xlane.xlu0 %951
    %v953 = vsel %vm50, %v923, 0.0
    %954 = vadd.xlane.f32.xlu0 %v953
    %v955 = vpop.xlane.xlu0 %954
    %v956 = vsel %vm50, %v924, 0.0
    %957 = vadd.xlane.f32.xlu0 %v956
    %v958 = vpop.xlane.xlu0 %957
    %v959 = vsel %vm50, %v925, 0.0
    %960 = vadd.xlane.f32.xlu0 %v959
    %v961 = vpop.xlane.xlu0 %960
    %v962 = vsel %vm50, %v926, 0.0
    %963 = vadd.xlane.f32.xlu0 %v962
    %v964 = vpop.xlane.xlu0 %963
    %v965 = vsel %vm50, %v927, 0.0
    %966 = vadd.xlane.f32.xlu0 %v965
    %v967 = vpop.xlane.xlu0 %966
    %v968 = vsel %vm50, %v928, 0.0
    %969 = vadd.xlane.f32.xlu0 %v968
    %v970 = vpop.xlane.xlu0 %969
    %v971 = vsel %vm50, %v929, 0.0
    %972 = vadd.xlane.f32.xlu0 %v971
    %v973 = vpop.xlane.xlu0 %972
    %v974 = vsel %vm50, %v930, 0.0
    %975 = vadd.xlane.f32.xlu0 %v974
    %v976 = vpop.xlane.xlu0 %975
    %v977 = vsel %vm50, %v931, 0.0
    %978 = vadd.xlane.f32.xlu0 %v977
    %v979 = vpop.xlane.xlu0 %978
    %v980 = vmul.f32 %v934, %v105
    %v981 = vmul.f32 %v937, %v105
    %v982 = vmul.f32 %v940, %v105
    %v983 = vmul.f32 %v943, %v105
    %v984 = vmul.f32 %v946, %v105
    %v985 = vmul.f32 %v949, %v105
    %v986 = vmul.f32 %v952, %v105
    %v987 = vmul.f32 %v955, %v105
    %v988 = vmul.f32 %v958, %v105
    %v989 = vmul.f32 %v961, %v105
    %v990 = vmul.f32 %v964, %v105
    %v991 = vmul.f32 %v967, %v105
    %v992 = vmul.f32 %v970, %v105
    %v993 = vmul.f32 %v973, %v105
    %v994 = vmul.f32 %v976, %v105
    %v995 = vmul.f32 %v979, %v105
    %v996 = vadd.f32 %v980, 1e-05
    %v997 = vadd.f32 %v981, 1e-05
    %v998 = vadd.f32 %v982, 1e-05
    %v999 = vadd.f32 %v983, 1e-05
    %v1000 = vadd.f32 %v984, 1e-05
    %v1001 = vadd.f32 %v985, 1e-05
    %v1002 = vadd.f32 %v986, 1e-05
    %v1003 = vadd.f32 %v987, 1e-05
    %v1004 = vadd.f32 %v988, 1e-05
    %v1005 = vadd.f32 %v989, 1e-05
    %v1006 = vadd.f32 %v990, 1e-05
    %v1007 = vadd.f32 %v991, 1e-05
    %v1008 = vadd.f32 %v992, 1e-05
    %v1009 = vadd.f32 %v993, 1e-05
    %v1010 = vadd.f32 %v994, 1e-05
    %v1011 = vadd.f32 %v995, 1e-05
    %v1012 = vrsqrt.pop %v996
    %v1013 = vmul.f32 %v1012, %v996
    %v1014 = vmul.f32 %v1013, %v1012
    %v1015 = vmul.f32 0.5, %v1014
    %v1016 = vsub.f32 1.5, %v1015
    %v1017 = vmul.f32 %v1012, %v1016
    %vm1018 = vweird.f32 %v996
    %vm1019 = vweird.f32 %v1012
    %vm1020 = vmor %vm1018, %vm1019
    %v1021 = vsel %vm1020, %v1012, %v1017
    %v1022 = vrsqrt.pop %v997
    %v1023 = vmul.f32 %v1022, %v997
    %v1024 = vmul.f32 %v1023, %v1022
    %v1025 = vmul.f32 0.5, %v1024
    %v1026 = vsub.f32 1.5, %v1025
    %v1027 = vmul.f32 %v1022, %v1026
    %vm1028 = vweird.f32 %v997
    %vm1029 = vweird.f32 %v1022
    %vm1030 = vmor %vm1028, %vm1029
    %v1031 = vsel %vm1030, %v1022, %v1027
    %v1032 = vrsqrt.pop %v998
    %v1033 = vmul.f32 %v1032, %v998
    %v1034 = vmul.f32 %v1033, %v1032
    %v1035 = vmul.f32 0.5, %v1034
    %v1036 = vsub.f32 1.5, %v1035
    %v1037 = vmul.f32 %v1032, %v1036
    %vm1038 = vweird.f32 %v998
    %vm1039 = vweird.f32 %v1032
    %vm1040 = vmor %vm1038, %vm1039
    %v1041 = vsel %vm1040, %v1032, %v1037
    %v1042 = vrsqrt.pop %v999
    %v1043 = vmul.f32 %v1042, %v999
    %v1044 = vmul.f32 %v1043, %v1042
    %v1045 = vmul.f32 0.5, %v1044
    %v1046 = vsub.f32 1.5, %v1045
    %v1047 = vmul.f32 %v1042, %v1046
    %vm1048 = vweird.f32 %v999
    %vm1049 = vweird.f32 %v1042
    %vm1050 = vmor %vm1048, %vm1049
    %v1051 = vsel %vm1050, %v1042, %v1047
    %v1052 = vrsqrt.pop %v1000
    %v1053 = vmul.f32 %v1052, %v1000
    %v1054 = vmul.f32 %v1053, %v1052
    %v1055 = vmul.f32 0.5, %v1054
    %v1056 = vsub.f32 1.5, %v1055
    %v1057 = vmul.f32 %v1052, %v1056
    %vm1058 = vweird.f32 %v1000
    %vm1059 = vweird.f32 %v1052
    %vm1060 = vmor %vm1058, %vm1059
    %v1061 = vsel %vm1060, %v1052, %v1057
    %v1062 = vrsqrt.pop %v1001
    %v1063 = vmul.f32 %v1062, %v1001
    %v1064 = vmul.f32 %v1063, %v1062
    %v1065 = vmul.f32 0.5, %v1064
    %v1066 = vsub.f32 1.5, %v1065
    %v1067 = vmul.f32 %v1062, %v1066
    %vm1068 = vweird.f32 %v1001
    %vm1069 = vweird.f32 %v1062
    %vm1070 = vmor %vm1068, %vm1069
    %v1071 = vsel %vm1070, %v1062, %v1067
    %v1072 = vrsqrt.pop %v1002
    %v1073 = vmul.f32 %v1072, %v1002
    %v1074 = vmul.f32 %v1073, %v1072
    %v1075 = vmul.f32 0.5, %v1074
    %v1076 = vsub.f32 1.5, %v1075
    %v1077 = vmul.f32 %v1072, %v1076
    %vm1078 = vweird.f32 %v1002
    %vm1079 = vweird.f32 %v1072
    %vm1080 = vmor %vm1078, %vm1079
    %v1081 = vsel %vm1080, %v1072, %v1077
    %v1082 = vrsqrt.pop %v1003
    %v1083 = vmul.f32 %v1082, %v1003
    %v1084 = vmul.f32 %v1083, %v1082
    %v1085 = vmul.f32 0.5, %v1084
    %v1086 = vsub.f32 1.5, %v1085
    %v1087 = vmul.f32 %v1082, %v1086
    %vm1088 = vweird.f32 %v1003
    %vm1089 = vweird.f32 %v1082
    %vm1090 = vmor %vm1088, %vm1089
    %v1091 = vsel %vm1090, %v1082, %v1087
    %v1092 = vrsqrt.pop %v1004
    %v1093 = vmul.f32 %v1092, %v1004
    %v1094 = vmul.f32 %v1093, %v1092
    %v1095 = vmul.f32 0.5, %v1094
    %v1096 = vsub.f32 1.5, %v1095
    %v1097 = vmul.f32 %v1092, %v1096
    %vm1098 = vweird.f32 %v1004
    %vm1099 = vweird.f32 %v1092
    %vm1100 = vmor %vm1098, %vm1099
    %v1101 = vsel %vm1100, %v1092, %v1097
    %v1102 = vrsqrt.pop %v1005
    %v1103 = vmul.f32 %v1102, %v1005
    %v1104 = vmul.f32 %v1103, %v1102
    %v1105 = vmul.f32 0.5, %v1104
    %v1106 = vsub.f32 1.5, %v1105
    %v1107 = vmul.f32 %v1102, %v1106
    %vm1108 = vweird.f32 %v1005
    %vm1109 = vweird.f32 %v1102
    %vm1110 = vmor %vm1108, %vm1109
    %v1111 = vsel %vm1110, %v1102, %v1107
    %v1112 = vrsqrt.pop %v1006
    %v1113 = vmul.f32 %v1112, %v1006
    %v1114 = vmul.f32 %v1113, %v1112
    %v1115 = vmul.f32 0.5, %v1114
    %v1116 = vsub.f32 1.5, %v1115
    %v1117 = vmul.f32 %v1112, %v1116
    %vm1118 = vweird.f32 %v1006
    %vm1119 = vweird.f32 %v1112
    %vm1120 = vmor %vm1118, %vm1119
    %v1121 = vsel %vm1120, %v1112, %v1117
    %v1122 = vrsqrt.pop %v1007
    %v1123 = vmul.f32 %v1122, %v1007
    %v1124 = vmul.f32 %v1123, %v1122
    %v1125 = vmul.f32 0.5, %v1124
    %v1126 = vsub.f32 1.5, %v1125
    %v1127 = vmul.f32 %v1122, %v1126
    %vm1128 = vweird.f32 %v1007
    %vm1129 = vweird.f32 %v1122
    %vm1130 = vmor %vm1128, %vm1129
    %v1131 = vsel %vm1130, %v1122, %v1127
    %v1132 = vrsqrt.pop %v1008
    %v1133 = vmul.f32 %v1132, %v1008
    %v1134 = vmul.f32 %v1133, %v1132
    %v1135 = vmul.f32 0.5, %v1134
    %v1136 = vsub.f32 1.5, %v1135
    %v1137 = vmul.f32 %v1132, %v1136
    %vm1138 = vweird.f32 %v1008
    %vm1139 = vweird.f32 %v1132
    %vm1140 = vmor %vm1138, %vm1139
    %v1141 = vsel %vm1140, %v1132, %v1137
    %v1142 = vrsqrt.pop %v1009
    %v1143 = vmul.f32 %v1142, %v1009
    %v1144 = vmul.f32 %v1143, %v1142
    %v1145 = vmul.f32 0.5, %v1144
    %v1146 = vsub.f32 1.5, %v1145
    %v1147 = vmul.f32 %v1142, %v1146
    %vm1148 = vweird.f32 %v1009
    %vm1149 = vweird.f32 %v1142
    %vm1150 = vmor %vm1148, %vm1149
    %v1151 = vsel %vm1150, %v1142, %v1147
    %v1152 = vrsqrt.pop %v1010
    %v1153 = vmul.f32 %v1152, %v1010
    %v1154 = vmul.f32 %v1153, %v1152
    %v1155 = vmul.f32 0.5, %v1154
    %v1156 = vsub.f32 1.5, %v1155
    %v1157 = vmul.f32 %v1152, %v1156
    %vm1158 = vweird.f32 %v1010
    %vm1159 = vweird.f32 %v1152
    %vm1160 = vmor %vm1158, %vm1159
    %v1161 = vsel %vm1160, %v1152, %v1157
    %v1162 = vrsqrt.pop %v1011
    %v1163 = vmul.f32 %v1162, %v1011
    %v1164 = vmul.f32 %v1163, %v1162
    %v1165 = vmul.f32 0.5, %v1164
    %v1166 = vsub.f32 1.5, %v1165
    %v1167 = vmul.f32 %v1162, %v1166
    %vm1168 = vweird.f32 %v1011
    %vm1169 = vweird.f32 %v1162
    %vm1170 = vmor %vm1168, %vm1169
    %v1171 = vsel %vm1170, %v1162, %v1167
    %v1172 = vmul.f32 %v900, %v1021
    %v1173 = vmul.f32 %v901, %v1031
    %v1174 = vmul.f32 %v902, %v1041
    %v1175 = vmul.f32 %v903, %v1051
    %v1176 = vmul.f32 %v904, %v1061
    %v1177 = vmul.f32 %v905, %v1071
    %v1178 = vmul.f32 %v906, %v1081
    %v1179 = vmul.f32 %v907, %v1091
    %v1180 = vmul.f32 %v908, %v1101
    %v1181 = vmul.f32 %v909, %v1111
    %v1182 = vmul.f32 %v910, %v1121
    %v1183 = vmul.f32 %v911, %v1131
    %v1184 = vmul.f32 %v912, %v1141
    %v1185 = vmul.f32 %v913, %v1151
    %v1186 = vmul.f32 %v914, %v1161
    %v1187 = vmul.f32 %v915, %v1171
    %v1188 = vld [vmem:[%s7] sm:$0x1]
    %v1190 = vperm.slane %v1188, 0
    %v1192 = vmul.f32 %v1172, %v1190
    %v1193 = vmul.f32 %v1173, %v1190
    %v1194 = vmul.f32 %v1174, %v1190
    %v1195 = vmul.f32 %v1175, %v1190
    %v1196 = vmul.f32 %v1176, %v1190
    %v1197 = vmul.f32 %v1177, %v1190
    %v1198 = vmul.f32 %v1178, %v1190
    %v1199 = vmul.f32 %v1179, %v1190
    %v1200 = vmul.f32 %v1180, %v1190
    %v1201 = vmul.f32 %v1181, %v1190
    %v1202 = vmul.f32 %v1182, %v1190
    %v1203 = vmul.f32 %v1183, %v1190
    %v1204 = vmul.f32 %v1184, %v1190
    %v1205 = vmul.f32 %v1185, %v1190
    %v1206 = vmul.f32 %v1186, %v1190
    %v1207 = vmul.f32 %v1187, %v1190
    %v1208 = vld [vmem:[%s8] sm:$0x1]
    %v1210 = vperm.slane %v1208, 0
    %v1212 = vadd.f32 %v1192, %v1210
    %v1213 = vadd.f32 %v1193, %v1210
    %v1214 = vadd.f32 %v1194, %v1210
    %v1215 = vadd.f32 %v1195, %v1210
    %v1216 = vadd.f32 %v1196, %v1210
    %v1217 = vadd.f32 %v1197, %v1210
    %v1218 = vadd.f32 %v1198, %v1210
    %v1219 = vadd.f32 %v1199, %v1210
    %v1220 = vadd.f32 %v1200, %v1210
    %v1221 = vadd.f32 %v1201, %v1210
    %v1222 = vadd.f32 %v1202, %v1210
    %v1223 = vadd.f32 %v1203, %v1210
    %v1224 = vadd.f32 %v1204, %v1210
    %v1225 = vadd.f32 %v1205, %v1210
    %v1226 = vadd.f32 %v1206, %v1210
    %v1227 = vadd.f32 %v1207, %v1210
    %1228 = vst.msk [vmem:[#allocation2] sm:$0xff] %vm50, %v1212
    %1229 = vst.msk [vmem:[#allocation2 + $0x8] sm:$0xff] %vm50, %v1213
    %1230 = vst.msk [vmem:[#allocation2 + $0x10] sm:$0xff] %vm50, %v1214
    %1231 = vst.msk [vmem:[#allocation2 + $0x18] sm:$0xff] %vm50, %v1215
    %1232 = vst.msk [vmem:[#allocation2 + $0x20] sm:$0xff] %vm50, %v1216
    %1233 = vst.msk [vmem:[#allocation2 + $0x28] sm:$0xff] %vm50, %v1217
    %1234 = vst.msk [vmem:[#allocation2 + $0x30] sm:$0xff] %vm50, %v1218
    %1235 = vst.msk [vmem:[#allocation2 + $0x38] sm:$0xff] %vm50, %v1219
    %1236 = vst.msk [vmem:[#allocation2 + $0x40] sm:$0xff] %vm50, %v1220
    %1237 = vst.msk [vmem:[#allocation2 + $0x48] sm:$0xff] %vm50, %v1221
    %1238 = vst.msk [vmem:[#allocation2 + $0x50] sm:$0xff] %vm50, %v1222
    %1239 = vst.msk [vmem:[#allocation2 + $0x58] sm:$0xff] %vm50, %v1223
    %1240 = vst.msk [vmem:[#allocation2 + $0x60] sm:$0xff] %vm50, %v1224
    %1241 = vst.msk [vmem:[#allocation2 + $0x68] sm:$0xff] %vm50, %v1225
    %1242 = vst.msk [vmem:[#allocation2 + $0x70] sm:$0xff] %vm50, %v1226
    %1243 = vst.msk [vmem:[#allocation2 + $0x78] sm:$0xff] %vm50, %v1227
    // Predicated region
    $region38: #{video_encoder_forward.11} parent=1 // pred_check
      _
    $region39: #{video_encoder_forward.11} parent=1 // pred_check_branch
      %1245 = sbr.rel (0) target = $region41
    $region40: #{video_encoder_forward.11} parent=1 // pred_region
      %1247 = vsyncadd [#allocation3], 0
      %s1248 = sshll.u32 [#allocation2], 4
      %s1249 = int_to_ptr.vmem [resolvable:$true] %s1248
      %s1250 = sshll.u32 %s9, 4
      %s1251 = int_to_ptr.hbm [resolvable:$true] %s1250
      %1256 = dma.vmem_to_hbm [thread:$0]  %s1249, 2048, %s1251, [#allocation3], 128, 128, 8
    $region41: #{video_encoder_forward.11} parent=1 // pred_fallthru
      _
    // Predicated region
    $region42: #{video_encoder_forward.11} parent=1 // pred_check
      _
    $region43: #{video_encoder_forward.11} parent=1 // pred_check_branch
      %1258 = sbr.rel (0) target = $region45
    $region44: #{video_encoder_forward.11} parent=1 // pred_region
      %1260 = dma.done [#allocation3], 2048
    $region45: #{video_encoder_forward.11} parent=1 // pred_fallthru
      _
    %1261 = vsyncpa [#allocation3], 1

</llo_original>
